<compile_context>
chip_gen: v7x
topology: tpu7x:2x2x1
jax: 0.10.0
libtpu: 0.0.40
codegen_flags: <defaults>
</compile_context>

<pallas_src>
import jax
import jax.numpy as jnp
from jax import lax
from jax.experimental import pallas as pl
from jax.experimental.pallas import tpu as pltpu

B_TILE_MAX = 32  # samples per grid step (multiple of 8); gated on runtime batch size


def _round_up(n, m):
    return (n + m - 1) // m * m


# ------------------------------- Pallas kernel ------------------------------ #

def simple_cnn_kernel(x_ref, w1b_ref, b1_ref, w2b_ref, b2_ref, w3_ref, b3_ref,
                      w4_ref, b4_ref, o_ref):
    """Fused SimpleCNN forward for one batch tile.

    x_ref  : (30, B, 32)  bf16  zero-padded input, rows = padded H, lanes = padded W
    w1b_ref: (96, 1024)   bf16  banded conv1 weight, col = dj*512 + pj*32 + c
    w2b_ref: (1536, 1024) bf16  banded conv2 weight, col = dj*512 + pj*64 + co
    w3_ref : (7, 448, 128) bf16 Linear1 weight split per pooled row (NHWC order)
    biases : f32, pre-tiled to match the lane layouts
    o_ref  : (B, 10) f32
    """
    bsz = o_ref.shape[0]

    # ---- conv1 (3x3, 1->32) as a single banded matmul over 3 padded rows ----
    # A1[(i, b), kk*32 + p] = xpad[b, i+kk, p]
    a1 = jnp.concatenate([x_ref[kk:kk + 28] for kk in range(3)], axis=-1)   # (28,B,96)
    a1 = a1.reshape(28 * bsz, 96)
    y1 = jnp.dot(a1, w1b_ref[...], preferred_element_type=jnp.float32)      # (28B,1024)

    # 2x2 max-pool: H pairs on the leading dim, W pairs = aligned 512-lane halves.
    y1 = y1.reshape(14, 2, bsz, 1024)
    y1 = jnp.maximum(y1[:, 0], y1[:, 1])                                    # (14,B,1024)
    y1 = jnp.maximum(y1[..., 0:448], y1[..., 512:960])                      # (14,B,448)
    h1 = jnp.maximum(y1 + b1_ref[...], 0.0).astype(jnp.bfloat16)            # lane=j*32+c

    # ---- spatial zero-pad h1 to 16x16 for conv2 (lane = jp*32 + ci) ----
    zlane = jnp.zeros((14, bsz, 32), jnp.bfloat16)
    h1p = jnp.concatenate([zlane, h1, zlane], axis=-1)                      # (14,B,512)
    zrow = jnp.zeros((1, bsz, 512), jnp.bfloat16)
    h1p = jnp.concatenate([zrow, h1p, zrow], axis=0)                        # (16,B,512)

    # ---- conv2 (3x3, 32->64) as a single banded matmul (K = 3*512, aligned concat)
    a2 = jnp.concatenate([h1p[kk:kk + 14] for kk in range(3)], axis=-1)     # (14,B,1536)
    a2 = a2.reshape(14 * bsz, 1536)
    z2 = jnp.dot(a2, w2b_ref[...], preferred_element_type=jnp.float32)      # (14B,1024)

    z2 = z2.reshape(7, 2, bsz, 1024)
    z2 = jnp.maximum(z2[:, 0], z2[:, 1])                                    # (7,B,1024)
    z2 = jnp.maximum(z2[..., 0:448], z2[..., 512:960])                      # (7,B,448)
    h2 = jnp.maximum(z2 + b2_ref[...], 0.0).astype(jnp.bfloat16)            # lane=j*64+co

    # ---- flatten + Linear(3136->128): accumulating contraction over the 7 rows ----
    acc = jnp.zeros((bsz, 128), jnp.float32)
    for pi in range(7):
        acc = acc + jnp.dot(h2[pi], w3_ref[pi], preferred_element_type=jnp.float32)
    h3 = jnp.maximum(acc + b3_ref[...], 0.0).astype(jnp.bfloat16)           # (B,128)

    out = jnp.dot(h3, w4_ref[...], preferred_element_type=jnp.float32) + b4_ref[...]
    o_ref[...] = out.astype(o_ref.dtype)


# ------------------------------ Pallas wrapper ------------------------------ #

def simple_cnn_pallas(x_t, prep, *, b_tile):
    _, b_pad, _ = x_t.shape
    per_sample_flops = 2 * (28 * 28 * 9 * 32 + 14 * 14 * 288 * 64 + 3136 * 128 + 128 * 10)
    bytes_accessed = int(
        x_t.size * x_t.dtype.itemsize
        + sum(int(v.size) * v.dtype.itemsize for v in prep.values())
        + b_pad * 10 * 4)
    return pl.pallas_call(
        simple_cnn_kernel,
        out_shape=jax.ShapeDtypeStruct((b_pad, 10), jnp.float32),
        grid=(b_pad // b_tile,),
        in_specs=[
            pl.BlockSpec((30, b_tile, 32), lambda i: (0, i, 0)),   # x (batch-tiled)
            pl.BlockSpec((96, 1024), lambda i: (0, 0)),            # w1 banded
            pl.BlockSpec((1, 448), lambda i: (0, 0)),              # b1 tiled
            pl.BlockSpec((1536, 1024), lambda i: (0, 0)),          # w2 banded
            pl.BlockSpec((1, 448), lambda i: (0, 0)),              # b2 tiled
            pl.BlockSpec((7, 448, 128), lambda i: (0, 0, 0)),      # w3 (NHWC rows)
            pl.BlockSpec((1, 128), lambda i: (0, 0)),              # b3
            pl.BlockSpec((128, 10), lambda i: (0, 0)),             # w4
            pl.BlockSpec((1, 10), lambda i: (0, 0)),               # b4
        ],
        out_specs=pl.BlockSpec((b_tile, 10), lambda i: (i, 0)),
        compiler_params=pltpu.CompilerParams(dimension_semantics=("parallel",)),
        cost_estimate=pl.CostEstimate(flops=per_sample_flops * int(b_pad),
                                      transcendentals=0,
                                      bytes_accessed=bytes_accessed),
    )(x_t, prep["w1b"], prep["b1"], prep["w2b"], prep["b2"],
      prep["w3"], prep["b3"], prep["w4"], prep["b4"])


# ---------------------------------- glue ------------------------------------ #

def init_params(key):
    ks = jax.random.split(key, 8)
    return {
        "w1": jax.random.normal(ks[0], (3, 3, 1, 32), jnp.float32) * 0.1,    # HWIO
        "b1": jax.random.normal(ks[1], (32,), jnp.float32) * 0.01,
        "w2": jax.random.normal(ks[2], (3, 3, 32, 64), jnp.float32) * 0.05,  # HWIO
        "b2": jax.random.normal(ks[3], (64,), jnp.float32) * 0.01,
        "w3": jax.random.normal(ks[4], (64 * 7 * 7, 128), jnp.float32) * 0.02,  # NCHW rows
        "b3": jax.random.normal(ks[5], (128,), jnp.float32) * 0.01,
        "w4": jax.random.normal(ks[6], (128, 10), jnp.float32) * 0.05,
        "b4": jax.random.normal(ks[7], (10,), jnp.float32) * 0.01,
    }


def prepare_params(params):
    """One-time layout prep (outside jit): banded conv weights, tiled biases,
    Linear1 rows permuted from NCHW flatten order to our (h, w, c) row order."""
    f32 = jnp.float32
    w1 = params["w1"].astype(f32)[:, :, 0, :]        # (3,3,32)
    w2 = params["w2"].astype(f32)                     # (3,3,32,64)

    # conv1 banded weight: row = kk*32 + p ; col = dj*512 + pj*32 + c ; j = 2*pj+dj.
    p_i = jnp.arange(32)[:, None, None, None]
    kw_i = jnp.arange(3)[None, :, None, None]
    pj_i = jnp.arange(14)[None, None, :, None]
    dj_i = jnp.arange(2)[None, None, None, :]
    s1 = (p_i == 2 * pj_i + dj_i + kw_i).astype(f32)            # (32,3,14,2)
    w1b = jnp.einsum("pwjd,kwc->kpdjc", s1, w1)                  # (3,32,2,14,32)
    w1b = jnp.pad(w1b.reshape(96, 2, 448), ((0, 0), (0, 0), (0, 64))).reshape(96, 1024)

    # conv2 banded weight: row = kk*512 + jp*32 + ci ; col = dj*512 + pj*64 + co.
    jp_i = jnp.arange(16)[:, None, None, None]
    pj2_i = jnp.arange(7)[None, None, :, None]
    s2 = (jp_i == 2 * pj2_i + dj_i + kw_i).astype(f32)           # (16,3,7,2)
    w2b = jnp.einsum("jwpd,kwio->kjidpo", s2, w2)                # (3,16,32,2,7,64)
    w2b = jnp.pad(w2b.reshape(1536, 2, 448), ((0, 0), (0, 0), (0, 64))).reshape(1536, 1024)

    # Linear1: PyTorch flattens NCHW (c,h,w); our rows are (h, w*64 + c).
    w3 = params["w3"].reshape(64, 7, 7, 128).transpose(1, 2, 0, 3).reshape(7, 448, 128)

    return {
        "w1b": w1b.astype(jnp.bfloat16),
        "b1": jnp.tile(params["b1"], 14).reshape(1, 448).astype(f32),
        "w2b": w2b.astype(jnp.bfloat16),
        "b2": jnp.tile(params["b2"], 7).reshape(1, 448).astype(f32),
        "w3": w3.astype(jnp.bfloat16),
        "b3": params["b3"].reshape(1, 128).astype(f32),
        "w4": params["w4"].astype(jnp.bfloat16),
        "b4": params["b4"].reshape(1, 10).astype(f32),
    }


@jax.jit
def simple_cnn_forward(x_nchw, prep):
    n = x_nchw.shape[0]
    b_tile = min(B_TILE_MAX, _round_up(n, 8))     # gate tile on runtime batch size
    b_pad = _round_up(n, b_tile)
    # Only XLA-side prep: zero-pad the raw image (H->30, W->32) and put batch on
    # the sublane dim (the 9x im2col blow-ups are gone; taps are built in-kernel).
    x = x_nchw[:, 0].astype(jnp.bfloat16)                       # (N,28,28)
    x = jnp.pad(x, ((0, b_pad - n), (1, 1), (1, 3)))            # (b_pad,30,32)
    x = jnp.transpose(x, (1, 0, 2))                             # (30,b_pad,32)
    out = simple_cnn_pallas(x, prep, b_tile=b_tile)             # (b_pad,10)
    return out[:n]


def reference_forward(x_nchw, params):
    """Pure-JAX/XLA f32 reference mirroring the PyTorch forward pass."""
    dn = ("NCHW", "OIHW", "NCHW")
    w1 = jnp.transpose(params["w1"], (3, 2, 0, 1))   # HWIO -> OIHW
    w2 = jnp.transpose(params["w2"], (3, 2, 0, 1))
    y = lax.conv_general_dilated(x_nchw, w1, (1, 1), "SAME", dimension_numbers=dn)
    y = jnp.maximum(y + params["b1"][None, :, None, None], 0.0)
    y = lax.reduce_window(y, -jnp.inf, lax.max, (1, 1, 2, 2), (1, 1, 2, 2), "VALID")
    y = lax.conv_general_dilated(y, w2, (1, 1), "SAME", dimension_numbers=dn)
    y = jnp.maximum(y + params["b2"][None, :, None, None], 0.0)
    y = lax.reduce_window(y, -jnp.inf, lax.max, (1, 1, 2, 2), (1, 1, 2, 2), "VALID")
    y = y.reshape(y.shape[0], -1)                    # NCHW flatten (matches w3 rows)
    y = jnp.maximum(y @ params["w3"] + params["b3"], 0.0)
    return y @ params["w4"] + params["b4"]


if __name__ == "__main__":
    key = jax.random.PRNGKey(0)
    k_x, k_p = jax.random.split(key)
    # Linear(64*7*7) implies 28x28 single-channel inputs (MNIST-style).
    x = jax.random.normal(k_x, (2, 1, 28, 28), jnp.float32)
    params = init_params(k_p)
    prep = prepare_params(params)

    out = simple_cnn_forward(x, prep)
    out = jax.block_until_ready(out)
    assert out.shape == (2, 10), out.shape

    ref = reference_forward(x, params)
    err = float(jnp.max(jnp.abs(out - ref)))
    assert jnp.allclose(out, ref, rtol=2e-2, atol=2e-2), ("mismatch vs reference", err)

    print("KERNEL_OK")
</pallas_src>

<mosaic_0001>
module attributes {stable_mosaic.version = 11 : i64} {
  func.func @simple_cnn_kernel(%arg0: i32, %arg1: memref<30x8x32xbf16, #tpu.memory_space<vmem>>, %arg2: memref<96x1024xbf16, #tpu.memory_space<vmem>>, %arg3: memref<1x448xf32, #tpu.memory_space<vmem>>, %arg4: memref<1536x1024xbf16, #tpu.memory_space<vmem>>, %arg5: memref<1x448xf32, #tpu.memory_space<vmem>>, %arg6: memref<7x448x128xbf16, #tpu.memory_space<vmem>>, %arg7: memref<1x128xf32, #tpu.memory_space<vmem>>, %arg8: memref<128x10xbf16, #tpu.memory_space<vmem>>, %arg9: memref<1x10xf32, #tpu.memory_space<vmem>>, %arg10: memref<8x10xf32, #tpu.memory_space<vmem>>) attributes {dimension_semantics = [#tpu.dimension_semantics<parallel>], iteration_bounds = array<i64: 1>, scalar_prefetch = 0 : i64, scratch_operands = 0 : i64, tpu.core_type = #tpu.core_type<tc>, window_params = [{transform_indices = @transform_0, window_bounds = array<i64: 30, 8, 32>}, {pipeline_mode = #tpu.pipeline_mode<synchronous>, transform_indices = @transform_1, window_bounds = array<i64: 96, 1024>}, {pipeline_mode = #tpu.pipeline_mode<synchronous>, transform_indices = @transform_2, window_bounds = array<i64: 1, 448>}, {pipeline_mode = #tpu.pipeline_mode<synchronous>, transform_indices = @transform_3, window_bounds = array<i64: 1536, 1024>}, {pipeline_mode = #tpu.pipeline_mode<synchronous>, transform_indices = @transform_4, window_bounds = array<i64: 1, 448>}, {pipeline_mode = #tpu.pipeline_mode<synchronous>, transform_indices = @transform_5, window_bounds = array<i64: 7, 448, 128>}, {pipeline_mode = #tpu.pipeline_mode<synchronous>, transform_indices = @transform_6, window_bounds = array<i64: 1, 128>}, {pipeline_mode = #tpu.pipeline_mode<synchronous>, transform_indices = @transform_7, window_bounds = array<i64: 128, 10>}, {pipeline_mode = #tpu.pipeline_mode<synchronous>, transform_indices = @transform_8, window_bounds = array<i64: 1, 10>}, {transform_indices = @transform_9, window_bounds = array<i64: 8, 10>}]} {
    %c0 = arith.constant 0 : index
    %c0_0 = arith.constant 0 : index
    %c0_1 = arith.constant 0 : index
    %0 = vector.load %arg1[%c0, %c0_0, %c0_1] : memref<30x8x32xbf16, #tpu.memory_space<vmem>>, vector<28x8x32xbf16>
    %c1 = arith.constant 1 : index
    %c0_2 = arith.constant 0 : index
    %c0_3 = arith.constant 0 : index
    %1 = vector.load %arg1[%c1, %c0_2, %c0_3] : memref<30x8x32xbf16, #tpu.memory_space<vmem>>, vector<28x8x32xbf16>
    %c2 = arith.constant 2 : index
    %c0_4 = arith.constant 0 : index
    %c0_5 = arith.constant 0 : index
    %2 = vector.load %arg1[%c2, %c0_4, %c0_5] : memref<30x8x32xbf16, #tpu.memory_space<vmem>>, vector<28x8x32xbf16>
    %3 = tpu.concatenate %0, %1, %2 in 2 : vector<28x8x32xbf16>, vector<28x8x32xbf16>, vector<28x8x32xbf16> -> vector<28x8x96xbf16>
    %4 = vector.shape_cast %3 : vector<28x8x96xbf16> to vector<224x96xbf16>
    %c0_6 = arith.constant 0 : index
    %c0_7 = arith.constant 0 : index
    %5 = vector.load %arg2[%c0_6, %c0_7] : memref<96x1024xbf16, #tpu.memory_space<vmem>>, vector<96x1024xbf16>
    %cst = arith.constant dense<0.000000e+00> : vector<224x1024xf32>
    %6 = tpu.matmul %4, %5, %cst {dimension_numbers = #tpu.dot_dimension_numbers<[1], [0], [0], [1], [0, 0, 1, 1], [], []>} : vector<224x96xbf16>, vector<96x1024xbf16>, vector<224x1024xf32> -> vector<224x1024xf32>
    %7 = vector.shape_cast %6 : vector<224x1024xf32> to vector<14x2x8x1024xf32>
    %8 = vector.extract_strided_slice %7 {offsets = [0, 0, 0, 0], sizes = [14, 1, 8, 1024], strides = [1, 1, 1, 1]} : vector<14x2x8x1024xf32> to vector<14x1x8x1024xf32>
    %9 = vector.shape_cast %8 : vector<14x1x8x1024xf32> to vector<14x8x1024xf32>
    %10 = vector.extract_strided_slice %7 {offsets = [0, 1, 0, 0], sizes = [14, 1, 8, 1024], strides = [1, 1, 1, 1]} : vector<14x2x8x1024xf32> to vector<14x1x8x1024xf32>
    %11 = vector.shape_cast %10 : vector<14x1x8x1024xf32> to vector<14x8x1024xf32>
    %12 = arith.maximumf %9, %11 : vector<14x8x1024xf32>
    %13 = vector.extract_strided_slice %12 {offsets = [0, 0, 0], sizes = [14, 8, 448], strides = [1, 1, 1]} : vector<14x8x1024xf32> to vector<14x8x448xf32>
    %14 = vector.extract_strided_slice %12 {offsets = [0, 0, 512], sizes = [14, 8, 448], strides = [1, 1, 1]} : vector<14x8x1024xf32> to vector<14x8x448xf32>
    %15 = arith.maximumf %13, %14 : vector<14x8x448xf32>
    %c0_8 = arith.constant 0 : index
    %c0_9 = arith.constant 0 : index
    %16 = vector.load %arg3[%c0_8, %c0_9] : memref<1x448xf32, #tpu.memory_space<vmem>>, vector<1x448xf32>
    %17 = vector.shape_cast %16 : vector<1x448xf32> to vector<1x1x448xf32>
    %18 = vector.broadcast %17 : vector<1x1x448xf32> to vector<14x8x448xf32>
    %19 = arith.addf %15, %18 : vector<14x8x448xf32>
    %cst_10 = arith.constant 0.000000e+00 : f32
    %20 = vector.broadcast %cst_10 : f32 to vector<14x8x448xf32>
    %21 = arith.maximumf %19, %20 : vector<14x8x448xf32>
    %22 = arith.truncf %21 : vector<14x8x448xf32> to vector<14x8x448xbf16>
    %cst_11 = arith.constant 0.000000e+00 : bf16
    %23 = vector.broadcast %cst_11 : bf16 to vector<14x8x32xbf16>
    %24 = tpu.concatenate %23, %22, %23 in 2 : vector<14x8x32xbf16>, vector<14x8x448xbf16>, vector<14x8x32xbf16> -> vector<14x8x512xbf16>
    %cst_12 = arith.constant 0.000000e+00 : bf16
    %25 = vector.broadcast %cst_12 : bf16 to vector<1x8x512xbf16>
    %26 = tpu.concatenate %25, %24, %25 in 0 : vector<1x8x512xbf16>, vector<14x8x512xbf16>, vector<1x8x512xbf16> -> vector<16x8x512xbf16>
    %27 = vector.extract_strided_slice %26 {offsets = [0, 0, 0], sizes = [14, 8, 512], strides = [1, 1, 1]} : vector<16x8x512xbf16> to vector<14x8x512xbf16>
    %28 = vector.extract_strided_slice %26 {offsets = [1, 0, 0], sizes = [14, 8, 512], strides = [1, 1, 1]} : vector<16x8x512xbf16> to vector<14x8x512xbf16>
    %29 = vector.extract_strided_slice %26 {offsets = [2, 0, 0], sizes = [14, 8, 512], strides = [1, 1, 1]} : vector<16x8x512xbf16> to vector<14x8x512xbf16>
    %30 = tpu.concatenate %27, %28, %29 in 2 : vector<14x8x512xbf16>, vector<14x8x512xbf16>, vector<14x8x512xbf16> -> vector<14x8x1536xbf16>
    %31 = vector.shape_cast %30 : vector<14x8x1536xbf16> to vector<112x1536xbf16>
    %c0_13 = arith.constant 0 : index
    %c0_14 = arith.constant 0 : index
    %32 = vector.load %arg4[%c0_13, %c0_14] : memref<1536x1024xbf16, #tpu.memory_space<vmem>>, vector<1536x1024xbf16>
    %cst_15 = arith.constant dense<0.000000e+00> : vector<112x1024xf32>
    %33 = tpu.matmul %31, %32, %cst_15 {dimension_numbers = #tpu.dot_dimension_numbers<[1], [0], [0], [1], [0, 0, 1, 1], [], []>} : vector<112x1536xbf16>, vector<1536x1024xbf16>, vector<112x1024xf32> -> vector<112x1024xf32>
    %34 = vector.shape_cast %33 : vector<112x1024xf32> to vector<7x2x8x1024xf32>
    %35 = vector.extract_strided_slice %34 {offsets = [0, 0, 0, 0], sizes = [7, 1, 8, 1024], strides = [1, 1, 1, 1]} : vector<7x2x8x1024xf32> to vector<7x1x8x1024xf32>
    %36 = vector.shape_cast %35 : vector<7x1x8x1024xf32> to vector<7x8x1024xf32>
    %37 = vector.extract_strided_slice %34 {offsets = [0, 1, 0, 0], sizes = [7, 1, 8, 1024], strides = [1, 1, 1, 1]} : vector<7x2x8x1024xf32> to vector<7x1x8x1024xf32>
    %38 = vector.shape_cast %37 : vector<7x1x8x1024xf32> to vector<7x8x1024xf32>
    %39 = arith.maximumf %36, %38 : vector<7x8x1024xf32>
    %40 = vector.extract_strided_slice %39 {offsets = [0, 0, 0], sizes = [7, 8, 448], strides = [1, 1, 1]} : vector<7x8x1024xf32> to vector<7x8x448xf32>
    %41 = vector.extract_strided_slice %39 {offsets = [0, 0, 512], sizes = [7, 8, 448], strides = [1, 1, 1]} : vector<7x8x1024xf32> to vector<7x8x448xf32>
    %42 = arith.maximumf %40, %41 : vector<7x8x448xf32>
    %c0_16 = arith.constant 0 : index
    %c0_17 = arith.constant 0 : index
    %43 = vector.load %arg5[%c0_16, %c0_17] : memref<1x448xf32, #tpu.memory_space<vmem>>, vector<1x448xf32>
    %44 = vector.shape_cast %43 : vector<1x448xf32> to vector<1x1x448xf32>
    %45 = vector.broadcast %44 : vector<1x1x448xf32> to vector<7x8x448xf32>
    %46 = arith.addf %42, %45 : vector<7x8x448xf32>
    %cst_18 = arith.constant 0.000000e+00 : f32
    %47 = vector.broadcast %cst_18 : f32 to vector<7x8x448xf32>
    %48 = arith.maximumf %46, %47 : vector<7x8x448xf32>
    %49 = arith.truncf %48 : vector<7x8x448xf32> to vector<7x8x448xbf16>
    %cst_19 = arith.constant 0.000000e+00 : f32
    %50 = vector.broadcast %cst_19 : f32 to vector<8x128xf32>
    %51 = vector.extract_strided_slice %49 {offsets = [0, 0, 0], sizes = [1, 8, 448], strides = [1, 1, 1]} : vector<7x8x448xbf16> to vector<1x8x448xbf16>
    %52 = vector.shape_cast %51 : vector<1x8x448xbf16> to vector<8x448xbf16>
    %c0_20 = arith.constant 0 : index
    %c0_21 = arith.constant 0 : index
    %c0_22 = arith.constant 0 : index
    %53 = vector.load %arg6[%c0_20, %c0_21, %c0_22] : memref<7x448x128xbf16, #tpu.memory_space<vmem>>, vector<1x448x128xbf16>
    %54 = vector.shape_cast %53 : vector<1x448x128xbf16> to vector<448x128xbf16>
    %cst_23 = arith.constant dense<0.000000e+00> : vector<8x128xf32>
    %55 = tpu.matmul %52, %54, %cst_23 {dimension_numbers = #tpu.dot_dimension_numbers<[1], [0], [0], [1], [0, 0, 1, 1], [], []>} : vector<8x448xbf16>, vector<448x128xbf16>, vector<8x128xf32> -> vector<8x128xf32>
    %56 = arith.addf %50, %55 : vector<8x128xf32>
    %57 = vector.extract_strided_slice %49 {offsets = [1, 0, 0], sizes = [1, 8, 448], strides = [1, 1, 1]} : vector<7x8x448xbf16> to vector<1x8x448xbf16>
    %58 = vector.shape_cast %57 : vector<1x8x448xbf16> to vector<8x448xbf16>
    %c1_24 = arith.constant 1 : index
    %c0_25 = arith.constant 0 : index
    %c0_26 = arith.constant 0 : index
    %59 = vector.load %arg6[%c1_24, %c0_25, %c0_26] : memref<7x448x128xbf16, #tpu.memory_space<vmem>>, vector<1x448x128xbf16>
    %60 = vector.shape_cast %59 : vector<1x448x128xbf16> to vector<448x128xbf16>
    %cst_27 = arith.constant dense<0.000000e+00> : vector<8x128xf32>
    %61 = tpu.matmul %58, %60, %cst_27 {dimension_numbers = #tpu.dot_dimension_numbers<[1], [0], [0], [1], [0, 0, 1, 1], [], []>} : vector<8x448xbf16>, vector<448x128xbf16>, vector<8x128xf32> -> vector<8x128xf32>
    %62 = arith.addf %56, %61 : vector<8x128xf32>
    %63 = vector.extract_strided_slice %49 {offsets = [2, 0, 0], sizes = [1, 8, 448], strides = [1, 1, 1]} : vector<7x8x448xbf16> to vector<1x8x448xbf16>
    %64 = vector.shape_cast %63 : vector<1x8x448xbf16> to vector<8x448xbf16>
    %c2_28 = arith.constant 2 : index
    %c0_29 = arith.constant 0 : index
    %c0_30 = arith.constant 0 : index
    %65 = vector.load %arg6[%c2_28, %c0_29, %c0_30] : memref<7x448x128xbf16, #tpu.memory_space<vmem>>, vector<1x448x128xbf16>
    %66 = vector.shape_cast %65 : vector<1x448x128xbf16> to vector<448x128xbf16>
    %cst_31 = arith.constant dense<0.000000e+00> : vector<8x128xf32>
    %67 = tpu.matmul %64, %66, %cst_31 {dimension_numbers = #tpu.dot_dimension_numbers<[1], [0], [0], [1], [0, 0, 1, 1], [], []>} : vector<8x448xbf16>, vector<448x128xbf16>, vector<8x128xf32> -> vector<8x128xf32>
    %68 = arith.addf %62, %67 : vector<8x128xf32>
    %69 = vector.extract_strided_slice %49 {offsets = [3, 0, 0], sizes = [1, 8, 448], strides = [1, 1, 1]} : vector<7x8x448xbf16> to vector<1x8x448xbf16>
    %70 = vector.shape_cast %69 : vector<1x8x448xbf16> to vector<8x448xbf16>
    %c3 = arith.constant 3 : index
    %c0_32 = arith.constant 0 : index
    %c0_33 = arith.constant 0 : index
    %71 = vector.load %arg6[%c3, %c0_32, %c0_33] : memref<7x448x128xbf16, #tpu.memory_space<vmem>>, vector<1x448x128xbf16>
    %72 = vector.shape_cast %71 : vector<1x448x128xbf16> to vector<448x128xbf16>
    %cst_34 = arith.constant dense<0.000000e+00> : vector<8x128xf32>
    %73 = tpu.matmul %70, %72, %cst_34 {dimension_numbers = #tpu.dot_dimension_numbers<[1], [0], [0], [1], [0, 0, 1, 1], [], []>} : vector<8x448xbf16>, vector<448x128xbf16>, vector<8x128xf32> -> vector<8x128xf32>
    %74 = arith.addf %68, %73 : vector<8x128xf32>
    %75 = vector.extract_strided_slice %49 {offsets = [4, 0, 0], sizes = [1, 8, 448], strides = [1, 1, 1]} : vector<7x8x448xbf16> to vector<1x8x448xbf16>
    %76 = vector.shape_cast %75 : vector<1x8x448xbf16> to vector<8x448xbf16>
    %c4 = arith.constant 4 : index
    %c0_35 = arith.constant 0 : index
    %c0_36 = arith.constant 0 : index
    %77 = vector.load %arg6[%c4, %c0_35, %c0_36] : memref<7x448x128xbf16, #tpu.memory_space<vmem>>, vector<1x448x128xbf16>
    %78 = vector.shape_cast %77 : vector<1x448x128xbf16> to vector<448x128xbf16>
    %cst_37 = arith.constant dense<0.000000e+00> : vector<8x128xf32>
    %79 = tpu.matmul %76, %78, %cst_37 {dimension_numbers = #tpu.dot_dimension_numbers<[1], [0], [0], [1], [0, 0, 1, 1], [], []>} : vector<8x448xbf16>, vector<448x128xbf16>, vector<8x128xf32> -> vector<8x128xf32>
    %80 = arith.addf %74, %79 : vector<8x128xf32>
    %81 = vector.extract_strided_slice %49 {offsets = [5, 0, 0], sizes = [1, 8, 448], strides = [1, 1, 1]} : vector<7x8x448xbf16> to vector<1x8x448xbf16>
    %82 = vector.shape_cast %81 : vector<1x8x448xbf16> to vector<8x448xbf16>
    %c5 = arith.constant 5 : index
    %c0_38 = arith.constant 0 : index
    %c0_39 = arith.constant 0 : index
    %83 = vector.load %arg6[%c5, %c0_38, %c0_39] : memref<7x448x128xbf16, #tpu.memory_space<vmem>>, vector<1x448x128xbf16>
    %84 = vector.shape_cast %83 : vector<1x448x128xbf16> to vector<448x128xbf16>
    %cst_40 = arith.constant dense<0.000000e+00> : vector<8x128xf32>
    %85 = tpu.matmul %82, %84, %cst_40 {dimension_numbers = #tpu.dot_dimension_numbers<[1], [0], [0], [1], [0, 0, 1, 1], [], []>} : vector<8x448xbf16>, vector<448x128xbf16>, vector<8x128xf32> -> vector<8x128xf32>
    %86 = arith.addf %80, %85 : vector<8x128xf32>
    %87 = vector.extract_strided_slice %49 {offsets = [6, 0, 0], sizes = [1, 8, 448], strides = [1, 1, 1]} : vector<7x8x448xbf16> to vector<1x8x448xbf16>
    %88 = vector.shape_cast %87 : vector<1x8x448xbf16> to vector<8x448xbf16>
    %c6 = arith.constant 6 : index
    %c0_41 = arith.constant 0 : index
    %c0_42 = arith.constant 0 : index
    %89 = vector.load %arg6[%c6, %c0_41, %c0_42] : memref<7x448x128xbf16, #tpu.memory_space<vmem>>, vector<1x448x128xbf16>
    %90 = vector.shape_cast %89 : vector<1x448x128xbf16> to vector<448x128xbf16>
    %cst_43 = arith.constant dense<0.000000e+00> : vector<8x128xf32>
    %91 = tpu.matmul %88, %90, %cst_43 {dimension_numbers = #tpu.dot_dimension_numbers<[1], [0], [0], [1], [0, 0, 1, 1], [], []>} : vector<8x448xbf16>, vector<448x128xbf16>, vector<8x128xf32> -> vector<8x128xf32>
    %92 = arith.addf %86, %91 : vector<8x128xf32>
    %c0_44 = arith.constant 0 : index
    %c0_45 = arith.constant 0 : index
    %93 = vector.load %arg7[%c0_44, %c0_45] : memref<1x128xf32, #tpu.memory_space<vmem>>, vector<1x128xf32>
    %94 = vector.broadcast %93 : vector<1x128xf32> to vector<8x128xf32>
    %95 = arith.addf %92, %94 : vector<8x128xf32>
    %cst_46 = arith.constant 0.000000e+00 : f32
    %96 = vector.broadcast %cst_46 : f32 to vector<8x128xf32>
    %97 = arith.maximumf %95, %96 : vector<8x128xf32>
    %98 = arith.truncf %97 : vector<8x128xf32> to vector<8x128xbf16>
    %c0_47 = arith.constant 0 : index
    %c0_48 = arith.constant 0 : index
    %99 = vector.load %arg8[%c0_47, %c0_48] : memref<128x10xbf16, #tpu.memory_space<vmem>>, vector<128x10xbf16>
    %cst_49 = arith.constant dense<0.000000e+00> : vector<8x10xf32>
    %100 = tpu.matmul %98, %99, %cst_49 {dimension_numbers = #tpu.dot_dimension_numbers<[1], [0], [0], [1], [0, 0, 1, 1], [], []>} : vector<8x128xbf16>, vector<128x10xbf16>, vector<8x10xf32> -> vector<8x10xf32>
    %c0_50 = arith.constant 0 : index
    %c0_51 = arith.constant 0 : index
    %101 = vector.load %arg9[%c0_50, %c0_51] : memref<1x10xf32, #tpu.memory_space<vmem>>, vector<1x10xf32>
    %102 = vector.broadcast %101 : vector<1x10xf32> to vector<8x10xf32>
    %103 = arith.addf %100, %102 : vector<8x10xf32>
    %c0_52 = arith.constant 0 : index
    %c0_53 = arith.constant 0 : index
    %104 = vector.load %arg10[%c0_52, %c0_53] : memref<8x10xf32, #tpu.memory_space<vmem>>, vector<8x10xf32>
    tpu.vector_store %arg10[%c0_52, %c0_53], %103 {strides = array<i32>} : memref<8x10xf32, #tpu.memory_space<vmem>>, vector<8x10xf32>,
    return
  }
  func.func @transform_0(%arg0: i32) -> (i32, i32, i32) {
    %c0_i32 = arith.constant 0 : i32
    %c0_i32_0 = arith.constant 0 : i32
    %c0_i32_1 = arith.constant 0 : i32
    return %c0_i32, %arg0, %c0_i32_0 : i32, i32, i32
  }
  func.func @transform_1(%arg0: i32) -> (i32, i32) {
    %c0_i32 = arith.constant 0 : i32
    %c0_i32_0 = arith.constant 0 : i32
    %c0_i32_1 = arith.constant 0 : i32
    return %c0_i32, %c0_i32_0 : i32, i32
  }
  func.func @transform_2(%arg0: i32) -> (i32, i32) {
    %c0_i32 = arith.constant 0 : i32
    %c0_i32_0 = arith.constant 0 : i32
    %c0_i32_1 = arith.constant 0 : i32
    return %c0_i32, %c0_i32_0 : i32, i32
  }
  func.func @transform_3(%arg0: i32) -> (i32, i32) {
    %c0_i32 = arith.constant 0 : i32
    %c0_i32_0 = arith.constant 0 : i32
    %c0_i32_1 = arith.constant 0 : i32
    return %c0_i32, %c0_i32_0 : i32, i32
  }
  func.func @transform_4(%arg0: i32) -> (i32, i32) {
    %c0_i32 = arith.constant 0 : i32
    %c0_i32_0 = arith.constant 0 : i32
    %c0_i32_1 = arith.constant 0 : i32
    return %c0_i32, %c0_i32_0 : i32, i32
  }
  func.func @transform_5(%arg0: i32) -> (i32, i32, i32) {
    %c0_i32 = arith.constant 0 : i32
    %c0_i32_0 = arith.constant 0 : i32
    %c0_i32_1 = arith.constant 0 : i32
    %c0_i32_2 = arith.constant 0 : i32
    return %c0_i32, %c0_i32_0, %c0_i32_1 : i32, i32, i32
  }
  func.func @transform_6(%arg0: i32) -> (i32, i32) {
    %c0_i32 = arith.constant 0 : i32
    %c0_i32_0 = arith.constant 0 : i32
    %c0_i32_1 = arith.constant 0 : i32
    return %c0_i32, %c0_i32_0 : i32, i32
  }
  func.func @transform_7(%arg0: i32) -> (i32, i32) {
    %c0_i32 = arith.constant 0 : i32
    %c0_i32_0 = arith.constant 0 : i32
    %c0_i32_1 = arith.constant 0 : i32
    return %c0_i32, %c0_i32_0 : i32, i32
  }
  func.func @transform_8(%arg0: i32) -> (i32, i32) {
    %c0_i32 = arith.constant 0 : i32
    %c0_i32_0 = arith.constant 0 : i32
    %c0_i32_1 = arith.constant 0 : i32
    return %c0_i32, %c0_i32_0 : i32, i32
  }
  func.func @transform_9(%arg0: i32) -> (i32, i32) {
    %c0_i32 = arith.constant 0 : i32
    %c0_i32_0 = arith.constant 0 : i32
    return %arg0, %c0_i32 : i32, i32
  }
}

</mosaic_0001>

<llo_original>
// kernel: simple_cnn_forward.1
$region0: #{simple_cnn_forward.1}
  #allocation0 [shape = 'u32[]', space=smem, size = 0x4, offset = 0x4, fixed_abs, tag = 'smem constant byte address 0x4 - core index']
  #allocation1 [shape = 'u32[144,128]{1,0:T(1,128)}', space=vmem, size = 0x12000, scoped, tag = 'internal scratch']
  %s0 = inlined_call_operand.vmem [shape: bf16[30,8,32], index: 0, kind: input, shape index: {}]
  %s1 = inlined_call_operand.hbm [shape: bf16[96,1024], index: 1, kind: input, shape index: {}]
  %s2 = inlined_call_operand.hbm [shape: f32[1,448], index: 2, kind: input, shape index: {}]
  %s3 = inlined_call_operand.hbm [shape: bf16[1536,1024], index: 3, kind: input, shape index: {}]
  %s4 = inlined_call_operand.hbm [shape: f32[1,448], index: 4, kind: input, shape index: {}]
  %s5 = inlined_call_operand.hbm [shape: bf16[7,448,128], index: 5, kind: input, shape index: {}]
  %s6 = inlined_call_operand.hbm [shape: f32[1,128], index: 6, kind: input, shape index: {}]
  %s7 = inlined_call_operand.vmem [shape: bf16[128,10], index: 7, kind: input, shape index: {}]
  %s8 = inlined_call_operand.hbm [shape: f32[1,10], index: 8, kind: input, shape index: {}]
  %s9 = inlined_call_operand.vmem [shape: f32[8,10], index: 9, kind: output, shape index: {}]
  %s10 = sld [smem:[#allocation0]]
  $region74: #{simple_cnn_forward.1} parent=0
    _
  %s12 = ssub.s32 1, %s10
  %s13 = scalar_select 0, %s12, %s10
  $region1: #{simple_cnn_forward.1} parent=0
    #allocation2 [shape = 'u8[196608]{0}', space=vmem, size = 0x30000, scoped, tag = 'input window, operand 1, single buffered']
    #allocation3 [shape = 's32[1]{0}', space=sflag, size = 0x4, scoped, tag = 'scoped memory for simple_cnn_forward.1']
    #allocation4 [shape = 'u8[2048]{0}', space=vmem, size = 0x800, scoped, tag = 'input window, operand 2, single buffered']
    #allocation5 [shape = 's32[1]{0}', space=sflag, size = 0x4, scoped, tag = 'scoped memory for simple_cnn_forward.1']
    #allocation6 [shape = 'u8[3145728]{0}', space=vmem, size = 0x300000, scoped, tag = 'input window, operand 3, single buffered']
    #allocation7 [shape = 'u8[2048]{0}', space=vmem, size = 0x800, scoped, tag = 'input window, operand 4, single buffered']
    #allocation8 [shape = 's32[1]{0}', space=sflag, size = 0x4, scoped, tag = 'scoped memory for simple_cnn_forward.1']
    #allocation9 [shape = 'u8[802816]{0}', space=vmem, size = 0xc4000, scoped, tag = 'input window, operand 5, single buffered']
    #allocation10 [shape = 'u8[512]{0}', space=vmem, size = 0x400, scoped, tag = 'input window, operand 6, single buffered']
    #allocation11 [shape = 's32[1]{0}', space=sflag, size = 0x4, scoped, tag = 'scoped memory for simple_cnn_forward.1']
    #allocation12 [shape = 'u8[512]{0}', space=vmem, size = 0x400, scoped, tag = 'input window, operand 8, single buffered']
    %14 = vsyncpa [#allocation3], 0
    %15 = vsyncpa [#allocation5], 0
    %16 = vsyncpa [#allocation8], 0
    %17 = vsyncpa [#allocation11], 0
    // Predicated region
    $region2: #{simple_cnn_forward.1} parent=1 // pred_check
      _
    $region3: #{simple_cnn_forward.1} parent=1 // pred_check_branch
      %19 = sbr.rel (0) target = $region5
    $region4: #{simple_cnn_forward.1} parent=1 // pred_region
      _
    $region5: #{simple_cnn_forward.1} parent=1 // pred_fallthru
      _
    // Predicated region
    $region6: #{simple_cnn_forward.1} parent=1 // pred_check
      _
    $region7: #{simple_cnn_forward.1} parent=1 // pred_check_branch
      %21 = sbr.rel (0) target = $region9
    $region8: #{simple_cnn_forward.1} parent=1 // pred_region
      %s23 = ssub.s32 6144, 6144
      %24 = vsyncadd [#allocation3], %s23
      %s25 = sshll.u32 [#allocation2], 4
      %s26 = int_to_ptr.vmem [resolvable:$true] %s25
      %31 = dma.hbm_to_vmem [thread:$0]  %s1, 6144, %s26, [#allocation3], 512, 512, 32
    $region9: #{simple_cnn_forward.1} parent=1 // pred_fallthru
      _
    // Predicated region
    $region10: #{simple_cnn_forward.1} parent=1 // pred_check
      _
    $region11: #{simple_cnn_forward.1} parent=1 // pred_check_branch
      %33 = sbr.rel (0) target = $region13
    $region12: #{simple_cnn_forward.1} parent=1 // pred_region
      %s35 = ssub.s32 64, 64
      %36 = vsyncadd [#allocation5], %s35
      %s38 = sshll.u32 [#allocation4], 4
      %s39 = int_to_ptr.vmem [resolvable:$true] %s38
      %41 = dma.hbm_to_vmem [thread:$0]  %s2, 64, %s39, [#allocation5]
    $region13: #{simple_cnn_forward.1} parent=1 // pred_fallthru
      _
    // Predicated region
    $region14: #{simple_cnn_forward.1} parent=1 // pred_check
      _
    $region15: #{simple_cnn_forward.1} parent=1 // pred_check_branch
      %43 = sbr.rel (0) target = $region17
    $region16: #{simple_cnn_forward.1} parent=1 // pred_region
      %s45 = ssub.s32 98304, 98304
      %46 = vsyncadd [#allocation5], %s45
      %s47 = sshll.u32 [#allocation6], 4
      %s48 = int_to_ptr.vmem [resolvable:$true] %s47
      %53 = dma.hbm_to_vmem [thread:$0]  %s3, 98304, %s48, [#allocation5], 512, 512, 32
    $region17: #{simple_cnn_forward.1} parent=1 // pred_fallthru
      _
    // Predicated region
    $region18: #{simple_cnn_forward.1} parent=1 // pred_check
      _
    $region19: #{simple_cnn_forward.1} parent=1 // pred_check_branch
      %55 = sbr.rel (0) target = $region21
    $region20: #{simple_cnn_forward.1} parent=1 // pred_region
      %s57 = ssub.s32 64, 64
      %58 = vsyncadd [#allocation8], %s57
      %s60 = sshll.u32 [#allocation7], 4
      %s61 = int_to_ptr.vmem [resolvable:$true] %s60
      %63 = dma.hbm_to_vmem [thread:$0]  %s4, 64, %s61, [#allocation8]
    $region21: #{simple_cnn_forward.1} parent=1 // pred_fallthru
      _
    // Predicated region
    $region22: #{simple_cnn_forward.1} parent=1 // pred_check
      _
    $region23: #{simple_cnn_forward.1} parent=1 // pred_check_branch
      %65 = sbr.rel (0) target = $region25
    $region24: #{simple_cnn_forward.1} parent=1 // pred_region
      %s67 = ssub.s32 25088, 25088
      %68 = vsyncadd [#allocation8], %s67
      %s69 = sshll.u32 [#allocation9], 4
      %s70 = int_to_ptr.vmem [resolvable:$true] %s69
      %75 = dma.hbm_to_vmem [thread:$0]  %s5, 25088, %s70, [#allocation8], 64, 64, 4
    $region25: #{simple_cnn_forward.1} parent=1 // pred_fallthru
      _
    // Predicated region
    $region26: #{simple_cnn_forward.1} parent=1 // pred_check
      _
    $region27: #{simple_cnn_forward.1} parent=1 // pred_check_branch
      %77 = sbr.rel (0) target = $region29
    $region28: #{simple_cnn_forward.1} parent=1 // pred_region
      %s79 = ssub.s32 16, 16
      %80 = vsyncadd [#allocation11], %s79
      %s82 = sshll.u32 [#allocation10], 4
      %s83 = int_to_ptr.vmem [resolvable:$true] %s82
      %85 = dma.hbm_to_vmem [thread:$0]  %s6, 16, %s83, [#allocation11]
    $region29: #{simple_cnn_forward.1} parent=1 // pred_fallthru
      _
    // Predicated region
    $region30: #{simple_cnn_forward.1} parent=1 // pred_check
      _
    $region31: #{simple_cnn_forward.1} parent=1 // pred_check_branch
      %87 = sbr.rel (0) target = $region33
    $region32: #{simple_cnn_forward.1} parent=1 // pred_region
      _
    $region33: #{simple_cnn_forward.1} parent=1 // pred_fallthru
      _
    // Predicated region
    $region34: #{simple_cnn_forward.1} parent=1 // pred_check
      _
    $region35: #{simple_cnn_forward.1} parent=1 // pred_check_branch
      %89 = sbr.rel (0) target = $region37
    $region36: #{simple_cnn_forward.1} parent=1 // pred_region
      %s91 = ssub.s32 16, 16
      %92 = vsyncadd [#allocation11], %s91
      %s94 = sshll.u32 [#allocation12], 4
      %s95 = int_to_ptr.vmem [resolvable:$true] %s94
      %97 = dma.hbm_to_vmem [thread:$0]  %s8, 16, %s95, [#allocation11]
    $region37: #{simple_cnn_forward.1} parent=1 // pred_fallthru
      _
    // Predicated region
    $region38: #{simple_cnn_forward.1} parent=1 // pred_check
      _
    $region39: #{simple_cnn_forward.1} parent=1 // pred_check_branch
      %99 = sbr.rel (0) target = $region41
    $region40: #{simple_cnn_forward.1} parent=1 // pred_region
      %100 = dma.done [#allocation3], 6144
    $region41: #{simple_cnn_forward.1} parent=1 // pred_fallthru
      _
    // Predicated region
    $region42: #{simple_cnn_forward.1} parent=1 // pred_check
      _
    $region43: #{simple_cnn_forward.1} parent=1 // pred_check_branch
      %102 = sbr.rel (0) target = $region45
    $region44: #{simple_cnn_forward.1} parent=1 // pred_region
      %103 = dma.done [#allocation5], 64
    $region45: #{simple_cnn_forward.1} parent=1 // pred_fallthru
      _
    // Predicated region
    $region46: #{simple_cnn_forward.1} parent=1 // pred_check
      _
    $region47: #{simple_cnn_forward.1} parent=1 // pred_check_branch
      %105 = sbr.rel (0) target = $region49
    $region48: #{simple_cnn_forward.1} parent=1 // pred_region
      %106 = dma.done [#allocation5], 98304
    $region49: #{simple_cnn_forward.1} parent=1 // pred_fallthru
      _
    // Predicated region
    $region50: #{simple_cnn_forward.1} parent=1 // pred_check
      _
    $region51: #{simple_cnn_forward.1} parent=1 // pred_check_branch
      %108 = sbr.rel (0) target = $region53
    $region52: #{simple_cnn_forward.1} parent=1 // pred_region
      %109 = dma.done [#allocation8], 64
    $region53: #{simple_cnn_forward.1} parent=1 // pred_fallthru
      _
    // Predicated region
    $region54: #{simple_cnn_forward.1} parent=1 // pred_check
      _
    $region55: #{simple_cnn_forward.1} parent=1 // pred_check_branch
      %111 = sbr.rel (0) target = $region57
    $region56: #{simple_cnn_forward.1} parent=1 // pred_region
      %112 = dma.done [#allocation8], 25088
    $region57: #{simple_cnn_forward.1} parent=1 // pred_fallthru
      _
    // Predicated region
    $region58: #{simple_cnn_forward.1} parent=1 // pred_check
      _
    $region59: #{simple_cnn_forward.1} parent=1 // pred_check_branch
      %114 = sbr.rel (0) target = $region61
    $region60: #{simple_cnn_forward.1} parent=1 // pred_region
      %115 = dma.done [#allocation11], 16
    $region61: #{simple_cnn_forward.1} parent=1 // pred_fallthru
      _
    // Predicated region
    $region62: #{simple_cnn_forward.1} parent=1 // pred_check
      _
    $region63: #{simple_cnn_forward.1} parent=1 // pred_check_branch
      %117 = sbr.rel (0) target = $region65
    $region64: #{simple_cnn_forward.1} parent=1 // pred_region
      %118 = dma.done [#allocation11], 16
    $region65: #{simple_cnn_forward.1} parent=1 // pred_fallthru
      _
    %v120 = vld [vmem:[%s0] sm:$0xf]
    %v121 = vld [vmem:[%s0 + $0x4] sm:$0xf]
    %v122 = vld [vmem:[%s0 + $0x8] sm:$0xf]
    %v123 = vld [vmem:[%s0 + $0xc] sm:$0xf]
    %v124 = vld [vmem:[%s0 + $0x10] sm:$0xf]
    %v125 = vld [vmem:[%s0 + $0x14] sm:$0xf]
    %v126 = vld [vmem:[%s0 + $0x18] sm:$0xf]
    %v127 = vld [vmem:[%s0 + $0x1c] sm:$0xf]
    %v128 = vld [vmem:[%s0 + $0x20] sm:$0xf]
    %v129 = vld [vmem:[%s0 + $0x24] sm:$0xf]
    %v130 = vld [vmem:[%s0 + $0x28] sm:$0xf]
    %v131 = vld [vmem:[%s0 + $0x2c] sm:$0xf]
    %v132 = vld [vmem:[%s0 + $0x30] sm:$0xf]
    %v133 = vld [vmem:[%s0 + $0x34] sm:$0xf]
    %v134 = vld [vmem:[%s0 + $0x38] sm:$0xf]
    %v135 = vld [vmem:[%s0 + $0x3c] sm:$0xf]
    %v136 = vld [vmem:[%s0 + $0x40] sm:$0xf]
    %v137 = vld [vmem:[%s0 + $0x44] sm:$0xf]
    %v138 = vld [vmem:[%s0 + $0x48] sm:$0xf]
    %v139 = vld [vmem:[%s0 + $0x4c] sm:$0xf]
    %v140 = vld [vmem:[%s0 + $0x50] sm:$0xf]
    %v141 = vld [vmem:[%s0 + $0x54] sm:$0xf]
    %v142 = vld [vmem:[%s0 + $0x58] sm:$0xf]
    %v143 = vld [vmem:[%s0 + $0x5c] sm:$0xf]
    %v144 = vld [vmem:[%s0 + $0x60] sm:$0xf]
    %v145 = vld [vmem:[%s0 + $0x64] sm:$0xf]
    %v146 = vld [vmem:[%s0 + $0x68] sm:$0xf]
    %v147 = vld [vmem:[%s0 + $0x6c] sm:$0xf]
    %s148 = scalar_lea.vmem %s0, 4
    %v149 = vld [vmem:[%s148] sm:$0xf]
    %v150 = vld [vmem:[%s148 + $0x4] sm:$0xf]
    %v151 = vld [vmem:[%s148 + $0x8] sm:$0xf]
    %v152 = vld [vmem:[%s148 + $0xc] sm:$0xf]
    %v153 = vld [vmem:[%s148 + $0x10] sm:$0xf]
    %v154 = vld [vmem:[%s148 + $0x14] sm:$0xf]
    %v155 = vld [vmem:[%s148 + $0x18] sm:$0xf]
    %v156 = vld [vmem:[%s148 + $0x1c] sm:$0xf]
    %v157 = vld [vmem:[%s148 + $0x20] sm:$0xf]
    %v158 = vld [vmem:[%s148 + $0x24] sm:$0xf]
    %v159 = vld [vmem:[%s148 + $0x28] sm:$0xf]
    %v160 = vld [vmem:[%s148 + $0x2c] sm:$0xf]
    %v161 = vld [vmem:[%s148 + $0x30] sm:$0xf]
    %v162 = vld [vmem:[%s148 + $0x34] sm:$0xf]
    %v163 = vld [vmem:[%s148 + $0x38] sm:$0xf]
    %v164 = vld [vmem:[%s148 + $0x3c] sm:$0xf]
    %v165 = vld [vmem:[%s148 + $0x40] sm:$0xf]
    %v166 = vld [vmem:[%s148 + $0x44] sm:$0xf]
    %v167 = vld [vmem:[%s148 + $0x48] sm:$0xf]
    %v168 = vld [vmem:[%s148 + $0x4c] sm:$0xf]
    %v169 = vld [vmem:[%s148 + $0x50] sm:$0xf]
    %v170 = vld [vmem:[%s148 + $0x54] sm:$0xf]
    %v171 = vld [vmem:[%s148 + $0x58] sm:$0xf]
    %v172 = vld [vmem:[%s148 + $0x5c] sm:$0xf]
    %v173 = vld [vmem:[%s148 + $0x60] sm:$0xf]
    %v174 = vld [vmem:[%s148 + $0x64] sm:$0xf]
    %v175 = vld [vmem:[%s148 + $0x68] sm:$0xf]
    %v176 = vld [vmem:[%s148 + $0x6c] sm:$0xf]
    %s177 = scalar_lea.vmem %s0, 8
    %v178 = vld [vmem:[%s177] sm:$0xf]
    %v179 = vld [vmem:[%s177 + $0x4] sm:$0xf]
    %v180 = vld [vmem:[%s177 + $0x8] sm:$0xf]
    %v181 = vld [vmem:[%s177 + $0xc] sm:$0xf]
    %v182 = vld [vmem:[%s177 + $0x10] sm:$0xf]
    %v183 = vld [vmem:[%s177 + $0x14] sm:$0xf]
    %v184 = vld [vmem:[%s177 + $0x18] sm:$0xf]
    %v185 = vld [vmem:[%s177 + $0x1c] sm:$0xf]
    %v186 = vld [vmem:[%s177 + $0x20] sm:$0xf]
    %v187 = vld [vmem:[%s177 + $0x24] sm:$0xf]
    %v188 = vld [vmem:[%s177 + $0x28] sm:$0xf]
    %v189 = vld [vmem:[%s177 + $0x2c] sm:$0xf]
    %v190 = vld [vmem:[%s177 + $0x30] sm:$0xf]
    %v191 = vld [vmem:[%s177 + $0x34] sm:$0xf]
    %v192 = vld [vmem:[%s177 + $0x38] sm:$0xf]
    %v193 = vld [vmem:[%s177 + $0x3c] sm:$0xf]
    %v194 = vld [vmem:[%s177 + $0x40] sm:$0xf]
    %v195 = vld [vmem:[%s177 + $0x44] sm:$0xf]
    %v196 = vld [vmem:[%s177 + $0x48] sm:$0xf]
    %v197 = vld [vmem:[%s177 + $0x4c] sm:$0xf]
    %v198 = vld [vmem:[%s177 + $0x50] sm:$0xf]
    %v199 = vld [vmem:[%s177 + $0x54] sm:$0xf]
    %v200 = vld [vmem:[%s177 + $0x58] sm:$0xf]
    %v201 = vld [vmem:[%s177 + $0x5c] sm:$0xf]
    %v202 = vld [vmem:[%s177 + $0x60] sm:$0xf]
    %v203 = vld [vmem:[%s177 + $0x64] sm:$0xf]
    %v204 = vld [vmem:[%s177 + $0x68] sm:$0xf]
    %v205 = vld [vmem:[%s177 + $0x6c] sm:$0xf]
    %v234 = vunpack.c.l.b16 %v149
    %v235 = vunpack.c.l.b16 %v150
    %v236 = vunpack.c.l.b16 %v151
    %v237 = vunpack.c.l.b16 %v152
    %v238 = vunpack.c.l.b16 %v153
    %v239 = vunpack.c.l.b16 %v154
    %v240 = vunpack.c.l.b16 %v155
    %v241 = vunpack.c.l.b16 %v156
    %v242 = vunpack.c.l.b16 %v157
    %v243 = vunpack.c.l.b16 %v158
    %v244 = vunpack.c.l.b16 %v159
    %v245 = vunpack.c.l.b16 %v160
    %v246 = vunpack.c.l.b16 %v161
    %v247 = vunpack.c.l.b16 %v162
    %v248 = vunpack.c.l.b16 %v163
    %v249 = vunpack.c.l.b16 %v164
    %v250 = vunpack.c.l.b16 %v165
    %v251 = vunpack.c.l.b16 %v166
    %v252 = vunpack.c.l.b16 %v167
    %v253 = vunpack.c.l.b16 %v168
    %v254 = vunpack.c.l.b16 %v169
    %v255 = vunpack.c.l.b16 %v170
    %v256 = vunpack.c.l.b16 %v171
    %v257 = vunpack.c.l.b16 %v172
    %v258 = vunpack.c.l.b16 %v173
    %v259 = vunpack.c.l.b16 %v174
    %v260 = vunpack.c.l.b16 %v175
    %v261 = vunpack.c.l.b16 %v176
    %v262 = vpack.c.b16 %v234, %v234
    %v263 = vpack.c.b16 %v235, %v235
    %v264 = vpack.c.b16 %v236, %v236
    %v265 = vpack.c.b16 %v237, %v237
    %v266 = vpack.c.b16 %v238, %v238
    %v267 = vpack.c.b16 %v239, %v239
    %v268 = vpack.c.b16 %v240, %v240
    %v269 = vpack.c.b16 %v241, %v241
    %v270 = vpack.c.b16 %v242, %v242
    %v271 = vpack.c.b16 %v243, %v243
    %v272 = vpack.c.b16 %v244, %v244
    %v273 = vpack.c.b16 %v245, %v245
    %v274 = vpack.c.b16 %v246, %v246
    %v275 = vpack.c.b16 %v247, %v247
    %v276 = vpack.c.b16 %v248, %v248
    %v277 = vpack.c.b16 %v249, %v249
    %v278 = vpack.c.b16 %v250, %v250
    %v279 = vpack.c.b16 %v251, %v251
    %v280 = vpack.c.b16 %v252, %v252
    %v281 = vpack.c.b16 %v253, %v253
    %v282 = vpack.c.b16 %v254, %v254
    %v283 = vpack.c.b16 %v255, %v255
    %v284 = vpack.c.b16 %v256, %v256
    %v285 = vpack.c.b16 %v257, %v257
    %v286 = vpack.c.b16 %v258, %v258
    %v287 = vpack.c.b16 %v259, %v259
    %v288 = vpack.c.b16 %v260, %v260
    %v289 = vpack.c.b16 %v261, %v261
    %290 = vrot.lane.b32.xlu0 %v262, 32
    %v291 = vpop.permute.xlu0 %290
    %292 = vrot.lane.b32.xlu0 %v263, 32
    %v293 = vpop.permute.xlu0 %292
    %294 = vrot.lane.b32.xlu0 %v264, 32
    %v295 = vpop.permute.xlu0 %294
    %296 = vrot.lane.b32.xlu0 %v265, 32
    %v297 = vpop.permute.xlu0 %296
    %298 = vrot.lane.b32.xlu0 %v266, 32
    %v299 = vpop.permute.xlu0 %298
    %300 = vrot.lane.b32.xlu0 %v267, 32
    %v301 = vpop.permute.xlu0 %300
    %302 = vrot.lane.b32.xlu0 %v268, 32
    %v303 = vpop.permute.xlu0 %302
    %304 = vrot.lane.b32.xlu0 %v269, 32
    %v305 = vpop.permute.xlu0 %304
    %306 = vrot.lane.b32.xlu0 %v270, 32
    %v307 = vpop.permute.xlu0 %306
    %308 = vrot.lane.b32.xlu0 %v271, 32
    %v309 = vpop.permute.xlu0 %308
    %310 = vrot.lane.b32.xlu0 %v272, 32
    %v311 = vpop.permute.xlu0 %310
    %312 = vrot.lane.b32.xlu0 %v273, 32
    %v313 = vpop.permute.xlu0 %312
    %314 = vrot.lane.b32.xlu0 %v274, 32
    %v315 = vpop.permute.xlu0 %314
    %316 = vrot.lane.b32.xlu0 %v275, 32
    %v317 = vpop.permute.xlu0 %316
    %318 = vrot.lane.b32.xlu0 %v276, 32
    %v319 = vpop.permute.xlu0 %318
    %320 = vrot.lane.b32.xlu0 %v277, 32
    %v321 = vpop.permute.xlu0 %320
    %322 = vrot.lane.b32.xlu0 %v278, 32
    %v323 = vpop.permute.xlu0 %322
    %324 = vrot.lane.b32.xlu0 %v279, 32
    %v325 = vpop.permute.xlu0 %324
    %326 = vrot.lane.b32.xlu0 %v280, 32
    %v327 = vpop.permute.xlu0 %326
    %328 = vrot.lane.b32.xlu0 %v281, 32
    %v329 = vpop.permute.xlu0 %328
    %330 = vrot.lane.b32.xlu0 %v282, 32
    %v331 = vpop.permute.xlu0 %330
    %332 = vrot.lane.b32.xlu0 %v283, 32
    %v333 = vpop.permute.xlu0 %332
    %334 = vrot.lane.b32.xlu0 %v284, 32
    %v335 = vpop.permute.xlu0 %334
    %336 = vrot.lane.b32.xlu0 %v285, 32
    %v337 = vpop.permute.xlu0 %336
    %338 = vrot.lane.b32.xlu0 %v286, 32
    %v339 = vpop.permute.xlu0 %338
    %340 = vrot.lane.b32.xlu0 %v287, 32
    %v341 = vpop.permute.xlu0 %340
    %342 = vrot.lane.b32.xlu0 %v288, 32
    %v343 = vpop.permute.xlu0 %342
    %344 = vrot.lane.b32.xlu0 %v289, 32
    %v345 = vpop.permute.xlu0 %344
    %v374 = vunpack.c.l.b16 %v178
    %v375 = vunpack.c.l.b16 %v179
    %v376 = vunpack.c.l.b16 %v180
    %v377 = vunpack.c.l.b16 %v181
    %v378 = vunpack.c.l.b16 %v182
    %v379 = vunpack.c.l.b16 %v183
    %v380 = vunpack.c.l.b16 %v184
    %v381 = vunpack.c.l.b16 %v185
    %v382 = vunpack.c.l.b16 %v186
    %v383 = vunpack.c.l.b16 %v187
    %v384 = vunpack.c.l.b16 %v188
    %v385 = vunpack.c.l.b16 %v189
    %v386 = vunpack.c.l.b16 %v190
    %v387 = vunpack.c.l.b16 %v191
    %v388 = vunpack.c.l.b16 %v192
    %v389 = vunpack.c.l.b16 %v193
    %v390 = vunpack.c.l.b16 %v194
    %v391 = vunpack.c.l.b16 %v195
    %v392 = vunpack.c.l.b16 %v196
    %v393 = vunpack.c.l.b16 %v197
    %v394 = vunpack.c.l.b16 %v198
    %v395 = vunpack.c.l.b16 %v199
    %v396 = vunpack.c.l.b16 %v200
    %v397 = vunpack.c.l.b16 %v201
    %v398 = vunpack.c.l.b16 %v202
    %v399 = vunpack.c.l.b16 %v203
    %v400 = vunpack.c.l.b16 %v204
    %v401 = vunpack.c.l.b16 %v205
    %v402 = vpack.c.b16 %v374, %v374
    %v403 = vpack.c.b16 %v375, %v375
    %v404 = vpack.c.b16 %v376, %v376
    %v405 = vpack.c.b16 %v377, %v377
    %v406 = vpack.c.b16 %v378, %v378
    %v407 = vpack.c.b16 %v379, %v379
    %v408 = vpack.c.b16 %v380, %v380
    %v409 = vpack.c.b16 %v381, %v381
    %v410 = vpack.c.b16 %v382, %v382
    %v411 = vpack.c.b16 %v383, %v383
    %v412 = vpack.c.b16 %v384, %v384
    %v413 = vpack.c.b16 %v385, %v385
    %v414 = vpack.c.b16 %v386, %v386
    %v415 = vpack.c.b16 %v387, %v387
    %v416 = vpack.c.b16 %v388, %v388
    %v417 = vpack.c.b16 %v389, %v389
    %v418 = vpack.c.b16 %v390, %v390
    %v419 = vpack.c.b16 %v391, %v391
    %v420 = vpack.c.b16 %v392, %v392
    %v421 = vpack.c.b16 %v393, %v393
    %v422 = vpack.c.b16 %v394, %v394
    %v423 = vpack.c.b16 %v395, %v395
    %v424 = vpack.c.b16 %v396, %v396
    %v425 = vpack.c.b16 %v397, %v397
    %v426 = vpack.c.b16 %v398, %v398
    %v427 = vpack.c.b16 %v399, %v399
    %v428 = vpack.c.b16 %v400, %v400
    %v429 = vpack.c.b16 %v401, %v401
    %430 = vrot.lane.b32.xlu0 %v402, 64
    %v431 = vpop.permute.xlu0 %430
    %432 = vrot.lane.b32.xlu0 %v403, 64
    %v433 = vpop.permute.xlu0 %432
    %434 = vrot.lane.b32.xlu0 %v404, 64
    %v435 = vpop.permute.xlu0 %434
    %436 = vrot.lane.b32.xlu0 %v405, 64
    %v437 = vpop.permute.xlu0 %436
    %438 = vrot.lane.b32.xlu0 %v406, 64
    %v439 = vpop.permute.xlu0 %438
    %440 = vrot.lane.b32.xlu0 %v407, 64
    %v441 = vpop.permute.xlu0 %440
    %442 = vrot.lane.b32.xlu0 %v408, 64
    %v443 = vpop.permute.xlu0 %442
    %444 = vrot.lane.b32.xlu0 %v409, 64
    %v445 = vpop.permute.xlu0 %444
    %446 = vrot.lane.b32.xlu0 %v410, 64
    %v447 = vpop.permute.xlu0 %446
    %448 = vrot.lane.b32.xlu0 %v411, 64
    %v449 = vpop.permute.xlu0 %448
    %450 = vrot.lane.b32.xlu0 %v412, 64
    %v451 = vpop.permute.xlu0 %450
    %452 = vrot.lane.b32.xlu0 %v413, 64
    %v453 = vpop.permute.xlu0 %452
    %454 = vrot.lane.b32.xlu0 %v414, 64
    %v455 = vpop.permute.xlu0 %454
    %456 = vrot.lane.b32.xlu0 %v415, 64
    %v457 = vpop.permute.xlu0 %456
    %458 = vrot.lane.b32.xlu0 %v416, 64
    %v459 = vpop.permute.xlu0 %458
    %460 = vrot.lane.b32.xlu0 %v417, 64
    %v461 = vpop.permute.xlu0 %460
    %462 = vrot.lane.b32.xlu0 %v418, 64
    %v463 = vpop.permute.xlu0 %462
    %464 = vrot.lane.b32.xlu0 %v419, 64
    %v465 = vpop.permute.xlu0 %464
    %466 = vrot.lane.b32.xlu0 %v420, 64
    %v467 = vpop.permute.xlu0 %466
    %468 = vrot.lane.b32.xlu0 %v421, 64
    %v469 = vpop.permute.xlu0 %468
    %470 = vrot.lane.b32.xlu0 %v422, 64
    %v471 = vpop.permute.xlu0 %470
    %472 = vrot.lane.b32.xlu0 %v423, 64
    %v473 = vpop.permute.xlu0 %472
    %474 = vrot.lane.b32.xlu0 %v424, 64
    %v475 = vpop.permute.xlu0 %474
    %476 = vrot.lane.b32.xlu0 %v425, 64
    %v477 = vpop.permute.xlu0 %476
    %478 = vrot.lane.b32.xlu0 %v426, 64
    %v479 = vpop.permute.xlu0 %478
    %480 = vrot.lane.b32.xlu0 %v427, 64
    %v481 = vpop.permute.xlu0 %480
    %482 = vrot.lane.b32.xlu0 %v428, 64
    %v483 = vpop.permute.xlu0 %482
    %484 = vrot.lane.b32.xlu0 %v429, 64
    %v485 = vpop.permute.xlu0 %484
    %vm486 = vcmask 261120
    %v489 = vsel %vm486, %v120, %v291
    %v492 = vsel %vm486, %v121, %v293
    %v495 = vsel %vm486, %v122, %v295
    %v498 = vsel %vm486, %v123, %v297
    %v501 = vsel %vm486, %v124, %v299
    %v504 = vsel %vm486, %v125, %v301
    %v507 = vsel %vm486, %v126, %v303
    %v510 = vsel %vm486, %v127, %v305
    %v513 = vsel %vm486, %v128, %v307
    %v516 = vsel %vm486, %v129, %v309
    %v519 = vsel %vm486, %v130, %v311
    %v522 = vsel %vm486, %v131, %v313
    %v525 = vsel %vm486, %v132, %v315
    %v528 = vsel %vm486, %v133, %v317
    %v531 = vsel %vm486, %v134, %v319
    %v534 = vsel %vm486, %v135, %v321
    %v537 = vsel %vm486, %v136, %v323
    %v540 = vsel %vm486, %v137, %v325
    %v543 = vsel %vm486, %v138, %v327
    %v546 = vsel %vm486, %v139, %v329
    %v549 = vsel %vm486, %v140, %v331
    %v552 = vsel %vm486, %v141, %v333
    %v555 = vsel %vm486, %v142, %v335
    %v558 = vsel %vm486, %v143, %v337
    %v561 = vsel %vm486, %v144, %v339
    %v564 = vsel %vm486, %v145, %v341
    %v567 = vsel %vm486, %v146, %v343
    %v570 = vsel %vm486, %v147, %v345
    %vm571 = vcmask 523264
    %v573 = vsel %vm571, %v489, %v431
    %v575 = vsel %vm571, %v492, %v433
    %v577 = vsel %vm571, %v495, %v435
    %v579 = vsel %vm571, %v498, %v437
    %v581 = vsel %vm571, %v501, %v439
    %v583 = vsel %vm571, %v504, %v441
    %v585 = vsel %vm571, %v507, %v443
    %v587 = vsel %vm571, %v510, %v445
    %v589 = vsel %vm571, %v513, %v447
    %v591 = vsel %vm571, %v516, %v449
    %v593 = vsel %vm571, %v519, %v451
    %v595 = vsel %vm571, %v522, %v453
    %v597 = vsel %vm571, %v525, %v455
    %v599 = vsel %vm571, %v528, %v457
    %v601 = vsel %vm571, %v531, %v459
    %v603 = vsel %vm571, %v534, %v461
    %v605 = vsel %vm571, %v537, %v463
    %v607 = vsel %vm571, %v540, %v465
    %v609 = vsel %vm571, %v543, %v467
    %v611 = vsel %vm571, %v546, %v469
    %v613 = vsel %vm571, %v549, %v471
    %v615 = vsel %vm571, %v552, %v473
    %v617 = vsel %vm571, %v555, %v475
    %v619 = vsel %vm571, %v558, %v477
    %v621 = vsel %vm571, %v561, %v479
    %v623 = vsel %vm571, %v564, %v481
    %v625 = vsel %vm571, %v567, %v483
    %v627 = vsel %vm571, %v570, %v485
    %v628 = vld [vmem:[#allocation2] sm:$0xff]
    %v629 = vld [vmem:[#allocation2 + $0x8] sm:$0xff]
    %v630 = vld [vmem:[#allocation2 + $0x10] sm:$0xff]
    %v631 = vld [vmem:[#allocation2 + $0x18] sm:$0xff]
    %v632 = vld [vmem:[#allocation2 + $0x20] sm:$0xff]
    %v633 = vld [vmem:[#allocation2 + $0x28] sm:$0xff]
    %v634 = vld [vmem:[#allocation2 + $0x30] sm:$0xff]
    %v635 = vld [vmem:[#allocation2 + $0x38] sm:$0xff]
    %v636 = vld [vmem:[#allocation2 + $0x40] sm:$0xff]
    %v637 = vld [vmem:[#allocation2 + $0x48] sm:$0xff]
    %v638 = vld [vmem:[#allocation2 + $0x50] sm:$0xff]
    %v639 = vld [vmem:[#allocation2 + $0x58] sm:$0xff]
    %v640 = vld [vmem:[#allocation2 + $0x60] sm:$0xff]
    %v641 = vld [vmem:[#allocation2 + $0x68] sm:$0xff]
    %v642 = vld [vmem:[#allocation2 + $0x70] sm:$0xff]
    %v643 = vld [vmem:[#allocation2 + $0x78] sm:$0xff]
    %v644 = vld [vmem:[#allocation2 + $0x80] sm:$0xff]
    %v645 = vld [vmem:[#allocation2 + $0x88] sm:$0xff]
    %v646 = vld [vmem:[#allocation2 + $0x90] sm:$0xff]
    %v647 = vld [vmem:[#allocation2 + $0x98] sm:$0xff]
    %v648 = vld [vmem:[#allocation2 + $0xa0] sm:$0xff]
    %v649 = vld [vmem:[#allocation2 + $0xa8] sm:$0xff]
    %v650 = vld [vmem:[#allocation2 + $0xb0] sm:$0xff]
    %v651 = vld [vmem:[#allocation2 + $0xb8] sm:$0xff]
    %v652 = vld [vmem:[#allocation2 + $0xc0] sm:$0xff]
    %v653 = vld [vmem:[#allocation2 + $0xc8] sm:$0xff]
    %v654 = vld [vmem:[#allocation2 + $0xd0] sm:$0xff]
    %v655 = vld [vmem:[#allocation2 + $0xd8] sm:$0xff]
    %v656 = vld [vmem:[#allocation2 + $0xe0] sm:$0xff]
    %v657 = vld [vmem:[#allocation2 + $0xe8] sm:$0xff]
    %v658 = vld [vmem:[#allocation2 + $0xf0] sm:$0xff]
    %v659 = vld [vmem:[#allocation2 + $0xf8] sm:$0xff]
    %v660 = vld [vmem:[#allocation2 + $0x100] sm:$0xff]
    %v661 = vld [vmem:[#allocation2 + $0x108] sm:$0xff]
    %v662 = vld [vmem:[#allocation2 + $0x110] sm:$0xff]
    %v663 = vld [vmem:[#allocation2 + $0x118] sm:$0xff]
    %v664 = vld [vmem:[#allocation2 + $0x120] sm:$0xff]
    %v665 = vld [vmem:[#allocation2 + $0x128] sm:$0xff]
    %v666 = vld [vmem:[#allocation2 + $0x130] sm:$0xff]
    %v667 = vld [vmem:[#allocation2 + $0x138] sm:$0xff]
    %v668 = vld [vmem:[#allocation2 + $0x140] sm:$0xff]
    %v669 = vld [vmem:[#allocation2 + $0x148] sm:$0xff]
    %v670 = vld [vmem:[#allocation2 + $0x150] sm:$0xff]
    %v671 = vld [vmem:[#allocation2 + $0x158] sm:$0xff]
    %v672 = vld [vmem:[#allocation2 + $0x160] sm:$0xff]
    %v673 = vld [vmem:[#allocation2 + $0x168] sm:$0xff]
    %v674 = vld [vmem:[#allocation2 + $0x170] sm:$0xff]
    %v675 = vld [vmem:[#allocation2 + $0x178] sm:$0xff]
    %v704 = vunpack.c.l.b16 %v573
    %v705 = vunpack.c.l.b16 %v575
    %v706 = vunpack.c.l.b16 %v577
    %v707 = vunpack.c.l.b16 %v579
    %v708 = vunpack.c.l.b16 %v581
    %v709 = vunpack.c.l.b16 %v583
    %v710 = vunpack.c.l.b16 %v585
    %v711 = vunpack.c.l.b16 %v587
    %v712 = vunpack.c.l.b16 %v589
    %v713 = vunpack.c.l.b16 %v591
    %v714 = vunpack.c.l.b16 %v593
    %v715 = vunpack.c.l.b16 %v595
    %v716 = vunpack.c.l.b16 %v597
    %v717 = vunpack.c.l.b16 %v599
    %v718 = vunpack.c.l.b16 %v601
    %v719 = vunpack.c.l.b16 %v603
    %v720 = vunpack.c.l.b16 %v605
    %v721 = vunpack.c.l.b16 %v607
    %v722 = vunpack.c.l.b16 %v609
    %v723 = vunpack.c.l.b16 %v611
    %v724 = vunpack.c.l.b16 %v613
    %v725 = vunpack.c.l.b16 %v615
    %v726 = vunpack.c.l.b16 %v617
    %v727 = vunpack.c.l.b16 %v619
    %v728 = vunpack.c.l.b16 %v621
    %v729 = vunpack.c.l.b16 %v623
    %v730 = vunpack.c.l.b16 %v625
    %v731 = vunpack.c.l.b16 %v627
    %v732 = vpack.c.b16 %v705, %v704
    %v733 = vpack.c.b16 %v707, %v706
    %v734 = vpack.c.b16 %v709, %v708
    %v735 = vpack.c.b16 %v711, %v710
    %v736 = vpack.c.b16 %v713, %v712
    %v737 = vpack.c.b16 %v715, %v714
    %v738 = vpack.c.b16 %v717, %v716
    %v739 = vpack.c.b16 %v719, %v718
    %v740 = vpack.c.b16 %v721, %v720
    %v741 = vpack.c.b16 %v723, %v722
    %v742 = vpack.c.b16 %v725, %v724
    %v743 = vpack.c.b16 %v727, %v726
    %v744 = vpack.c.b16 %v729, %v728
    %v745 = vpack.c.b16 %v731, %v730
    %v794 = vunpack.c.l.b16 %v628
    %v795 = vunpack.c.h.b16 %v628
    %v796 = vunpack.c.l.b16 %v629
    %v797 = vunpack.c.h.b16 %v629
    %v798 = vunpack.c.l.b16 %v630
    %v799 = vunpack.c.h.b16 %v630
    %v800 = vunpack.c.l.b16 %v631
    %v801 = vunpack.c.h.b16 %v631
    %v802 = vunpack.c.l.b16 %v632
    %v803 = vunpack.c.h.b16 %v632
    %v804 = vunpack.c.l.b16 %v633
    %v805 = vunpack.c.h.b16 %v633
    %v806 = vunpack.c.l.b16 %v634
    %v807 = vunpack.c.h.b16 %v634
    %v808 = vunpack.c.l.b16 %v635
    %v809 = vunpack.c.h.b16 %v635
    %v810 = vunpack.c.l.b16 %v636
    %v811 = vunpack.c.h.b16 %v636
    %v812 = vunpack.c.l.b16 %v637
    %v813 = vunpack.c.h.b16 %v637
    %v814 = vunpack.c.l.b16 %v638
    %v815 = vunpack.c.h.b16 %v638
    %v816 = vunpack.c.l.b16 %v639
    %v817 = vunpack.c.h.b16 %v639
    %v818 = vunpack.c.l.b16 %v640
    %v819 = vunpack.c.h.b16 %v640
    %v820 = vunpack.c.l.b16 %v641
    %v821 = vunpack.c.h.b16 %v641
    %v822 = vunpack.c.l.b16 %v642
    %v823 = vunpack.c.h.b16 %v642
    %v824 = vunpack.c.l.b16 %v643
    %v825 = vunpack.c.h.b16 %v643
    %v826 = vunpack.c.l.b16 %v644
    %v827 = vunpack.c.h.b16 %v644
    %v828 = vunpack.c.l.b16 %v645
    %v829 = vunpack.c.h.b16 %v645
    %v830 = vunpack.c.l.b16 %v646
    %v831 = vunpack.c.h.b16 %v646
    %v832 = vunpack.c.l.b16 %v647
    %v833 = vunpack.c.h.b16 %v647
    %v834 = vunpack.c.l.b16 %v648
    %v835 = vunpack.c.h.b16 %v648
    %v836 = vunpack.c.l.b16 %v649
    %v837 = vunpack.c.h.b16 %v649
    %v838 = vunpack.c.l.b16 %v650
    %v839 = vunpack.c.h.b16 %v650
    %v840 = vunpack.c.l.b16 %v651
    %v841 = vunpack.c.h.b16 %v651
    %v842 = vunpack.c.l.b16 %v652
    %v843 = vunpack.c.h.b16 %v652
    %v844 = vunpack.c.l.b16 %v653
    %v845 = vunpack.c.h.b16 %v653
    %v846 = vunpack.c.l.b16 %v654
    %v847 = vunpack.c.h.b16 %v654
    %v848 = vunpack.c.l.b16 %v655
    %v849 = vunpack.c.h.b16 %v655
    %v850 = vunpack.c.l.b16 %v656
    %v851 = vunpack.c.h.b16 %v656
    %v852 = vunpack.c.l.b16 %v657
    %v853 = vunpack.c.h.b16 %v657
    %v854 = vunpack.c.l.b16 %v658
    %v855 = vunpack.c.h.b16 %v658
    %v856 = vunpack.c.l.b16 %v659
    %v857 = vunpack.c.h.b16 %v659
    %v858 = vunpack.c.l.b16 %v660
    %v859 = vunpack.c.h.b16 %v660
    %v860 = vunpack.c.l.b16 %v661
    %v861 = vunpack.c.h.b16 %v661
    %v862 = vunpack.c.l.b16 %v662
    %v863 = vunpack.c.h.b16 %v662
    %v864 = vunpack.c.l.b16 %v663
    %v865 = vunpack.c.h.b16 %v663
    %v866 = vunpack.c.l.b16 %v664
    %v867 = vunpack.c.h.b16 %v664
    %v868 = vunpack.c.l.b16 %v665
    %v869 = vunpack.c.h.b16 %v665
    %v870 = vunpack.c.l.b16 %v666
    %v871 = vunpack.c.h.b16 %v666
    %v872 = vunpack.c.l.b16 %v667
    %v873 = vunpack.c.h.b16 %v667
    %v874 = vunpack.c.l.b16 %v668
    %v875 = vunpack.c.h.b16 %v668
    %v876 = vunpack.c.l.b16 %v669
    %v877 = vunpack.c.h.b16 %v669
    %v878 = vunpack.c.l.b16 %v670
    %v879 = vunpack.c.h.b16 %v670
    %v880 = vunpack.c.l.b16 %v671
    %v881 = vunpack.c.h.b16 %v671
    %v882 = vunpack.c.l.b16 %v672
    %v883 = vunpack.c.h.b16 %v672
    %v884 = vunpack.c.l.b16 %v673
    %v885 = vunpack.c.h.b16 %v673
    %v886 = vunpack.c.l.b16 %v674
    %v887 = vunpack.c.h.b16 %v674
    %v888 = vunpack.c.l.b16 %v675
    %v889 = vunpack.c.h.b16 %v675
    %v890 = vpack.c.b16 %v802, %v794
    %v891 = vpack.c.b16 %v803, %v795
    %v892 = vpack.c.b16 %v804, %v796
    %v893 = vpack.c.b16 %v805, %v797
    %v894 = vpack.c.b16 %v806, %v798
    %v895 = vpack.c.b16 %v807, %v799
    %v896 = vpack.c.b16 %v808, %v800
    %v897 = vpack.c.b16 %v809, %v801
    %v898 = vpack.c.b16 %v818, %v810
    %v899 = vpack.c.b16 %v819, %v811
    %v900 = vpack.c.b16 %v820, %v812
    %v901 = vpack.c.b16 %v821, %v813
    %v902 = vpack.c.b16 %v822, %v814
    %v903 = vpack.c.b16 %v823, %v815
    %v904 = vpack.c.b16 %v824, %v816
    %v905 = vpack.c.b16 %v825, %v817
    %v906 = vpack.c.b16 %v834, %v826
    %v907 = vpack.c.b16 %v835, %v827
    %v908 = vpack.c.b16 %v836, %v828
    %v909 = vpack.c.b16 %v837, %v829
    %v910 = vpack.c.b16 %v838, %v830
    %v911 = vpack.c.b16 %v839, %v831
    %v912 = vpack.c.b16 %v840, %v832
    %v913 = vpack.c.b16 %v841, %v833
    %v914 = vpack.c.b16 %v850, %v842
    %v915 = vpack.c.b16 %v851, %v843
    %v916 = vpack.c.b16 %v852, %v844
    %v917 = vpack.c.b16 %v853, %v845
    %v918 = vpack.c.b16 %v854, %v846
    %v919 = vpack.c.b16 %v855, %v847
    %v920 = vpack.c.b16 %v856, %v848
    %v921 = vpack.c.b16 %v857, %v849
    %v922 = vpack.c.b16 %v866, %v858
    %v923 = vpack.c.b16 %v867, %v859
    %v924 = vpack.c.b16 %v868, %v860
    %v925 = vpack.c.b16 %v869, %v861
    %v926 = vpack.c.b16 %v870, %v862
    %v927 = vpack.c.b16 %v871, %v863
    %v928 = vpack.c.b16 %v872, %v864
    %v929 = vpack.c.b16 %v873, %v865
    %v930 = vpack.c.b16 %v882, %v874
    %v931 = vpack.c.b16 %v883, %v875
    %v932 = vpack.c.b16 %v884, %v876
    %v933 = vpack.c.b16 %v885, %v877
    %v934 = vpack.c.b16 %v886, %v878
    %v935 = vpack.c.b16 %v887, %v879
    %v936 = vpack.c.b16 %v888, %v880
    %v937 = vpack.c.b16 %v889, %v881
    %vm986 = vcmask 785408
    %v988 = vsel %vm986, %v732, 0
    %v991 = vsel %vm986, %v733, 0
    %v994 = vsel %vm986, %v734, 0
    %v997 = vsel %vm986, %v735, 0
    %v1000 = vsel %vm986, %v736, 0
    %v1003 = vsel %vm986, %v737, 0
    %v1006 = vsel %vm986, %v738, 0
    %v1009 = vsel %vm986, %v739, 0
    %v1012 = vsel %vm986, %v740, 0
    %v1015 = vsel %vm986, %v741, 0
    %v1018 = vsel %vm986, %v742, 0
    %v1021 = vsel %vm986, %v743, 0
    %v1024 = vsel %vm986, %v744, 0
    %v1027 = vsel %vm986, %v745, 0
    %1029 = vmatprep.subr.bf16.mxu0 %v891
    %1030 = vmatpush1.bf16.msra.mxu0 %v890
    %1031 = vmatprep.subr.bf16.mxu0 %v899
    %1032 = vmatpush1.bf16.msra.mxu0 %v898
    %1033 = vmatprep.subr.bf16.mxu0 %v907
    %1034 = vmatpush1.bf16.msra.mxu0 %v906
    %1035 = vmatprep.subr.bf16.mxu0 %v915
    %1036 = vmatpush1.bf16.msra.mxu0 %v914
    %1037 = vmatprep.subr.bf16.mxu0 %v923
    %1038 = vmatpush1.bf16.msra.mxu0 %v922
    %1039 = vmatprep.subr.bf16.mxu0 %v931
    %1040 = vmatpush1.bf16.msra.mxu0 %v930
    %1041 = vmatprep.subr.bf16.mxu0 0
    %1042 = vmatpush1.bf16.msra.mxu0 0
    %1043 = vmatprep.subr.bf16.mxu0 0
    %1044 = vmatpush1.bf16.msra.mxu0 0
    %1045 = vmatprep.subr.bf16.mxu0 0
    %1046 = vmatpush1.bf16.msra.mxu0 0
    %1047 = vmatprep.subr.bf16.mxu0 0
    %1048 = vmatpush1.bf16.msra.mxu0 0
    %1049 = vmatprep.subr.bf16.mxu0 0
    %1050 = vmatpush1.bf16.msra.mxu0 0
    %1051 = vmatprep.subr.bf16.mxu0 0
    %1052 = vmatpush1.bf16.msra.mxu0 0
    %1053 = vmatprep.subr.bf16.mxu0 0
    %1054 = vmatpush1.bf16.msra.mxu0 0
    %1055 = vmatprep.subr.bf16.mxu0 0
    %1056 = vmatpush1.bf16.msra.mxu0 0
    %1057 = vmatprep.subr.bf16.mxu0 0
    %1058 = vmatpush1.bf16.msra.mxu0 0
    %1059 = vmatprep.subr.bf16.mxu0 0
    %1060 = vmatpush1.bf16.msra.mxu0 0
    %1061 = vmatprep.mubr.bf16.mxu0 0
    %1062 = vmatmul.mubr.bf16.gmra.mrb[0].mxu0 %v988
    %v1063 = vpop.f32.mrb[0].mxu0
    %v1064 = vadd.f32 0.0, %v1063
    %v1065 = vpop.f32.mrb[0].mxu0
    %v1066 = vadd.f32 0.0, %v1065
    %v1067 = vpop.f32.mrb[0].mxu0
    %v1068 = vadd.f32 0.0, %v1067
    %v1069 = vpop.f32.mrb[0].mxu0
    %v1070 = vadd.f32 0.0, %v1069
    %1071 = vmatprep.mubr.bf16.mxu0 0
    %1072 = vmatmul.mubr.bf16.gmra.mrb[0].mxu0 %v991
    %v1073 = vpop.f32.mrb[0].mxu0
    %v1074 = vadd.f32 0.0, %v1073
    %v1075 = vpop.f32.mrb[0].mxu0
    %v1076 = vadd.f32 0.0, %v1075
    %v1077 = vpop.f32.mrb[0].mxu0
    %v1078 = vadd.f32 0.0, %v1077
    %v1079 = vpop.f32.mrb[0].mxu0
    %v1080 = vadd.f32 0.0, %v1079
    %1081 = vmatprep.mubr.bf16.mxu0 0
    %1082 = vmatmul.mubr.bf16.gmra.mrb[0].mxu0 %v994
    %v1083 = vpop.f32.mrb[0].mxu0
    %v1084 = vadd.f32 0.0, %v1083
    %v1085 = vpop.f32.mrb[0].mxu0
    %v1086 = vadd.f32 0.0, %v1085
    %v1087 = vpop.f32.mrb[0].mxu0
    %v1088 = vadd.f32 0.0, %v1087
    %v1089 = vpop.f32.mrb[0].mxu0
    %v1090 = vadd.f32 0.0, %v1089
    %1091 = vmatprep.mubr.bf16.mxu0 0
    %1092 = vmatmul.mubr.bf16.gmra.mrb[0].mxu0 %v997
    %v1093 = vpop.f32.mrb[0].mxu0
    %v1094 = vadd.f32 0.0, %v1093
    %v1095 = vpop.f32.mrb[0].mxu0
    %v1096 = vadd.f32 0.0, %v1095
    %v1097 = vpop.f32.mrb[0].mxu0
    %v1098 = vadd.f32 0.0, %v1097
    %v1099 = vpop.f32.mrb[0].mxu0
    %v1100 = vadd.f32 0.0, %v1099
    %1101 = vmatprep.mubr.bf16.mxu0 0
    %1102 = vmatmul.mubr.bf16.gmra.mrb[0].mxu0 %v1000
    %v1103 = vpop.f32.mrb[0].mxu0
    %v1104 = vadd.f32 0.0, %v1103
    %v1105 = vpop.f32.mrb[0].mxu0
    %v1106 = vadd.f32 0.0, %v1105
    %v1107 = vpop.f32.mrb[0].mxu0
    %v1108 = vadd.f32 0.0, %v1107
    %v1109 = vpop.f32.mrb[0].mxu0
    %v1110 = vadd.f32 0.0, %v1109
    %1111 = vmatprep.mubr.bf16.mxu0 0
    %1112 = vmatmul.mubr.bf16.gmra.mrb[0].mxu0 %v1003
    %v1113 = vpop.f32.mrb[0].mxu0
    %v1114 = vadd.f32 0.0, %v1113
    %v1115 = vpop.f32.mrb[0].mxu0
    %v1116 = vadd.f32 0.0, %v1115
    %v1117 = vpop.f32.mrb[0].mxu0
    %v1118 = vadd.f32 0.0, %v1117
    %v1119 = vpop.f32.mrb[0].mxu0
    %v1120 = vadd.f32 0.0, %v1119
    %1121 = vmatprep.mubr.bf16.mxu0 0
    %1122 = vmatmul.mubr.bf16.gmra.mrb[0].mxu0 %v1006
    %v1123 = vpop.f32.mrb[0].mxu0
    %v1124 = vadd.f32 0.0, %v1123
    %v1125 = vpop.f32.mrb[0].mxu0
    %v1126 = vadd.f32 0.0, %v1125
    %v1127 = vpop.f32.mrb[0].mxu0
    %v1128 = vadd.f32 0.0, %v1127
    %v1129 = vpop.f32.mrb[0].mxu0
    %v1130 = vadd.f32 0.0, %v1129
    %1131 = vmatprep.mubr.bf16.mxu0 0
    %1132 = vmatmul.mubr.bf16.gmra.mrb[0].mxu0 %v1009
    %v1133 = vpop.f32.mrb[0].mxu0
    %v1134 = vadd.f32 0.0, %v1133
    %v1135 = vpop.f32.mrb[0].mxu0
    %v1136 = vadd.f32 0.0, %v1135
    %v1137 = vpop.f32.mrb[0].mxu0
    %v1138 = vadd.f32 0.0, %v1137
    %v1139 = vpop.f32.mrb[0].mxu0
    %v1140 = vadd.f32 0.0, %v1139
    %1141 = vmatprep.mubr.bf16.mxu0 0
    %1142 = vmatmul.mubr.bf16.gmra.mrb[0].mxu0 %v1012
    %v1143 = vpop.f32.mrb[0].mxu0
    %v1144 = vadd.f32 0.0, %v1143
    %v1145 = vpop.f32.mrb[0].mxu0
    %v1146 = vadd.f32 0.0, %v1145
    %v1147 = vpop.f32.mrb[0].mxu0
    %v1148 = vadd.f32 0.0, %v1147
    %v1149 = vpop.f32.mrb[0].mxu0
    %v1150 = vadd.f32 0.0, %v1149
    %1151 = vmatprep.mubr.bf16.mxu0 0
    %1152 = vmatmul.mubr.bf16.gmra.mrb[0].mxu0 %v1015
    %v1153 = vpop.f32.mrb[0].mxu0
    %v1154 = vadd.f32 0.0, %v1153
    %v1155 = vpop.f32.mrb[0].mxu0
    %v1156 = vadd.f32 0.0, %v1155
    %v1157 = vpop.f32.mrb[0].mxu0
    %v1158 = vadd.f32 0.0, %v1157
    %v1159 = vpop.f32.mrb[0].mxu0
    %v1160 = vadd.f32 0.0, %v1159
    %1161 = vmatprep.mubr.bf16.mxu0 0
    %1162 = vmatmul.mubr.bf16.gmra.mrb[0].mxu0 %v1018
    %v1163 = vpop.f32.mrb[0].mxu0
    %v1164 = vadd.f32 0.0, %v1163
    %v1165 = vpop.f32.mrb[0].mxu0
    %v1166 = vadd.f32 0.0, %v1165
    %v1167 = vpop.f32.mrb[0].mxu0
    %v1168 = vadd.f32 0.0, %v1167
    %v1169 = vpop.f32.mrb[0].mxu0
    %v1170 = vadd.f32 0.0, %v1169
    %1171 = vmatprep.mubr.bf16.mxu0 0
    %1172 = vmatmul.mubr.bf16.gmra.mrb[0].mxu0 %v1021
    %v1173 = vpop.f32.mrb[0].mxu0
    %v1174 = vadd.f32 0.0, %v1173
    %v1175 = vpop.f32.mrb[0].mxu0
    %v1176 = vadd.f32 0.0, %v1175
    %v1177 = vpop.f32.mrb[0].mxu0
    %v1178 = vadd.f32 0.0, %v1177
    %v1179 = vpop.f32.mrb[0].mxu0
    %v1180 = vadd.f32 0.0, %v1179
    %1181 = vmatprep.mubr.bf16.mxu0 0
    %1182 = vmatmul.mubr.bf16.gmra.mrb[0].mxu0 %v1024
    %v1183 = vpop.f32.mrb[0].mxu0
    %v1184 = vadd.f32 0.0, %v1183
    %v1185 = vpop.f32.mrb[0].mxu0
    %v1186 = vadd.f32 0.0, %v1185
    %v1187 = vpop.f32.mrb[0].mxu0
    %v1188 = vadd.f32 0.0, %v1187
    %v1189 = vpop.f32.mrb[0].mxu0
    %v1190 = vadd.f32 0.0, %v1189
    %1191 = vmatprep.mubr.bf16.mxu0 0
    %1192 = vmatmul.mubr.bf16.gmra.mrb[0].mxu0 %v1027
    %v1193 = vpop.f32.mrb[0].mxu0
    %v1194 = vadd.f32 0.0, %v1193
    %v1195 = vpop.f32.mrb[0].mxu0
    %v1196 = vadd.f32 0.0, %v1195
    %v1197 = vpop.f32.mrb[0].mxu0
    %v1198 = vadd.f32 0.0, %v1197
    %v1199 = vpop.f32.mrb[0].mxu0
    %v1200 = vadd.f32 0.0, %v1199
    %1201 = vdwg.mxu0
    %1202 = vmatprep.subr.bf16.mxu0 %v893
    %1203 = vmatpush1.bf16.msra.mxu0 %v892
    %1204 = vmatprep.subr.bf16.mxu0 %v901
    %1205 = vmatpush1.bf16.msra.mxu0 %v900
    %1206 = vmatprep.subr.bf16.mxu0 %v909
    %1207 = vmatpush1.bf16.msra.mxu0 %v908
    %1208 = vmatprep.subr.bf16.mxu0 %v917
    %1209 = vmatpush1.bf16.msra.mxu0 %v916
    %1210 = vmatprep.subr.bf16.mxu0 %v925
    %1211 = vmatpush1.bf16.msra.mxu0 %v924
    %1212 = vmatprep.subr.bf16.mxu0 %v933
    %1213 = vmatpush1.bf16.msra.mxu0 %v932
    %1214 = vmatprep.subr.bf16.mxu0 0
    %1215 = vmatpush1.bf16.msra.mxu0 0
    %1216 = vmatprep.subr.bf16.mxu0 0
    %1217 = vmatpush1.bf16.msra.mxu0 0
    %1218 = vmatprep.subr.bf16.mxu0 0
    %1219 = vmatpush1.bf16.msra.mxu0 0
    %1220 = vmatprep.subr.bf16.mxu0 0
    %1221 = vmatpush1.bf16.msra.mxu0 0
    %1222 = vmatprep.subr.bf16.mxu0 0
    %1223 = vmatpush1.bf16.msra.mxu0 0
    %1224 = vmatprep.subr.bf16.mxu0 0
    %1225 = vmatpush1.bf16.msra.mxu0 0
    %1226 = vmatprep.subr.bf16.mxu0 0
    %1227 = vmatpush1.bf16.msra.mxu0 0
    %1228 = vmatprep.subr.bf16.mxu0 0
    %1229 = vmatpush1.bf16.msra.mxu0 0
    %1230 = vmatprep.subr.bf16.mxu0 0
    %1231 = vmatpush1.bf16.msra.mxu0 0
    %1232 = vmatprep.subr.bf16.mxu0 0
    %1233 = vmatpush1.bf16.msra.mxu0 0
    %1234 = vmatprep.mubr.bf16.mxu0 0
    %1235 = vmatmul.mubr.bf16.gmra.mrb[0].mxu0 %v988
    %v1236 = vpop.f32.mrb[0].mxu0
    %v1237 = vadd.f32 0.0, %v1236
    %v1238 = vpop.f32.mrb[0].mxu0
    %v1239 = vadd.f32 0.0, %v1238
    %v1240 = vpop.f32.mrb[0].mxu0
    %v1241 = vadd.f32 0.0, %v1240
    %v1242 = vpop.f32.mrb[0].mxu0
    %v1243 = vadd.f32 0.0, %v1242
    %1244 = vmatprep.mubr.bf16.mxu0 0
    %1245 = vmatmul.mubr.bf16.gmra.mrb[0].mxu0 %v991
    %v1246 = vpop.f32.mrb[0].mxu0
    %v1247 = vadd.f32 0.0, %v1246
    %v1248 = vpop.f32.mrb[0].mxu0
    %v1249 = vadd.f32 0.0, %v1248
    %v1250 = vpop.f32.mrb[0].mxu0
    %v1251 = vadd.f32 0.0, %v1250
    %v1252 = vpop.f32.mrb[0].mxu0
    %v1253 = vadd.f32 0.0, %v1252
    %1254 = vmatprep.mubr.bf16.mxu0 0
    %1255 = vmatmul.mubr.bf16.gmra.mrb[0].mxu0 %v994
    %v1256 = vpop.f32.mrb[0].mxu0
    %v1257 = vadd.f32 0.0, %v1256
    %v1258 = vpop.f32.mrb[0].mxu0
    %v1259 = vadd.f32 0.0, %v1258
    %v1260 = vpop.f32.mrb[0].mxu0
    %v1261 = vadd.f32 0.0, %v1260
    %v1262 = vpop.f32.mrb[0].mxu0
    %v1263 = vadd.f32 0.0, %v1262
    %1264 = vmatprep.mubr.bf16.mxu0 0
    %1265 = vmatmul.mubr.bf16.gmra.mrb[0].mxu0 %v997
    %v1266 = vpop.f32.mrb[0].mxu0
    %v1267 = vadd.f32 0.0, %v1266
    %v1268 = vpop.f32.mrb[0].mxu0
    %v1269 = vadd.f32 0.0, %v1268
    %v1270 = vpop.f32.mrb[0].mxu0
    %v1271 = vadd.f32 0.0, %v1270
    %v1272 = vpop.f32.mrb[0].mxu0
    %v1273 = vadd.f32 0.0, %v1272
    %1274 = vmatprep.mubr.bf16.mxu0 0
    %1275 = vmatmul.mubr.bf16.gmra.mrb[0].mxu0 %v1000
    %v1276 = vpop.f32.mrb[0].mxu0
    %v1277 = vadd.f32 0.0, %v1276
    %v1278 = vpop.f32.mrb[0].mxu0
    %v1279 = vadd.f32 0.0, %v1278
    %v1280 = vpop.f32.mrb[0].mxu0
    %v1281 = vadd.f32 0.0, %v1280
    %v1282 = vpop.f32.mrb[0].mxu0
    %v1283 = vadd.f32 0.0, %v1282
    %1284 = vmatprep.mubr.bf16.mxu0 0
    %1285 = vmatmul.mubr.bf16.gmra.mrb[0].mxu0 %v1003
    %v1286 = vpop.f32.mrb[0].mxu0
    %v1287 = vadd.f32 0.0, %v1286
    %v1288 = vpop.f32.mrb[0].mxu0
    %v1289 = vadd.f32 0.0, %v1288
    %v1290 = vpop.f32.mrb[0].mxu0
    %v1291 = vadd.f32 0.0, %v1290
    %v1292 = vpop.f32.mrb[0].mxu0
    %v1293 = vadd.f32 0.0, %v1292
    %1294 = vmatprep.mubr.bf16.mxu0 0
    %1295 = vmatmul.mubr.bf16.gmra.mrb[0].mxu0 %v1006
    %v1296 = vpop.f32.mrb[0].mxu0
    %v1297 = vadd.f32 0.0, %v1296
    %v1298 = vpop.f32.mrb[0].mxu0
    %v1299 = vadd.f32 0.0, %v1298
    %v1300 = vpop.f32.mrb[0].mxu0
    %v1301 = vadd.f32 0.0, %v1300
    %v1302 = vpop.f32.mrb[0].mxu0
    %v1303 = vadd.f32 0.0, %v1302
    %1304 = vmatprep.mubr.bf16.mxu0 0
    %1305 = vmatmul.mubr.bf16.gmra.mrb[0].mxu0 %v1009
    %v1306 = vpop.f32.mrb[0].mxu0
    %v1307 = vadd.f32 0.0, %v1306
    %v1308 = vpop.f32.mrb[0].mxu0
    %v1309 = vadd.f32 0.0, %v1308
    %v1310 = vpop.f32.mrb[0].mxu0
    %v1311 = vadd.f32 0.0, %v1310
    %v1312 = vpop.f32.mrb[0].mxu0
    %v1313 = vadd.f32 0.0, %v1312
    %1314 = vmatprep.mubr.bf16.mxu0 0
    %1315 = vmatmul.mubr.bf16.gmra.mrb[0].mxu0 %v1012
    %v1316 = vpop.f32.mrb[0].mxu0
    %v1317 = vadd.f32 0.0, %v1316
    %v1318 = vpop.f32.mrb[0].mxu0
    %v1319 = vadd.f32 0.0, %v1318
    %v1320 = vpop.f32.mrb[0].mxu0
    %v1321 = vadd.f32 0.0, %v1320
    %v1322 = vpop.f32.mrb[0].mxu0
    %v1323 = vadd.f32 0.0, %v1322
    %1324 = vmatprep.mubr.bf16.mxu0 0
    %1325 = vmatmul.mubr.bf16.gmra.mrb[0].mxu0 %v1015
    %v1326 = vpop.f32.mrb[0].mxu0
    %v1327 = vadd.f32 0.0, %v1326
    %v1328 = vpop.f32.mrb[0].mxu0
    %v1329 = vadd.f32 0.0, %v1328
    %v1330 = vpop.f32.mrb[0].mxu0
    %v1331 = vadd.f32 0.0, %v1330
    %v1332 = vpop.f32.mrb[0].mxu0
    %v1333 = vadd.f32 0.0, %v1332
    %1334 = vmatprep.mubr.bf16.mxu0 0
    %1335 = vmatmul.mubr.bf16.gmra.mrb[0].mxu0 %v1018
    %v1336 = vpop.f32.mrb[0].mxu0
    %v1337 = vadd.f32 0.0, %v1336
    %v1338 = vpop.f32.mrb[0].mxu0
    %v1339 = vadd.f32 0.0, %v1338
    %v1340 = vpop.f32.mrb[0].mxu0
    %v1341 = vadd.f32 0.0, %v1340
    %v1342 = vpop.f32.mrb[0].mxu0
    %v1343 = vadd.f32 0.0, %v1342
    %1344 = vmatprep.mubr.bf16.mxu0 0
    %1345 = vmatmul.mubr.bf16.gmra.mrb[0].mxu0 %v1021
    %v1346 = vpop.f32.mrb[0].mxu0
    %v1347 = vadd.f32 0.0, %v1346
    %v1348 = vpop.f32.mrb[0].mxu0
    %v1349 = vadd.f32 0.0, %v1348
    %v1350 = vpop.f32.mrb[0].mxu0
    %v1351 = vadd.f32 0.0, %v1350
    %v1352 = vpop.f32.mrb[0].mxu0
    %v1353 = vadd.f32 0.0, %v1352
    %1354 = vmatprep.mubr.bf16.mxu0 0
    %1355 = vmatmul.mubr.bf16.gmra.mrb[0].mxu0 %v1024
    %v1356 = vpop.f32.mrb[0].mxu0
    %v1357 = vadd.f32 0.0, %v1356
    %v1358 = vpop.f32.mrb[0].mxu0
    %v1359 = vadd.f32 0.0, %v1358
    %v1360 = vpop.f32.mrb[0].mxu0
    %v1361 = vadd.f32 0.0, %v1360
    %v1362 = vpop.f32.mrb[0].mxu0
    %v1363 = vadd.f32 0.0, %v1362
    %1364 = vmatprep.mubr.bf16.mxu0 0
    %1365 = vmatmul.mubr.bf16.gmra.mrb[0].mxu0 %v1027
    %v1366 = vpop.f32.mrb[0].mxu0
    %v1367 = vadd.f32 0.0, %v1366
    %v1368 = vpop.f32.mrb[0].mxu0
    %v1369 = vadd.f32 0.0, %v1368
    %v1370 = vpop.f32.mrb[0].mxu0
    %v1371 = vadd.f32 0.0, %v1370
    %v1372 = vpop.f32.mrb[0].mxu0
    %v1373 = vadd.f32 0.0, %v1372
    %1374 = vdwg.mxu0
    %1375 = vmatprep.subr.bf16.mxu0 %v895
    %1376 = vmatpush1.bf16.msra.mxu0 %v894
    %1377 = vmatprep.subr.bf16.mxu0 %v903
    %1378 = vmatpush1.bf16.msra.mxu0 %v902
    %1379 = vmatprep.subr.bf16.mxu0 %v911
    %1380 = vmatpush1.bf16.msra.mxu0 %v910
    %1381 = vmatprep.subr.bf16.mxu0 %v919
    %1382 = vmatpush1.bf16.msra.mxu0 %v918
    %1383 = vmatprep.subr.bf16.mxu0 %v927
    %1384 = vmatpush1.bf16.msra.mxu0 %v926
    %1385 = vmatprep.subr.bf16.mxu0 %v935
    %1386 = vmatpush1.bf16.msra.mxu0 %v934
    %1387 = vmatprep.subr.bf16.mxu0 0
    %1388 = vmatpush1.bf16.msra.mxu0 0
    %1389 = vmatprep.subr.bf16.mxu0 0
    %1390 = vmatpush1.bf16.msra.mxu0 0
    %1391 = vmatprep.subr.bf16.mxu0 0
    %1392 = vmatpush1.bf16.msra.mxu0 0
    %1393 = vmatprep.subr.bf16.mxu0 0
    %1394 = vmatpush1.bf16.msra.mxu0 0
    %1395 = vmatprep.subr.bf16.mxu0 0
    %1396 = vmatpush1.bf16.msra.mxu0 0
    %1397 = vmatprep.subr.bf16.mxu0 0
    %1398 = vmatpush1.bf16.msra.mxu0 0
    %1399 = vmatprep.subr.bf16.mxu0 0
    %1400 = vmatpush1.bf16.msra.mxu0 0
    %1401 = vmatprep.subr.bf16.mxu0 0
    %1402 = vmatpush1.bf16.msra.mxu0 0
    %1403 = vmatprep.subr.bf16.mxu0 0
    %1404 = vmatpush1.bf16.msra.mxu0 0
    %1405 = vmatprep.subr.bf16.mxu0 0
    %1406 = vmatpush1.bf16.msra.mxu0 0
    %1407 = vmatprep.mubr.bf16.mxu0 0
    %1408 = vmatmul.mubr.bf16.gmra.mrb[0].mxu0 %v988
    %v1409 = vpop.f32.mrb[0].mxu0
    %v1410 = vadd.f32 0.0, %v1409
    %v1411 = vpop.f32.mrb[0].mxu0
    %v1412 = vadd.f32 0.0, %v1411
    %v1413 = vpop.f32.mrb[0].mxu0
    %v1414 = vadd.f32 0.0, %v1413
    %v1415 = vpop.f32.mrb[0].mxu0
    %v1416 = vadd.f32 0.0, %v1415
    %1417 = vmatprep.mubr.bf16.mxu0 0
    %1418 = vmatmul.mubr.bf16.gmra.mrb[0].mxu0 %v991
    %v1419 = vpop.f32.mrb[0].mxu0
    %v1420 = vadd.f32 0.0, %v1419
    %v1421 = vpop.f32.mrb[0].mxu0
    %v1422 = vadd.f32 0.0, %v1421
    %v1423 = vpop.f32.mrb[0].mxu0
    %v1424 = vadd.f32 0.0, %v1423
    %v1425 = vpop.f32.mrb[0].mxu0
    %v1426 = vadd.f32 0.0, %v1425
    %1427 = vmatprep.mubr.bf16.mxu0 0
    %1428 = vmatmul.mubr.bf16.gmra.mrb[0].mxu0 %v994
    %v1429 = vpop.f32.mrb[0].mxu0
    %v1430 = vadd.f32 0.0, %v1429
    %v1431 = vpop.f32.mrb[0].mxu0
    %v1432 = vadd.f32 0.0, %v1431
    %v1433 = vpop.f32.mrb[0].mxu0
    %v1434 = vadd.f32 0.0, %v1433
    %v1435 = vpop.f32.mrb[0].mxu0
    %v1436 = vadd.f32 0.0, %v1435
    %1437 = vmatprep.mubr.bf16.mxu0 0
    %1438 = vmatmul.mubr.bf16.gmra.mrb[0].mxu0 %v997
    %v1439 = vpop.f32.mrb[0].mxu0
    %v1440 = vadd.f32 0.0, %v1439
    %v1441 = vpop.f32.mrb[0].mxu0
    %v1442 = vadd.f32 0.0, %v1441
    %v1443 = vpop.f32.mrb[0].mxu0
    %v1444 = vadd.f32 0.0, %v1443
    %v1445 = vpop.f32.mrb[0].mxu0
    %v1446 = vadd.f32 0.0, %v1445
    %1447 = vmatprep.mubr.bf16.mxu0 0
    %1448 = vmatmul.mubr.bf16.gmra.mrb[0].mxu0 %v1000
    %v1449 = vpop.f32.mrb[0].mxu0
    %v1450 = vadd.f32 0.0, %v1449
    %v1451 = vpop.f32.mrb[0].mxu0
    %v1452 = vadd.f32 0.0, %v1451
    %v1453 = vpop.f32.mrb[0].mxu0
    %v1454 = vadd.f32 0.0, %v1453
    %v1455 = vpop.f32.mrb[0].mxu0
    %v1456 = vadd.f32 0.0, %v1455
    %1457 = vmatprep.mubr.bf16.mxu0 0
    %1458 = vmatmul.mubr.bf16.gmra.mrb[0].mxu0 %v1003
    %v1459 = vpop.f32.mrb[0].mxu0
    %v1460 = vadd.f32 0.0, %v1459
    %v1461 = vpop.f32.mrb[0].mxu0
    %v1462 = vadd.f32 0.0, %v1461
    %v1463 = vpop.f32.mrb[0].mxu0
    %v1464 = vadd.f32 0.0, %v1463
    %v1465 = vpop.f32.mrb[0].mxu0
    %v1466 = vadd.f32 0.0, %v1465
    %1467 = vmatprep.mubr.bf16.mxu0 0
    %1468 = vmatmul.mubr.bf16.gmra.mrb[0].mxu0 %v1006
    %v1469 = vpop.f32.mrb[0].mxu0
    %v1470 = vadd.f32 0.0, %v1469
    %v1471 = vpop.f32.mrb[0].mxu0
    %v1472 = vadd.f32 0.0, %v1471
    %v1473 = vpop.f32.mrb[0].mxu0
    %v1474 = vadd.f32 0.0, %v1473
    %v1475 = vpop.f32.mrb[0].mxu0
    %v1476 = vadd.f32 0.0, %v1475
    %1477 = vmatprep.mubr.bf16.mxu0 0
    %1478 = vmatmul.mubr.bf16.gmra.mrb[0].mxu0 %v1009
    %v1479 = vpop.f32.mrb[0].mxu0
    %v1480 = vadd.f32 0.0, %v1479
    %v1481 = vpop.f32.mrb[0].mxu0
    %v1482 = vadd.f32 0.0, %v1481
    %v1483 = vpop.f32.mrb[0].mxu0
    %v1484 = vadd.f32 0.0, %v1483
    %v1485 = vpop.f32.mrb[0].mxu0
    %v1486 = vadd.f32 0.0, %v1485
    %1487 = vmatprep.mubr.bf16.mxu0 0
    %1488 = vmatmul.mubr.bf16.gmra.mrb[0].mxu0 %v1012
    %v1489 = vpop.f32.mrb[0].mxu0
    %v1490 = vadd.f32 0.0, %v1489
    %v1491 = vpop.f32.mrb[0].mxu0
    %v1492 = vadd.f32 0.0, %v1491
    %v1493 = vpop.f32.mrb[0].mxu0
    %v1494 = vadd.f32 0.0, %v1493
    %v1495 = vpop.f32.mrb[0].mxu0
    %v1496 = vadd.f32 0.0, %v1495
    %1497 = vmatprep.mubr.bf16.mxu0 0
    %1498 = vmatmul.mubr.bf16.gmra.mrb[0].mxu0 %v1015
    %v1499 = vpop.f32.mrb[0].mxu0
    %v1500 = vadd.f32 0.0, %v1499
    %v1501 = vpop.f32.mrb[0].mxu0
    %v1502 = vadd.f32 0.0, %v1501
    %v1503 = vpop.f32.mrb[0].mxu0
    %v1504 = vadd.f32 0.0, %v1503
    %v1505 = vpop.f32.mrb[0].mxu0
    %v1506 = vadd.f32 0.0, %v1505
    %1507 = vmatprep.mubr.bf16.mxu0 0
    %1508 = vmatmul.mubr.bf16.gmra.mrb[0].mxu0 %v1018
    %v1509 = vpop.f32.mrb[0].mxu0
    %v1510 = vadd.f32 0.0, %v1509
    %v1511 = vpop.f32.mrb[0].mxu0
    %v1512 = vadd.f32 0.0, %v1511
    %v1513 = vpop.f32.mrb[0].mxu0
    %v1514 = vadd.f32 0.0, %v1513
    %v1515 = vpop.f32.mrb[0].mxu0
    %v1516 = vadd.f32 0.0, %v1515
    %1517 = vmatprep.mubr.bf16.mxu0 0
    %1518 = vmatmul.mubr.bf16.gmra.mrb[0].mxu0 %v1021
    %v1519 = vpop.f32.mrb[0].mxu0
    %v1520 = vadd.f32 0.0, %v1519
    %v1521 = vpop.f32.mrb[0].mxu0
    %v1522 = vadd.f32 0.0, %v1521
    %v1523 = vpop.f32.mrb[0].mxu0
    %v1524 = vadd.f32 0.0, %v1523
    %v1525 = vpop.f32.mrb[0].mxu0
    %v1526 = vadd.f32 0.0, %v1525
    %1527 = vmatprep.mubr.bf16.mxu0 0
    %1528 = vmatmul.mubr.bf16.gmra.mrb[0].mxu0 %v1024
    %v1529 = vpop.f32.mrb[0].mxu0
    %v1530 = vadd.f32 0.0, %v1529
    %v1531 = vpop.f32.mrb[0].mxu0
    %v1532 = vadd.f32 0.0, %v1531
    %v1533 = vpop.f32.mrb[0].mxu0
    %v1534 = vadd.f32 0.0, %v1533
    %v1535 = vpop.f32.mrb[0].mxu0
    %v1536 = vadd.f32 0.0, %v1535
    %1537 = vmatprep.mubr.bf16.mxu0 0
    %1538 = vmatmul.mubr.bf16.gmra.mrb[0].mxu0 %v1027
    %v1539 = vpop.f32.mrb[0].mxu0
    %v1540 = vadd.f32 0.0, %v1539
    %v1541 = vpop.f32.mrb[0].mxu0
    %v1542 = vadd.f32 0.0, %v1541
    %v1543 = vpop.f32.mrb[0].mxu0
    %v1544 = vadd.f32 0.0, %v1543
    %v1545 = vpop.f32.mrb[0].mxu0
    %v1546 = vadd.f32 0.0, %v1545
    %1547 = vdwg.mxu0
    %1548 = vmatprep.subr.bf16.mxu0 %v897
    %1549 = vmatpush1.bf16.msra.mxu0 %v896
    %1550 = vmatprep.subr.bf16.mxu0 %v905
    %1551 = vmatpush1.bf16.msra.mxu0 %v904
    %1552 = vmatprep.subr.bf16.mxu0 %v913
    %1553 = vmatpush1.bf16.msra.mxu0 %v912
    %1554 = vmatprep.subr.bf16.mxu0 %v921
    %1555 = vmatpush1.bf16.msra.mxu0 %v920
    %1556 = vmatprep.subr.bf16.mxu0 %v929
    %1557 = vmatpush1.bf16.msra.mxu0 %v928
    %1558 = vmatprep.subr.bf16.mxu0 %v937
    %1559 = vmatpush1.bf16.msra.mxu0 %v936
    %1560 = vmatprep.subr.bf16.mxu0 0
    %1561 = vmatpush1.bf16.msra.mxu0 0
    %1562 = vmatprep.subr.bf16.mxu0 0
    %1563 = vmatpush1.bf16.msra.mxu0 0
    %1564 = vmatprep.subr.bf16.mxu0 0
    %1565 = vmatpush1.bf16.msra.mxu0 0
    %1566 = vmatprep.subr.bf16.mxu0 0
    %1567 = vmatpush1.bf16.msra.mxu0 0
    %1568 = vmatprep.subr.bf16.mxu0 0
    %1569 = vmatpush1.bf16.msra.mxu0 0
    %1570 = vmatprep.subr.bf16.mxu0 0
    %1571 = vmatpush1.bf16.msra.mxu0 0
    %1572 = vmatprep.subr.bf16.mxu0 0
    %1573 = vmatpush1.bf16.msra.mxu0 0
    %1574 = vmatprep.subr.bf16.mxu0 0
    %1575 = vmatpush1.bf16.msra.mxu0 0
    %1576 = vmatprep.subr.bf16.mxu0 0
    %1577 = vmatpush1.bf16.msra.mxu0 0
    %1578 = vmatprep.subr.bf16.mxu0 0
    %1579 = vmatpush1.bf16.msra.mxu0 0
    %1580 = vmatprep.mubr.bf16.mxu0 0
    %1581 = vmatmul.mubr.bf16.gmra.mrb[0].mxu0 %v988
    %v1582 = vpop.f32.mrb[0].mxu0
    %v1583 = vadd.f32 0.0, %v1582
    %v1584 = vpop.f32.mrb[0].mxu0
    %v1585 = vadd.f32 0.0, %v1584
    %v1586 = vpop.f32.mrb[0].mxu0
    %v1587 = vadd.f32 0.0, %v1586
    %v1588 = vpop.f32.mrb[0].mxu0
    %v1589 = vadd.f32 0.0, %v1588
    %1590 = vmatprep.mubr.bf16.mxu0 0
    %1591 = vmatmul.mubr.bf16.gmra.mrb[0].mxu0 %v991
    %v1592 = vpop.f32.mrb[0].mxu0
    %v1593 = vadd.f32 0.0, %v1592
    %v1594 = vpop.f32.mrb[0].mxu0
    %v1595 = vadd.f32 0.0, %v1594
    %v1596 = vpop.f32.mrb[0].mxu0
    %v1597 = vadd.f32 0.0, %v1596
    %v1598 = vpop.f32.mrb[0].mxu0
    %v1599 = vadd.f32 0.0, %v1598
    %1600 = vmatprep.mubr.bf16.mxu0 0
    %1601 = vmatmul.mubr.bf16.gmra.mrb[0].mxu0 %v994
    %v1602 = vpop.f32.mrb[0].mxu0
    %v1603 = vadd.f32 0.0, %v1602
    %v1604 = vpop.f32.mrb[0].mxu0
    %v1605 = vadd.f32 0.0, %v1604
    %v1606 = vpop.f32.mrb[0].mxu0
    %v1607 = vadd.f32 0.0, %v1606
    %v1608 = vpop.f32.mrb[0].mxu0
    %v1609 = vadd.f32 0.0, %v1608
    %1610 = vmatprep.mubr.bf16.mxu0 0
    %1611 = vmatmul.mubr.bf16.gmra.mrb[0].mxu0 %v997
    %v1612 = vpop.f32.mrb[0].mxu0
    %v1613 = vadd.f32 0.0, %v1612
    %v1614 = vpop.f32.mrb[0].mxu0
    %v1615 = vadd.f32 0.0, %v1614
    %v1616 = vpop.f32.mrb[0].mxu0
    %v1617 = vadd.f32 0.0, %v1616
    %v1618 = vpop.f32.mrb[0].mxu0
    %v1619 = vadd.f32 0.0, %v1618
    %1620 = vmatprep.mubr.bf16.mxu0 0
    %1621 = vmatmul.mubr.bf16.gmra.mrb[0].mxu0 %v1000
    %v1622 = vpop.f32.mrb[0].mxu0
    %v1623 = vadd.f32 0.0, %v1622
    %v1624 = vpop.f32.mrb[0].mxu0
    %v1625 = vadd.f32 0.0, %v1624
    %v1626 = vpop.f32.mrb[0].mxu0
    %v1627 = vadd.f32 0.0, %v1626
    %v1628 = vpop.f32.mrb[0].mxu0
    %v1629 = vadd.f32 0.0, %v1628
    %1630 = vmatprep.mubr.bf16.mxu0 0
    %1631 = vmatmul.mubr.bf16.gmra.mrb[0].mxu0 %v1003
    %v1632 = vpop.f32.mrb[0].mxu0
    %v1633 = vadd.f32 0.0, %v1632
    %v1634 = vpop.f32.mrb[0].mxu0
    %v1635 = vadd.f32 0.0, %v1634
    %v1636 = vpop.f32.mrb[0].mxu0
    %v1637 = vadd.f32 0.0, %v1636
    %v1638 = vpop.f32.mrb[0].mxu0
    %v1639 = vadd.f32 0.0, %v1638
    %1640 = vmatprep.mubr.bf16.mxu0 0
    %1641 = vmatmul.mubr.bf16.gmra.mrb[0].mxu0 %v1006
    %v1642 = vpop.f32.mrb[0].mxu0
    %v1643 = vadd.f32 0.0, %v1642
    %v1644 = vpop.f32.mrb[0].mxu0
    %v1645 = vadd.f32 0.0, %v1644
    %v1646 = vpop.f32.mrb[0].mxu0
    %v1647 = vadd.f32 0.0, %v1646
    %v1648 = vpop.f32.mrb[0].mxu0
    %v1649 = vadd.f32 0.0, %v1648
    %1650 = vmatprep.mubr.bf16.mxu0 0
    %1651 = vmatmul.mubr.bf16.gmra.mrb[0].mxu0 %v1009
    %v1652 = vpop.f32.mrb[0].mxu0
    %v1653 = vadd.f32 0.0, %v1652
    %v1654 = vpop.f32.mrb[0].mxu0
    %v1655 = vadd.f32 0.0, %v1654
    %v1656 = vpop.f32.mrb[0].mxu0
    %v1657 = vadd.f32 0.0, %v1656
    %v1658 = vpop.f32.mrb[0].mxu0
    %v1659 = vadd.f32 0.0, %v1658
    %1660 = vmatprep.mubr.bf16.mxu0 0
    %1661 = vmatmul.mubr.bf16.gmra.mrb[0].mxu0 %v1012
    %v1662 = vpop.f32.mrb[0].mxu0
    %v1663 = vadd.f32 0.0, %v1662
    %v1664 = vpop.f32.mrb[0].mxu0
    %v1665 = vadd.f32 0.0, %v1664
    %v1666 = vpop.f32.mrb[0].mxu0
    %v1667 = vadd.f32 0.0, %v1666
    %v1668 = vpop.f32.mrb[0].mxu0
    %v1669 = vadd.f32 0.0, %v1668
    %1670 = vmatprep.mubr.bf16.mxu0 0
    %1671 = vmatmul.mubr.bf16.gmra.mrb[0].mxu0 %v1015
    %v1672 = vpop.f32.mrb[0].mxu0
    %v1673 = vadd.f32 0.0, %v1672
    %v1674 = vpop.f32.mrb[0].mxu0
    %v1675 = vadd.f32 0.0, %v1674
    %v1676 = vpop.f32.mrb[0].mxu0
    %v1677 = vadd.f32 0.0, %v1676
    %v1678 = vpop.f32.mrb[0].mxu0
    %v1679 = vadd.f32 0.0, %v1678
    %1680 = vmatprep.mubr.bf16.mxu0 0
    %1681 = vmatmul.mubr.bf16.gmra.mrb[0].mxu0 %v1018
    %v1682 = vpop.f32.mrb[0].mxu0
    %v1683 = vadd.f32 0.0, %v1682
    %v1684 = vpop.f32.mrb[0].mxu0
    %v1685 = vadd.f32 0.0, %v1684
    %v1686 = vpop.f32.mrb[0].mxu0
    %v1687 = vadd.f32 0.0, %v1686
    %v1688 = vpop.f32.mrb[0].mxu0
    %v1689 = vadd.f32 0.0, %v1688
    %1690 = vmatprep.mubr.bf16.mxu0 0
    %1691 = vmatmul.mubr.bf16.gmra.mrb[0].mxu0 %v1021
    %v1692 = vpop.f32.mrb[0].mxu0
    %v1693 = vadd.f32 0.0, %v1692
    %v1694 = vpop.f32.mrb[0].mxu0
    %v1695 = vadd.f32 0.0, %v1694
    %v1696 = vpop.f32.mrb[0].mxu0
    %v1697 = vadd.f32 0.0, %v1696
    %v1698 = vpop.f32.mrb[0].mxu0
    %v1699 = vadd.f32 0.0, %v1698
    %1700 = vmatprep.mubr.bf16.mxu0 0
    %1701 = vmatmul.mubr.bf16.gmra.mrb[0].mxu0 %v1024
    %v1702 = vpop.f32.mrb[0].mxu0
    %v1703 = vadd.f32 0.0, %v1702
    %v1704 = vpop.f32.mrb[0].mxu0
    %v1705 = vadd.f32 0.0, %v1704
    %v1706 = vpop.f32.mrb[0].mxu0
    %v1707 = vadd.f32 0.0, %v1706
    %v1708 = vpop.f32.mrb[0].mxu0
    %v1709 = vadd.f32 0.0, %v1708
    %1710 = vmatprep.mubr.bf16.mxu0 0
    %1711 = vmatmul.mubr.bf16.gmra.mrb[0].mxu0 %v1027
    %v1712 = vpop.f32.mrb[0].mxu0
    %v1713 = vadd.f32 0.0, %v1712
    %v1714 = vpop.f32.mrb[0].mxu0
    %v1715 = vadd.f32 0.0, %v1714
    %v1716 = vpop.f32.mrb[0].mxu0
    %v1717 = vadd.f32 0.0, %v1716
    %v1718 = vpop.f32.mrb[0].mxu0
    %v1719 = vadd.f32 0.0, %v1718
    %1720 = vdwg.mxu0
    %v1721 = vmax.f32 %v1064, %v1068
    %v1722 = vmax.f32 %v1066, %v1070
    %v1723 = vmax.f32 %v1237, %v1241
    %v1724 = vmax.f32 %v1239, %v1243
    %v1725 = vmax.f32 %v1410, %v1414
    %v1726 = vmax.f32 %v1412, %v1416
    %v1727 = vmax.f32 %v1583, %v1587
    %v1728 = vmax.f32 %v1585, %v1589
    %v1729 = vmax.f32 %v1074, %v1078
    %v1730 = vmax.f32 %v1076, %v1080
    %v1731 = vmax.f32 %v1247, %v1251
    %v1732 = vmax.f32 %v1249, %v1253
    %v1733 = vmax.f32 %v1420, %v1424
    %v1734 = vmax.f32 %v1422, %v1426
    %v1735 = vmax.f32 %v1593, %v1597
    %v1736 = vmax.f32 %v1595, %v1599
    %v1737 = vmax.f32 %v1084, %v1088
    %v1738 = vmax.f32 %v1086, %v1090
    %v1739 = vmax.f32 %v1257, %v1261
    %v1740 = vmax.f32 %v1259, %v1263
    %v1741 = vmax.f32 %v1430, %v1434
    %v1742 = vmax.f32 %v1432, %v1436
    %v1743 = vmax.f32 %v1603, %v1607
    %v1744 = vmax.f32 %v1605, %v1609
    %v1745 = vmax.f32 %v1094, %v1098
    %v1746 = vmax.f32 %v1096, %v1100
    %v1747 = vmax.f32 %v1267, %v1271
    %v1748 = vmax.f32 %v1269, %v1273
    %v1749 = vmax.f32 %v1440, %v1444
    %v1750 = vmax.f32 %v1442, %v1446
    %v1751 = vmax.f32 %v1613, %v1617
    %v1752 = vmax.f32 %v1615, %v1619
    %v1753 = vmax.f32 %v1104, %v1108
    %v1754 = vmax.f32 %v1106, %v1110
    %v1755 = vmax.f32 %v1277, %v1281
    %v1756 = vmax.f32 %v1279, %v1283
    %v1757 = vmax.f32 %v1450, %v1454
    %v1758 = vmax.f32 %v1452, %v1456
    %v1759 = vmax.f32 %v1623, %v1627
    %v1760 = vmax.f32 %v1625, %v1629
    %v1761 = vmax.f32 %v1114, %v1118
    %v1762 = vmax.f32 %v1116, %v1120
    %v1763 = vmax.f32 %v1287, %v1291
    %v1764 = vmax.f32 %v1289, %v1293
    %v1765 = vmax.f32 %v1460, %v1464
    %v1766 = vmax.f32 %v1462, %v1466
    %v1767 = vmax.f32 %v1633, %v1637
    %v1768 = vmax.f32 %v1635, %v1639
    %v1769 = vmax.f32 %v1124, %v1128
    %v1770 = vmax.f32 %v1126, %v1130
    %v1771 = vmax.f32 %v1297, %v1301
    %v1772 = vmax.f32 %v1299, %v1303
    %v1773 = vmax.f32 %v1470, %v1474
    %v1774 = vmax.f32 %v1472, %v1476
    %v1775 = vmax.f32 %v1643, %v1647
    %v1776 = vmax.f32 %v1645, %v1649
    %v1777 = vmax.f32 %v1134, %v1138
    %v1778 = vmax.f32 %v1136, %v1140
    %v1779 = vmax.f32 %v1307, %v1311
    %v1780 = vmax.f32 %v1309, %v1313
    %v1781 = vmax.f32 %v1480, %v1484
    %v1782 = vmax.f32 %v1482, %v1486
    %v1783 = vmax.f32 %v1653, %v1657
    %v1784 = vmax.f32 %v1655, %v1659
    %v1785 = vmax.f32 %v1144, %v1148
    %v1786 = vmax.f32 %v1146, %v1150
    %v1787 = vmax.f32 %v1317, %v1321
    %v1788 = vmax.f32 %v1319, %v1323
    %v1789 = vmax.f32 %v1490, %v1494
    %v1790 = vmax.f32 %v1492, %v1496
    %v1791 = vmax.f32 %v1663, %v1667
    %v1792 = vmax.f32 %v1665, %v1669
    %v1793 = vmax.f32 %v1154, %v1158
    %v1794 = vmax.f32 %v1156, %v1160
    %v1795 = vmax.f32 %v1327, %v1331
    %v1796 = vmax.f32 %v1329, %v1333
    %v1797 = vmax.f32 %v1500, %v1504
    %v1798 = vmax.f32 %v1502, %v1506
    %v1799 = vmax.f32 %v1673, %v1677
    %v1800 = vmax.f32 %v1675, %v1679
    %v1801 = vmax.f32 %v1164, %v1168
    %v1802 = vmax.f32 %v1166, %v1170
    %v1803 = vmax.f32 %v1337, %v1341
    %v1804 = vmax.f32 %v1339, %v1343
    %v1805 = vmax.f32 %v1510, %v1514
    %v1806 = vmax.f32 %v1512, %v1516
    %v1807 = vmax.f32 %v1683, %v1687
    %v1808 = vmax.f32 %v1685, %v1689
    %v1809 = vmax.f32 %v1174, %v1178
    %v1810 = vmax.f32 %v1176, %v1180
    %v1811 = vmax.f32 %v1347, %v1351
    %v1812 = vmax.f32 %v1349, %v1353
    %v1813 = vmax.f32 %v1520, %v1524
    %v1814 = vmax.f32 %v1522, %v1526
    %v1815 = vmax.f32 %v1693, %v1697
    %v1816 = vmax.f32 %v1695, %v1699
    %v1817 = vmax.f32 %v1184, %v1188
    %v1818 = vmax.f32 %v1186, %v1190
    %v1819 = vmax.f32 %v1357, %v1361
    %v1820 = vmax.f32 %v1359, %v1363
    %v1821 = vmax.f32 %v1530, %v1534
    %v1822 = vmax.f32 %v1532, %v1536
    %v1823 = vmax.f32 %v1703, %v1707
    %v1824 = vmax.f32 %v1705, %v1709
    %v1825 = vmax.f32 %v1194, %v1198
    %v1826 = vmax.f32 %v1196, %v1200
    %v1827 = vmax.f32 %v1367, %v1371
    %v1828 = vmax.f32 %v1369, %v1373
    %v1829 = vmax.f32 %v1540, %v1544
    %v1830 = vmax.f32 %v1542, %v1546
    %v1831 = vmax.f32 %v1713, %v1717
    %v1832 = vmax.f32 %v1715, %v1719
    %v1833 = vmax.f32 %v1721, %v1725
    %v1834 = vmax.f32 %v1722, %v1726
    %v1835 = vmax.f32 %v1723, %v1727
    %v1836 = vmax.f32 %v1724, %v1728
    %v1837 = vmax.f32 %v1729, %v1733
    %v1838 = vmax.f32 %v1730, %v1734
    %v1839 = vmax.f32 %v1731, %v1735
    %v1840 = vmax.f32 %v1732, %v1736
    %v1841 = vmax.f32 %v1737, %v1741
    %v1842 = vmax.f32 %v1738, %v1742
    %v1843 = vmax.f32 %v1739, %v1743
    %v1844 = vmax.f32 %v1740, %v1744
    %v1845 = vmax.f32 %v1745, %v1749
    %v1846 = vmax.f32 %v1746, %v1750
    %v1847 = vmax.f32 %v1747, %v1751
    %v1848 = vmax.f32 %v1748, %v1752
    %v1849 = vmax.f32 %v1753, %v1757
    %v1850 = vmax.f32 %v1754, %v1758
    %v1851 = vmax.f32 %v1755, %v1759
    %v1852 = vmax.f32 %v1756, %v1760
    %v1853 = vmax.f32 %v1761, %v1765
    %v1854 = vmax.f32 %v1762, %v1766
    %v1855 = vmax.f32 %v1763, %v1767
    %v1856 = vmax.f32 %v1764, %v1768
    %v1857 = vmax.f32 %v1769, %v1773
    %v1858 = vmax.f32 %v1770, %v1774
    %v1859 = vmax.f32 %v1771, %v1775
    %v1860 = vmax.f32 %v1772, %v1776
    %v1861 = vmax.f32 %v1777, %v1781
    %v1862 = vmax.f32 %v1778, %v1782
    %v1863 = vmax.f32 %v1779, %v1783
    %v1864 = vmax.f32 %v1780, %v1784
    %v1865 = vmax.f32 %v1785, %v1789
    %v1866 = vmax.f32 %v1786, %v1790
    %v1867 = vmax.f32 %v1787, %v1791
    %v1868 = vmax.f32 %v1788, %v1792
    %v1869 = vmax.f32 %v1793, %v1797
    %v1870 = vmax.f32 %v1794, %v1798
    %v1871 = vmax.f32 %v1795, %v1799
    %v1872 = vmax.f32 %v1796, %v1800
    %v1873 = vmax.f32 %v1801, %v1805
    %v1874 = vmax.f32 %v1802, %v1806
    %v1875 = vmax.f32 %v1803, %v1807
    %v1876 = vmax.f32 %v1804, %v1808
    %v1877 = vmax.f32 %v1809, %v1813
    %v1878 = vmax.f32 %v1810, %v1814
    %v1879 = vmax.f32 %v1811, %v1815
    %v1880 = vmax.f32 %v1812, %v1816
    %v1881 = vmax.f32 %v1817, %v1821
    %v1882 = vmax.f32 %v1818, %v1822
    %v1883 = vmax.f32 %v1819, %v1823
    %v1884 = vmax.f32 %v1820, %v1824
    %v1885 = vmax.f32 %v1825, %v1829
    %v1886 = vmax.f32 %v1826, %v1830
    %v1887 = vmax.f32 %v1827, %v1831
    %v1888 = vmax.f32 %v1828, %v1832
    %v1889 = vld [vmem:[#allocation4] sm:$0xf]
    %v1891 = vlaneseq
    %v1892 = vshrl.u32 %v1891, 7
    %v1893 = vsub.s32 0, %v1892
    %v1894 = vrot.slane %v1889, %v1893
    %v1895 = vlaneseq
    %v1896 = vshrl.u32 %v1895, 7
    %v1897 = vsub.s32 1, %v1896
    %v1898 = vrot.slane %v1889, %v1897
    %v1899 = vlaneseq
    %v1900 = vshrl.u32 %v1899, 7
    %v1901 = vsub.s32 2, %v1900
    %v1902 = vrot.slane %v1889, %v1901
    %v1903 = vlaneseq
    %v1904 = vshrl.u32 %v1903, 7
    %v1905 = vsub.s32 3, %v1904
    %v1906 = vrot.slane %v1889, %v1905
    %v1911 = vadd.f32 %v1833, %v1894
    %v1912 = vadd.f32 %v1834, %v1898
    %v1913 = vadd.f32 %v1835, %v1902
    %v1914 = vadd.f32 %v1836, %v1906
    %v1915 = vadd.f32 %v1837, %v1894
    %v1916 = vadd.f32 %v1838, %v1898
    %v1917 = vadd.f32 %v1839, %v1902
    %v1918 = vadd.f32 %v1840, %v1906
    %v1919 = vadd.f32 %v1841, %v1894
    %v1920 = vadd.f32 %v1842, %v1898
    %v1921 = vadd.f32 %v1843, %v1902
    %v1922 = vadd.f32 %v1844, %v1906
    %v1923 = vadd.f32 %v1845, %v1894
    %v1924 = vadd.f32 %v1846, %v1898
    %v1925 = vadd.f32 %v1847, %v1902
    %v1926 = vadd.f32 %v1848, %v1906
    %v1927 = vadd.f32 %v1849, %v1894
    %v1928 = vadd.f32 %v1850, %v1898
    %v1929 = vadd.f32 %v1851, %v1902
    %v1930 = vadd.f32 %v1852, %v1906
    %v1931 = vadd.f32 %v1853, %v1894
    %v1932 = vadd.f32 %v1854, %v1898
    %v1933 = vadd.f32 %v1855, %v1902
    %v1934 = vadd.f32 %v1856, %v1906
    %v1935 = vadd.f32 %v1857, %v1894
    %v1936 = vadd.f32 %v1858, %v1898
    %v1937 = vadd.f32 %v1859, %v1902
    %v1938 = vadd.f32 %v1860, %v1906
    %v1939 = vadd.f32 %v1861, %v1894
    %v1940 = vadd.f32 %v1862, %v1898
    %v1941 = vadd.f32 %v1863, %v1902
    %v1942 = vadd.f32 %v1864, %v1906
    %v1943 = vadd.f32 %v1865, %v1894
    %v1944 = vadd.f32 %v1866, %v1898
    %v1945 = vadd.f32 %v1867, %v1902
    %v1946 = vadd.f32 %v1868, %v1906
    %v1947 = vadd.f32 %v1869, %v1894
    %v1948 = vadd.f32 %v1870, %v1898
    %v1949 = vadd.f32 %v1871, %v1902
    %v1950 = vadd.f32 %v1872, %v1906
    %v1951 = vadd.f32 %v1873, %v1894
    %v1952 = vadd.f32 %v1874, %v1898
    %v1953 = vadd.f32 %v1875, %v1902
    %v1954 = vadd.f32 %v1876, %v1906
    %v1955 = vadd.f32 %v1877, %v1894
    %v1956 = vadd.f32 %v1878, %v1898
    %v1957 = vadd.f32 %v1879, %v1902
    %v1958 = vadd.f32 %v1880, %v1906
    %v1959 = vadd.f32 %v1881, %v1894
    %v1960 = vadd.f32 %v1882, %v1898
    %v1961 = vadd.f32 %v1883, %v1902
    %v1962 = vadd.f32 %v1884, %v1906
    %v1963 = vadd.f32 %v1885, %v1894
    %v1964 = vadd.f32 %v1886, %v1898
    %v1965 = vadd.f32 %v1887, %v1902
    %v1966 = vadd.f32 %v1888, %v1906
    %v1967 = vmax.f32 %v1911, 0.0
    %v1968 = vmax.f32 %v1912, 0.0
    %v1969 = vmax.f32 %v1913, 0.0
    %v1970 = vmax.f32 %v1914, 0.0
    %v1971 = vmax.f32 %v1915, 0.0
    %v1972 = vmax.f32 %v1916, 0.0
    %v1973 = vmax.f32 %v1917, 0.0
    %v1974 = vmax.f32 %v1918, 0.0
    %v1975 = vmax.f32 %v1919, 0.0
    %v1976 = vmax.f32 %v1920, 0.0
    %v1977 = vmax.f32 %v1921, 0.0
    %v1978 = vmax.f32 %v1922, 0.0
    %v1979 = vmax.f32 %v1923, 0.0
    %v1980 = vmax.f32 %v1924, 0.0
    %v1981 = vmax.f32 %v1925, 0.0
    %v1982 = vmax.f32 %v1926, 0.0
    %v1983 = vmax.f32 %v1927, 0.0
    %v1984 = vmax.f32 %v1928, 0.0
    %v1985 = vmax.f32 %v1929, 0.0
    %v1986 = vmax.f32 %v1930, 0.0
    %v1987 = vmax.f32 %v1931, 0.0
    %v1988 = vmax.f32 %v1932, 0.0
    %v1989 = vmax.f32 %v1933, 0.0
    %v1990 = vmax.f32 %v1934, 0.0
    %v1991 = vmax.f32 %v1935, 0.0
    %v1992 = vmax.f32 %v1936, 0.0
    %v1993 = vmax.f32 %v1937, 0.0
    %v1994 = vmax.f32 %v1938, 0.0
    %v1995 = vmax.f32 %v1939, 0.0
    %v1996 = vmax.f32 %v1940, 0.0
    %v1997 = vmax.f32 %v1941, 0.0
    %v1998 = vmax.f32 %v1942, 0.0
    %v1999 = vmax.f32 %v1943, 0.0
    %v2000 = vmax.f32 %v1944, 0.0
    %v2001 = vmax.f32 %v1945, 0.0
    %v2002 = vmax.f32 %v1946, 0.0
    %v2003 = vmax.f32 %v1947, 0.0
    %v2004 = vmax.f32 %v1948, 0.0
    %v2005 = vmax.f32 %v1949, 0.0
    %v2006 = vmax.f32 %v1950, 0.0
    %v2007 = vmax.f32 %v1951, 0.0
    %v2008 = vmax.f32 %v1952, 0.0
    %v2009 = vmax.f32 %v1953, 0.0
    %v2010 = vmax.f32 %v1954, 0.0
    %v2011 = vmax.f32 %v1955, 0.0
    %v2012 = vmax.f32 %v1956, 0.0
    %v2013 = vmax.f32 %v1957, 0.0
    %v2014 = vmax.f32 %v1958, 0.0
    %v2015 = vmax.f32 %v1959, 0.0
    %v2016 = vmax.f32 %v1960, 0.0
    %v2017 = vmax.f32 %v1961, 0.0
    %v2018 = vmax.f32 %v1962, 0.0
    %v2019 = vmax.f32 %v1963, 0.0
    %v2020 = vmax.f32 %v1964, 0.0
    %v2021 = vmax.f32 %v1965, 0.0
    %v2022 = vmax.f32 %v1966, 0.0
    %v2023 = vpack.c.bf16 %v1967, %v1967
    %v2024 = vpack.c.bf16 %v1968, %v1968
    %v2025 = vpack.c.bf16 %v1969, %v1969
    %v2026 = vpack.c.bf16 %v1970, %v1970
    %v2027 = vpack.c.bf16 %v1971, %v1971
    %v2028 = vpack.c.bf16 %v1972, %v1972
    %v2029 = vpack.c.bf16 %v1973, %v1973
    %v2030 = vpack.c.bf16 %v1974, %v1974
    %v2031 = vpack.c.bf16 %v1975, %v1975
    %v2032 = vpack.c.bf16 %v1976, %v1976
    %v2033 = vpack.c.bf16 %v1977, %v1977
    %v2034 = vpack.c.bf16 %v1978, %v1978
    %v2035 = vpack.c.bf16 %v1979, %v1979
    %v2036 = vpack.c.bf16 %v1980, %v1980
    %v2037 = vpack.c.bf16 %v1981, %v1981
    %v2038 = vpack.c.bf16 %v1982, %v1982
    %v2039 = vpack.c.bf16 %v1983, %v1983
    %v2040 = vpack.c.bf16 %v1984, %v1984
    %v2041 = vpack.c.bf16 %v1985, %v1985
    %v2042 = vpack.c.bf16 %v1986, %v1986
    %v2043 = vpack.c.bf16 %v1987, %v1987
    %v2044 = vpack.c.bf16 %v1988, %v1988
    %v2045 = vpack.c.bf16 %v1989, %v1989
    %v2046 = vpack.c.bf16 %v1990, %v1990
    %v2047 = vpack.c.bf16 %v1991, %v1991
    %v2048 = vpack.c.bf16 %v1992, %v1992
    %v2049 = vpack.c.bf16 %v1993, %v1993
    %v2050 = vpack.c.bf16 %v1994, %v1994
    %v2051 = vpack.c.bf16 %v1995, %v1995
    %v2052 = vpack.c.bf16 %v1996, %v1996
    %v2053 = vpack.c.bf16 %v1997, %v1997
    %v2054 = vpack.c.bf16 %v1998, %v1998
    %v2055 = vpack.c.bf16 %v1999, %v1999
    %v2056 = vpack.c.bf16 %v2000, %v2000
    %v2057 = vpack.c.bf16 %v2001, %v2001
    %v2058 = vpack.c.bf16 %v2002, %v2002
    %v2059 = vpack.c.bf16 %v2003, %v2003
    %v2060 = vpack.c.bf16 %v2004, %v2004
    %v2061 = vpack.c.bf16 %v2005, %v2005
    %v2062 = vpack.c.bf16 %v2006, %v2006
    %v2063 = vpack.c.bf16 %v2007, %v2007
    %v2064 = vpack.c.bf16 %v2008, %v2008
    %v2065 = vpack.c.bf16 %v2009, %v2009
    %v2066 = vpack.c.bf16 %v2010, %v2010
    %v2067 = vpack.c.bf16 %v2011, %v2011
    %v2068 = vpack.c.bf16 %v2012, %v2012
    %v2069 = vpack.c.bf16 %v2013, %v2013
    %v2070 = vpack.c.bf16 %v2014, %v2014
    %v2071 = vpack.c.bf16 %v2015, %v2015
    %v2072 = vpack.c.bf16 %v2016, %v2016
    %v2073 = vpack.c.bf16 %v2017, %v2017
    %v2074 = vpack.c.bf16 %v2018, %v2018
    %v2075 = vpack.c.bf16 %v2019, %v2019
    %v2076 = vpack.c.bf16 %v2020, %v2020
    %v2077 = vpack.c.bf16 %v2021, %v2021
    %v2078 = vpack.c.bf16 %v2022, %v2022
    %2135 = vrot.lane.b32.xlu0 %v2023, 32
    %v2136 = vpop.permute.xlu0 %2135
    %2137 = vrot.lane.b32.xlu0 %v2024, 32
    %v2138 = vpop.permute.xlu0 %2137
    %2139 = vrot.lane.b32.xlu0 %v2025, 32
    %v2140 = vpop.permute.xlu0 %2139
    %2141 = vrot.lane.b32.xlu0 %v2026, 32
    %v2142 = vpop.permute.xlu0 %2141
    %2143 = vrot.lane.b32.xlu0 %v2027, 32
    %v2144 = vpop.permute.xlu0 %2143
    %2145 = vrot.lane.b32.xlu0 %v2028, 32
    %v2146 = vpop.permute.xlu0 %2145
    %2147 = vrot.lane.b32.xlu0 %v2029, 32
    %v2148 = vpop.permute.xlu0 %2147
    %2149 = vrot.lane.b32.xlu0 %v2030, 32
    %v2150 = vpop.permute.xlu0 %2149
    %2151 = vrot.lane.b32.xlu0 %v2031, 32
    %v2152 = vpop.permute.xlu0 %2151
    %2153 = vrot.lane.b32.xlu0 %v2032, 32
    %v2154 = vpop.permute.xlu0 %2153
    %2155 = vrot.lane.b32.xlu0 %v2033, 32
    %v2156 = vpop.permute.xlu0 %2155
    %2157 = vrot.lane.b32.xlu0 %v2034, 32
    %v2158 = vpop.permute.xlu0 %2157
    %2159 = vrot.lane.b32.xlu0 %v2035, 32
    %v2160 = vpop.permute.xlu0 %2159
    %2161 = vrot.lane.b32.xlu0 %v2036, 32
    %v2162 = vpop.permute.xlu0 %2161
    %2163 = vrot.lane.b32.xlu0 %v2037, 32
    %v2164 = vpop.permute.xlu0 %2163
    %2165 = vrot.lane.b32.xlu0 %v2038, 32
    %v2166 = vpop.permute.xlu0 %2165
    %2167 = vrot.lane.b32.xlu0 %v2039, 32
    %v2168 = vpop.permute.xlu0 %2167
    %2169 = vrot.lane.b32.xlu0 %v2040, 32
    %v2170 = vpop.permute.xlu0 %2169
    %2171 = vrot.lane.b32.xlu0 %v2041, 32
    %v2172 = vpop.permute.xlu0 %2171
    %2173 = vrot.lane.b32.xlu0 %v2042, 32
    %v2174 = vpop.permute.xlu0 %2173
    %2175 = vrot.lane.b32.xlu0 %v2043, 32
    %v2176 = vpop.permute.xlu0 %2175
    %2177 = vrot.lane.b32.xlu0 %v2044, 32
    %v2178 = vpop.permute.xlu0 %2177
    %2179 = vrot.lane.b32.xlu0 %v2045, 32
    %v2180 = vpop.permute.xlu0 %2179
    %2181 = vrot.lane.b32.xlu0 %v2046, 32
    %v2182 = vpop.permute.xlu0 %2181
    %2183 = vrot.lane.b32.xlu0 %v2047, 32
    %v2184 = vpop.permute.xlu0 %2183
    %2185 = vrot.lane.b32.xlu0 %v2048, 32
    %v2186 = vpop.permute.xlu0 %2185
    %2187 = vrot.lane.b32.xlu0 %v2049, 32
    %v2188 = vpop.permute.xlu0 %2187
    %2189 = vrot.lane.b32.xlu0 %v2050, 32
    %v2190 = vpop.permute.xlu0 %2189
    %2191 = vrot.lane.b32.xlu0 %v2051, 32
    %v2192 = vpop.permute.xlu0 %2191
    %2193 = vrot.lane.b32.xlu0 %v2052, 32
    %v2194 = vpop.permute.xlu0 %2193
    %2195 = vrot.lane.b32.xlu0 %v2053, 32
    %v2196 = vpop.permute.xlu0 %2195
    %2197 = vrot.lane.b32.xlu0 %v2054, 32
    %v2198 = vpop.permute.xlu0 %2197
    %2199 = vrot.lane.b32.xlu0 %v2055, 32
    %v2200 = vpop.permute.xlu0 %2199
    %2201 = vrot.lane.b32.xlu0 %v2056, 32
    %v2202 = vpop.permute.xlu0 %2201
    %2203 = vrot.lane.b32.xlu0 %v2057, 32
    %v2204 = vpop.permute.xlu0 %2203
    %2205 = vrot.lane.b32.xlu0 %v2058, 32
    %v2206 = vpop.permute.xlu0 %2205
    %2207 = vrot.lane.b32.xlu0 %v2059, 32
    %v2208 = vpop.permute.xlu0 %2207
    %2209 = vrot.lane.b32.xlu0 %v2060, 32
    %v2210 = vpop.permute.xlu0 %2209
    %2211 = vrot.lane.b32.xlu0 %v2061, 32
    %v2212 = vpop.permute.xlu0 %2211
    %2213 = vrot.lane.b32.xlu0 %v2062, 32
    %v2214 = vpop.permute.xlu0 %2213
    %2215 = vrot.lane.b32.xlu0 %v2063, 32
    %v2216 = vpop.permute.xlu0 %2215
    %2217 = vrot.lane.b32.xlu0 %v2064, 32
    %v2218 = vpop.permute.xlu0 %2217
    %2219 = vrot.lane.b32.xlu0 %v2065, 32
    %v2220 = vpop.permute.xlu0 %2219
    %2221 = vrot.lane.b32.xlu0 %v2066, 32
    %v2222 = vpop.permute.xlu0 %2221
    %2223 = vrot.lane.b32.xlu0 %v2067, 32
    %v2224 = vpop.permute.xlu0 %2223
    %2225 = vrot.lane.b32.xlu0 %v2068, 32
    %v2226 = vpop.permute.xlu0 %2225
    %2227 = vrot.lane.b32.xlu0 %v2069, 32
    %v2228 = vpop.permute.xlu0 %2227
    %2229 = vrot.lane.b32.xlu0 %v2070, 32
    %v2230 = vpop.permute.xlu0 %2229
    %2231 = vrot.lane.b32.xlu0 %v2071, 32
    %v2232 = vpop.permute.xlu0 %2231
    %2233 = vrot.lane.b32.xlu0 %v2072, 32
    %v2234 = vpop.permute.xlu0 %2233
    %2235 = vrot.lane.b32.xlu0 %v2073, 32
    %v2236 = vpop.permute.xlu0 %2235
    %2237 = vrot.lane.b32.xlu0 %v2074, 32
    %v2238 = vpop.permute.xlu0 %2237
    %2239 = vrot.lane.b32.xlu0 %v2075, 32
    %v2240 = vpop.permute.xlu0 %2239
    %2241 = vrot.lane.b32.xlu0 %v2076, 32
    %v2242 = vpop.permute.xlu0 %2241
    %2243 = vrot.lane.b32.xlu0 %v2077, 32
    %v2244 = vpop.permute.xlu0 %2243
    %2245 = vrot.lane.b32.xlu0 %v2078, 32
    %v2246 = vpop.permute.xlu0 %2245
    %vm2247 = vcmask 261120
    %v2248 = vsel %vm2247, %v2136, %v2138
    %v2249 = vsel %vm2247, %v2138, %v2140
    %v2250 = vsel %vm2247, %v2140, %v2142
    %v2251 = vsel %vm2247, %v2144, %v2146
    %v2252 = vsel %vm2247, %v2146, %v2148
    %v2253 = vsel %vm2247, %v2148, %v2150
    %v2254 = vsel %vm2247, %v2152, %v2154
    %v2255 = vsel %vm2247, %v2154, %v2156
    %v2256 = vsel %vm2247, %v2156, %v2158
    %v2257 = vsel %vm2247, %v2160, %v2162
    %v2258 = vsel %vm2247, %v2162, %v2164
    %v2259 = vsel %vm2247, %v2164, %v2166
    %v2260 = vsel %vm2247, %v2168, %v2170
    %v2261 = vsel %vm2247, %v2170, %v2172
    %v2262 = vsel %vm2247, %v2172, %v2174
    %v2263 = vsel %vm2247, %v2176, %v2178
    %v2264 = vsel %vm2247, %v2178, %v2180
    %v2265 = vsel %vm2247, %v2180, %v2182
    %v2266 = vsel %vm2247, %v2184, %v2186
    %v2267 = vsel %vm2247, %v2186, %v2188
    %v2268 = vsel %vm2247, %v2188, %v2190
    %v2269 = vsel %vm2247, %v2192, %v2194
    %v2270 = vsel %vm2247, %v2194, %v2196
    %v2271 = vsel %vm2247, %v2196, %v2198
    %v2272 = vsel %vm2247, %v2200, %v2202
    %v2273 = vsel %vm2247, %v2202, %v2204
    %v2274 = vsel %vm2247, %v2204, %v2206
    %v2275 = vsel %vm2247, %v2208, %v2210
    %v2276 = vsel %vm2247, %v2210, %v2212
    %v2277 = vsel %vm2247, %v2212, %v2214
    %v2278 = vsel %vm2247, %v2216, %v2218
    %v2279 = vsel %vm2247, %v2218, %v2220
    %v2280 = vsel %vm2247, %v2220, %v2222
    %v2281 = vsel %vm2247, %v2224, %v2226
    %v2282 = vsel %vm2247, %v2226, %v2228
    %v2283 = vsel %vm2247, %v2228, %v2230
    %v2284 = vsel %vm2247, %v2232, %v2234
    %v2285 = vsel %vm2247, %v2234, %v2236
    %v2286 = vsel %vm2247, %v2236, %v2238
    %v2287 = vsel %vm2247, %v2240, %v2242
    %v2288 = vsel %vm2247, %v2242, %v2244
    %v2289 = vsel %vm2247, %v2244, %v2246
    %v2292 = vsel %vm486, 0, %v2136
    %v2294 = vsel %vm486, 0, %v2144
    %v2296 = vsel %vm486, 0, %v2152
    %v2298 = vsel %vm486, 0, %v2160
    %v2300 = vsel %vm486, 0, %v2168
    %v2302 = vsel %vm486, 0, %v2176
    %v2304 = vsel %vm486, 0, %v2184
    %v2306 = vsel %vm486, 0, %v2192
    %v2308 = vsel %vm486, 0, %v2200
    %v2310 = vsel %vm486, 0, %v2208
    %v2312 = vsel %vm486, 0, %v2216
    %v2314 = vsel %vm486, 0, %v2224
    %v2316 = vsel %vm486, 0, %v2232
    %v2318 = vsel %vm486, 0, %v2240
    %v2320 = vsel %vm986, %v2250, 0
    %v2322 = vsel %vm986, %v2253, 0
    %v2324 = vsel %vm986, %v2256, 0
    %v2326 = vsel %vm986, %v2259, 0
    %v2328 = vsel %vm986, %v2262, 0
    %v2330 = vsel %vm986, %v2265, 0
    %v2332 = vsel %vm986, %v2268, 0
    %v2334 = vsel %vm986, %v2271, 0
    %v2336 = vsel %vm986, %v2274, 0
    %v2338 = vsel %vm986, %v2277, 0
    %v2340 = vsel %vm986, %v2280, 0
    %v2342 = vsel %vm986, %v2283, 0
    %v2344 = vsel %vm986, %v2286, 0
    %v2346 = vsel %vm986, %v2289, 0
    %v2376 = vunpack.c.l.b16 0
    %v2377 = vunpack.c.l.b16 %v2292
    %v2378 = vunpack.c.l.b16 %v2248
    %v2379 = vunpack.c.l.b16 %v2249
    %v2380 = vunpack.c.l.b16 %v2320
    %v2381 = vunpack.c.l.b16 %v2294
    %v2382 = vunpack.c.l.b16 %v2251
    %v2383 = vunpack.c.l.b16 %v2252
    %v2384 = vunpack.c.l.b16 %v2322
    %v2385 = vunpack.c.l.b16 %v2296
    %v2386 = vunpack.c.l.b16 %v2254
    %v2387 = vunpack.c.l.b16 %v2255
    %v2388 = vunpack.c.l.b16 %v2324
    %v2389 = vunpack.c.l.b16 %v2298
    %v2390 = vunpack.c.l.b16 %v2257
    %v2391 = vunpack.c.l.b16 %v2258
    %v2392 = vunpack.c.l.b16 %v2326
    %v2393 = vunpack.c.l.b16 %v2300
    %v2394 = vunpack.c.l.b16 %v2260
    %v2395 = vunpack.c.l.b16 %v2261
    %v2396 = vunpack.c.l.b16 %v2328
    %v2397 = vunpack.c.l.b16 %v2302
    %v2398 = vunpack.c.l.b16 %v2263
    %v2399 = vunpack.c.l.b16 %v2264
    %v2400 = vunpack.c.l.b16 %v2330
    %v2401 = vunpack.c.l.b16 %v2304
    %v2402 = vunpack.c.l.b16 %v2266
    %v2403 = vunpack.c.l.b16 %v2267
    %v2404 = vunpack.c.l.b16 %v2332
    %v2405 = vunpack.c.l.b16 %v2306
    %v2406 = vunpack.c.l.b16 %v2269
    %v2407 = vunpack.c.l.b16 %v2270
    %v2408 = vunpack.c.l.b16 %v2334
    %v2409 = vunpack.c.l.b16 %v2308
    %v2410 = vunpack.c.l.b16 %v2272
    %v2411 = vunpack.c.l.b16 %v2273
    %v2412 = vunpack.c.l.b16 %v2336
    %v2413 = vunpack.c.l.b16 %v2310
    %v2414 = vunpack.c.l.b16 %v2275
    %v2415 = vunpack.c.l.b16 %v2276
    %v2416 = vunpack.c.l.b16 %v2338
    %v2417 = vunpack.c.l.b16 %v2312
    %v2418 = vunpack.c.l.b16 %v2278
    %v2419 = vunpack.c.l.b16 %v2279
    %v2420 = vunpack.c.l.b16 %v2340
    %v2421 = vunpack.c.l.b16 %v2314
    %v2422 = vunpack.c.l.b16 %v2281
    %v2423 = vunpack.c.l.b16 %v2282
    %v2424 = vunpack.c.l.b16 %v2342
    %v2425 = vunpack.c.l.b16 %v2316
    %v2426 = vunpack.c.l.b16 %v2284
    %v2427 = vunpack.c.l.b16 %v2285
    %v2428 = vunpack.c.l.b16 %v2344
    %v2429 = vunpack.c.l.b16 %v2318
    %v2430 = vunpack.c.l.b16 %v2287
    %v2431 = vunpack.c.l.b16 %v2288
    %v2432 = vunpack.c.l.b16 %v2346
    %v2433 = vld [vmem:[#allocation6] sm:$0xff]
    %v2434 = vld [vmem:[#allocation6 + $0x8] sm:$0xff]
    %v2435 = vld [vmem:[#allocation6 + $0x10] sm:$0xff]
    %v2436 = vld [vmem:[#allocation6 + $0x18] sm:$0xff]
    %v2437 = vld [vmem:[#allocation6 + $0x20] sm:$0xff]
    %v2438 = vld [vmem:[#allocation6 + $0x28] sm:$0xff]
    %v2439 = vld [vmem:[#allocation6 + $0x30] sm:$0xff]
    %v2440 = vld [vmem:[#allocation6 + $0x38] sm:$0xff]
    %v2441 = vld [vmem:[#allocation6 + $0x40] sm:$0xff]
    %v2442 = vld [vmem:[#allocation6 + $0x48] sm:$0xff]
    %v2443 = vld [vmem:[#allocation6 + $0x50] sm:$0xff]
    %v2444 = vld [vmem:[#allocation6 + $0x58] sm:$0xff]
    %v2445 = vld [vmem:[#allocation6 + $0x60] sm:$0xff]
    %v2446 = vld [vmem:[#allocation6 + $0x68] sm:$0xff]
    %v2447 = vld [vmem:[#allocation6 + $0x70] sm:$0xff]
    %v2448 = vld [vmem:[#allocation6 + $0x78] sm:$0xff]
    %v2449 = vld [vmem:[#allocation6 + $0x80] sm:$0xff]
    %v2450 = vld [vmem:[#allocation6 + $0x88] sm:$0xff]
    %v2451 = vld [vmem:[#allocation6 + $0x90] sm:$0xff]
    %v2452 = vld [vmem:[#allocation6 + $0x98] sm:$0xff]
    %v2453 = vld [vmem:[#allocation6 + $0xa0] sm:$0xff]
    %v2454 = vld [vmem:[#allocation6 + $0xa8] sm:$0xff]
    %v2455 = vld [vmem:[#allocation6 + $0xb0] sm:$0xff]
    %v2456 = vld [vmem:[#allocation6 + $0xb8] sm:$0xff]
    %v2457 = vld [vmem:[#allocation6 + $0xc0] sm:$0xff]
    %v2458 = vld [vmem:[#allocation6 + $0xc8] sm:$0xff]
    %v2459 = vld [vmem:[#allocation6 + $0xd0] sm:$0xff]
    %v2460 = vld [vmem:[#allocation6 + $0xd8] sm:$0xff]
    %v2461 = vld [vmem:[#allocation6 + $0xe0] sm:$0xff]
    %v2462 = vld [vmem:[#allocation6 + $0xe8] sm:$0xff]
    %v2463 = vld [vmem:[#allocation6 + $0xf0] sm:$0xff]
    %v2464 = vld [vmem:[#allocation6 + $0xf8] sm:$0xff]
    %v2465 = vld [vmem:[#allocation6 + $0x100] sm:$0xff]
    %v2466 = vld [vmem:[#allocation6 + $0x108] sm:$0xff]
    %v2467 = vld [vmem:[#allocation6 + $0x110] sm:$0xff]
    %v2468 = vld [vmem:[#allocation6 + $0x118] sm:$0xff]
    %v2469 = vld [vmem:[#allocation6 + $0x120] sm:$0xff]
    %v2470 = vld [vmem:[#allocation6 + $0x128] sm:$0xff]
    %v2471 = vld [vmem:[#allocation6 + $0x130] sm:$0xff]
    %v2472 = vld [vmem:[#allocation6 + $0x138] sm:$0xff]
    %v2473 = vld [vmem:[#allocation6 + $0x140] sm:$0xff]
    %v2474 = vld [vmem:[#allocation6 + $0x148] sm:$0xff]
    %v2475 = vld [vmem:[#allocation6 + $0x150] sm:$0xff]
    %v2476 = vld [vmem:[#allocation6 + $0x158] sm:$0xff]
    %v2477 = vld [vmem:[#allocation6 + $0x160] sm:$0xff]
    %v2478 = vld [vmem:[#allocation6 + $0x168] sm:$0xff]
    %v2479 = vld [vmem:[#allocation6 + $0x170] sm:$0xff]
    %v2480 = vld [vmem:[#allocation6 + $0x178] sm:$0xff]
    %v2481 = vld [vmem:[#allocation6 + $0x180] sm:$0xff]
    %v2482 = vld [vmem:[#allocation6 + $0x188] sm:$0xff]
    %v2483 = vld [vmem:[#allocation6 + $0x190] sm:$0xff]
    %v2484 = vld [vmem:[#allocation6 + $0x198] sm:$0xff]
    %v2485 = vld [vmem:[#allocation6 + $0x1a0] sm:$0xff]
    %v2486 = vld [vmem:[#allocation6 + $0x1a8] sm:$0xff]
    %v2487 = vld [vmem:[#allocation6 + $0x1b0] sm:$0xff]
    %v2488 = vld [vmem:[#allocation6 + $0x1b8] sm:$0xff]
    %v2489 = vld [vmem:[#allocation6 + $0x1c0] sm:$0xff]
    %v2490 = vld [vmem:[#allocation6 + $0x1c8] sm:$0xff]
    %v2491 = vld [vmem:[#allocation6 + $0x1d0] sm:$0xff]
    %v2492 = vld [vmem:[#allocation6 + $0x1d8] sm:$0xff]
    %v2493 = vld [vmem:[#allocation6 + $0x1e0] sm:$0xff]
    %v2494 = vld [vmem:[#allocation6 + $0x1e8] sm:$0xff]
    %v2495 = vld [vmem:[#allocation6 + $0x1f0] sm:$0xff]
    %v2496 = vld [vmem:[#allocation6 + $0x1f8] sm:$0xff]
    %v2497 = vld [vmem:[#allocation6 + $0x200] sm:$0xff]
    %v2498 = vld [vmem:[#allocation6 + $0x208] sm:$0xff]
    %v2499 = vld [vmem:[#allocation6 + $0x210] sm:$0xff]
    %v2500 = vld [vmem:[#allocation6 + $0x218] sm:$0xff]
    %v2501 = vld [vmem:[#allocation6 + $0x220] sm:$0xff]
    %v2502 = vld [vmem:[#allocation6 + $0x228] sm:$0xff]
    %v2503 = vld [vmem:[#allocation6 + $0x230] sm:$0xff]
    %v2504 = vld [vmem:[#allocation6 + $0x238] sm:$0xff]
    %v2505 = vld [vmem:[#allocation6 + $0x240] sm:$0xff]
    %v2506 = vld [vmem:[#allocation6 + $0x248] sm:$0xff]
    %v2507 = vld [vmem:[#allocation6 + $0x250] sm:$0xff]
    %v2508 = vld [vmem:[#allocation6 + $0x258] sm:$0xff]
    %v2509 = vld [vmem:[#allocation6 + $0x260] sm:$0xff]
    %v2510 = vld [vmem:[#allocation6 + $0x268] sm:$0xff]
    %v2511 = vld [vmem:[#allocation6 + $0x270] sm:$0xff]
    %v2512 = vld [vmem:[#allocation6 + $0x278] sm:$0xff]
    %v2513 = vld [vmem:[#allocation6 + $0x280] sm:$0xff]
    %v2514 = vld [vmem:[#allocation6 + $0x288] sm:$0xff]
    %v2515 = vld [vmem:[#allocation6 + $0x290] sm:$0xff]
    %v2516 = vld [vmem:[#allocation6 + $0x298] sm:$0xff]
    %v2517 = vld [vmem:[#allocation6 + $0x2a0] sm:$0xff]
    %v2518 = vld [vmem:[#allocation6 + $0x2a8] sm:$0xff]
    %v2519 = vld [vmem:[#allocation6 + $0x2b0] sm:$0xff]
    %v2520 = vld [vmem:[#allocation6 + $0x2b8] sm:$0xff]
    %v2521 = vld [vmem:[#allocation6 + $0x2c0] sm:$0xff]
    %v2522 = vld [vmem:[#allocation6 + $0x2c8] sm:$0xff]
    %v2523 = vld [vmem:[#allocation6 + $0x2d0] sm:$0xff]
    %v2524 = vld [vmem:[#allocation6 + $0x2d8] sm:$0xff]
    %v2525 = vld [vmem:[#allocation6 + $0x2e0] sm:$0xff]
    %v2526 = vld [vmem:[#allocation6 + $0x2e8] sm:$0xff]
    %v2527 = vld [vmem:[#allocation6 + $0x2f0] sm:$0xff]
    %v2528 = vld [vmem:[#allocation6 + $0x2f8] sm:$0xff]
    %v2529 = vld [vmem:[#allocation6 + $0x300] sm:$0xff]
    %v2530 = vld [vmem:[#allocation6 + $0x308] sm:$0xff]
    %v2531 = vld [vmem:[#allocation6 + $0x310] sm:$0xff]
    %v2532 = vld [vmem:[#allocation6 + $0x318] sm:$0xff]
    %v2533 = vld [vmem:[#allocation6 + $0x320] sm:$0xff]
    %v2534 = vld [vmem:[#allocation6 + $0x328] sm:$0xff]
    %v2535 = vld [vmem:[#allocation6 + $0x330] sm:$0xff]
    %v2536 = vld [vmem:[#allocation6 + $0x338] sm:$0xff]
    %v2537 = vld [vmem:[#allocation6 + $0x340] sm:$0xff]
    %v2538 = vld [vmem:[#allocation6 + $0x348] sm:$0xff]
    %v2539 = vld [vmem:[#allocation6 + $0x350] sm:$0xff]
    %v2540 = vld [vmem:[#allocation6 + $0x358] sm:$0xff]
    %v2541 = vld [vmem:[#allocation6 + $0x360] sm:$0xff]
    %v2542 = vld [vmem:[#allocation6 + $0x368] sm:$0xff]
    %v2543 = vld [vmem:[#allocation6 + $0x370] sm:$0xff]
    %v2544 = vld [vmem:[#allocation6 + $0x378] sm:$0xff]
    %v2545 = vld [vmem:[#allocation6 + $0x380] sm:$0xff]
    %v2546 = vld [vmem:[#allocation6 + $0x388] sm:$0xff]
    %v2547 = vld [vmem:[#allocation6 + $0x390] sm:$0xff]
    %v2548 = vld [vmem:[#allocation6 + $0x398] sm:$0xff]
    %v2549 = vld [vmem:[#allocation6 + $0x3a0] sm:$0xff]
    %v2550 = vld [vmem:[#allocation6 + $0x3a8] sm:$0xff]
    %v2551 = vld [vmem:[#allocation6 + $0x3b0] sm:$0xff]
    %v2552 = vld [vmem:[#allocation6 + $0x3b8] sm:$0xff]
    %v2553 = vld [vmem:[#allocation6 + $0x3c0] sm:$0xff]
    %v2554 = vld [vmem:[#allocation6 + $0x3c8] sm:$0xff]
    %v2555 = vld [vmem:[#allocation6 + $0x3d0] sm:$0xff]
    %v2556 = vld [vmem:[#allocation6 + $0x3d8] sm:$0xff]
    %v2557 = vld [vmem:[#allocation6 + $0x3e0] sm:$0xff]
    %v2558 = vld [vmem:[#allocation6 + $0x3e8] sm:$0xff]
    %v2559 = vld [vmem:[#allocation6 + $0x3f0] sm:$0xff]
    %v2560 = vld [vmem:[#allocation6 + $0x3f8] sm:$0xff]
    %v2561 = vld [vmem:[#allocation6 + $0x400] sm:$0xff]
    %v2562 = vld [vmem:[#allocation6 + $0x408] sm:$0xff]
    %v2563 = vld [vmem:[#allocation6 + $0x410] sm:$0xff]
    %v2564 = vld [vmem:[#allocation6 + $0x418] sm:$0xff]
    %v2565 = vld [vmem:[#allocation6 + $0x420] sm:$0xff]
    %v2566 = vld [vmem:[#allocation6 + $0x428] sm:$0xff]
    %v2567 = vld [vmem:[#allocation6 + $0x430] sm:$0xff]
    %v2568 = vld [vmem:[#allocation6 + $0x438] sm:$0xff]
    %v2569 = vld [vmem:[#allocation6 + $0x440] sm:$0xff]
    %v2570 = vld [vmem:[#allocation6 + $0x448] sm:$0xff]
    %v2571 = vld [vmem:[#allocation6 + $0x450] sm:$0xff]
    %v2572 = vld [vmem:[#allocation6 + $0x458] sm:$0xff]
    %v2573 = vld [vmem:[#allocation6 + $0x460] sm:$0xff]
    %v2574 = vld [vmem:[#allocation6 + $0x468] sm:$0xff]
    %v2575 = vld [vmem:[#allocation6 + $0x470] sm:$0xff]
    %v2576 = vld [vmem:[#allocation6 + $0x478] sm:$0xff]
    %v2577 = vld [vmem:[#allocation6 + $0x480] sm:$0xff]
    %v2578 = vld [vmem:[#allocation6 + $0x488] sm:$0xff]
    %v2579 = vld [vmem:[#allocation6 + $0x490] sm:$0xff]
    %v2580 = vld [vmem:[#allocation6 + $0x498] sm:$0xff]
    %v2581 = vld [vmem:[#allocation6 + $0x4a0] sm:$0xff]
    %v2582 = vld [vmem:[#allocation6 + $0x4a8] sm:$0xff]
    %v2583 = vld [vmem:[#allocation6 + $0x4b0] sm:$0xff]
    %v2584 = vld [vmem:[#allocation6 + $0x4b8] sm:$0xff]
    %v2585 = vld [vmem:[#allocation6 + $0x4c0] sm:$0xff]
    %v2586 = vld [vmem:[#allocation6 + $0x4c8] sm:$0xff]
    %v2587 = vld [vmem:[#allocation6 + $0x4d0] sm:$0xff]
    %v2588 = vld [vmem:[#allocation6 + $0x4d8] sm:$0xff]
    %v2589 = vld [vmem:[#allocation6 + $0x4e0] sm:$0xff]
    %v2590 = vld [vmem:[#allocation6 + $0x4e8] sm:$0xff]
    %v2591 = vld [vmem:[#allocation6 + $0x4f0] sm:$0xff]
    %v2592 = vld [vmem:[#allocation6 + $0x4f8] sm:$0xff]
    %v2593 = vld [vmem:[#allocation6 + $0x500] sm:$0xff]
    %v2594 = vld [vmem:[#allocation6 + $0x508] sm:$0xff]
    %v2595 = vld [vmem:[#allocation6 + $0x510] sm:$0xff]
    %v2596 = vld [vmem:[#allocation6 + $0x518] sm:$0xff]
    %v2597 = vld [vmem:[#allocation6 + $0x520] sm:$0xff]
    %v2598 = vld [vmem:[#allocation6 + $0x528] sm:$0xff]
    %v2599 = vld [vmem:[#allocation6 + $0x530] sm:$0xff]
    %v2600 = vld [vmem:[#allocation6 + $0x538] sm:$0xff]
    %v2601 = vld [vmem:[#allocation6 + $0x540] sm:$0xff]
    %v2602 = vld [vmem:[#allocation6 + $0x548] sm:$0xff]
    %v2603 = vld [vmem:[#allocation6 + $0x550] sm:$0xff]
    %v2604 = vld [vmem:[#allocation6 + $0x558] sm:$0xff]
    %v2605 = vld [vmem:[#allocation6 + $0x560] sm:$0xff]
    %v2606 = vld [vmem:[#allocation6 + $0x568] sm:$0xff]
    %v2607 = vld [vmem:[#allocation6 + $0x570] sm:$0xff]
    %v2608 = vld [vmem:[#allocation6 + $0x578] sm:$0xff]
    %v2609 = vld [vmem:[#allocation6 + $0x580] sm:$0xff]
    %v2610 = vld [vmem:[#allocation6 + $0x588] sm:$0xff]
    %v2611 = vld [vmem:[#allocation6 + $0x590] sm:$0xff]
    %v2612 = vld [vmem:[#allocation6 + $0x598] sm:$0xff]
    %v2613 = vld [vmem:[#allocation6 + $0x5a0] sm:$0xff]
    %v2614 = vld [vmem:[#allocation6 + $0x5a8] sm:$0xff]
    %v2615 = vld [vmem:[#allocation6 + $0x5b0] sm:$0xff]
    %v2616 = vld [vmem:[#allocation6 + $0x5b8] sm:$0xff]
    %v2617 = vld [vmem:[#allocation6 + $0x5c0] sm:$0xff]
    %v2618 = vld [vmem:[#allocation6 + $0x5c8] sm:$0xff]
    %v2619 = vld [vmem:[#allocation6 + $0x5d0] sm:$0xff]
    %v2620 = vld [vmem:[#allocation6 + $0x5d8] sm:$0xff]
    %v2621 = vld [vmem:[#allocation6 + $0x5e0] sm:$0xff]
    %v2622 = vld [vmem:[#allocation6 + $0x5e8] sm:$0xff]
    %v2623 = vld [vmem:[#allocation6 + $0x5f0] sm:$0xff]
    %v2624 = vld [vmem:[#allocation6 + $0x5f8] sm:$0xff]
    %v2625 = vld [vmem:[#allocation6 + $0x600] sm:$0xff]
    %v2626 = vld [vmem:[#allocation6 + $0x608] sm:$0xff]
    %v2627 = vld [vmem:[#allocation6 + $0x610] sm:$0xff]
    %v2628 = vld [vmem:[#allocation6 + $0x618] sm:$0xff]
    %v2629 = vld [vmem:[#allocation6 + $0x620] sm:$0xff]
    %v2630 = vld [vmem:[#allocation6 + $0x628] sm:$0xff]
    %v2631 = vld [vmem:[#allocation6 + $0x630] sm:$0xff]
    %v2632 = vld [vmem:[#allocation6 + $0x638] sm:$0xff]
    %v2633 = vld [vmem:[#allocation6 + $0x640] sm:$0xff]
    %v2634 = vld [vmem:[#allocation6 + $0x648] sm:$0xff]
    %v2635 = vld [vmem:[#allocation6 + $0x650] sm:$0xff]
    %v2636 = vld [vmem:[#allocation6 + $0x658] sm:$0xff]
    %v2637 = vld [vmem:[#allocation6 + $0x660] sm:$0xff]
    %v2638 = vld [vmem:[#allocation6 + $0x668] sm:$0xff]
    %v2639 = vld [vmem:[#allocation6 + $0x670] sm:$0xff]
    %v2640 = vld [vmem:[#allocation6 + $0x678] sm:$0xff]
    %v2641 = vld [vmem:[#allocation6 + $0x680] sm:$0xff]
    %v2642 = vld [vmem:[#allocation6 + $0x688] sm:$0xff]
    %v2643 = vld [vmem:[#allocation6 + $0x690] sm:$0xff]
    %v2644 = vld [vmem:[#allocation6 + $0x698] sm:$0xff]
    %v2645 = vld [vmem:[#allocation6 + $0x6a0] sm:$0xff]
    %v2646 = vld [vmem:[#allocation6 + $0x6a8] sm:$0xff]
    %v2647 = vld [vmem:[#allocation6 + $0x6b0] sm:$0xff]
    %v2648 = vld [vmem:[#allocation6 + $0x6b8] sm:$0xff]
    %v2649 = vld [vmem:[#allocation6 + $0x6c0] sm:$0xff]
    %v2650 = vld [vmem:[#allocation6 + $0x6c8] sm:$0xff]
    %v2651 = vld [vmem:[#allocation6 + $0x6d0] sm:$0xff]
    %v2652 = vld [vmem:[#allocation6 + $0x6d8] sm:$0xff]
    %v2653 = vld [vmem:[#allocation6 + $0x6e0] sm:$0xff]
    %v2654 = vld [vmem:[#allocation6 + $0x6e8] sm:$0xff]
    %v2655 = vld [vmem:[#allocation6 + $0x6f0] sm:$0xff]
    %v2656 = vld [vmem:[#allocation6 + $0x6f8] sm:$0xff]
    %v2657 = vld [vmem:[#allocation6 + $0x700] sm:$0xff]
    %v2658 = vld [vmem:[#allocation6 + $0x708] sm:$0xff]
    %v2659 = vld [vmem:[#allocation6 + $0x710] sm:$0xff]
    %v2660 = vld [vmem:[#allocation6 + $0x718] sm:$0xff]
    %v2661 = vld [vmem:[#allocation6 + $0x720] sm:$0xff]
    %v2662 = vld [vmem:[#allocation6 + $0x728] sm:$0xff]
    %v2663 = vld [vmem:[#allocation6 + $0x730] sm:$0xff]
    %v2664 = vld [vmem:[#allocation6 + $0x738] sm:$0xff]
    %v2665 = vld [vmem:[#allocation6 + $0x740] sm:$0xff]
    %v2666 = vld [vmem:[#allocation6 + $0x748] sm:$0xff]
    %v2667 = vld [vmem:[#allocation6 + $0x750] sm:$0xff]
    %v2668 = vld [vmem:[#allocation6 + $0x758] sm:$0xff]
    %v2669 = vld [vmem:[#allocation6 + $0x760] sm:$0xff]
    %v2670 = vld [vmem:[#allocation6 + $0x768] sm:$0xff]
    %v2671 = vld [vmem:[#allocation6 + $0x770] sm:$0xff]
    %v2672 = vld [vmem:[#allocation6 + $0x778] sm:$0xff]
    %v2673 = vld [vmem:[#allocation6 + $0x780] sm:$0xff]
    %v2674 = vld [vmem:[#allocation6 + $0x788] sm:$0xff]
    %v2675 = vld [vmem:[#allocation6 + $0x790] sm:$0xff]
    %v2676 = vld [vmem:[#allocation6 + $0x798] sm:$0xff]
    %v2677 = vld [vmem:[#allocation6 + $0x7a0] sm:$0xff]
    %v2678 = vld [vmem:[#allocation6 + $0x7a8] sm:$0xff]
    %v2679 = vld [vmem:[#allocation6 + $0x7b0] sm:$0xff]
    %v2680 = vld [vmem:[#allocation6 + $0x7b8] sm:$0xff]
    %v2681 = vld [vmem:[#allocation6 + $0x7c0] sm:$0xff]
    %v2682 = vld [vmem:[#allocation6 + $0x7c8] sm:$0xff]
    %v2683 = vld [vmem:[#allocation6 + $0x7d0] sm:$0xff]
    %v2684 = vld [vmem:[#allocation6 + $0x7d8] sm:$0xff]
    %v2685 = vld [vmem:[#allocation6 + $0x7e0] sm:$0xff]
    %v2686 = vld [vmem:[#allocation6 + $0x7e8] sm:$0xff]
    %v2687 = vld [vmem:[#allocation6 + $0x7f0] sm:$0xff]
    %v2688 = vld [vmem:[#allocation6 + $0x7f8] sm:$0xff]
    %v2689 = vld [vmem:[#allocation6 + $0x800] sm:$0xff]
    %v2690 = vld [vmem:[#allocation6 + $0x808] sm:$0xff]
    %v2691 = vld [vmem:[#allocation6 + $0x810] sm:$0xff]
    %v2692 = vld [vmem:[#allocation6 + $0x818] sm:$0xff]
    %v2693 = vld [vmem:[#allocation6 + $0x820] sm:$0xff]
    %v2694 = vld [vmem:[#allocation6 + $0x828] sm:$0xff]
    %v2695 = vld [vmem:[#allocation6 + $0x830] sm:$0xff]
    %v2696 = vld [vmem:[#allocation6 + $0x838] sm:$0xff]
    %v2697 = vld [vmem:[#allocation6 + $0x840] sm:$0xff]
    %v2698 = vld [vmem:[#allocation6 + $0x848] sm:$0xff]
    %v2699 = vld [vmem:[#allocation6 + $0x850] sm:$0xff]
    %v2700 = vld [vmem:[#allocation6 + $0x858] sm:$0xff]
    %v2701 = vld [vmem:[#allocation6 + $0x860] sm:$0xff]
    %v2702 = vld [vmem:[#allocation6 + $0x868] sm:$0xff]
    %v2703 = vld [vmem:[#allocation6 + $0x870] sm:$0xff]
    %v2704 = vld [vmem:[#allocation6 + $0x878] sm:$0xff]
    %v2705 = vld [vmem:[#allocation6 + $0x880] sm:$0xff]
    %v2706 = vld [vmem:[#allocation6 + $0x888] sm:$0xff]
    %v2707 = vld [vmem:[#allocation6 + $0x890] sm:$0xff]
    %v2708 = vld [vmem:[#allocation6 + $0x898] sm:$0xff]
    %v2709 = vld [vmem:[#allocation6 + $0x8a0] sm:$0xff]
    %v2710 = vld [vmem:[#allocation6 + $0x8a8] sm:$0xff]
    %v2711 = vld [vmem:[#allocation6 + $0x8b0] sm:$0xff]
    %v2712 = vld [vmem:[#allocation6 + $0x8b8] sm:$0xff]
    %v2713 = vld [vmem:[#allocation6 + $0x8c0] sm:$0xff]
    %v2714 = vld [vmem:[#allocation6 + $0x8c8] sm:$0xff]
    %v2715 = vld [vmem:[#allocation6 + $0x8d0] sm:$0xff]
    %v2716 = vld [vmem:[#allocation6 + $0x8d8] sm:$0xff]
    %v2717 = vld [vmem:[#allocation6 + $0x8e0] sm:$0xff]
    %v2718 = vld [vmem:[#allocation6 + $0x8e8] sm:$0xff]
    %v2719 = vld [vmem:[#allocation6 + $0x8f0] sm:$0xff]
    %v2720 = vld [vmem:[#allocation6 + $0x8f8] sm:$0xff]
    %v2721 = vld [vmem:[#allocation6 + $0x900] sm:$0xff]
    %v2722 = vld [vmem:[#allocation6 + $0x908] sm:$0xff]
    %v2723 = vld [vmem:[#allocation6 + $0x910] sm:$0xff]
    %v2724 = vld [vmem:[#allocation6 + $0x918] sm:$0xff]
    %v2725 = vld [vmem:[#allocation6 + $0x920] sm:$0xff]
    %v2726 = vld [vmem:[#allocation6 + $0x928] sm:$0xff]
    %v2727 = vld [vmem:[#allocation6 + $0x930] sm:$0xff]
    %v2728 = vld [vmem:[#allocation6 + $0x938] sm:$0xff]
    %v2729 = vld [vmem:[#allocation6 + $0x940] sm:$0xff]
    %v2730 = vld [vmem:[#allocation6 + $0x948] sm:$0xff]
    %v2731 = vld [vmem:[#allocation6 + $0x950] sm:$0xff]
    %v2732 = vld [vmem:[#allocation6 + $0x958] sm:$0xff]
    %v2733 = vld [vmem:[#allocation6 + $0x960] sm:$0xff]
    %v2734 = vld [vmem:[#allocation6 + $0x968] sm:$0xff]
    %v2735 = vld [vmem:[#allocation6 + $0x970] sm:$0xff]
    %v2736 = vld [vmem:[#allocation6 + $0x978] sm:$0xff]
    %v2737 = vld [vmem:[#allocation6 + $0x980] sm:$0xff]
    %v2738 = vld [vmem:[#allocation6 + $0x988] sm:$0xff]
    %v2739 = vld [vmem:[#allocation6 + $0x990] sm:$0xff]
    %v2740 = vld [vmem:[#allocation6 + $0x998] sm:$0xff]
    %v2741 = vld [vmem:[#allocation6 + $0x9a0] sm:$0xff]
    %v2742 = vld [vmem:[#allocation6 + $0x9a8] sm:$0xff]
    %v2743 = vld [vmem:[#allocation6 + $0x9b0] sm:$0xff]
    %v2744 = vld [vmem:[#allocation6 + $0x9b8] sm:$0xff]
    %v2745 = vld [vmem:[#allocation6 + $0x9c0] sm:$0xff]
    %v2746 = vld [vmem:[#allocation6 + $0x9c8] sm:$0xff]
    %v2747 = vld [vmem:[#allocation6 + $0x9d0] sm:$0xff]
    %v2748 = vld [vmem:[#allocation6 + $0x9d8] sm:$0xff]
    %v2749 = vld [vmem:[#allocation6 + $0x9e0] sm:$0xff]
    %v2750 = vld [vmem:[#allocation6 + $0x9e8] sm:$0xff]
    %v2751 = vld [vmem:[#allocation6 + $0x9f0] sm:$0xff]
    %v2752 = vld [vmem:[#allocation6 + $0x9f8] sm:$0xff]
    %v2753 = vld [vmem:[#allocation6 + $0xa00] sm:$0xff]
    %v2754 = vld [vmem:[#allocation6 + $0xa08] sm:$0xff]
    %v2755 = vld [vmem:[#allocation6 + $0xa10] sm:$0xff]
    %v2756 = vld [vmem:[#allocation6 + $0xa18] sm:$0xff]
    %v2757 = vld [vmem:[#allocation6 + $0xa20] sm:$0xff]
    %v2758 = vld [vmem:[#allocation6 + $0xa28] sm:$0xff]
    %v2759 = vld [vmem:[#allocation6 + $0xa30] sm:$0xff]
    %v2760 = vld [vmem:[#allocation6 + $0xa38] sm:$0xff]
    %v2761 = vld [vmem:[#allocation6 + $0xa40] sm:$0xff]
    %v2762 = vld [vmem:[#allocation6 + $0xa48] sm:$0xff]
    %v2763 = vld [vmem:[#allocation6 + $0xa50] sm:$0xff]
    %v2764 = vld [vmem:[#allocation6 + $0xa58] sm:$0xff]
    %v2765 = vld [vmem:[#allocation6 + $0xa60] sm:$0xff]
    %v2766 = vld [vmem:[#allocation6 + $0xa68] sm:$0xff]
    %v2767 = vld [vmem:[#allocation6 + $0xa70] sm:$0xff]
    %v2768 = vld [vmem:[#allocation6 + $0xa78] sm:$0xff]
    %v2769 = vld [vmem:[#allocation6 + $0xa80] sm:$0xff]
    %v2770 = vld [vmem:[#allocation6 + $0xa88] sm:$0xff]
    %v2771 = vld [vmem:[#allocation6 + $0xa90] sm:$0xff]
    %v2772 = vld [vmem:[#allocation6 + $0xa98] sm:$0xff]
    %v2773 = vld [vmem:[#allocation6 + $0xaa0] sm:$0xff]
    %v2774 = vld [vmem:[#allocation6 + $0xaa8] sm:$0xff]
    %v2775 = vld [vmem:[#allocation6 + $0xab0] sm:$0xff]
    %v2776 = vld [vmem:[#allocation6 + $0xab8] sm:$0xff]
    %v2777 = vld [vmem:[#allocation6 + $0xac0] sm:$0xff]
    %v2778 = vld [vmem:[#allocation6 + $0xac8] sm:$0xff]
    %v2779 = vld [vmem:[#allocation6 + $0xad0] sm:$0xff]
    %v2780 = vld [vmem:[#allocation6 + $0xad8] sm:$0xff]
    %v2781 = vld [vmem:[#allocation6 + $0xae0] sm:$0xff]
    %v2782 = vld [vmem:[#allocation6 + $0xae8] sm:$0xff]
    %v2783 = vld [vmem:[#allocation6 + $0xaf0] sm:$0xff]
    %v2784 = vld [vmem:[#allocation6 + $0xaf8] sm:$0xff]
    %v2785 = vld [vmem:[#allocation6 + $0xb00] sm:$0xff]
    %v2786 = vld [vmem:[#allocation6 + $0xb08] sm:$0xff]
    %v2787 = vld [vmem:[#allocation6 + $0xb10] sm:$0xff]
    %v2788 = vld [vmem:[#allocation6 + $0xb18] sm:$0xff]
    %v2789 = vld [vmem:[#allocation6 + $0xb20] sm:$0xff]
    %v2790 = vld [vmem:[#allocation6 + $0xb28] sm:$0xff]
    %v2791 = vld [vmem:[#allocation6 + $0xb30] sm:$0xff]
    %v2792 = vld [vmem:[#allocation6 + $0xb38] sm:$0xff]
    %v2793 = vld [vmem:[#allocation6 + $0xb40] sm:$0xff]
    %v2794 = vld [vmem:[#allocation6 + $0xb48] sm:$0xff]
    %v2795 = vld [vmem:[#allocation6 + $0xb50] sm:$0xff]
    %v2796 = vld [vmem:[#allocation6 + $0xb58] sm:$0xff]
    %v2797 = vld [vmem:[#allocation6 + $0xb60] sm:$0xff]
    %v2798 = vld [vmem:[#allocation6 + $0xb68] sm:$0xff]
    %v2799 = vld [vmem:[#allocation6 + $0xb70] sm:$0xff]
    %v2800 = vld [vmem:[#allocation6 + $0xb78] sm:$0xff]
    %v2801 = vld [vmem:[#allocation6 + $0xb80] sm:$0xff]
    %v2802 = vld [vmem:[#allocation6 + $0xb88] sm:$0xff]
    %v2803 = vld [vmem:[#allocation6 + $0xb90] sm:$0xff]
    %v2804 = vld [vmem:[#allocation6 + $0xb98] sm:$0xff]
    %v2805 = vld [vmem:[#allocation6 + $0xba0] sm:$0xff]
    %v2806 = vld [vmem:[#allocation6 + $0xba8] sm:$0xff]
    %v2807 = vld [vmem:[#allocation6 + $0xbb0] sm:$0xff]
    %v2808 = vld [vmem:[#allocation6 + $0xbb8] sm:$0xff]
    %v2809 = vld [vmem:[#allocation6 + $0xbc0] sm:$0xff]
    %v2810 = vld [vmem:[#allocation6 + $0xbc8] sm:$0xff]
    %v2811 = vld [vmem:[#allocation6 + $0xbd0] sm:$0xff]
    %v2812 = vld [vmem:[#allocation6 + $0xbd8] sm:$0xff]
    %v2813 = vld [vmem:[#allocation6 + $0xbe0] sm:$0xff]
    %v2814 = vld [vmem:[#allocation6 + $0xbe8] sm:$0xff]
    %v2815 = vld [vmem:[#allocation6 + $0xbf0] sm:$0xff]
    %v2816 = vld [vmem:[#allocation6 + $0xbf8] sm:$0xff]
    %v2817 = vld [vmem:[#allocation6 + $0xc00] sm:$0xff]
    %v2818 = vld [vmem:[#allocation6 + $0xc08] sm:$0xff]
    %v2819 = vld [vmem:[#allocation6 + $0xc10] sm:$0xff]
    %v2820 = vld [vmem:[#allocation6 + $0xc18] sm:$0xff]
    %v2821 = vld [vmem:[#allocation6 + $0xc20] sm:$0xff]
    %v2822 = vld [vmem:[#allocation6 + $0xc28] sm:$0xff]
    %v2823 = vld [vmem:[#allocation6 + $0xc30] sm:$0xff]
    %v2824 = vld [vmem:[#allocation6 + $0xc38] sm:$0xff]
    %v2825 = vld [vmem:[#allocation6 + $0xc40] sm:$0xff]
    %v2826 = vld [vmem:[#allocation6 + $0xc48] sm:$0xff]
    %v2827 = vld [vmem:[#allocation6 + $0xc50] sm:$0xff]
    %v2828 = vld [vmem:[#allocation6 + $0xc58] sm:$0xff]
    %v2829 = vld [vmem:[#allocation6 + $0xc60] sm:$0xff]
    %v2830 = vld [vmem:[#allocation6 + $0xc68] sm:$0xff]
    %v2831 = vld [vmem:[#allocation6 + $0xc70] sm:$0xff]
    %v2832 = vld [vmem:[#allocation6 + $0xc78] sm:$0xff]
    %v2833 = vld [vmem:[#allocation6 + $0xc80] sm:$0xff]
    %v2834 = vld [vmem:[#allocation6 + $0xc88] sm:$0xff]
    %v2835 = vld [vmem:[#allocation6 + $0xc90] sm:$0xff]
    %v2836 = vld [vmem:[#allocation6 + $0xc98] sm:$0xff]
    %v2837 = vld [vmem:[#allocation6 + $0xca0] sm:$0xff]
    %v2838 = vld [vmem:[#allocation6 + $0xca8] sm:$0xff]
    %v2839 = vld [vmem:[#allocation6 + $0xcb0] sm:$0xff]
    %v2840 = vld [vmem:[#allocation6 + $0xcb8] sm:$0xff]
    %v2841 = vld [vmem:[#allocation6 + $0xcc0] sm:$0xff]
    %v2842 = vld [vmem:[#allocation6 + $0xcc8] sm:$0xff]
    %v2843 = vld [vmem:[#allocation6 + $0xcd0] sm:$0xff]
    %v2844 = vld [vmem:[#allocation6 + $0xcd8] sm:$0xff]
    %v2845 = vld [vmem:[#allocation6 + $0xce0] sm:$0xff]
    %v2846 = vld [vmem:[#allocation6 + $0xce8] sm:$0xff]
    %v2847 = vld [vmem:[#allocation6 + $0xcf0] sm:$0xff]
    %v2848 = vld [vmem:[#allocation6 + $0xcf8] sm:$0xff]
    %v2849 = vld [vmem:[#allocation6 + $0xd00] sm:$0xff]
    %v2850 = vld [vmem:[#allocation6 + $0xd08] sm:$0xff]
    %v2851 = vld [vmem:[#allocation6 + $0xd10] sm:$0xff]
    %v2852 = vld [vmem:[#allocation6 + $0xd18] sm:$0xff]
    %v2853 = vld [vmem:[#allocation6 + $0xd20] sm:$0xff]
    %v2854 = vld [vmem:[#allocation6 + $0xd28] sm:$0xff]
    %v2855 = vld [vmem:[#allocation6 + $0xd30] sm:$0xff]
    %v2856 = vld [vmem:[#allocation6 + $0xd38] sm:$0xff]
    %v2857 = vld [vmem:[#allocation6 + $0xd40] sm:$0xff]
    %v2858 = vld [vmem:[#allocation6 + $0xd48] sm:$0xff]
    %v2859 = vld [vmem:[#allocation6 + $0xd50] sm:$0xff]
    %v2860 = vld [vmem:[#allocation6 + $0xd58] sm:$0xff]
    %v2861 = vld [vmem:[#allocation6 + $0xd60] sm:$0xff]
    %v2862 = vld [vmem:[#allocation6 + $0xd68] sm:$0xff]
    %v2863 = vld [vmem:[#allocation6 + $0xd70] sm:$0xff]
    %v2864 = vld [vmem:[#allocation6 + $0xd78] sm:$0xff]
    %v2865 = vld [vmem:[#allocation6 + $0xd80] sm:$0xff]
    %v2866 = vld [vmem:[#allocation6 + $0xd88] sm:$0xff]
    %v2867 = vld [vmem:[#allocation6 + $0xd90] sm:$0xff]
    %v2868 = vld [vmem:[#allocation6 + $0xd98] sm:$0xff]
    %v2869 = vld [vmem:[#allocation6 + $0xda0] sm:$0xff]
    %v2870 = vld [vmem:[#allocation6 + $0xda8] sm:$0xff]
    %v2871 = vld [vmem:[#allocation6 + $0xdb0] sm:$0xff]
    %v2872 = vld [vmem:[#allocation6 + $0xdb8] sm:$0xff]
    %v2873 = vld [vmem:[#allocation6 + $0xdc0] sm:$0xff]
    %v2874 = vld [vmem:[#allocation6 + $0xdc8] sm:$0xff]
    %v2875 = vld [vmem:[#allocation6 + $0xdd0] sm:$0xff]
    %v2876 = vld [vmem:[#allocation6 + $0xdd8] sm:$0xff]
    %v2877 = vld [vmem:[#allocation6 + $0xde0] sm:$0xff]
    %v2878 = vld [vmem:[#allocation6 + $0xde8] sm:$0xff]
    %v2879 = vld [vmem:[#allocation6 + $0xdf0] sm:$0xff]
    %v2880 = vld [vmem:[#allocation6 + $0xdf8] sm:$0xff]
    %v2881 = vld [vmem:[#allocation6 + $0xe00] sm:$0xff]
    %v2882 = vld [vmem:[#allocation6 + $0xe08] sm:$0xff]
    %v2883 = vld [vmem:[#allocation6 + $0xe10] sm:$0xff]
    %v2884 = vld [vmem:[#allocation6 + $0xe18] sm:$0xff]
    %v2885 = vld [vmem:[#allocation6 + $0xe20] sm:$0xff]
    %v2886 = vld [vmem:[#allocation6 + $0xe28] sm:$0xff]
    %v2887 = vld [vmem:[#allocation6 + $0xe30] sm:$0xff]
    %v2888 = vld [vmem:[#allocation6 + $0xe38] sm:$0xff]
    %v2889 = vld [vmem:[#allocation6 + $0xe40] sm:$0xff]
    %v2890 = vld [vmem:[#allocation6 + $0xe48] sm:$0xff]
    %v2891 = vld [vmem:[#allocation6 + $0xe50] sm:$0xff]
    %v2892 = vld [vmem:[#allocation6 + $0xe58] sm:$0xff]
    %v2893 = vld [vmem:[#allocation6 + $0xe60] sm:$0xff]
    %v2894 = vld [vmem:[#allocation6 + $0xe68] sm:$0xff]
    %v2895 = vld [vmem:[#allocation6 + $0xe70] sm:$0xff]
    %v2896 = vld [vmem:[#allocation6 + $0xe78] sm:$0xff]
    %v2897 = vld [vmem:[#allocation6 + $0xe80] sm:$0xff]
    %v2898 = vld [vmem:[#allocation6 + $0xe88] sm:$0xff]
    %v2899 = vld [vmem:[#allocation6 + $0xe90] sm:$0xff]
    %v2900 = vld [vmem:[#allocation6 + $0xe98] sm:$0xff]
    %v2901 = vld [vmem:[#allocation6 + $0xea0] sm:$0xff]
    %v2902 = vld [vmem:[#allocation6 + $0xea8] sm:$0xff]
    %v2903 = vld [vmem:[#allocation6 + $0xeb0] sm:$0xff]
    %v2904 = vld [vmem:[#allocation6 + $0xeb8] sm:$0xff]
    %v2905 = vld [vmem:[#allocation6 + $0xec0] sm:$0xff]
    %v2906 = vld [vmem:[#allocation6 + $0xec8] sm:$0xff]
    %v2907 = vld [vmem:[#allocation6 + $0xed0] sm:$0xff]
    %v2908 = vld [vmem:[#allocation6 + $0xed8] sm:$0xff]
    %v2909 = vld [vmem:[#allocation6 + $0xee0] sm:$0xff]
    %v2910 = vld [vmem:[#allocation6 + $0xee8] sm:$0xff]
    %v2911 = vld [vmem:[#allocation6 + $0xef0] sm:$0xff]
    %v2912 = vld [vmem:[#allocation6 + $0xef8] sm:$0xff]
    %v2913 = vld [vmem:[#allocation6 + $0xf00] sm:$0xff]
    %v2914 = vld [vmem:[#allocation6 + $0xf08] sm:$0xff]
    %v2915 = vld [vmem:[#allocation6 + $0xf10] sm:$0xff]
    %v2916 = vld [vmem:[#allocation6 + $0xf18] sm:$0xff]
    %v2917 = vld [vmem:[#allocation6 + $0xf20] sm:$0xff]
    %v2918 = vld [vmem:[#allocation6 + $0xf28] sm:$0xff]
    %v2919 = vld [vmem:[#allocation6 + $0xf30] sm:$0xff]
    %v2920 = vld [vmem:[#allocation6 + $0xf38] sm:$0xff]
    %v2921 = vld [vmem:[#allocation6 + $0xf40] sm:$0xff]
    %v2922 = vld [vmem:[#allocation6 + $0xf48] sm:$0xff]
    %v2923 = vld [vmem:[#allocation6 + $0xf50] sm:$0xff]
    %v2924 = vld [vmem:[#allocation6 + $0xf58] sm:$0xff]
    %v2925 = vld [vmem:[#allocation6 + $0xf60] sm:$0xff]
    %v2926 = vld [vmem:[#allocation6 + $0xf68] sm:$0xff]
    %v2927 = vld [vmem:[#allocation6 + $0xf70] sm:$0xff]
    %v2928 = vld [vmem:[#allocation6 + $0xf78] sm:$0xff]
    %v2929 = vld [vmem:[#allocation6 + $0xf80] sm:$0xff]
    %v2930 = vld [vmem:[#allocation6 + $0xf88] sm:$0xff]
    %v2931 = vld [vmem:[#allocation6 + $0xf90] sm:$0xff]
    %v2932 = vld [vmem:[#allocation6 + $0xf98] sm:$0xff]
    %v2933 = vld [vmem:[#allocation6 + $0xfa0] sm:$0xff]
    %v2934 = vld [vmem:[#allocation6 + $0xfa8] sm:$0xff]
    %v2935 = vld [vmem:[#allocation6 + $0xfb0] sm:$0xff]
    %v2936 = vld [vmem:[#allocation6 + $0xfb8] sm:$0xff]
    %v2937 = vld [vmem:[#allocation6 + $0xfc0] sm:$0xff]
    %v2938 = vld [vmem:[#allocation6 + $0xfc8] sm:$0xff]
    %v2939 = vld [vmem:[#allocation6 + $0xfd0] sm:$0xff]
    %v2940 = vld [vmem:[#allocation6 + $0xfd8] sm:$0xff]
    %v2941 = vld [vmem:[#allocation6 + $0xfe0] sm:$0xff]
    %v2942 = vld [vmem:[#allocation6 + $0xfe8] sm:$0xff]
    %v2943 = vld [vmem:[#allocation6 + $0xff0] sm:$0xff]
    %v2944 = vld [vmem:[#allocation6 + $0xff8] sm:$0xff]
    %v2945 = vld [vmem:[#allocation6 + $0x1000] sm:$0xff]
    %v2946 = vld [vmem:[#allocation6 + $0x1008] sm:$0xff]
    %v2947 = vld [vmem:[#allocation6 + $0x1010] sm:$0xff]
    %v2948 = vld [vmem:[#allocation6 + $0x1018] sm:$0xff]
    %v2949 = vld [vmem:[#allocation6 + $0x1020] sm:$0xff]
    %v2950 = vld [vmem:[#allocation6 + $0x1028] sm:$0xff]
    %v2951 = vld [vmem:[#allocation6 + $0x1030] sm:$0xff]
    %v2952 = vld [vmem:[#allocation6 + $0x1038] sm:$0xff]
    %v2953 = vld [vmem:[#allocation6 + $0x1040] sm:$0xff]
    %v2954 = vld [vmem:[#allocation6 + $0x1048] sm:$0xff]
    %v2955 = vld [vmem:[#allocation6 + $0x1050] sm:$0xff]
    %v2956 = vld [vmem:[#allocation6 + $0x1058] sm:$0xff]
    %v2957 = vld [vmem:[#allocation6 + $0x1060] sm:$0xff]
    %v2958 = vld [vmem:[#allocation6 + $0x1068] sm:$0xff]
    %v2959 = vld [vmem:[#allocation6 + $0x1070] sm:$0xff]
    %v2960 = vld [vmem:[#allocation6 + $0x1078] sm:$0xff]
    %v2961 = vld [vmem:[#allocation6 + $0x1080] sm:$0xff]
    %v2962 = vld [vmem:[#allocation6 + $0x1088] sm:$0xff]
    %v2963 = vld [vmem:[#allocation6 + $0x1090] sm:$0xff]
    %v2964 = vld [vmem:[#allocation6 + $0x1098] sm:$0xff]
    %v2965 = vld [vmem:[#allocation6 + $0x10a0] sm:$0xff]
    %v2966 = vld [vmem:[#allocation6 + $0x10a8] sm:$0xff]
    %v2967 = vld [vmem:[#allocation6 + $0x10b0] sm:$0xff]
    %v2968 = vld [vmem:[#allocation6 + $0x10b8] sm:$0xff]
    %v2969 = vld [vmem:[#allocation6 + $0x10c0] sm:$0xff]
    %v2970 = vld [vmem:[#allocation6 + $0x10c8] sm:$0xff]
    %v2971 = vld [vmem:[#allocation6 + $0x10d0] sm:$0xff]
    %v2972 = vld [vmem:[#allocation6 + $0x10d8] sm:$0xff]
    %v2973 = vld [vmem:[#allocation6 + $0x10e0] sm:$0xff]
    %v2974 = vld [vmem:[#allocation6 + $0x10e8] sm:$0xff]
    %v2975 = vld [vmem:[#allocation6 + $0x10f0] sm:$0xff]
    %v2976 = vld [vmem:[#allocation6 + $0x10f8] sm:$0xff]
    %v2977 = vld [vmem:[#allocation6 + $0x1100] sm:$0xff]
    %v2978 = vld [vmem:[#allocation6 + $0x1108] sm:$0xff]
    %v2979 = vld [vmem:[#allocation6 + $0x1110] sm:$0xff]
    %v2980 = vld [vmem:[#allocation6 + $0x1118] sm:$0xff]
    %v2981 = vld [vmem:[#allocation6 + $0x1120] sm:$0xff]
    %v2982 = vld [vmem:[#allocation6 + $0x1128] sm:$0xff]
    %v2983 = vld [vmem:[#allocation6 + $0x1130] sm:$0xff]
    %v2984 = vld [vmem:[#allocation6 + $0x1138] sm:$0xff]
    %v2985 = vld [vmem:[#allocation6 + $0x1140] sm:$0xff]
    %v2986 = vld [vmem:[#allocation6 + $0x1148] sm:$0xff]
    %v2987 = vld [vmem:[#allocation6 + $0x1150] sm:$0xff]
    %v2988 = vld [vmem:[#allocation6 + $0x1158] sm:$0xff]
    %v2989 = vld [vmem:[#allocation6 + $0x1160] sm:$0xff]
    %v2990 = vld [vmem:[#allocation6 + $0x1168] sm:$0xff]
    %v2991 = vld [vmem:[#allocation6 + $0x1170] sm:$0xff]
    %v2992 = vld [vmem:[#allocation6 + $0x1178] sm:$0xff]
    %v2993 = vld [vmem:[#allocation6 + $0x1180] sm:$0xff]
    %v2994 = vld [vmem:[#allocation6 + $0x1188] sm:$0xff]
    %v2995 = vld [vmem:[#allocation6 + $0x1190] sm:$0xff]
    %v2996 = vld [vmem:[#allocation6 + $0x1198] sm:$0xff]
    %v2997 = vld [vmem:[#allocation6 + $0x11a0] sm:$0xff]
    %v2998 = vld [vmem:[#allocation6 + $0x11a8] sm:$0xff]
    %v2999 = vld [vmem:[#allocation6 + $0x11b0] sm:$0xff]
    %v3000 = vld [vmem:[#allocation6 + $0x11b8] sm:$0xff]
    %v3001 = vld [vmem:[#allocation6 + $0x11c0] sm:$0xff]
    %v3002 = vld [vmem:[#allocation6 + $0x11c8] sm:$0xff]
    %v3003 = vld [vmem:[#allocation6 + $0x11d0] sm:$0xff]
    %v3004 = vld [vmem:[#allocation6 + $0x11d8] sm:$0xff]
    %v3005 = vld [vmem:[#allocation6 + $0x11e0] sm:$0xff]
    %v3006 = vld [vmem:[#allocation6 + $0x11e8] sm:$0xff]
    %v3007 = vld [vmem:[#allocation6 + $0x11f0] sm:$0xff]
    %v3008 = vld [vmem:[#allocation6 + $0x11f8] sm:$0xff]
    %v3009 = vld [vmem:[#allocation6 + $0x1200] sm:$0xff]
    %v3010 = vld [vmem:[#allocation6 + $0x1208] sm:$0xff]
    %v3011 = vld [vmem:[#allocation6 + $0x1210] sm:$0xff]
    %v3012 = vld [vmem:[#allocation6 + $0x1218] sm:$0xff]
    %v3013 = vld [vmem:[#allocation6 + $0x1220] sm:$0xff]
    %v3014 = vld [vmem:[#allocation6 + $0x1228] sm:$0xff]
    %v3015 = vld [vmem:[#allocation6 + $0x1230] sm:$0xff]
    %v3016 = vld [vmem:[#allocation6 + $0x1238] sm:$0xff]
    %v3017 = vld [vmem:[#allocation6 + $0x1240] sm:$0xff]
    %v3018 = vld [vmem:[#allocation6 + $0x1248] sm:$0xff]
    %v3019 = vld [vmem:[#allocation6 + $0x1250] sm:$0xff]
    %v3020 = vld [vmem:[#allocation6 + $0x1258] sm:$0xff]
    %v3021 = vld [vmem:[#allocation6 + $0x1260] sm:$0xff]
    %v3022 = vld [vmem:[#allocation6 + $0x1268] sm:$0xff]
    %v3023 = vld [vmem:[#allocation6 + $0x1270] sm:$0xff]
    %v3024 = vld [vmem:[#allocation6 + $0x1278] sm:$0xff]
    %v3025 = vld [vmem:[#allocation6 + $0x1280] sm:$0xff]
    %v3026 = vld [vmem:[#allocation6 + $0x1288] sm:$0xff]
    %v3027 = vld [vmem:[#allocation6 + $0x1290] sm:$0xff]
    %v3028 = vld [vmem:[#allocation6 + $0x1298] sm:$0xff]
    %v3029 = vld [vmem:[#allocation6 + $0x12a0] sm:$0xff]
    %v3030 = vld [vmem:[#allocation6 + $0x12a8] sm:$0xff]
    %v3031 = vld [vmem:[#allocation6 + $0x12b0] sm:$0xff]
    %v3032 = vld [vmem:[#allocation6 + $0x12b8] sm:$0xff]
    %v3033 = vld [vmem:[#allocation6 + $0x12c0] sm:$0xff]
    %v3034 = vld [vmem:[#allocation6 + $0x12c8] sm:$0xff]
    %v3035 = vld [vmem:[#allocation6 + $0x12d0] sm:$0xff]
    %v3036 = vld [vmem:[#allocation6 + $0x12d8] sm:$0xff]
    %v3037 = vld [vmem:[#allocation6 + $0x12e0] sm:$0xff]
    %v3038 = vld [vmem:[#allocation6 + $0x12e8] sm:$0xff]
    %v3039 = vld [vmem:[#allocation6 + $0x12f0] sm:$0xff]
    %v3040 = vld [vmem:[#allocation6 + $0x12f8] sm:$0xff]
    %v3041 = vld [vmem:[#allocation6 + $0x1300] sm:$0xff]
    %v3042 = vld [vmem:[#allocation6 + $0x1308] sm:$0xff]
    %v3043 = vld [vmem:[#allocation6 + $0x1310] sm:$0xff]
    %v3044 = vld [vmem:[#allocation6 + $0x1318] sm:$0xff]
    %v3045 = vld [vmem:[#allocation6 + $0x1320] sm:$0xff]
    %v3046 = vld [vmem:[#allocation6 + $0x1328] sm:$0xff]
    %v3047 = vld [vmem:[#allocation6 + $0x1330] sm:$0xff]
    %v3048 = vld [vmem:[#allocation6 + $0x1338] sm:$0xff]
    %v3049 = vld [vmem:[#allocation6 + $0x1340] sm:$0xff]
    %v3050 = vld [vmem:[#allocation6 + $0x1348] sm:$0xff]
    %v3051 = vld [vmem:[#allocation6 + $0x1350] sm:$0xff]
    %v3052 = vld [vmem:[#allocation6 + $0x1358] sm:$0xff]
    %v3053 = vld [vmem:[#allocation6 + $0x1360] sm:$0xff]
    %v3054 = vld [vmem:[#allocation6 + $0x1368] sm:$0xff]
    %v3055 = vld [vmem:[#allocation6 + $0x1370] sm:$0xff]
    %v3056 = vld [vmem:[#allocation6 + $0x1378] sm:$0xff]
    %v3057 = vld [vmem:[#allocation6 + $0x1380] sm:$0xff]
    %v3058 = vld [vmem:[#allocation6 + $0x1388] sm:$0xff]
    %v3059 = vld [vmem:[#allocation6 + $0x1390] sm:$0xff]
    %v3060 = vld [vmem:[#allocation6 + $0x1398] sm:$0xff]
    %v3061 = vld [vmem:[#allocation6 + $0x13a0] sm:$0xff]
    %v3062 = vld [vmem:[#allocation6 + $0x13a8] sm:$0xff]
    %v3063 = vld [vmem:[#allocation6 + $0x13b0] sm:$0xff]
    %v3064 = vld [vmem:[#allocation6 + $0x13b8] sm:$0xff]
    %v3065 = vld [vmem:[#allocation6 + $0x13c0] sm:$0xff]
    %v3066 = vld [vmem:[#allocation6 + $0x13c8] sm:$0xff]
    %v3067 = vld [vmem:[#allocation6 + $0x13d0] sm:$0xff]
    %v3068 = vld [vmem:[#allocation6 + $0x13d8] sm:$0xff]
    %v3069 = vld [vmem:[#allocation6 + $0x13e0] sm:$0xff]
    %v3070 = vld [vmem:[#allocation6 + $0x13e8] sm:$0xff]
    %v3071 = vld [vmem:[#allocation6 + $0x13f0] sm:$0xff]
    %v3072 = vld [vmem:[#allocation6 + $0x13f8] sm:$0xff]
    %v3073 = vld [vmem:[#allocation6 + $0x1400] sm:$0xff]
    %v3074 = vld [vmem:[#allocation6 + $0x1408] sm:$0xff]
    %v3075 = vld [vmem:[#allocation6 + $0x1410] sm:$0xff]
    %v3076 = vld [vmem:[#allocation6 + $0x1418] sm:$0xff]
    %v3077 = vld [vmem:[#allocation6 + $0x1420] sm:$0xff]
    %v3078 = vld [vmem:[#allocation6 + $0x1428] sm:$0xff]
    %v3079 = vld [vmem:[#allocation6 + $0x1430] sm:$0xff]
    %v3080 = vld [vmem:[#allocation6 + $0x1438] sm:$0xff]
    %v3081 = vld [vmem:[#allocation6 + $0x1440] sm:$0xff]
    %v3082 = vld [vmem:[#allocation6 + $0x1448] sm:$0xff]
    %v3083 = vld [vmem:[#allocation6 + $0x1450] sm:$0xff]
    %v3084 = vld [vmem:[#allocation6 + $0x1458] sm:$0xff]
    %v3085 = vld [vmem:[#allocation6 + $0x1460] sm:$0xff]
    %v3086 = vld [vmem:[#allocation6 + $0x1468] sm:$0xff]
    %v3087 = vld [vmem:[#allocation6 + $0x1470] sm:$0xff]
    %v3088 = vld [vmem:[#allocation6 + $0x1478] sm:$0xff]
    %v3089 = vld [vmem:[#allocation6 + $0x1480] sm:$0xff]
    %v3090 = vld [vmem:[#allocation6 + $0x1488] sm:$0xff]
    %v3091 = vld [vmem:[#allocation6 + $0x1490] sm:$0xff]
    %v3092 = vld [vmem:[#allocation6 + $0x1498] sm:$0xff]
    %v3093 = vld [vmem:[#allocation6 + $0x14a0] sm:$0xff]
    %v3094 = vld [vmem:[#allocation6 + $0x14a8] sm:$0xff]
    %v3095 = vld [vmem:[#allocation6 + $0x14b0] sm:$0xff]
    %v3096 = vld [vmem:[#allocation6 + $0x14b8] sm:$0xff]
    %v3097 = vld [vmem:[#allocation6 + $0x14c0] sm:$0xff]
    %v3098 = vld [vmem:[#allocation6 + $0x14c8] sm:$0xff]
    %v3099 = vld [vmem:[#allocation6 + $0x14d0] sm:$0xff]
    %v3100 = vld [vmem:[#allocation6 + $0x14d8] sm:$0xff]
    %v3101 = vld [vmem:[#allocation6 + $0x14e0] sm:$0xff]
    %v3102 = vld [vmem:[#allocation6 + $0x14e8] sm:$0xff]
    %v3103 = vld [vmem:[#allocation6 + $0x14f0] sm:$0xff]
    %v3104 = vld [vmem:[#allocation6 + $0x14f8] sm:$0xff]
    %v3105 = vld [vmem:[#allocation6 + $0x1500] sm:$0xff]
    %v3106 = vld [vmem:[#allocation6 + $0x1508] sm:$0xff]
    %v3107 = vld [vmem:[#allocation6 + $0x1510] sm:$0xff]
    %v3108 = vld [vmem:[#allocation6 + $0x1518] sm:$0xff]
    %v3109 = vld [vmem:[#allocation6 + $0x1520] sm:$0xff]
    %v3110 = vld [vmem:[#allocation6 + $0x1528] sm:$0xff]
    %v3111 = vld [vmem:[#allocation6 + $0x1530] sm:$0xff]
    %v3112 = vld [vmem:[#allocation6 + $0x1538] sm:$0xff]
    %v3113 = vld [vmem:[#allocation6 + $0x1540] sm:$0xff]
    %v3114 = vld [vmem:[#allocation6 + $0x1548] sm:$0xff]
    %v3115 = vld [vmem:[#allocation6 + $0x1550] sm:$0xff]
    %v3116 = vld [vmem:[#allocation6 + $0x1558] sm:$0xff]
    %v3117 = vld [vmem:[#allocation6 + $0x1560] sm:$0xff]
    %v3118 = vld [vmem:[#allocation6 + $0x1568] sm:$0xff]
    %v3119 = vld [vmem:[#allocation6 + $0x1570] sm:$0xff]
    %v3120 = vld [vmem:[#allocation6 + $0x1578] sm:$0xff]
    %v3121 = vld [vmem:[#allocation6 + $0x1580] sm:$0xff]
    %v3122 = vld [vmem:[#allocation6 + $0x1588] sm:$0xff]
    %v3123 = vld [vmem:[#allocation6 + $0x1590] sm:$0xff]
    %v3124 = vld [vmem:[#allocation6 + $0x1598] sm:$0xff]
    %v3125 = vld [vmem:[#allocation6 + $0x15a0] sm:$0xff]
    %v3126 = vld [vmem:[#allocation6 + $0x15a8] sm:$0xff]
    %v3127 = vld [vmem:[#allocation6 + $0x15b0] sm:$0xff]
    %v3128 = vld [vmem:[#allocation6 + $0x15b8] sm:$0xff]
    %v3129 = vld [vmem:[#allocation6 + $0x15c0] sm:$0xff]
    %v3130 = vld [vmem:[#allocation6 + $0x15c8] sm:$0xff]
    %v3131 = vld [vmem:[#allocation6 + $0x15d0] sm:$0xff]
    %v3132 = vld [vmem:[#allocation6 + $0x15d8] sm:$0xff]
    %v3133 = vld [vmem:[#allocation6 + $0x15e0] sm:$0xff]
    %v3134 = vld [vmem:[#allocation6 + $0x15e8] sm:$0xff]
    %v3135 = vld [vmem:[#allocation6 + $0x15f0] sm:$0xff]
    %v3136 = vld [vmem:[#allocation6 + $0x15f8] sm:$0xff]
    %v3137 = vld [vmem:[#allocation6 + $0x1600] sm:$0xff]
    %v3138 = vld [vmem:[#allocation6 + $0x1608] sm:$0xff]
    %v3139 = vld [vmem:[#allocation6 + $0x1610] sm:$0xff]
    %v3140 = vld [vmem:[#allocation6 + $0x1618] sm:$0xff]
    %v3141 = vld [vmem:[#allocation6 + $0x1620] sm:$0xff]
    %v3142 = vld [vmem:[#allocation6 + $0x1628] sm:$0xff]
    %v3143 = vld [vmem:[#allocation6 + $0x1630] sm:$0xff]
    %v3144 = vld [vmem:[#allocation6 + $0x1638] sm:$0xff]
    %v3145 = vld [vmem:[#allocation6 + $0x1640] sm:$0xff]
    %v3146 = vld [vmem:[#allocation6 + $0x1648] sm:$0xff]
    %v3147 = vld [vmem:[#allocation6 + $0x1650] sm:$0xff]
    %v3148 = vld [vmem:[#allocation6 + $0x1658] sm:$0xff]
    %v3149 = vld [vmem:[#allocation6 + $0x1660] sm:$0xff]
    %v3150 = vld [vmem:[#allocation6 + $0x1668] sm:$0xff]
    %v3151 = vld [vmem:[#allocation6 + $0x1670] sm:$0xff]
    %v3152 = vld [vmem:[#allocation6 + $0x1678] sm:$0xff]
    %v3153 = vld [vmem:[#allocation6 + $0x1680] sm:$0xff]
    %v3154 = vld [vmem:[#allocation6 + $0x1688] sm:$0xff]
    %v3155 = vld [vmem:[#allocation6 + $0x1690] sm:$0xff]
    %v3156 = vld [vmem:[#allocation6 + $0x1698] sm:$0xff]
    %v3157 = vld [vmem:[#allocation6 + $0x16a0] sm:$0xff]
    %v3158 = vld [vmem:[#allocation6 + $0x16a8] sm:$0xff]
    %v3159 = vld [vmem:[#allocation6 + $0x16b0] sm:$0xff]
    %v3160 = vld [vmem:[#allocation6 + $0x16b8] sm:$0xff]
    %v3161 = vld [vmem:[#allocation6 + $0x16c0] sm:$0xff]
    %v3162 = vld [vmem:[#allocation6 + $0x16c8] sm:$0xff]
    %v3163 = vld [vmem:[#allocation6 + $0x16d0] sm:$0xff]
    %v3164 = vld [vmem:[#allocation6 + $0x16d8] sm:$0xff]
    %v3165 = vld [vmem:[#allocation6 + $0x16e0] sm:$0xff]
    %v3166 = vld [vmem:[#allocation6 + $0x16e8] sm:$0xff]
    %v3167 = vld [vmem:[#allocation6 + $0x16f0] sm:$0xff]
    %v3168 = vld [vmem:[#allocation6 + $0x16f8] sm:$0xff]
    %v3169 = vld [vmem:[#allocation6 + $0x1700] sm:$0xff]
    %v3170 = vld [vmem:[#allocation6 + $0x1708] sm:$0xff]
    %v3171 = vld [vmem:[#allocation6 + $0x1710] sm:$0xff]
    %v3172 = vld [vmem:[#allocation6 + $0x1718] sm:$0xff]
    %v3173 = vld [vmem:[#allocation6 + $0x1720] sm:$0xff]
    %v3174 = vld [vmem:[#allocation6 + $0x1728] sm:$0xff]
    %v3175 = vld [vmem:[#allocation6 + $0x1730] sm:$0xff]
    %v3176 = vld [vmem:[#allocation6 + $0x1738] sm:$0xff]
    %v3177 = vld [vmem:[#allocation6 + $0x1740] sm:$0xff]
    %v3178 = vld [vmem:[#allocation6 + $0x1748] sm:$0xff]
    %v3179 = vld [vmem:[#allocation6 + $0x1750] sm:$0xff]
    %v3180 = vld [vmem:[#allocation6 + $0x1758] sm:$0xff]
    %v3181 = vld [vmem:[#allocation6 + $0x1760] sm:$0xff]
    %v3182 = vld [vmem:[#allocation6 + $0x1768] sm:$0xff]
    %v3183 = vld [vmem:[#allocation6 + $0x1770] sm:$0xff]
    %v3184 = vld [vmem:[#allocation6 + $0x1778] sm:$0xff]
    %v3185 = vld [vmem:[#allocation6 + $0x1780] sm:$0xff]
    %v3186 = vld [vmem:[#allocation6 + $0x1788] sm:$0xff]
    %v3187 = vld [vmem:[#allocation6 + $0x1790] sm:$0xff]
    %v3188 = vld [vmem:[#allocation6 + $0x1798] sm:$0xff]
    %v3189 = vld [vmem:[#allocation6 + $0x17a0] sm:$0xff]
    %v3190 = vld [vmem:[#allocation6 + $0x17a8] sm:$0xff]
    %v3191 = vld [vmem:[#allocation6 + $0x17b0] sm:$0xff]
    %v3192 = vld [vmem:[#allocation6 + $0x17b8] sm:$0xff]
    %v3193 = vld [vmem:[#allocation6 + $0x17c0] sm:$0xff]
    %v3194 = vld [vmem:[#allocation6 + $0x17c8] sm:$0xff]
    %v3195 = vld [vmem:[#allocation6 + $0x17d0] sm:$0xff]
    %v3196 = vld [vmem:[#allocation6 + $0x17d8] sm:$0xff]
    %v3197 = vld [vmem:[#allocation6 + $0x17e0] sm:$0xff]
    %v3198 = vld [vmem:[#allocation6 + $0x17e8] sm:$0xff]
    %v3199 = vld [vmem:[#allocation6 + $0x17f0] sm:$0xff]
    %v3200 = vld [vmem:[#allocation6 + $0x17f8] sm:$0xff]
    %v3201 = vpack.c.b16 %v2377, %v2376
    %v3202 = vpack.c.b16 %v2378, %v2376
    %v3203 = vpack.c.b16 %v2379, %v2376
    %v3204 = vpack.c.b16 %v2380, %v2376
    %v3205 = vpack.c.b16 %v2381, %v2377
    %v3206 = vpack.c.b16 %v2382, %v2378
    %v3207 = vpack.c.b16 %v2383, %v2379
    %v3208 = vpack.c.b16 %v2384, %v2380
    %v3209 = vpack.c.b16 %v2385, %v2381
    %v3210 = vpack.c.b16 %v2386, %v2382
    %v3211 = vpack.c.b16 %v2387, %v2383
    %v3212 = vpack.c.b16 %v2388, %v2384
    %v3213 = vpack.c.b16 %v2389, %v2385
    %v3214 = vpack.c.b16 %v2390, %v2386
    %v3215 = vpack.c.b16 %v2391, %v2387
    %v3216 = vpack.c.b16 %v2392, %v2388
    %v3217 = vpack.c.b16 %v2393, %v2389
    %v3218 = vpack.c.b16 %v2394, %v2390
    %v3219 = vpack.c.b16 %v2395, %v2391
    %v3220 = vpack.c.b16 %v2396, %v2392
    %v3221 = vpack.c.b16 %v2397, %v2393
    %v3222 = vpack.c.b16 %v2398, %v2394
    %v3223 = vpack.c.b16 %v2399, %v2395
    %v3224 = vpack.c.b16 %v2400, %v2396
    %v3225 = vpack.c.b16 %v2401, %v2397
    %v3226 = vpack.c.b16 %v2402, %v2398
    %v3227 = vpack.c.b16 %v2403, %v2399
    %v3228 = vpack.c.b16 %v2404, %v2400
    %v3229 = vpack.c.b16 %v2405, %v2401
    %v3230 = vpack.c.b16 %v2406, %v2402
    %v3231 = vpack.c.b16 %v2407, %v2403
    %v3232 = vpack.c.b16 %v2408, %v2404
    %v3233 = vpack.c.b16 %v2409, %v2405
    %v3234 = vpack.c.b16 %v2410, %v2406
    %v3235 = vpack.c.b16 %v2411, %v2407
    %v3236 = vpack.c.b16 %v2412, %v2408
    %v3237 = vpack.c.b16 %v2413, %v2409
    %v3238 = vpack.c.b16 %v2414, %v2410
    %v3239 = vpack.c.b16 %v2415, %v2411
    %v3240 = vpack.c.b16 %v2416, %v2412
    %v3241 = vpack.c.b16 %v2417, %v2413
    %v3242 = vpack.c.b16 %v2418, %v2414
    %v3243 = vpack.c.b16 %v2419, %v2415
    %v3244 = vpack.c.b16 %v2420, %v2416
    %v3245 = vpack.c.b16 %v2421, %v2417
    %v3246 = vpack.c.b16 %v2422, %v2418
    %v3247 = vpack.c.b16 %v2423, %v2419
    %v3248 = vpack.c.b16 %v2424, %v2420
    %v3249 = vpack.c.b16 %v2425, %v2421
    %v3250 = vpack.c.b16 %v2426, %v2422
    %v3251 = vpack.c.b16 %v2427, %v2423
    %v3252 = vpack.c.b16 %v2428, %v2424
    %v3253 = vpack.c.b16 %v2429, %v2425
    %v3254 = vpack.c.b16 %v2430, %v2426
    %v3255 = vpack.c.b16 %v2431, %v2427
    %v3256 = vpack.c.b16 %v2432, %v2428
    %v3257 = vpack.c.b16 %v2376, %v2429
    %v3258 = vpack.c.b16 %v2376, %v2430
    %v3259 = vpack.c.b16 %v2376, %v2431
    %v3260 = vpack.c.b16 %v2376, %v2432
    %v4089 = vunpack.c.l.b16 %v2433
    %v4090 = vunpack.c.h.b16 %v2433
    %v4091 = vunpack.c.l.b16 %v2434
    %v4092 = vunpack.c.h.b16 %v2434
    %v4093 = vunpack.c.l.b16 %v2435
    %v4094 = vunpack.c.h.b16 %v2435
    %v4095 = vunpack.c.l.b16 %v2436
    %v4096 = vunpack.c.h.b16 %v2436
    %v4097 = vunpack.c.l.b16 %v2437
    %v4098 = vunpack.c.h.b16 %v2437
    %v4099 = vunpack.c.l.b16 %v2438
    %v4100 = vunpack.c.h.b16 %v2438
    %v4101 = vunpack.c.l.b16 %v2439
    %v4102 = vunpack.c.h.b16 %v2439
    %v4103 = vunpack.c.l.b16 %v2440
    %v4104 = vunpack.c.h.b16 %v2440
    %v4105 = vunpack.c.l.b16 %v2441
    %v4106 = vunpack.c.h.b16 %v2441
    %v4107 = vunpack.c.l.b16 %v2442
    %v4108 = vunpack.c.h.b16 %v2442
    %v4109 = vunpack.c.l.b16 %v2443
    %v4110 = vunpack.c.h.b16 %v2443
    %v4111 = vunpack.c.l.b16 %v2444
    %v4112 = vunpack.c.h.b16 %v2444
    %v4113 = vunpack.c.l.b16 %v2445
    %v4114 = vunpack.c.h.b16 %v2445
    %v4115 = vunpack.c.l.b16 %v2446
    %v4116 = vunpack.c.h.b16 %v2446
    %v4117 = vunpack.c.l.b16 %v2447
    %v4118 = vunpack.c.h.b16 %v2447
    %v4119 = vunpack.c.l.b16 %v2448
    %v4120 = vunpack.c.h.b16 %v2448
    %v4121 = vunpack.c.l.b16 %v2449
    %v4122 = vunpack.c.h.b16 %v2449
    %v4123 = vunpack.c.l.b16 %v2450
    %v4124 = vunpack.c.h.b16 %v2450
    %v4125 = vunpack.c.l.b16 %v2451
    %v4126 = vunpack.c.h.b16 %v2451
    %v4127 = vunpack.c.l.b16 %v2452
    %v4128 = vunpack.c.h.b16 %v2452
    %v4129 = vunpack.c.l.b16 %v2453
    %v4130 = vunpack.c.h.b16 %v2453
    %v4131 = vunpack.c.l.b16 %v2454
    %v4132 = vunpack.c.h.b16 %v2454
    %v4133 = vunpack.c.l.b16 %v2455
    %v4134 = vunpack.c.h.b16 %v2455
    %v4135 = vunpack.c.l.b16 %v2456
    %v4136 = vunpack.c.h.b16 %v2456
    %v4137 = vunpack.c.l.b16 %v2457
    %v4138 = vunpack.c.h.b16 %v2457
    %v4139 = vunpack.c.l.b16 %v2458
    %v4140 = vunpack.c.h.b16 %v2458
    %v4141 = vunpack.c.l.b16 %v2459
    %v4142 = vunpack.c.h.b16 %v2459
    %v4143 = vunpack.c.l.b16 %v2460
    %v4144 = vunpack.c.h.b16 %v2460
    %v4145 = vunpack.c.l.b16 %v2461
    %v4146 = vunpack.c.h.b16 %v2461
    %v4147 = vunpack.c.l.b16 %v2462
    %v4148 = vunpack.c.h.b16 %v2462
    %v4149 = vunpack.c.l.b16 %v2463
    %v4150 = vunpack.c.h.b16 %v2463
    %v4151 = vunpack.c.l.b16 %v2464
    %v4152 = vunpack.c.h.b16 %v2464
    %v4153 = vunpack.c.l.b16 %v2465
    %v4154 = vunpack.c.h.b16 %v2465
    %v4155 = vunpack.c.l.b16 %v2466
    %v4156 = vunpack.c.h.b16 %v2466
    %v4157 = vunpack.c.l.b16 %v2467
    %v4158 = vunpack.c.h.b16 %v2467
    %v4159 = vunpack.c.l.b16 %v2468
    %v4160 = vunpack.c.h.b16 %v2468
    %v4161 = vunpack.c.l.b16 %v2469
    %v4162 = vunpack.c.h.b16 %v2469
    %v4163 = vunpack.c.l.b16 %v2470
    %v4164 = vunpack.c.h.b16 %v2470
    %v4165 = vunpack.c.l.b16 %v2471
    %v4166 = vunpack.c.h.b16 %v2471
    %v4167 = vunpack.c.l.b16 %v2472
    %v4168 = vunpack.c.h.b16 %v2472
    %v4169 = vunpack.c.l.b16 %v2473
    %v4170 = vunpack.c.h.b16 %v2473
    %v4171 = vunpack.c.l.b16 %v2474
    %v4172 = vunpack.c.h.b16 %v2474
    %v4173 = vunpack.c.l.b16 %v2475
    %v4174 = vunpack.c.h.b16 %v2475
    %v4175 = vunpack.c.l.b16 %v2476
    %v4176 = vunpack.c.h.b16 %v2476
    %v4177 = vunpack.c.l.b16 %v2477
    %v4178 = vunpack.c.h.b16 %v2477
    %v4179 = vunpack.c.l.b16 %v2478
    %v4180 = vunpack.c.h.b16 %v2478
    %v4181 = vunpack.c.l.b16 %v2479
    %v4182 = vunpack.c.h.b16 %v2479
    %v4183 = vunpack.c.l.b16 %v2480
    %v4184 = vunpack.c.h.b16 %v2480
    %v4185 = vunpack.c.l.b16 %v2481
    %v4186 = vunpack.c.h.b16 %v2481
    %v4187 = vunpack.c.l.b16 %v2482
    %v4188 = vunpack.c.h.b16 %v2482
    %v4189 = vunpack.c.l.b16 %v2483
    %v4190 = vunpack.c.h.b16 %v2483
    %v4191 = vunpack.c.l.b16 %v2484
    %v4192 = vunpack.c.h.b16 %v2484
    %v4193 = vunpack.c.l.b16 %v2485
    %v4194 = vunpack.c.h.b16 %v2485
    %v4195 = vunpack.c.l.b16 %v2486
    %v4196 = vunpack.c.h.b16 %v2486
    %v4197 = vunpack.c.l.b16 %v2487
    %v4198 = vunpack.c.h.b16 %v2487
    %v4199 = vunpack.c.l.b16 %v2488
    %v4200 = vunpack.c.h.b16 %v2488
    %v4201 = vunpack.c.l.b16 %v2489
    %v4202 = vunpack.c.h.b16 %v2489
    %v4203 = vunpack.c.l.b16 %v2490
    %v4204 = vunpack.c.h.b16 %v2490
    %v4205 = vunpack.c.l.b16 %v2491
    %v4206 = vunpack.c.h.b16 %v2491
    %v4207 = vunpack.c.l.b16 %v2492
    %v4208 = vunpack.c.h.b16 %v2492
    %v4209 = vunpack.c.l.b16 %v2493
    %v4210 = vunpack.c.h.b16 %v2493
    %v4211 = vunpack.c.l.b16 %v2494
    %v4212 = vunpack.c.h.b16 %v2494
    %v4213 = vunpack.c.l.b16 %v2495
    %v4214 = vunpack.c.h.b16 %v2495
    %v4215 = vunpack.c.l.b16 %v2496
    %v4216 = vunpack.c.h.b16 %v2496
    %v4217 = vunpack.c.l.b16 %v2497
    %v4218 = vunpack.c.h.b16 %v2497
    %v4219 = vunpack.c.l.b16 %v2498
    %v4220 = vunpack.c.h.b16 %v2498
    %v4221 = vunpack.c.l.b16 %v2499
    %v4222 = vunpack.c.h.b16 %v2499
    %v4223 = vunpack.c.l.b16 %v2500
    %v4224 = vunpack.c.h.b16 %v2500
    %v4225 = vunpack.c.l.b16 %v2501
    %v4226 = vunpack.c.h.b16 %v2501
    %v4227 = vunpack.c.l.b16 %v2502
    %v4228 = vunpack.c.h.b16 %v2502
    %v4229 = vunpack.c.l.b16 %v2503
    %v4230 = vunpack.c.h.b16 %v2503
    %v4231 = vunpack.c.l.b16 %v2504
    %v4232 = vunpack.c.h.b16 %v2504
    %v4233 = vunpack.c.l.b16 %v2505
    %v4234 = vunpack.c.h.b16 %v2505
    %v4235 = vunpack.c.l.b16 %v2506
    %v4236 = vunpack.c.h.b16 %v2506
    %v4237 = vunpack.c.l.b16 %v2507
    %v4238 = vunpack.c.h.b16 %v2507
    %v4239 = vunpack.c.l.b16 %v2508
    %v4240 = vunpack.c.h.b16 %v2508
    %v4241 = vunpack.c.l.b16 %v2509
    %v4242 = vunpack.c.h.b16 %v2509
    %v4243 = vunpack.c.l.b16 %v2510
    %v4244 = vunpack.c.h.b16 %v2510
    %v4245 = vunpack.c.l.b16 %v2511
    %v4246 = vunpack.c.h.b16 %v2511
    %v4247 = vunpack.c.l.b16 %v2512
    %v4248 = vunpack.c.h.b16 %v2512
    %v4249 = vunpack.c.l.b16 %v2513
    %v4250 = vunpack.c.h.b16 %v2513
    %v4251 = vunpack.c.l.b16 %v2514
    %v4252 = vunpack.c.h.b16 %v2514
    %v4253 = vunpack.c.l.b16 %v2515
    %v4254 = vunpack.c.h.b16 %v2515
    %v4255 = vunpack.c.l.b16 %v2516
    %v4256 = vunpack.c.h.b16 %v2516
    %v4257 = vunpack.c.l.b16 %v2517
    %v4258 = vunpack.c.h.b16 %v2517
    %v4259 = vunpack.c.l.b16 %v2518
    %v4260 = vunpack.c.h.b16 %v2518
    %v4261 = vunpack.c.l.b16 %v2519
    %v4262 = vunpack.c.h.b16 %v2519
    %v4263 = vunpack.c.l.b16 %v2520
    %v4264 = vunpack.c.h.b16 %v2520
    %v4265 = vunpack.c.l.b16 %v2521
    %v4266 = vunpack.c.h.b16 %v2521
    %v4267 = vunpack.c.l.b16 %v2522
    %v4268 = vunpack.c.h.b16 %v2522
    %v4269 = vunpack.c.l.b16 %v2523
    %v4270 = vunpack.c.h.b16 %v2523
    %v4271 = vunpack.c.l.b16 %v2524
    %v4272 = vunpack.c.h.b16 %v2524
    %v4273 = vunpack.c.l.b16 %v2525
    %v4274 = vunpack.c.h.b16 %v2525
    %v4275 = vunpack.c.l.b16 %v2526
    %v4276 = vunpack.c.h.b16 %v2526
    %v4277 = vunpack.c.l.b16 %v2527
    %v4278 = vunpack.c.h.b16 %v2527
    %v4279 = vunpack.c.l.b16 %v2528
    %v4280 = vunpack.c.h.b16 %v2528
    %v4281 = vunpack.c.l.b16 %v2529
    %v4282 = vunpack.c.h.b16 %v2529
    %v4283 = vunpack.c.l.b16 %v2530
    %v4284 = vunpack.c.h.b16 %v2530
    %v4285 = vunpack.c.l.b16 %v2531
    %v4286 = vunpack.c.h.b16 %v2531
    %v4287 = vunpack.c.l.b16 %v2532
    %v4288 = vunpack.c.h.b16 %v2532
    %v4289 = vunpack.c.l.b16 %v2533
    %v4290 = vunpack.c.h.b16 %v2533
    %v4291 = vunpack.c.l.b16 %v2534
    %v4292 = vunpack.c.h.b16 %v2534
    %v4293 = vunpack.c.l.b16 %v2535
    %v4294 = vunpack.c.h.b16 %v2535
    %v4295 = vunpack.c.l.b16 %v2536
    %v4296 = vunpack.c.h.b16 %v2536
    %v4297 = vunpack.c.l.b16 %v2537
    %v4298 = vunpack.c.h.b16 %v2537
    %v4299 = vunpack.c.l.b16 %v2538
    %v4300 = vunpack.c.h.b16 %v2538
    %v4301 = vunpack.c.l.b16 %v2539
    %v4302 = vunpack.c.h.b16 %v2539
    %v4303 = vunpack.c.l.b16 %v2540
    %v4304 = vunpack.c.h.b16 %v2540
    %v4305 = vunpack.c.l.b16 %v2541
    %v4306 = vunpack.c.h.b16 %v2541
    %v4307 = vunpack.c.l.b16 %v2542
    %v4308 = vunpack.c.h.b16 %v2542
    %v4309 = vunpack.c.l.b16 %v2543
    %v4310 = vunpack.c.h.b16 %v2543
    %v4311 = vunpack.c.l.b16 %v2544
    %v4312 = vunpack.c.h.b16 %v2544
    %v4313 = vunpack.c.l.b16 %v2545
    %v4314 = vunpack.c.h.b16 %v2545
    %v4315 = vunpack.c.l.b16 %v2546
    %v4316 = vunpack.c.h.b16 %v2546
    %v4317 = vunpack.c.l.b16 %v2547
    %v4318 = vunpack.c.h.b16 %v2547
    %v4319 = vunpack.c.l.b16 %v2548
    %v4320 = vunpack.c.h.b16 %v2548
    %v4321 = vunpack.c.l.b16 %v2549
    %v4322 = vunpack.c.h.b16 %v2549
    %v4323 = vunpack.c.l.b16 %v2550
    %v4324 = vunpack.c.h.b16 %v2550
    %v4325 = vunpack.c.l.b16 %v2551
    %v4326 = vunpack.c.h.b16 %v2551
    %v4327 = vunpack.c.l.b16 %v2552
    %v4328 = vunpack.c.h.b16 %v2552
    %v4329 = vunpack.c.l.b16 %v2553
    %v4330 = vunpack.c.h.b16 %v2553
    %v4331 = vunpack.c.l.b16 %v2554
    %v4332 = vunpack.c.h.b16 %v2554
    %v4333 = vunpack.c.l.b16 %v2555
    %v4334 = vunpack.c.h.b16 %v2555
    %v4335 = vunpack.c.l.b16 %v2556
    %v4336 = vunpack.c.h.b16 %v2556
    %v4337 = vunpack.c.l.b16 %v2557
    %v4338 = vunpack.c.h.b16 %v2557
    %v4339 = vunpack.c.l.b16 %v2558
    %v4340 = vunpack.c.h.b16 %v2558
    %v4341 = vunpack.c.l.b16 %v2559
    %v4342 = vunpack.c.h.b16 %v2559
    %v4343 = vunpack.c.l.b16 %v2560
    %v4344 = vunpack.c.h.b16 %v2560
    %v4345 = vunpack.c.l.b16 %v2561
    %v4346 = vunpack.c.h.b16 %v2561
    %v4347 = vunpack.c.l.b16 %v2562
    %v4348 = vunpack.c.h.b16 %v2562
    %v4349 = vunpack.c.l.b16 %v2563
    %v4350 = vunpack.c.h.b16 %v2563
    %v4351 = vunpack.c.l.b16 %v2564
    %v4352 = vunpack.c.h.b16 %v2564
    %v4353 = vunpack.c.l.b16 %v2565
    %v4354 = vunpack.c.h.b16 %v2565
    %v4355 = vunpack.c.l.b16 %v2566
    %v4356 = vunpack.c.h.b16 %v2566
    %v4357 = vunpack.c.l.b16 %v2567
    %v4358 = vunpack.c.h.b16 %v2567
    %v4359 = vunpack.c.l.b16 %v2568
    %v4360 = vunpack.c.h.b16 %v2568
    %v4361 = vunpack.c.l.b16 %v2569
    %v4362 = vunpack.c.h.b16 %v2569
    %v4363 = vunpack.c.l.b16 %v2570
    %v4364 = vunpack.c.h.b16 %v2570
    %v4365 = vunpack.c.l.b16 %v2571
    %v4366 = vunpack.c.h.b16 %v2571
    %v4367 = vunpack.c.l.b16 %v2572
    %v4368 = vunpack.c.h.b16 %v2572
    %v4369 = vunpack.c.l.b16 %v2573
    %v4370 = vunpack.c.h.b16 %v2573
    %v4371 = vunpack.c.l.b16 %v2574
    %v4372 = vunpack.c.h.b16 %v2574
    %v4373 = vunpack.c.l.b16 %v2575
    %v4374 = vunpack.c.h.b16 %v2575
    %v4375 = vunpack.c.l.b16 %v2576
    %v4376 = vunpack.c.h.b16 %v2576
    %v4377 = vunpack.c.l.b16 %v2577
    %v4378 = vunpack.c.h.b16 %v2577
    %v4379 = vunpack.c.l.b16 %v2578
    %v4380 = vunpack.c.h.b16 %v2578
    %v4381 = vunpack.c.l.b16 %v2579
    %v4382 = vunpack.c.h.b16 %v2579
    %v4383 = vunpack.c.l.b16 %v2580
    %v4384 = vunpack.c.h.b16 %v2580
    %v4385 = vunpack.c.l.b16 %v2581
    %v4386 = vunpack.c.h.b16 %v2581
    %v4387 = vunpack.c.l.b16 %v2582
    %v4388 = vunpack.c.h.b16 %v2582
    %v4389 = vunpack.c.l.b16 %v2583
    %v4390 = vunpack.c.h.b16 %v2583
    %v4391 = vunpack.c.l.b16 %v2584
    %v4392 = vunpack.c.h.b16 %v2584
    %v4393 = vunpack.c.l.b16 %v2585
    %v4394 = vunpack.c.h.b16 %v2585
    %v4395 = vunpack.c.l.b16 %v2586
    %v4396 = vunpack.c.h.b16 %v2586
    %v4397 = vunpack.c.l.b16 %v2587
    %v4398 = vunpack.c.h.b16 %v2587
    %v4399 = vunpack.c.l.b16 %v2588
    %v4400 = vunpack.c.h.b16 %v2588
    %v4401 = vunpack.c.l.b16 %v2589
    %v4402 = vunpack.c.h.b16 %v2589
    %v4403 = vunpack.c.l.b16 %v2590
    %v4404 = vunpack.c.h.b16 %v2590
    %v4405 = vunpack.c.l.b16 %v2591
    %v4406 = vunpack.c.h.b16 %v2591
    %v4407 = vunpack.c.l.b16 %v2592
    %v4408 = vunpack.c.h.b16 %v2592
    %v4409 = vunpack.c.l.b16 %v2593
    %v4410 = vunpack.c.h.b16 %v2593
    %v4411 = vunpack.c.l.b16 %v2594
    %v4412 = vunpack.c.h.b16 %v2594
    %v4413 = vunpack.c.l.b16 %v2595
    %v4414 = vunpack.c.h.b16 %v2595
    %v4415 = vunpack.c.l.b16 %v2596
    %v4416 = vunpack.c.h.b16 %v2596
    %v4417 = vunpack.c.l.b16 %v2597
    %v4418 = vunpack.c.h.b16 %v2597
    %v4419 = vunpack.c.l.b16 %v2598
    %v4420 = vunpack.c.h.b16 %v2598
    %v4421 = vunpack.c.l.b16 %v2599
    %v4422 = vunpack.c.h.b16 %v2599
    %v4423 = vunpack.c.l.b16 %v2600
    %v4424 = vunpack.c.h.b16 %v2600
    %v4425 = vunpack.c.l.b16 %v2601
    %v4426 = vunpack.c.h.b16 %v2601
    %v4427 = vunpack.c.l.b16 %v2602
    %v4428 = vunpack.c.h.b16 %v2602
    %v4429 = vunpack.c.l.b16 %v2603
    %v4430 = vunpack.c.h.b16 %v2603
    %v4431 = vunpack.c.l.b16 %v2604
    %v4432 = vunpack.c.h.b16 %v2604
    %v4433 = vunpack.c.l.b16 %v2605
    %v4434 = vunpack.c.h.b16 %v2605
    %v4435 = vunpack.c.l.b16 %v2606
    %v4436 = vunpack.c.h.b16 %v2606
    %v4437 = vunpack.c.l.b16 %v2607
    %v4438 = vunpack.c.h.b16 %v2607
    %v4439 = vunpack.c.l.b16 %v2608
    %v4440 = vunpack.c.h.b16 %v2608
    %v4441 = vunpack.c.l.b16 %v2609
    %v4442 = vunpack.c.h.b16 %v2609
    %v4443 = vunpack.c.l.b16 %v2610
    %v4444 = vunpack.c.h.b16 %v2610
    %v4445 = vunpack.c.l.b16 %v2611
    %v4446 = vunpack.c.h.b16 %v2611
    %v4447 = vunpack.c.l.b16 %v2612
    %v4448 = vunpack.c.h.b16 %v2612
    %v4449 = vunpack.c.l.b16 %v2613
    %v4450 = vunpack.c.h.b16 %v2613
    %v4451 = vunpack.c.l.b16 %v2614
    %v4452 = vunpack.c.h.b16 %v2614
    %v4453 = vunpack.c.l.b16 %v2615
    %v4454 = vunpack.c.h.b16 %v2615
    %v4455 = vunpack.c.l.b16 %v2616
    %v4456 = vunpack.c.h.b16 %v2616
    %v4457 = vunpack.c.l.b16 %v2617
    %v4458 = vunpack.c.h.b16 %v2617
    %v4459 = vunpack.c.l.b16 %v2618
    %v4460 = vunpack.c.h.b16 %v2618
    %v4461 = vunpack.c.l.b16 %v2619
    %v4462 = vunpack.c.h.b16 %v2619
    %v4463 = vunpack.c.l.b16 %v2620
    %v4464 = vunpack.c.h.b16 %v2620
    %v4465 = vunpack.c.l.b16 %v2621
    %v4466 = vunpack.c.h.b16 %v2621
    %v4467 = vunpack.c.l.b16 %v2622
    %v4468 = vunpack.c.h.b16 %v2622
    %v4469 = vunpack.c.l.b16 %v2623
    %v4470 = vunpack.c.h.b16 %v2623
    %v4471 = vunpack.c.l.b16 %v2624
    %v4472 = vunpack.c.h.b16 %v2624
    %v4473 = vunpack.c.l.b16 %v2625
    %v4474 = vunpack.c.h.b16 %v2625
    %v4475 = vunpack.c.l.b16 %v2626
    %v4476 = vunpack.c.h.b16 %v2626
    %v4477 = vunpack.c.l.b16 %v2627
    %v4478 = vunpack.c.h.b16 %v2627
    %v4479 = vunpack.c.l.b16 %v2628
    %v4480 = vunpack.c.h.b16 %v2628
    %v4481 = vunpack.c.l.b16 %v2629
    %v4482 = vunpack.c.h.b16 %v2629
    %v4483 = vunpack.c.l.b16 %v2630
    %v4484 = vunpack.c.h.b16 %v2630
    %v4485 = vunpack.c.l.b16 %v2631
    %v4486 = vunpack.c.h.b16 %v2631
    %v4487 = vunpack.c.l.b16 %v2632
    %v4488 = vunpack.c.h.b16 %v2632
    %v4489 = vunpack.c.l.b16 %v2633
    %v4490 = vunpack.c.h.b16 %v2633
    %v4491 = vunpack.c.l.b16 %v2634
    %v4492 = vunpack.c.h.b16 %v2634
    %v4493 = vunpack.c.l.b16 %v2635
    %v4494 = vunpack.c.h.b16 %v2635
    %v4495 = vunpack.c.l.b16 %v2636
    %v4496 = vunpack.c.h.b16 %v2636
    %v4497 = vunpack.c.l.b16 %v2637
    %v4498 = vunpack.c.h.b16 %v2637
    %v4499 = vunpack.c.l.b16 %v2638
    %v4500 = vunpack.c.h.b16 %v2638
    %v4501 = vunpack.c.l.b16 %v2639
    %v4502 = vunpack.c.h.b16 %v2639
    %v4503 = vunpack.c.l.b16 %v2640
    %v4504 = vunpack.c.h.b16 %v2640
    %v4505 = vunpack.c.l.b16 %v2641
    %v4506 = vunpack.c.h.b16 %v2641
    %v4507 = vunpack.c.l.b16 %v2642
    %v4508 = vunpack.c.h.b16 %v2642
    %v4509 = vunpack.c.l.b16 %v2643
    %v4510 = vunpack.c.h.b16 %v2643
    %v4511 = vunpack.c.l.b16 %v2644
    %v4512 = vunpack.c.h.b16 %v2644
    %v4513 = vunpack.c.l.b16 %v2645
    %v4514 = vunpack.c.h.b16 %v2645
    %v4515 = vunpack.c.l.b16 %v2646
    %v4516 = vunpack.c.h.b16 %v2646
    %v4517 = vunpack.c.l.b16 %v2647
    %v4518 = vunpack.c.h.b16 %v2647
    %v4519 = vunpack.c.l.b16 %v2648
    %v4520 = vunpack.c.h.b16 %v2648
    %v4521 = vunpack.c.l.b16 %v2649
    %v4522 = vunpack.c.h.b16 %v2649
    %v4523 = vunpack.c.l.b16 %v2650
    %v4524 = vunpack.c.h.b16 %v2650
    %v4525 = vunpack.c.l.b16 %v2651
    %v4526 = vunpack.c.h.b16 %v2651
    %v4527 = vunpack.c.l.b16 %v2652
    %v4528 = vunpack.c.h.b16 %v2652
    %v4529 = vunpack.c.l.b16 %v2653
    %v4530 = vunpack.c.h.b16 %v2653
    %v4531 = vunpack.c.l.b16 %v2654
    %v4532 = vunpack.c.h.b16 %v2654
    %v4533 = vunpack.c.l.b16 %v2655
    %v4534 = vunpack.c.h.b16 %v2655
    %v4535 = vunpack.c.l.b16 %v2656
    %v4536 = vunpack.c.h.b16 %v2656
    %v4537 = vunpack.c.l.b16 %v2657
    %v4538 = vunpack.c.h.b16 %v2657
    %v4539 = vunpack.c.l.b16 %v2658
    %v4540 = vunpack.c.h.b16 %v2658
    %v4541 = vunpack.c.l.b16 %v2659
    %v4542 = vunpack.c.h.b16 %v2659
    %v4543 = vunpack.c.l.b16 %v2660
    %v4544 = vunpack.c.h.b16 %v2660
    %v4545 = vunpack.c.l.b16 %v2661
    %v4546 = vunpack.c.h.b16 %v2661
    %v4547 = vunpack.c.l.b16 %v2662
    %v4548 = vunpack.c.h.b16 %v2662
    %v4549 = vunpack.c.l.b16 %v2663
    %v4550 = vunpack.c.h.b16 %v2663
    %v4551 = vunpack.c.l.b16 %v2664
    %v4552 = vunpack.c.h.b16 %v2664
    %v4553 = vunpack.c.l.b16 %v2665
    %v4554 = vunpack.c.h.b16 %v2665
    %v4555 = vunpack.c.l.b16 %v2666
    %v4556 = vunpack.c.h.b16 %v2666
    %v4557 = vunpack.c.l.b16 %v2667
    %v4558 = vunpack.c.h.b16 %v2667
    %v4559 = vunpack.c.l.b16 %v2668
    %v4560 = vunpack.c.h.b16 %v2668
    %v4561 = vunpack.c.l.b16 %v2669
    %v4562 = vunpack.c.h.b16 %v2669
    %v4563 = vunpack.c.l.b16 %v2670
    %v4564 = vunpack.c.h.b16 %v2670
    %v4565 = vunpack.c.l.b16 %v2671
    %v4566 = vunpack.c.h.b16 %v2671
    %v4567 = vunpack.c.l.b16 %v2672
    %v4568 = vunpack.c.h.b16 %v2672
    %v4569 = vunpack.c.l.b16 %v2673
    %v4570 = vunpack.c.h.b16 %v2673
    %v4571 = vunpack.c.l.b16 %v2674
    %v4572 = vunpack.c.h.b16 %v2674
    %v4573 = vunpack.c.l.b16 %v2675
    %v4574 = vunpack.c.h.b16 %v2675
    %v4575 = vunpack.c.l.b16 %v2676
    %v4576 = vunpack.c.h.b16 %v2676
    %v4577 = vunpack.c.l.b16 %v2677
    %v4578 = vunpack.c.h.b16 %v2677
    %v4579 = vunpack.c.l.b16 %v2678
    %v4580 = vunpack.c.h.b16 %v2678
    %v4581 = vunpack.c.l.b16 %v2679
    %v4582 = vunpack.c.h.b16 %v2679
    %v4583 = vunpack.c.l.b16 %v2680
    %v4584 = vunpack.c.h.b16 %v2680
    %v4585 = vunpack.c.l.b16 %v2681
    %v4586 = vunpack.c.h.b16 %v2681
    %v4587 = vunpack.c.l.b16 %v2682
    %v4588 = vunpack.c.h.b16 %v2682
    %v4589 = vunpack.c.l.b16 %v2683
    %v4590 = vunpack.c.h.b16 %v2683
    %v4591 = vunpack.c.l.b16 %v2684
    %v4592 = vunpack.c.h.b16 %v2684
    %v4593 = vunpack.c.l.b16 %v2685
    %v4594 = vunpack.c.h.b16 %v2685
    %v4595 = vunpack.c.l.b16 %v2686
    %v4596 = vunpack.c.h.b16 %v2686
    %v4597 = vunpack.c.l.b16 %v2687
    %v4598 = vunpack.c.h.b16 %v2687
    %v4599 = vunpack.c.l.b16 %v2688
    %v4600 = vunpack.c.h.b16 %v2688
    %v4601 = vunpack.c.l.b16 %v2689
    %v4602 = vunpack.c.h.b16 %v2689
    %v4603 = vunpack.c.l.b16 %v2690
    %v4604 = vunpack.c.h.b16 %v2690
    %v4605 = vunpack.c.l.b16 %v2691
    %v4606 = vunpack.c.h.b16 %v2691
    %v4607 = vunpack.c.l.b16 %v2692
    %v4608 = vunpack.c.h.b16 %v2692
    %v4609 = vunpack.c.l.b16 %v2693
    %v4610 = vunpack.c.h.b16 %v2693
    %v4611 = vunpack.c.l.b16 %v2694
    %v4612 = vunpack.c.h.b16 %v2694
    %v4613 = vunpack.c.l.b16 %v2695
    %v4614 = vunpack.c.h.b16 %v2695
    %v4615 = vunpack.c.l.b16 %v2696
    %v4616 = vunpack.c.h.b16 %v2696
    %v4617 = vunpack.c.l.b16 %v2697
    %v4618 = vunpack.c.h.b16 %v2697
    %v4619 = vunpack.c.l.b16 %v2698
    %v4620 = vunpack.c.h.b16 %v2698
    %v4621 = vunpack.c.l.b16 %v2699
    %v4622 = vunpack.c.h.b16 %v2699
    %v4623 = vunpack.c.l.b16 %v2700
    %v4624 = vunpack.c.h.b16 %v2700
    %v4625 = vunpack.c.l.b16 %v2701
    %v4626 = vunpack.c.h.b16 %v2701
    %v4627 = vunpack.c.l.b16 %v2702
    %v4628 = vunpack.c.h.b16 %v2702
    %v4629 = vunpack.c.l.b16 %v2703
    %v4630 = vunpack.c.h.b16 %v2703
    %v4631 = vunpack.c.l.b16 %v2704
    %v4632 = vunpack.c.h.b16 %v2704
    %v4633 = vunpack.c.l.b16 %v2705
    %v4634 = vunpack.c.h.b16 %v2705
    %v4635 = vunpack.c.l.b16 %v2706
    %v4636 = vunpack.c.h.b16 %v2706
    %v4637 = vunpack.c.l.b16 %v2707
    %v4638 = vunpack.c.h.b16 %v2707
    %v4639 = vunpack.c.l.b16 %v2708
    %v4640 = vunpack.c.h.b16 %v2708
    %v4641 = vunpack.c.l.b16 %v2709
    %v4642 = vunpack.c.h.b16 %v2709
    %v4643 = vunpack.c.l.b16 %v2710
    %v4644 = vunpack.c.h.b16 %v2710
    %v4645 = vunpack.c.l.b16 %v2711
    %v4646 = vunpack.c.h.b16 %v2711
    %v4647 = vunpack.c.l.b16 %v2712
    %v4648 = vunpack.c.h.b16 %v2712
    %v4649 = vunpack.c.l.b16 %v2713
    %v4650 = vunpack.c.h.b16 %v2713
    %v4651 = vunpack.c.l.b16 %v2714
    %v4652 = vunpack.c.h.b16 %v2714
    %v4653 = vunpack.c.l.b16 %v2715
    %v4654 = vunpack.c.h.b16 %v2715
    %v4655 = vunpack.c.l.b16 %v2716
    %v4656 = vunpack.c.h.b16 %v2716
    %v4657 = vunpack.c.l.b16 %v2717
    %v4658 = vunpack.c.h.b16 %v2717
    %v4659 = vunpack.c.l.b16 %v2718
    %v4660 = vunpack.c.h.b16 %v2718
    %v4661 = vunpack.c.l.b16 %v2719
    %v4662 = vunpack.c.h.b16 %v2719
    %v4663 = vunpack.c.l.b16 %v2720
    %v4664 = vunpack.c.h.b16 %v2720
    %v4665 = vunpack.c.l.b16 %v2721
    %v4666 = vunpack.c.h.b16 %v2721
    %v4667 = vunpack.c.l.b16 %v2722
    %v4668 = vunpack.c.h.b16 %v2722
    %v4669 = vunpack.c.l.b16 %v2723
    %v4670 = vunpack.c.h.b16 %v2723
    %v4671 = vunpack.c.l.b16 %v2724
    %v4672 = vunpack.c.h.b16 %v2724
    %v4673 = vunpack.c.l.b16 %v2725
    %v4674 = vunpack.c.h.b16 %v2725
    %v4675 = vunpack.c.l.b16 %v2726
    %v4676 = vunpack.c.h.b16 %v2726
    %v4677 = vunpack.c.l.b16 %v2727
    %v4678 = vunpack.c.h.b16 %v2727
    %v4679 = vunpack.c.l.b16 %v2728
    %v4680 = vunpack.c.h.b16 %v2728
    %v4681 = vunpack.c.l.b16 %v2729
    %v4682 = vunpack.c.h.b16 %v2729
    %v4683 = vunpack.c.l.b16 %v2730
    %v4684 = vunpack.c.h.b16 %v2730
    %v4685 = vunpack.c.l.b16 %v2731
    %v4686 = vunpack.c.h.b16 %v2731
    %v4687 = vunpack.c.l.b16 %v2732
    %v4688 = vunpack.c.h.b16 %v2732
    %v4689 = vunpack.c.l.b16 %v2733
    %v4690 = vunpack.c.h.b16 %v2733
    %v4691 = vunpack.c.l.b16 %v2734
    %v4692 = vunpack.c.h.b16 %v2734
    %v4693 = vunpack.c.l.b16 %v2735
    %v4694 = vunpack.c.h.b16 %v2735
    %v4695 = vunpack.c.l.b16 %v2736
    %v4696 = vunpack.c.h.b16 %v2736
    %v4697 = vunpack.c.l.b16 %v2737
    %v4698 = vunpack.c.h.b16 %v2737
    %v4699 = vunpack.c.l.b16 %v2738
    %v4700 = vunpack.c.h.b16 %v2738
    %v4701 = vunpack.c.l.b16 %v2739
    %v4702 = vunpack.c.h.b16 %v2739
    %v4703 = vunpack.c.l.b16 %v2740
    %v4704 = vunpack.c.h.b16 %v2740
    %v4705 = vunpack.c.l.b16 %v2741
    %v4706 = vunpack.c.h.b16 %v2741
    %v4707 = vunpack.c.l.b16 %v2742
    %v4708 = vunpack.c.h.b16 %v2742
    %v4709 = vunpack.c.l.b16 %v2743
    %v4710 = vunpack.c.h.b16 %v2743
    %v4711 = vunpack.c.l.b16 %v2744
    %v4712 = vunpack.c.h.b16 %v2744
    %v4713 = vunpack.c.l.b16 %v2745
    %v4714 = vunpack.c.h.b16 %v2745
    %v4715 = vunpack.c.l.b16 %v2746
    %v4716 = vunpack.c.h.b16 %v2746
    %v4717 = vunpack.c.l.b16 %v2747
    %v4718 = vunpack.c.h.b16 %v2747
    %v4719 = vunpack.c.l.b16 %v2748
    %v4720 = vunpack.c.h.b16 %v2748
    %v4721 = vunpack.c.l.b16 %v2749
    %v4722 = vunpack.c.h.b16 %v2749
    %v4723 = vunpack.c.l.b16 %v2750
    %v4724 = vunpack.c.h.b16 %v2750
    %v4725 = vunpack.c.l.b16 %v2751
    %v4726 = vunpack.c.h.b16 %v2751
    %v4727 = vunpack.c.l.b16 %v2752
    %v4728 = vunpack.c.h.b16 %v2752
    %v4729 = vunpack.c.l.b16 %v2753
    %v4730 = vunpack.c.h.b16 %v2753
    %v4731 = vunpack.c.l.b16 %v2754
    %v4732 = vunpack.c.h.b16 %v2754
    %v4733 = vunpack.c.l.b16 %v2755
    %v4734 = vunpack.c.h.b16 %v2755
    %v4735 = vunpack.c.l.b16 %v2756
    %v4736 = vunpack.c.h.b16 %v2756
    %v4737 = vunpack.c.l.b16 %v2757
    %v4738 = vunpack.c.h.b16 %v2757
    %v4739 = vunpack.c.l.b16 %v2758
    %v4740 = vunpack.c.h.b16 %v2758
    %v4741 = vunpack.c.l.b16 %v2759
    %v4742 = vunpack.c.h.b16 %v2759
    %v4743 = vunpack.c.l.b16 %v2760
    %v4744 = vunpack.c.h.b16 %v2760
    %v4745 = vunpack.c.l.b16 %v2761
    %v4746 = vunpack.c.h.b16 %v2761
    %v4747 = vunpack.c.l.b16 %v2762
    %v4748 = vunpack.c.h.b16 %v2762
    %v4749 = vunpack.c.l.b16 %v2763
    %v4750 = vunpack.c.h.b16 %v2763
    %v4751 = vunpack.c.l.b16 %v2764
    %v4752 = vunpack.c.h.b16 %v2764
    %v4753 = vunpack.c.l.b16 %v2765
    %v4754 = vunpack.c.h.b16 %v2765
    %v4755 = vunpack.c.l.b16 %v2766
    %v4756 = vunpack.c.h.b16 %v2766
    %v4757 = vunpack.c.l.b16 %v2767
    %v4758 = vunpack.c.h.b16 %v2767
    %v4759 = vunpack.c.l.b16 %v2768
    %v4760 = vunpack.c.h.b16 %v2768
    %v4761 = vunpack.c.l.b16 %v2769
    %v4762 = vunpack.c.h.b16 %v2769
    %v4763 = vunpack.c.l.b16 %v2770
    %v4764 = vunpack.c.h.b16 %v2770
    %v4765 = vunpack.c.l.b16 %v2771
    %v4766 = vunpack.c.h.b16 %v2771
    %v4767 = vunpack.c.l.b16 %v2772
    %v4768 = vunpack.c.h.b16 %v2772
    %v4769 = vunpack.c.l.b16 %v2773
    %v4770 = vunpack.c.h.b16 %v2773
    %v4771 = vunpack.c.l.b16 %v2774
    %v4772 = vunpack.c.h.b16 %v2774
    %v4773 = vunpack.c.l.b16 %v2775
    %v4774 = vunpack.c.h.b16 %v2775
    %v4775 = vunpack.c.l.b16 %v2776
    %v4776 = vunpack.c.h.b16 %v2776
    %v4777 = vunpack.c.l.b16 %v2777
    %v4778 = vunpack.c.h.b16 %v2777
    %v4779 = vunpack.c.l.b16 %v2778
    %v4780 = vunpack.c.h.b16 %v2778
    %v4781 = vunpack.c.l.b16 %v2779
    %v4782 = vunpack.c.h.b16 %v2779
    %v4783 = vunpack.c.l.b16 %v2780
    %v4784 = vunpack.c.h.b16 %v2780
    %v4785 = vunpack.c.l.b16 %v2781
    %v4786 = vunpack.c.h.b16 %v2781
    %v4787 = vunpack.c.l.b16 %v2782
    %v4788 = vunpack.c.h.b16 %v2782
    %v4789 = vunpack.c.l.b16 %v2783
    %v4790 = vunpack.c.h.b16 %v2783
    %v4791 = vunpack.c.l.b16 %v2784
    %v4792 = vunpack.c.h.b16 %v2784
    %v4793 = vunpack.c.l.b16 %v2785
    %v4794 = vunpack.c.h.b16 %v2785
    %v4795 = vunpack.c.l.b16 %v2786
    %v4796 = vunpack.c.h.b16 %v2786
    %v4797 = vunpack.c.l.b16 %v2787
    %v4798 = vunpack.c.h.b16 %v2787
    %v4799 = vunpack.c.l.b16 %v2788
    %v4800 = vunpack.c.h.b16 %v2788
    %v4801 = vunpack.c.l.b16 %v2789
    %v4802 = vunpack.c.h.b16 %v2789
    %v4803 = vunpack.c.l.b16 %v2790
    %v4804 = vunpack.c.h.b16 %v2790
    %v4805 = vunpack.c.l.b16 %v2791
    %v4806 = vunpack.c.h.b16 %v2791
    %v4807 = vunpack.c.l.b16 %v2792
    %v4808 = vunpack.c.h.b16 %v2792
    %v4809 = vunpack.c.l.b16 %v2793
    %v4810 = vunpack.c.h.b16 %v2793
    %v4811 = vunpack.c.l.b16 %v2794
    %v4812 = vunpack.c.h.b16 %v2794
    %v4813 = vunpack.c.l.b16 %v2795
    %v4814 = vunpack.c.h.b16 %v2795
    %v4815 = vunpack.c.l.b16 %v2796
    %v4816 = vunpack.c.h.b16 %v2796
    %v4817 = vunpack.c.l.b16 %v2797
    %v4818 = vunpack.c.h.b16 %v2797
    %v4819 = vunpack.c.l.b16 %v2798
    %v4820 = vunpack.c.h.b16 %v2798
    %v4821 = vunpack.c.l.b16 %v2799
    %v4822 = vunpack.c.h.b16 %v2799
    %v4823 = vunpack.c.l.b16 %v2800
    %v4824 = vunpack.c.h.b16 %v2800
    %v4825 = vunpack.c.l.b16 %v2801
    %v4826 = vunpack.c.h.b16 %v2801
    %v4827 = vunpack.c.l.b16 %v2802
    %v4828 = vunpack.c.h.b16 %v2802
    %v4829 = vunpack.c.l.b16 %v2803
    %v4830 = vunpack.c.h.b16 %v2803
    %v4831 = vunpack.c.l.b16 %v2804
    %v4832 = vunpack.c.h.b16 %v2804
    %v4833 = vunpack.c.l.b16 %v2805
    %v4834 = vunpack.c.h.b16 %v2805
    %v4835 = vunpack.c.l.b16 %v2806
    %v4836 = vunpack.c.h.b16 %v2806
    %v4837 = vunpack.c.l.b16 %v2807
    %v4838 = vunpack.c.h.b16 %v2807
    %v4839 = vunpack.c.l.b16 %v2808
    %v4840 = vunpack.c.h.b16 %v2808
    %v4841 = vunpack.c.l.b16 %v2809
    %v4842 = vunpack.c.h.b16 %v2809
    %v4843 = vunpack.c.l.b16 %v2810
    %v4844 = vunpack.c.h.b16 %v2810
    %v4845 = vunpack.c.l.b16 %v2811
    %v4846 = vunpack.c.h.b16 %v2811
    %v4847 = vunpack.c.l.b16 %v2812
    %v4848 = vunpack.c.h.b16 %v2812
    %v4849 = vunpack.c.l.b16 %v2813
    %v4850 = vunpack.c.h.b16 %v2813
    %v4851 = vunpack.c.l.b16 %v2814
    %v4852 = vunpack.c.h.b16 %v2814
    %v4853 = vunpack.c.l.b16 %v2815
    %v4854 = vunpack.c.h.b16 %v2815
    %v4855 = vunpack.c.l.b16 %v2816
    %v4856 = vunpack.c.h.b16 %v2816
    %v4857 = vunpack.c.l.b16 %v2817
    %v4858 = vunpack.c.h.b16 %v2817
    %v4859 = vunpack.c.l.b16 %v2818
    %v4860 = vunpack.c.h.b16 %v2818
    %v4861 = vunpack.c.l.b16 %v2819
    %v4862 = vunpack.c.h.b16 %v2819
    %v4863 = vunpack.c.l.b16 %v2820
    %v4864 = vunpack.c.h.b16 %v2820
    %v4865 = vunpack.c.l.b16 %v2821
    %v4866 = vunpack.c.h.b16 %v2821
    %v4867 = vunpack.c.l.b16 %v2822
    %v4868 = vunpack.c.h.b16 %v2822
    %v4869 = vunpack.c.l.b16 %v2823
    %v4870 = vunpack.c.h.b16 %v2823
    %v4871 = vunpack.c.l.b16 %v2824
    %v4872 = vunpack.c.h.b16 %v2824
    %v4873 = vunpack.c.l.b16 %v2825
    %v4874 = vunpack.c.h.b16 %v2825
    %v4875 = vunpack.c.l.b16 %v2826
    %v4876 = vunpack.c.h.b16 %v2826
    %v4877 = vunpack.c.l.b16 %v2827
    %v4878 = vunpack.c.h.b16 %v2827
    %v4879 = vunpack.c.l.b16 %v2828
    %v4880 = vunpack.c.h.b16 %v2828
    %v4881 = vunpack.c.l.b16 %v2829
    %v4882 = vunpack.c.h.b16 %v2829
    %v4883 = vunpack.c.l.b16 %v2830
    %v4884 = vunpack.c.h.b16 %v2830
    %v4885 = vunpack.c.l.b16 %v2831
    %v4886 = vunpack.c.h.b16 %v2831
    %v4887 = vunpack.c.l.b16 %v2832
    %v4888 = vunpack.c.h.b16 %v2832
    %v4889 = vunpack.c.l.b16 %v2833
    %v4890 = vunpack.c.h.b16 %v2833
    %v4891 = vunpack.c.l.b16 %v2834
    %v4892 = vunpack.c.h.b16 %v2834
    %v4893 = vunpack.c.l.b16 %v2835
    %v4894 = vunpack.c.h.b16 %v2835
    %v4895 = vunpack.c.l.b16 %v2836
    %v4896 = vunpack.c.h.b16 %v2836
    %v4897 = vunpack.c.l.b16 %v2837
    %v4898 = vunpack.c.h.b16 %v2837
    %v4899 = vunpack.c.l.b16 %v2838
    %v4900 = vunpack.c.h.b16 %v2838
    %v4901 = vunpack.c.l.b16 %v2839
    %v4902 = vunpack.c.h.b16 %v2839
    %v4903 = vunpack.c.l.b16 %v2840
    %v4904 = vunpack.c.h.b16 %v2840
    %v4905 = vunpack.c.l.b16 %v2841
    %v4906 = vunpack.c.h.b16 %v2841
    %v4907 = vunpack.c.l.b16 %v2842
    %v4908 = vunpack.c.h.b16 %v2842
    %v4909 = vunpack.c.l.b16 %v2843
    %v4910 = vunpack.c.h.b16 %v2843
    %v4911 = vunpack.c.l.b16 %v2844
    %v4912 = vunpack.c.h.b16 %v2844
    %v4913 = vunpack.c.l.b16 %v2845
    %v4914 = vunpack.c.h.b16 %v2845
    %v4915 = vunpack.c.l.b16 %v2846
    %v4916 = vunpack.c.h.b16 %v2846
    %v4917 = vunpack.c.l.b16 %v2847
    %v4918 = vunpack.c.h.b16 %v2847
    %v4919 = vunpack.c.l.b16 %v2848
    %v4920 = vunpack.c.h.b16 %v2848
    %v4921 = vunpack.c.l.b16 %v2849
    %v4922 = vunpack.c.h.b16 %v2849
    %v4923 = vunpack.c.l.b16 %v2850
    %v4924 = vunpack.c.h.b16 %v2850
    %v4925 = vunpack.c.l.b16 %v2851
    %v4926 = vunpack.c.h.b16 %v2851
    %v4927 = vunpack.c.l.b16 %v2852
    %v4928 = vunpack.c.h.b16 %v2852
    %v4929 = vunpack.c.l.b16 %v2853
    %v4930 = vunpack.c.h.b16 %v2853
    %v4931 = vunpack.c.l.b16 %v2854
    %v4932 = vunpack.c.h.b16 %v2854
    %v4933 = vunpack.c.l.b16 %v2855
    %v4934 = vunpack.c.h.b16 %v2855
    %v4935 = vunpack.c.l.b16 %v2856
    %v4936 = vunpack.c.h.b16 %v2856
    %v4937 = vunpack.c.l.b16 %v2857
    %v4938 = vunpack.c.h.b16 %v2857
    %v4939 = vunpack.c.l.b16 %v2858
    %v4940 = vunpack.c.h.b16 %v2858
    %v4941 = vunpack.c.l.b16 %v2859
    %v4942 = vunpack.c.h.b16 %v2859
    %v4943 = vunpack.c.l.b16 %v2860
    %v4944 = vunpack.c.h.b16 %v2860
    %v4945 = vunpack.c.l.b16 %v2861
    %v4946 = vunpack.c.h.b16 %v2861
    %v4947 = vunpack.c.l.b16 %v2862
    %v4948 = vunpack.c.h.b16 %v2862
    %v4949 = vunpack.c.l.b16 %v2863
    %v4950 = vunpack.c.h.b16 %v2863
    %v4951 = vunpack.c.l.b16 %v2864
    %v4952 = vunpack.c.h.b16 %v2864
    %v4953 = vunpack.c.l.b16 %v2865
    %v4954 = vunpack.c.h.b16 %v2865
    %v4955 = vunpack.c.l.b16 %v2866
    %v4956 = vunpack.c.h.b16 %v2866
    %v4957 = vunpack.c.l.b16 %v2867
    %v4958 = vunpack.c.h.b16 %v2867
    %v4959 = vunpack.c.l.b16 %v2868
    %v4960 = vunpack.c.h.b16 %v2868
    %v4961 = vunpack.c.l.b16 %v2869
    %v4962 = vunpack.c.h.b16 %v2869
    %v4963 = vunpack.c.l.b16 %v2870
    %v4964 = vunpack.c.h.b16 %v2870
    %v4965 = vunpack.c.l.b16 %v2871
    %v4966 = vunpack.c.h.b16 %v2871
    %v4967 = vunpack.c.l.b16 %v2872
    %v4968 = vunpack.c.h.b16 %v2872
    %v4969 = vunpack.c.l.b16 %v2873
    %v4970 = vunpack.c.h.b16 %v2873
    %v4971 = vunpack.c.l.b16 %v2874
    %v4972 = vunpack.c.h.b16 %v2874
    %v4973 = vunpack.c.l.b16 %v2875
    %v4974 = vunpack.c.h.b16 %v2875
    %v4975 = vunpack.c.l.b16 %v2876
    %v4976 = vunpack.c.h.b16 %v2876
    %v4977 = vunpack.c.l.b16 %v2877
    %v4978 = vunpack.c.h.b16 %v2877
    %v4979 = vunpack.c.l.b16 %v2878
    %v4980 = vunpack.c.h.b16 %v2878
    %v4981 = vunpack.c.l.b16 %v2879
    %v4982 = vunpack.c.h.b16 %v2879
    %v4983 = vunpack.c.l.b16 %v2880
    %v4984 = vunpack.c.h.b16 %v2880
    %v4985 = vunpack.c.l.b16 %v2881
    %v4986 = vunpack.c.h.b16 %v2881
    %v4987 = vunpack.c.l.b16 %v2882
    %v4988 = vunpack.c.h.b16 %v2882
    %v4989 = vunpack.c.l.b16 %v2883
    %v4990 = vunpack.c.h.b16 %v2883
    %v4991 = vunpack.c.l.b16 %v2884
    %v4992 = vunpack.c.h.b16 %v2884
    %v4993 = vunpack.c.l.b16 %v2885
    %v4994 = vunpack.c.h.b16 %v2885
    %v4995 = vunpack.c.l.b16 %v2886
    %v4996 = vunpack.c.h.b16 %v2886
    %v4997 = vunpack.c.l.b16 %v2887
    %v4998 = vunpack.c.h.b16 %v2887
    %v4999 = vunpack.c.l.b16 %v2888
    %v5000 = vunpack.c.h.b16 %v2888
    %v5001 = vunpack.c.l.b16 %v2889
    %v5002 = vunpack.c.h.b16 %v2889
    %v5003 = vunpack.c.l.b16 %v2890
    %v5004 = vunpack.c.h.b16 %v2890
    %v5005 = vunpack.c.l.b16 %v2891
    %v5006 = vunpack.c.h.b16 %v2891
    %v5007 = vunpack.c.l.b16 %v2892
    %v5008 = vunpack.c.h.b16 %v2892
    %v5009 = vunpack.c.l.b16 %v2893
    %v5010 = vunpack.c.h.b16 %v2893
    %v5011 = vunpack.c.l.b16 %v2894
    %v5012 = vunpack.c.h.b16 %v2894
    %v5013 = vunpack.c.l.b16 %v2895
    %v5014 = vunpack.c.h.b16 %v2895
    %v5015 = vunpack.c.l.b16 %v2896
    %v5016 = vunpack.c.h.b16 %v2896
    %v5017 = vunpack.c.l.b16 %v2897
    %v5018 = vunpack.c.h.b16 %v2897
    %v5019 = vunpack.c.l.b16 %v2898
    %v5020 = vunpack.c.h.b16 %v2898
    %v5021 = vunpack.c.l.b16 %v2899
    %v5022 = vunpack.c.h.b16 %v2899
    %v5023 = vunpack.c.l.b16 %v2900
    %v5024 = vunpack.c.h.b16 %v2900
    %v5025 = vunpack.c.l.b16 %v2901
    %v5026 = vunpack.c.h.b16 %v2901
    %v5027 = vunpack.c.l.b16 %v2902
    %v5028 = vunpack.c.h.b16 %v2902
    %v5029 = vunpack.c.l.b16 %v2903
    %v5030 = vunpack.c.h.b16 %v2903
    %v5031 = vunpack.c.l.b16 %v2904
    %v5032 = vunpack.c.h.b16 %v2904
    %v5033 = vunpack.c.l.b16 %v2905
    %v5034 = vunpack.c.h.b16 %v2905
    %v5035 = vunpack.c.l.b16 %v2906
    %v5036 = vunpack.c.h.b16 %v2906
    %v5037 = vunpack.c.l.b16 %v2907
    %v5038 = vunpack.c.h.b16 %v2907
    %v5039 = vunpack.c.l.b16 %v2908
    %v5040 = vunpack.c.h.b16 %v2908
    %v5041 = vunpack.c.l.b16 %v2909
    %v5042 = vunpack.c.h.b16 %v2909
    %v5043 = vunpack.c.l.b16 %v2910
    %v5044 = vunpack.c.h.b16 %v2910
    %v5045 = vunpack.c.l.b16 %v2911
    %v5046 = vunpack.c.h.b16 %v2911
    %v5047 = vunpack.c.l.b16 %v2912
    %v5048 = vunpack.c.h.b16 %v2912
    %v5049 = vunpack.c.l.b16 %v2913
    %v5050 = vunpack.c.h.b16 %v2913
    %v5051 = vunpack.c.l.b16 %v2914
    %v5052 = vunpack.c.h.b16 %v2914
    %v5053 = vunpack.c.l.b16 %v2915
    %v5054 = vunpack.c.h.b16 %v2915
    %v5055 = vunpack.c.l.b16 %v2916
    %v5056 = vunpack.c.h.b16 %v2916
    %v5057 = vunpack.c.l.b16 %v2917
    %v5058 = vunpack.c.h.b16 %v2917
    %v5059 = vunpack.c.l.b16 %v2918
    %v5060 = vunpack.c.h.b16 %v2918
    %v5061 = vunpack.c.l.b16 %v2919
    %v5062 = vunpack.c.h.b16 %v2919
    %v5063 = vunpack.c.l.b16 %v2920
    %v5064 = vunpack.c.h.b16 %v2920
    %v5065 = vunpack.c.l.b16 %v2921
    %v5066 = vunpack.c.h.b16 %v2921
    %v5067 = vunpack.c.l.b16 %v2922
    %v5068 = vunpack.c.h.b16 %v2922
    %v5069 = vunpack.c.l.b16 %v2923
    %v5070 = vunpack.c.h.b16 %v2923
    %v5071 = vunpack.c.l.b16 %v2924
    %v5072 = vunpack.c.h.b16 %v2924
    %v5073 = vunpack.c.l.b16 %v2925
    %v5074 = vunpack.c.h.b16 %v2925
    %v5075 = vunpack.c.l.b16 %v2926
    %v5076 = vunpack.c.h.b16 %v2926
    %v5077 = vunpack.c.l.b16 %v2927
    %v5078 = vunpack.c.h.b16 %v2927
    %v5079 = vunpack.c.l.b16 %v2928
    %v5080 = vunpack.c.h.b16 %v2928
    %v5081 = vunpack.c.l.b16 %v2929
    %v5082 = vunpack.c.h.b16 %v2929
    %v5083 = vunpack.c.l.b16 %v2930
    %v5084 = vunpack.c.h.b16 %v2930
    %v5085 = vunpack.c.l.b16 %v2931
    %v5086 = vunpack.c.h.b16 %v2931
    %v5087 = vunpack.c.l.b16 %v2932
    %v5088 = vunpack.c.h.b16 %v2932
    %v5089 = vunpack.c.l.b16 %v2933
    %v5090 = vunpack.c.h.b16 %v2933
    %v5091 = vunpack.c.l.b16 %v2934
    %v5092 = vunpack.c.h.b16 %v2934
    %v5093 = vunpack.c.l.b16 %v2935
    %v5094 = vunpack.c.h.b16 %v2935
    %v5095 = vunpack.c.l.b16 %v2936
    %v5096 = vunpack.c.h.b16 %v2936
    %v5097 = vunpack.c.l.b16 %v2937
    %v5098 = vunpack.c.h.b16 %v2937
    %v5099 = vunpack.c.l.b16 %v2938
    %v5100 = vunpack.c.h.b16 %v2938
    %v5101 = vunpack.c.l.b16 %v2939
    %v5102 = vunpack.c.h.b16 %v2939
    %v5103 = vunpack.c.l.b16 %v2940
    %v5104 = vunpack.c.h.b16 %v2940
    %v5105 = vunpack.c.l.b16 %v2941
    %v5106 = vunpack.c.h.b16 %v2941
    %v5107 = vunpack.c.l.b16 %v2942
    %v5108 = vunpack.c.h.b16 %v2942
    %v5109 = vunpack.c.l.b16 %v2943
    %v5110 = vunpack.c.h.b16 %v2943
    %v5111 = vunpack.c.l.b16 %v2944
    %v5112 = vunpack.c.h.b16 %v2944
    %v5113 = vunpack.c.l.b16 %v2945
    %v5114 = vunpack.c.h.b16 %v2945
    %v5115 = vunpack.c.l.b16 %v2946
    %v5116 = vunpack.c.h.b16 %v2946
    %v5117 = vunpack.c.l.b16 %v2947
    %v5118 = vunpack.c.h.b16 %v2947
    %v5119 = vunpack.c.l.b16 %v2948
    %v5120 = vunpack.c.h.b16 %v2948
    %v5121 = vunpack.c.l.b16 %v2949
    %v5122 = vunpack.c.h.b16 %v2949
    %v5123 = vunpack.c.l.b16 %v2950
    %v5124 = vunpack.c.h.b16 %v2950
    %v5125 = vunpack.c.l.b16 %v2951
    %v5126 = vunpack.c.h.b16 %v2951
    %v5127 = vunpack.c.l.b16 %v2952
    %v5128 = vunpack.c.h.b16 %v2952
    %v5129 = vunpack.c.l.b16 %v2953
    %v5130 = vunpack.c.h.b16 %v2953
    %v5131 = vunpack.c.l.b16 %v2954
    %v5132 = vunpack.c.h.b16 %v2954
    %v5133 = vunpack.c.l.b16 %v2955
    %v5134 = vunpack.c.h.b16 %v2955
    %v5135 = vunpack.c.l.b16 %v2956
    %v5136 = vunpack.c.h.b16 %v2956
    %v5137 = vunpack.c.l.b16 %v2957
    %v5138 = vunpack.c.h.b16 %v2957
    %v5139 = vunpack.c.l.b16 %v2958
    %v5140 = vunpack.c.h.b16 %v2958
    %v5141 = vunpack.c.l.b16 %v2959
    %v5142 = vunpack.c.h.b16 %v2959
    %v5143 = vunpack.c.l.b16 %v2960
    %v5144 = vunpack.c.h.b16 %v2960
    %v5145 = vunpack.c.l.b16 %v2961
    %v5146 = vunpack.c.h.b16 %v2961
    %v5147 = vunpack.c.l.b16 %v2962
    %v5148 = vunpack.c.h.b16 %v2962
    %v5149 = vunpack.c.l.b16 %v2963
    %v5150 = vunpack.c.h.b16 %v2963
    %v5151 = vunpack.c.l.b16 %v2964
    %v5152 = vunpack.c.h.b16 %v2964
    %v5153 = vunpack.c.l.b16 %v2965
    %v5154 = vunpack.c.h.b16 %v2965
    %v5155 = vunpack.c.l.b16 %v2966
    %v5156 = vunpack.c.h.b16 %v2966
    %v5157 = vunpack.c.l.b16 %v2967
    %v5158 = vunpack.c.h.b16 %v2967
    %v5159 = vunpack.c.l.b16 %v2968
    %v5160 = vunpack.c.h.b16 %v2968
    %v5161 = vunpack.c.l.b16 %v2969
    %v5162 = vunpack.c.h.b16 %v2969
    %v5163 = vunpack.c.l.b16 %v2970
    %v5164 = vunpack.c.h.b16 %v2970
    %v5165 = vunpack.c.l.b16 %v2971
    %v5166 = vunpack.c.h.b16 %v2971
    %v5167 = vunpack.c.l.b16 %v2972
    %v5168 = vunpack.c.h.b16 %v2972
    %v5169 = vunpack.c.l.b16 %v2973
    %v5170 = vunpack.c.h.b16 %v2973
    %v5171 = vunpack.c.l.b16 %v2974
    %v5172 = vunpack.c.h.b16 %v2974
    %v5173 = vunpack.c.l.b16 %v2975
    %v5174 = vunpack.c.h.b16 %v2975
    %v5175 = vunpack.c.l.b16 %v2976
    %v5176 = vunpack.c.h.b16 %v2976
    %v5177 = vunpack.c.l.b16 %v2977
    %v5178 = vunpack.c.h.b16 %v2977
    %v5179 = vunpack.c.l.b16 %v2978
    %v5180 = vunpack.c.h.b16 %v2978
    %v5181 = vunpack.c.l.b16 %v2979
    %v5182 = vunpack.c.h.b16 %v2979
    %v5183 = vunpack.c.l.b16 %v2980
    %v5184 = vunpack.c.h.b16 %v2980
    %v5185 = vunpack.c.l.b16 %v2981
    %v5186 = vunpack.c.h.b16 %v2981
    %v5187 = vunpack.c.l.b16 %v2982
    %v5188 = vunpack.c.h.b16 %v2982
    %v5189 = vunpack.c.l.b16 %v2983
    %v5190 = vunpack.c.h.b16 %v2983
    %v5191 = vunpack.c.l.b16 %v2984
    %v5192 = vunpack.c.h.b16 %v2984
    %v5193 = vunpack.c.l.b16 %v2985
    %v5194 = vunpack.c.h.b16 %v2985
    %v5195 = vunpack.c.l.b16 %v2986
    %v5196 = vunpack.c.h.b16 %v2986
    %v5197 = vunpack.c.l.b16 %v2987
    %v5198 = vunpack.c.h.b16 %v2987
    %v5199 = vunpack.c.l.b16 %v2988
    %v5200 = vunpack.c.h.b16 %v2988
    %v5201 = vunpack.c.l.b16 %v2989
    %v5202 = vunpack.c.h.b16 %v2989
    %v5203 = vunpack.c.l.b16 %v2990
    %v5204 = vunpack.c.h.b16 %v2990
    %v5205 = vunpack.c.l.b16 %v2991
    %v5206 = vunpack.c.h.b16 %v2991
    %v5207 = vunpack.c.l.b16 %v2992
    %v5208 = vunpack.c.h.b16 %v2992
    %v5209 = vunpack.c.l.b16 %v2993
    %v5210 = vunpack.c.h.b16 %v2993
    %v5211 = vunpack.c.l.b16 %v2994
    %v5212 = vunpack.c.h.b16 %v2994
    %v5213 = vunpack.c.l.b16 %v2995
    %v5214 = vunpack.c.h.b16 %v2995
    %v5215 = vunpack.c.l.b16 %v2996
    %v5216 = vunpack.c.h.b16 %v2996
    %v5217 = vunpack.c.l.b16 %v2997
    %v5218 = vunpack.c.h.b16 %v2997
    %v5219 = vunpack.c.l.b16 %v2998
    %v5220 = vunpack.c.h.b16 %v2998
    %v5221 = vunpack.c.l.b16 %v2999
    %v5222 = vunpack.c.h.b16 %v2999
    %v5223 = vunpack.c.l.b16 %v3000
    %v5224 = vunpack.c.h.b16 %v3000
    %v5225 = vunpack.c.l.b16 %v3001
    %v5226 = vunpack.c.h.b16 %v3001
    %v5227 = vunpack.c.l.b16 %v3002
    %v5228 = vunpack.c.h.b16 %v3002
    %v5229 = vunpack.c.l.b16 %v3003
    %v5230 = vunpack.c.h.b16 %v3003
    %v5231 = vunpack.c.l.b16 %v3004
    %v5232 = vunpack.c.h.b16 %v3004
    %v5233 = vunpack.c.l.b16 %v3005
    %v5234 = vunpack.c.h.b16 %v3005
    %v5235 = vunpack.c.l.b16 %v3006
    %v5236 = vunpack.c.h.b16 %v3006
    %v5237 = vunpack.c.l.b16 %v3007
    %v5238 = vunpack.c.h.b16 %v3007
    %v5239 = vunpack.c.l.b16 %v3008
    %v5240 = vunpack.c.h.b16 %v3008
    %v5241 = vunpack.c.l.b16 %v3009
    %v5242 = vunpack.c.h.b16 %v3009
    %v5243 = vunpack.c.l.b16 %v3010
    %v5244 = vunpack.c.h.b16 %v3010
    %v5245 = vunpack.c.l.b16 %v3011
    %v5246 = vunpack.c.h.b16 %v3011
    %v5247 = vunpack.c.l.b16 %v3012
    %v5248 = vunpack.c.h.b16 %v3012
    %v5249 = vunpack.c.l.b16 %v3013
    %v5250 = vunpack.c.h.b16 %v3013
    %v5251 = vunpack.c.l.b16 %v3014
    %v5252 = vunpack.c.h.b16 %v3014
    %v5253 = vunpack.c.l.b16 %v3015
    %v5254 = vunpack.c.h.b16 %v3015
    %v5255 = vunpack.c.l.b16 %v3016
    %v5256 = vunpack.c.h.b16 %v3016
    %v5257 = vunpack.c.l.b16 %v3017
    %v5258 = vunpack.c.h.b16 %v3017
    %v5259 = vunpack.c.l.b16 %v3018
    %v5260 = vunpack.c.h.b16 %v3018
    %v5261 = vunpack.c.l.b16 %v3019
    %v5262 = vunpack.c.h.b16 %v3019
    %v5263 = vunpack.c.l.b16 %v3020
    %v5264 = vunpack.c.h.b16 %v3020
    %v5265 = vunpack.c.l.b16 %v3021
    %v5266 = vunpack.c.h.b16 %v3021
    %v5267 = vunpack.c.l.b16 %v3022
    %v5268 = vunpack.c.h.b16 %v3022
    %v5269 = vunpack.c.l.b16 %v3023
    %v5270 = vunpack.c.h.b16 %v3023
    %v5271 = vunpack.c.l.b16 %v3024
    %v5272 = vunpack.c.h.b16 %v3024
    %v5273 = vunpack.c.l.b16 %v3025
    %v5274 = vunpack.c.h.b16 %v3025
    %v5275 = vunpack.c.l.b16 %v3026
    %v5276 = vunpack.c.h.b16 %v3026
    %v5277 = vunpack.c.l.b16 %v3027
    %v5278 = vunpack.c.h.b16 %v3027
    %v5279 = vunpack.c.l.b16 %v3028
    %v5280 = vunpack.c.h.b16 %v3028
    %v5281 = vunpack.c.l.b16 %v3029
    %v5282 = vunpack.c.h.b16 %v3029
    %v5283 = vunpack.c.l.b16 %v3030
    %v5284 = vunpack.c.h.b16 %v3030
    %v5285 = vunpack.c.l.b16 %v3031
    %v5286 = vunpack.c.h.b16 %v3031
    %v5287 = vunpack.c.l.b16 %v3032
    %v5288 = vunpack.c.h.b16 %v3032
    %v5289 = vunpack.c.l.b16 %v3033
    %v5290 = vunpack.c.h.b16 %v3033
    %v5291 = vunpack.c.l.b16 %v3034
    %v5292 = vunpack.c.h.b16 %v3034
    %v5293 = vunpack.c.l.b16 %v3035
    %v5294 = vunpack.c.h.b16 %v3035
    %v5295 = vunpack.c.l.b16 %v3036
    %v5296 = vunpack.c.h.b16 %v3036
    %v5297 = vunpack.c.l.b16 %v3037
    %v5298 = vunpack.c.h.b16 %v3037
    %v5299 = vunpack.c.l.b16 %v3038
    %v5300 = vunpack.c.h.b16 %v3038
    %v5301 = vunpack.c.l.b16 %v3039
    %v5302 = vunpack.c.h.b16 %v3039
    %v5303 = vunpack.c.l.b16 %v3040
    %v5304 = vunpack.c.h.b16 %v3040
    %v5305 = vunpack.c.l.b16 %v3041
    %v5306 = vunpack.c.h.b16 %v3041
    %v5307 = vunpack.c.l.b16 %v3042
    %v5308 = vunpack.c.h.b16 %v3042
    %v5309 = vunpack.c.l.b16 %v3043
    %v5310 = vunpack.c.h.b16 %v3043
    %v5311 = vunpack.c.l.b16 %v3044
    %v5312 = vunpack.c.h.b16 %v3044
    %v5313 = vunpack.c.l.b16 %v3045
    %v5314 = vunpack.c.h.b16 %v3045
    %v5315 = vunpack.c.l.b16 %v3046
    %v5316 = vunpack.c.h.b16 %v3046
    %v5317 = vunpack.c.l.b16 %v3047
    %v5318 = vunpack.c.h.b16 %v3047
    %v5319 = vunpack.c.l.b16 %v3048
    %v5320 = vunpack.c.h.b16 %v3048
    %v5321 = vunpack.c.l.b16 %v3049
    %v5322 = vunpack.c.h.b16 %v3049
    %v5323 = vunpack.c.l.b16 %v3050
    %v5324 = vunpack.c.h.b16 %v3050
    %v5325 = vunpack.c.l.b16 %v3051
    %v5326 = vunpack.c.h.b16 %v3051
    %v5327 = vunpack.c.l.b16 %v3052
    %v5328 = vunpack.c.h.b16 %v3052
    %v5329 = vunpack.c.l.b16 %v3053
    %v5330 = vunpack.c.h.b16 %v3053
    %v5331 = vunpack.c.l.b16 %v3054
    %v5332 = vunpack.c.h.b16 %v3054
    %v5333 = vunpack.c.l.b16 %v3055
    %v5334 = vunpack.c.h.b16 %v3055
    %v5335 = vunpack.c.l.b16 %v3056
    %v5336 = vunpack.c.h.b16 %v3056
    %v5337 = vunpack.c.l.b16 %v3057
    %v5338 = vunpack.c.h.b16 %v3057
    %v5339 = vunpack.c.l.b16 %v3058
    %v5340 = vunpack.c.h.b16 %v3058
    %v5341 = vunpack.c.l.b16 %v3059
    %v5342 = vunpack.c.h.b16 %v3059
    %v5343 = vunpack.c.l.b16 %v3060
    %v5344 = vunpack.c.h.b16 %v3060
    %v5345 = vunpack.c.l.b16 %v3061
    %v5346 = vunpack.c.h.b16 %v3061
    %v5347 = vunpack.c.l.b16 %v3062
    %v5348 = vunpack.c.h.b16 %v3062
    %v5349 = vunpack.c.l.b16 %v3063
    %v5350 = vunpack.c.h.b16 %v3063
    %v5351 = vunpack.c.l.b16 %v3064
    %v5352 = vunpack.c.h.b16 %v3064
    %v5353 = vunpack.c.l.b16 %v3065
    %v5354 = vunpack.c.h.b16 %v3065
    %v5355 = vunpack.c.l.b16 %v3066
    %v5356 = vunpack.c.h.b16 %v3066
    %v5357 = vunpack.c.l.b16 %v3067
    %v5358 = vunpack.c.h.b16 %v3067
    %v5359 = vunpack.c.l.b16 %v3068
    %v5360 = vunpack.c.h.b16 %v3068
    %v5361 = vunpack.c.l.b16 %v3069
    %v5362 = vunpack.c.h.b16 %v3069
    %v5363 = vunpack.c.l.b16 %v3070
    %v5364 = vunpack.c.h.b16 %v3070
    %v5365 = vunpack.c.l.b16 %v3071
    %v5366 = vunpack.c.h.b16 %v3071
    %v5367 = vunpack.c.l.b16 %v3072
    %v5368 = vunpack.c.h.b16 %v3072
    %v5369 = vunpack.c.l.b16 %v3073
    %v5370 = vunpack.c.h.b16 %v3073
    %v5371 = vunpack.c.l.b16 %v3074
    %v5372 = vunpack.c.h.b16 %v3074
    %v5373 = vunpack.c.l.b16 %v3075
    %v5374 = vunpack.c.h.b16 %v3075
    %v5375 = vunpack.c.l.b16 %v3076
    %v5376 = vunpack.c.h.b16 %v3076
    %v5377 = vunpack.c.l.b16 %v3077
    %v5378 = vunpack.c.h.b16 %v3077
    %v5379 = vunpack.c.l.b16 %v3078
    %v5380 = vunpack.c.h.b16 %v3078
    %v5381 = vunpack.c.l.b16 %v3079
    %v5382 = vunpack.c.h.b16 %v3079
    %v5383 = vunpack.c.l.b16 %v3080
    %v5384 = vunpack.c.h.b16 %v3080
    %v5385 = vunpack.c.l.b16 %v3081
    %v5386 = vunpack.c.h.b16 %v3081
    %v5387 = vunpack.c.l.b16 %v3082
    %v5388 = vunpack.c.h.b16 %v3082
    %v5389 = vunpack.c.l.b16 %v3083
    %v5390 = vunpack.c.h.b16 %v3083
    %v5391 = vunpack.c.l.b16 %v3084
    %v5392 = vunpack.c.h.b16 %v3084
    %v5393 = vunpack.c.l.b16 %v3085
    %v5394 = vunpack.c.h.b16 %v3085
    %v5395 = vunpack.c.l.b16 %v3086
    %v5396 = vunpack.c.h.b16 %v3086
    %v5397 = vunpack.c.l.b16 %v3087
    %v5398 = vunpack.c.h.b16 %v3087
    %v5399 = vunpack.c.l.b16 %v3088
    %v5400 = vunpack.c.h.b16 %v3088
    %v5401 = vunpack.c.l.b16 %v3089
    %v5402 = vunpack.c.h.b16 %v3089
    %v5403 = vunpack.c.l.b16 %v3090
    %v5404 = vunpack.c.h.b16 %v3090
    %v5405 = vunpack.c.l.b16 %v3091
    %v5406 = vunpack.c.h.b16 %v3091
    %v5407 = vunpack.c.l.b16 %v3092
    %v5408 = vunpack.c.h.b16 %v3092
    %v5409 = vunpack.c.l.b16 %v3093
    %v5410 = vunpack.c.h.b16 %v3093
    %v5411 = vunpack.c.l.b16 %v3094
    %v5412 = vunpack.c.h.b16 %v3094
    %v5413 = vunpack.c.l.b16 %v3095
    %v5414 = vunpack.c.h.b16 %v3095
    %v5415 = vunpack.c.l.b16 %v3096
    %v5416 = vunpack.c.h.b16 %v3096
    %v5417 = vunpack.c.l.b16 %v3097
    %v5418 = vunpack.c.h.b16 %v3097
    %v5419 = vunpack.c.l.b16 %v3098
    %v5420 = vunpack.c.h.b16 %v3098
    %v5421 = vunpack.c.l.b16 %v3099
    %v5422 = vunpack.c.h.b16 %v3099
    %v5423 = vunpack.c.l.b16 %v3100
    %v5424 = vunpack.c.h.b16 %v3100
    %v5425 = vunpack.c.l.b16 %v3101
    %v5426 = vunpack.c.h.b16 %v3101
    %v5427 = vunpack.c.l.b16 %v3102
    %v5428 = vunpack.c.h.b16 %v3102
    %v5429 = vunpack.c.l.b16 %v3103
    %v5430 = vunpack.c.h.b16 %v3103
    %v5431 = vunpack.c.l.b16 %v3104
    %v5432 = vunpack.c.h.b16 %v3104
    %v5433 = vunpack.c.l.b16 %v3105
    %v5434 = vunpack.c.h.b16 %v3105
    %v5435 = vunpack.c.l.b16 %v3106
    %v5436 = vunpack.c.h.b16 %v3106
    %v5437 = vunpack.c.l.b16 %v3107
    %v5438 = vunpack.c.h.b16 %v3107
    %v5439 = vunpack.c.l.b16 %v3108
    %v5440 = vunpack.c.h.b16 %v3108
    %v5441 = vunpack.c.l.b16 %v3109
    %v5442 = vunpack.c.h.b16 %v3109
    %v5443 = vunpack.c.l.b16 %v3110
    %v5444 = vunpack.c.h.b16 %v3110
    %v5445 = vunpack.c.l.b16 %v3111
    %v5446 = vunpack.c.h.b16 %v3111
    %v5447 = vunpack.c.l.b16 %v3112
    %v5448 = vunpack.c.h.b16 %v3112
    %v5449 = vunpack.c.l.b16 %v3113
    %v5450 = vunpack.c.h.b16 %v3113
    %v5451 = vunpack.c.l.b16 %v3114
    %v5452 = vunpack.c.h.b16 %v3114
    %v5453 = vunpack.c.l.b16 %v3115
    %v5454 = vunpack.c.h.b16 %v3115
    %v5455 = vunpack.c.l.b16 %v3116
    %v5456 = vunpack.c.h.b16 %v3116
    %v5457 = vunpack.c.l.b16 %v3117
    %v5458 = vunpack.c.h.b16 %v3117
    %v5459 = vunpack.c.l.b16 %v3118
    %v5460 = vunpack.c.h.b16 %v3118
    %v5461 = vunpack.c.l.b16 %v3119
    %v5462 = vunpack.c.h.b16 %v3119
    %v5463 = vunpack.c.l.b16 %v3120
    %v5464 = vunpack.c.h.b16 %v3120
    %v5465 = vunpack.c.l.b16 %v3121
    %v5466 = vunpack.c.h.b16 %v3121
    %v5467 = vunpack.c.l.b16 %v3122
    %v5468 = vunpack.c.h.b16 %v3122
    %v5469 = vunpack.c.l.b16 %v3123
    %v5470 = vunpack.c.h.b16 %v3123
    %v5471 = vunpack.c.l.b16 %v3124
    %v5472 = vunpack.c.h.b16 %v3124
    %v5473 = vunpack.c.l.b16 %v3125
    %v5474 = vunpack.c.h.b16 %v3125
    %v5475 = vunpack.c.l.b16 %v3126
    %v5476 = vunpack.c.h.b16 %v3126
    %v5477 = vunpack.c.l.b16 %v3127
    %v5478 = vunpack.c.h.b16 %v3127
    %v5479 = vunpack.c.l.b16 %v3128
    %v5480 = vunpack.c.h.b16 %v3128
    %v5481 = vunpack.c.l.b16 %v3129
    %v5482 = vunpack.c.h.b16 %v3129
    %v5483 = vunpack.c.l.b16 %v3130
    %v5484 = vunpack.c.h.b16 %v3130
    %v5485 = vunpack.c.l.b16 %v3131
    %v5486 = vunpack.c.h.b16 %v3131
    %v5487 = vunpack.c.l.b16 %v3132
    %v5488 = vunpack.c.h.b16 %v3132
    %v5489 = vunpack.c.l.b16 %v3133
    %v5490 = vunpack.c.h.b16 %v3133
    %v5491 = vunpack.c.l.b16 %v3134
    %v5492 = vunpack.c.h.b16 %v3134
    %v5493 = vunpack.c.l.b16 %v3135
    %v5494 = vunpack.c.h.b16 %v3135
    %v5495 = vunpack.c.l.b16 %v3136
    %v5496 = vunpack.c.h.b16 %v3136
    %v5497 = vunpack.c.l.b16 %v3137
    %v5498 = vunpack.c.h.b16 %v3137
    %v5499 = vunpack.c.l.b16 %v3138
    %v5500 = vunpack.c.h.b16 %v3138
    %v5501 = vunpack.c.l.b16 %v3139
    %v5502 = vunpack.c.h.b16 %v3139
    %v5503 = vunpack.c.l.b16 %v3140
    %v5504 = vunpack.c.h.b16 %v3140
    %v5505 = vunpack.c.l.b16 %v3141
    %v5506 = vunpack.c.h.b16 %v3141
    %v5507 = vunpack.c.l.b16 %v3142
    %v5508 = vunpack.c.h.b16 %v3142
    %v5509 = vunpack.c.l.b16 %v3143
    %v5510 = vunpack.c.h.b16 %v3143
    %v5511 = vunpack.c.l.b16 %v3144
    %v5512 = vunpack.c.h.b16 %v3144
    %v5513 = vunpack.c.l.b16 %v3145
    %v5514 = vunpack.c.h.b16 %v3145
    %v5515 = vunpack.c.l.b16 %v3146
    %v5516 = vunpack.c.h.b16 %v3146
    %v5517 = vunpack.c.l.b16 %v3147
    %v5518 = vunpack.c.h.b16 %v3147
    %v5519 = vunpack.c.l.b16 %v3148
    %v5520 = vunpack.c.h.b16 %v3148
    %v5521 = vunpack.c.l.b16 %v3149
    %v5522 = vunpack.c.h.b16 %v3149
    %v5523 = vunpack.c.l.b16 %v3150
    %v5524 = vunpack.c.h.b16 %v3150
    %v5525 = vunpack.c.l.b16 %v3151
    %v5526 = vunpack.c.h.b16 %v3151
    %v5527 = vunpack.c.l.b16 %v3152
    %v5528 = vunpack.c.h.b16 %v3152
    %v5529 = vunpack.c.l.b16 %v3153
    %v5530 = vunpack.c.h.b16 %v3153
    %v5531 = vunpack.c.l.b16 %v3154
    %v5532 = vunpack.c.h.b16 %v3154
    %v5533 = vunpack.c.l.b16 %v3155
    %v5534 = vunpack.c.h.b16 %v3155
    %v5535 = vunpack.c.l.b16 %v3156
    %v5536 = vunpack.c.h.b16 %v3156
    %v5537 = vunpack.c.l.b16 %v3157
    %v5538 = vunpack.c.h.b16 %v3157
    %v5539 = vunpack.c.l.b16 %v3158
    %v5540 = vunpack.c.h.b16 %v3158
    %v5541 = vunpack.c.l.b16 %v3159
    %v5542 = vunpack.c.h.b16 %v3159
    %v5543 = vunpack.c.l.b16 %v3160
    %v5544 = vunpack.c.h.b16 %v3160
    %v5545 = vunpack.c.l.b16 %v3161
    %v5546 = vunpack.c.h.b16 %v3161
    %v5547 = vunpack.c.l.b16 %v3162
    %v5548 = vunpack.c.h.b16 %v3162
    %v5549 = vunpack.c.l.b16 %v3163
    %v5550 = vunpack.c.h.b16 %v3163
    %v5551 = vunpack.c.l.b16 %v3164
    %v5552 = vunpack.c.h.b16 %v3164
    %v5553 = vunpack.c.l.b16 %v3165
    %v5554 = vunpack.c.h.b16 %v3165
    %v5555 = vunpack.c.l.b16 %v3166
    %v5556 = vunpack.c.h.b16 %v3166
    %v5557 = vunpack.c.l.b16 %v3167
    %v5558 = vunpack.c.h.b16 %v3167
    %v5559 = vunpack.c.l.b16 %v3168
    %v5560 = vunpack.c.h.b16 %v3168
    %v5561 = vunpack.c.l.b16 %v3169
    %v5562 = vunpack.c.h.b16 %v3169
    %v5563 = vunpack.c.l.b16 %v3170
    %v5564 = vunpack.c.h.b16 %v3170
    %v5565 = vunpack.c.l.b16 %v3171
    %v5566 = vunpack.c.h.b16 %v3171
    %v5567 = vunpack.c.l.b16 %v3172
    %v5568 = vunpack.c.h.b16 %v3172
    %v5569 = vunpack.c.l.b16 %v3173
    %v5570 = vunpack.c.h.b16 %v3173
    %v5571 = vunpack.c.l.b16 %v3174
    %v5572 = vunpack.c.h.b16 %v3174
    %v5573 = vunpack.c.l.b16 %v3175
    %v5574 = vunpack.c.h.b16 %v3175
    %v5575 = vunpack.c.l.b16 %v3176
    %v5576 = vunpack.c.h.b16 %v3176
    %v5577 = vunpack.c.l.b16 %v3177
    %v5578 = vunpack.c.h.b16 %v3177
    %v5579 = vunpack.c.l.b16 %v3178
    %v5580 = vunpack.c.h.b16 %v3178
    %v5581 = vunpack.c.l.b16 %v3179
    %v5582 = vunpack.c.h.b16 %v3179
    %v5583 = vunpack.c.l.b16 %v3180
    %v5584 = vunpack.c.h.b16 %v3180
    %v5585 = vunpack.c.l.b16 %v3181
    %v5586 = vunpack.c.h.b16 %v3181
    %v5587 = vunpack.c.l.b16 %v3182
    %v5588 = vunpack.c.h.b16 %v3182
    %v5589 = vunpack.c.l.b16 %v3183
    %v5590 = vunpack.c.h.b16 %v3183
    %v5591 = vunpack.c.l.b16 %v3184
    %v5592 = vunpack.c.h.b16 %v3184
    %v5593 = vunpack.c.l.b16 %v3185
    %v5594 = vunpack.c.h.b16 %v3185
    %v5595 = vunpack.c.l.b16 %v3186
    %v5596 = vunpack.c.h.b16 %v3186
    %v5597 = vunpack.c.l.b16 %v3187
    %v5598 = vunpack.c.h.b16 %v3187
    %v5599 = vunpack.c.l.b16 %v3188
    %v5600 = vunpack.c.h.b16 %v3188
    %v5601 = vunpack.c.l.b16 %v3189
    %v5602 = vunpack.c.h.b16 %v3189
    %v5603 = vunpack.c.l.b16 %v3190
    %v5604 = vunpack.c.h.b16 %v3190
    %v5605 = vunpack.c.l.b16 %v3191
    %v5606 = vunpack.c.h.b16 %v3191
    %v5607 = vunpack.c.l.b16 %v3192
    %v5608 = vunpack.c.h.b16 %v3192
    %v5609 = vunpack.c.l.b16 %v3193
    %v5610 = vunpack.c.h.b16 %v3193
    %v5611 = vunpack.c.l.b16 %v3194
    %v5612 = vunpack.c.h.b16 %v3194
    %v5613 = vunpack.c.l.b16 %v3195
    %v5614 = vunpack.c.h.b16 %v3195
    %v5615 = vunpack.c.l.b16 %v3196
    %v5616 = vunpack.c.h.b16 %v3196
    %v5617 = vunpack.c.l.b16 %v3197
    %v5618 = vunpack.c.h.b16 %v3197
    %v5619 = vunpack.c.l.b16 %v3198
    %v5620 = vunpack.c.h.b16 %v3198
    %v5621 = vunpack.c.l.b16 %v3199
    %v5622 = vunpack.c.h.b16 %v3199
    %v5623 = vunpack.c.l.b16 %v3200
    %v5624 = vunpack.c.h.b16 %v3200
    %v5625 = vpack.c.b16 %v4097, %v4089
    %v5626 = vpack.c.b16 %v4098, %v4090
    %v5627 = vpack.c.b16 %v4099, %v4091
    %v5628 = vpack.c.b16 %v4100, %v4092
    %v5629 = vpack.c.b16 %v4101, %v4093
    %v5630 = vpack.c.b16 %v4102, %v4094
    %v5631 = vpack.c.b16 %v4103, %v4095
    %v5632 = vpack.c.b16 %v4104, %v4096
    %v5633 = vpack.c.b16 %v4113, %v4105
    %v5634 = vpack.c.b16 %v4114, %v4106
    %v5635 = vpack.c.b16 %v4115, %v4107
    %v5636 = vpack.c.b16 %v4116, %v4108
    %v5637 = vpack.c.b16 %v4117, %v4109
    %v5638 = vpack.c.b16 %v4118, %v4110
    %v5639 = vpack.c.b16 %v4119, %v4111
    %v5640 = vpack.c.b16 %v4120, %v4112
    %v5641 = vpack.c.b16 %v4129, %v4121
    %v5642 = vpack.c.b16 %v4130, %v4122
    %v5643 = vpack.c.b16 %v4131, %v4123
    %v5644 = vpack.c.b16 %v4132, %v4124
    %v5645 = vpack.c.b16 %v4133, %v4125
    %v5646 = vpack.c.b16 %v4134, %v4126
    %v5647 = vpack.c.b16 %v4135, %v4127
    %v5648 = vpack.c.b16 %v4136, %v4128
    %v5649 = vpack.c.b16 %v4145, %v4137
    %v5650 = vpack.c.b16 %v4146, %v4138
    %v5651 = vpack.c.b16 %v4147, %v4139
    %v5652 = vpack.c.b16 %v4148, %v4140
    %v5653 = vpack.c.b16 %v4149, %v4141
    %v5654 = vpack.c.b16 %v4150, %v4142
    %v5655 = vpack.c.b16 %v4151, %v4143
    %v5656 = vpack.c.b16 %v4152, %v4144
    %v5657 = vpack.c.b16 %v4161, %v4153
    %v5658 = vpack.c.b16 %v4162, %v4154
    %v5659 = vpack.c.b16 %v4163, %v4155
    %v5660 = vpack.c.b16 %v4164, %v4156
    %v5661 = vpack.c.b16 %v4165, %v4157
    %v5662 = vpack.c.b16 %v4166, %v4158
    %v5663 = vpack.c.b16 %v4167, %v4159
    %v5664 = vpack.c.b16 %v4168, %v4160
    %v5665 = vpack.c.b16 %v4177, %v4169
    %v5666 = vpack.c.b16 %v4178, %v4170
    %v5667 = vpack.c.b16 %v4179, %v4171
    %v5668 = vpack.c.b16 %v4180, %v4172
    %v5669 = vpack.c.b16 %v4181, %v4173
    %v5670 = vpack.c.b16 %v4182, %v4174
    %v5671 = vpack.c.b16 %v4183, %v4175
    %v5672 = vpack.c.b16 %v4184, %v4176
    %v5673 = vpack.c.b16 %v4193, %v4185
    %v5674 = vpack.c.b16 %v4194, %v4186
    %v5675 = vpack.c.b16 %v4195, %v4187
    %v5676 = vpack.c.b16 %v4196, %v4188
    %v5677 = vpack.c.b16 %v4197, %v4189
    %v5678 = vpack.c.b16 %v4198, %v4190
    %v5679 = vpack.c.b16 %v4199, %v4191
    %v5680 = vpack.c.b16 %v4200, %v4192
    %v5681 = vpack.c.b16 %v4209, %v4201
    %v5682 = vpack.c.b16 %v4210, %v4202
    %v5683 = vpack.c.b16 %v4211, %v4203
    %v5684 = vpack.c.b16 %v4212, %v4204
    %v5685 = vpack.c.b16 %v4213, %v4205
    %v5686 = vpack.c.b16 %v4214, %v4206
    %v5687 = vpack.c.b16 %v4215, %v4207
    %v5688 = vpack.c.b16 %v4216, %v4208
    %v5689 = vpack.c.b16 %v4225, %v4217
    %v5690 = vpack.c.b16 %v4226, %v4218
    %v5691 = vpack.c.b16 %v4227, %v4219
    %v5692 = vpack.c.b16 %v4228, %v4220
    %v5693 = vpack.c.b16 %v4229, %v4221
    %v5694 = vpack.c.b16 %v4230, %v4222
    %v5695 = vpack.c.b16 %v4231, %v4223
    %v5696 = vpack.c.b16 %v4232, %v4224
    %v5697 = vpack.c.b16 %v4241, %v4233
    %v5698 = vpack.c.b16 %v4242, %v4234
    %v5699 = vpack.c.b16 %v4243, %v4235
    %v5700 = vpack.c.b16 %v4244, %v4236
    %v5701 = vpack.c.b16 %v4245, %v4237
    %v5702 = vpack.c.b16 %v4246, %v4238
    %v5703 = vpack.c.b16 %v4247, %v4239
    %v5704 = vpack.c.b16 %v4248, %v4240
    %v5705 = vpack.c.b16 %v4257, %v4249
    %v5706 = vpack.c.b16 %v4258, %v4250
    %v5707 = vpack.c.b16 %v4259, %v4251
    %v5708 = vpack.c.b16 %v4260, %v4252
    %v5709 = vpack.c.b16 %v4261, %v4253
    %v5710 = vpack.c.b16 %v4262, %v4254
    %v5711 = vpack.c.b16 %v4263, %v4255
    %v5712 = vpack.c.b16 %v4264, %v4256
    %v5713 = vpack.c.b16 %v4273, %v4265
    %v5714 = vpack.c.b16 %v4274, %v4266
    %v5715 = vpack.c.b16 %v4275, %v4267
    %v5716 = vpack.c.b16 %v4276, %v4268
    %v5717 = vpack.c.b16 %v4277, %v4269
    %v5718 = vpack.c.b16 %v4278, %v4270
    %v5719 = vpack.c.b16 %v4279, %v4271
    %v5720 = vpack.c.b16 %v4280, %v4272
    %v5721 = vpack.c.b16 %v4289, %v4281
    %v5722 = vpack.c.b16 %v4290, %v4282
    %v5723 = vpack.c.b16 %v4291, %v4283
    %v5724 = vpack.c.b16 %v4292, %v4284
    %v5725 = vpack.c.b16 %v4293, %v4285
    %v5726 = vpack.c.b16 %v4294, %v4286
    %v5727 = vpack.c.b16 %v4295, %v4287
    %v5728 = vpack.c.b16 %v4296, %v4288
    %v5729 = vpack.c.b16 %v4305, %v4297
    %v5730 = vpack.c.b16 %v4306, %v4298
    %v5731 = vpack.c.b16 %v4307, %v4299
    %v5732 = vpack.c.b16 %v4308, %v4300
    %v5733 = vpack.c.b16 %v4309, %v4301
    %v5734 = vpack.c.b16 %v4310, %v4302
    %v5735 = vpack.c.b16 %v4311, %v4303
    %v5736 = vpack.c.b16 %v4312, %v4304
    %v5737 = vpack.c.b16 %v4321, %v4313
    %v5738 = vpack.c.b16 %v4322, %v4314
    %v5739 = vpack.c.b16 %v4323, %v4315
    %v5740 = vpack.c.b16 %v4324, %v4316
    %v5741 = vpack.c.b16 %v4325, %v4317
    %v5742 = vpack.c.b16 %v4326, %v4318
    %v5743 = vpack.c.b16 %v4327, %v4319
    %v5744 = vpack.c.b16 %v4328, %v4320
    %v5745 = vpack.c.b16 %v4337, %v4329
    %v5746 = vpack.c.b16 %v4338, %v4330
    %v5747 = vpack.c.b16 %v4339, %v4331
    %v5748 = vpack.c.b16 %v4340, %v4332
    %v5749 = vpack.c.b16 %v4341, %v4333
    %v5750 = vpack.c.b16 %v4342, %v4334
    %v5751 = vpack.c.b16 %v4343, %v4335
    %v5752 = vpack.c.b16 %v4344, %v4336
    %v5753 = vpack.c.b16 %v4353, %v4345
    %v5754 = vpack.c.b16 %v4354, %v4346
    %v5755 = vpack.c.b16 %v4355, %v4347
    %v5756 = vpack.c.b16 %v4356, %v4348
    %v5757 = vpack.c.b16 %v4357, %v4349
    %v5758 = vpack.c.b16 %v4358, %v4350
    %v5759 = vpack.c.b16 %v4359, %v4351
    %v5760 = vpack.c.b16 %v4360, %v4352
    %v5761 = vpack.c.b16 %v4369, %v4361
    %v5762 = vpack.c.b16 %v4370, %v4362
    %v5763 = vpack.c.b16 %v4371, %v4363
    %v5764 = vpack.c.b16 %v4372, %v4364
    %v5765 = vpack.c.b16 %v4373, %v4365
    %v5766 = vpack.c.b16 %v4374, %v4366
    %v5767 = vpack.c.b16 %v4375, %v4367
    %v5768 = vpack.c.b16 %v4376, %v4368
    %v5769 = vpack.c.b16 %v4385, %v4377
    %v5770 = vpack.c.b16 %v4386, %v4378
    %v5771 = vpack.c.b16 %v4387, %v4379
    %v5772 = vpack.c.b16 %v4388, %v4380
    %v5773 = vpack.c.b16 %v4389, %v4381
    %v5774 = vpack.c.b16 %v4390, %v4382
    %v5775 = vpack.c.b16 %v4391, %v4383
    %v5776 = vpack.c.b16 %v4392, %v4384
    %v5777 = vpack.c.b16 %v4401, %v4393
    %v5778 = vpack.c.b16 %v4402, %v4394
    %v5779 = vpack.c.b16 %v4403, %v4395
    %v5780 = vpack.c.b16 %v4404, %v4396
    %v5781 = vpack.c.b16 %v4405, %v4397
    %v5782 = vpack.c.b16 %v4406, %v4398
    %v5783 = vpack.c.b16 %v4407, %v4399
    %v5784 = vpack.c.b16 %v4408, %v4400
    %v5785 = vpack.c.b16 %v4417, %v4409
    %v5786 = vpack.c.b16 %v4418, %v4410
    %v5787 = vpack.c.b16 %v4419, %v4411
    %v5788 = vpack.c.b16 %v4420, %v4412
    %v5789 = vpack.c.b16 %v4421, %v4413
    %v5790 = vpack.c.b16 %v4422, %v4414
    %v5791 = vpack.c.b16 %v4423, %v4415
    %v5792 = vpack.c.b16 %v4424, %v4416
    %v5793 = vpack.c.b16 %v4433, %v4425
    %v5794 = vpack.c.b16 %v4434, %v4426
    %v5795 = vpack.c.b16 %v4435, %v4427
    %v5796 = vpack.c.b16 %v4436, %v4428
    %v5797 = vpack.c.b16 %v4437, %v4429
    %v5798 = vpack.c.b16 %v4438, %v4430
    %v5799 = vpack.c.b16 %v4439, %v4431
    %v5800 = vpack.c.b16 %v4440, %v4432
    %v5801 = vpack.c.b16 %v4449, %v4441
    %v5802 = vpack.c.b16 %v4450, %v4442
    %v5803 = vpack.c.b16 %v4451, %v4443
    %v5804 = vpack.c.b16 %v4452, %v4444
    %v5805 = vpack.c.b16 %v4453, %v4445
    %v5806 = vpack.c.b16 %v4454, %v4446
    %v5807 = vpack.c.b16 %v4455, %v4447
    %v5808 = vpack.c.b16 %v4456, %v4448
    %v5809 = vpack.c.b16 %v4465, %v4457
    %v5810 = vpack.c.b16 %v4466, %v4458
    %v5811 = vpack.c.b16 %v4467, %v4459
    %v5812 = vpack.c.b16 %v4468, %v4460
    %v5813 = vpack.c.b16 %v4469, %v4461
    %v5814 = vpack.c.b16 %v4470, %v4462
    %v5815 = vpack.c.b16 %v4471, %v4463
    %v5816 = vpack.c.b16 %v4472, %v4464
    %v5817 = vpack.c.b16 %v4481, %v4473
    %v5818 = vpack.c.b16 %v4482, %v4474
    %v5819 = vpack.c.b16 %v4483, %v4475
    %v5820 = vpack.c.b16 %v4484, %v4476
    %v5821 = vpack.c.b16 %v4485, %v4477
    %v5822 = vpack.c.b16 %v4486, %v4478
    %v5823 = vpack.c.b16 %v4487, %v4479
    %v5824 = vpack.c.b16 %v4488, %v4480
    %v5825 = vpack.c.b16 %v4497, %v4489
    %v5826 = vpack.c.b16 %v4498, %v4490
    %v5827 = vpack.c.b16 %v4499, %v4491
    %v5828 = vpack.c.b16 %v4500, %v4492
    %v5829 = vpack.c.b16 %v4501, %v4493
    %v5830 = vpack.c.b16 %v4502, %v4494
    %v5831 = vpack.c.b16 %v4503, %v4495
    %v5832 = vpack.c.b16 %v4504, %v4496
    %v5833 = vpack.c.b16 %v4513, %v4505
    %v5834 = vpack.c.b16 %v4514, %v4506
    %v5835 = vpack.c.b16 %v4515, %v4507
    %v5836 = vpack.c.b16 %v4516, %v4508
    %v5837 = vpack.c.b16 %v4517, %v4509
    %v5838 = vpack.c.b16 %v4518, %v4510
    %v5839 = vpack.c.b16 %v4519, %v4511
    %v5840 = vpack.c.b16 %v4520, %v4512
    %v5841 = vpack.c.b16 %v4529, %v4521
    %v5842 = vpack.c.b16 %v4530, %v4522
    %v5843 = vpack.c.b16 %v4531, %v4523
    %v5844 = vpack.c.b16 %v4532, %v4524
    %v5845 = vpack.c.b16 %v4533, %v4525
    %v5846 = vpack.c.b16 %v4534, %v4526
    %v5847 = vpack.c.b16 %v4535, %v4527
    %v5848 = vpack.c.b16 %v4536, %v4528
    %v5849 = vpack.c.b16 %v4545, %v4537
    %v5850 = vpack.c.b16 %v4546, %v4538
    %v5851 = vpack.c.b16 %v4547, %v4539
    %v5852 = vpack.c.b16 %v4548, %v4540
    %v5853 = vpack.c.b16 %v4549, %v4541
    %v5854 = vpack.c.b16 %v4550, %v4542
    %v5855 = vpack.c.b16 %v4551, %v4543
    %v5856 = vpack.c.b16 %v4552, %v4544
    %v5857 = vpack.c.b16 %v4561, %v4553
    %v5858 = vpack.c.b16 %v4562, %v4554
    %v5859 = vpack.c.b16 %v4563, %v4555
    %v5860 = vpack.c.b16 %v4564, %v4556
    %v5861 = vpack.c.b16 %v4565, %v4557
    %v5862 = vpack.c.b16 %v4566, %v4558
    %v5863 = vpack.c.b16 %v4567, %v4559
    %v5864 = vpack.c.b16 %v4568, %v4560
    %v5865 = vpack.c.b16 %v4577, %v4569
    %v5866 = vpack.c.b16 %v4578, %v4570
    %v5867 = vpack.c.b16 %v4579, %v4571
    %v5868 = vpack.c.b16 %v4580, %v4572
    %v5869 = vpack.c.b16 %v4581, %v4573
    %v5870 = vpack.c.b16 %v4582, %v4574
    %v5871 = vpack.c.b16 %v4583, %v4575
    %v5872 = vpack.c.b16 %v4584, %v4576
    %v5873 = vpack.c.b16 %v4593, %v4585
    %v5874 = vpack.c.b16 %v4594, %v4586
    %v5875 = vpack.c.b16 %v4595, %v4587
    %v5876 = vpack.c.b16 %v4596, %v4588
    %v5877 = vpack.c.b16 %v4597, %v4589
    %v5878 = vpack.c.b16 %v4598, %v4590
    %v5879 = vpack.c.b16 %v4599, %v4591
    %v5880 = vpack.c.b16 %v4600, %v4592
    %v5881 = vpack.c.b16 %v4609, %v4601
    %v5882 = vpack.c.b16 %v4610, %v4602
    %v5883 = vpack.c.b16 %v4611, %v4603
    %v5884 = vpack.c.b16 %v4612, %v4604
    %v5885 = vpack.c.b16 %v4613, %v4605
    %v5886 = vpack.c.b16 %v4614, %v4606
    %v5887 = vpack.c.b16 %v4615, %v4607
    %v5888 = vpack.c.b16 %v4616, %v4608
    %v5889 = vpack.c.b16 %v4625, %v4617
    %v5890 = vpack.c.b16 %v4626, %v4618
    %v5891 = vpack.c.b16 %v4627, %v4619
    %v5892 = vpack.c.b16 %v4628, %v4620
    %v5893 = vpack.c.b16 %v4629, %v4621
    %v5894 = vpack.c.b16 %v4630, %v4622
    %v5895 = vpack.c.b16 %v4631, %v4623
    %v5896 = vpack.c.b16 %v4632, %v4624
    %v5897 = vpack.c.b16 %v4641, %v4633
    %v5898 = vpack.c.b16 %v4642, %v4634
    %v5899 = vpack.c.b16 %v4643, %v4635
    %v5900 = vpack.c.b16 %v4644, %v4636
    %v5901 = vpack.c.b16 %v4645, %v4637
    %v5902 = vpack.c.b16 %v4646, %v4638
    %v5903 = vpack.c.b16 %v4647, %v4639
    %v5904 = vpack.c.b16 %v4648, %v4640
    %v5905 = vpack.c.b16 %v4657, %v4649
    %v5906 = vpack.c.b16 %v4658, %v4650
    %v5907 = vpack.c.b16 %v4659, %v4651
    %v5908 = vpack.c.b16 %v4660, %v4652
    %v5909 = vpack.c.b16 %v4661, %v4653
    %v5910 = vpack.c.b16 %v4662, %v4654
    %v5911 = vpack.c.b16 %v4663, %v4655
    %v5912 = vpack.c.b16 %v4664, %v4656
    %v5913 = vpack.c.b16 %v4673, %v4665
    %v5914 = vpack.c.b16 %v4674, %v4666
    %v5915 = vpack.c.b16 %v4675, %v4667
    %v5916 = vpack.c.b16 %v4676, %v4668
    %v5917 = vpack.c.b16 %v4677, %v4669
    %v5918 = vpack.c.b16 %v4678, %v4670
    %v5919 = vpack.c.b16 %v4679, %v4671
    %v5920 = vpack.c.b16 %v4680, %v4672
    %v5921 = vpack.c.b16 %v4689, %v4681
    %v5922 = vpack.c.b16 %v4690, %v4682
    %v5923 = vpack.c.b16 %v4691, %v4683
    %v5924 = vpack.c.b16 %v4692, %v4684
    %v5925 = vpack.c.b16 %v4693, %v4685
    %v5926 = vpack.c.b16 %v4694, %v4686
    %v5927 = vpack.c.b16 %v4695, %v4687
    %v5928 = vpack.c.b16 %v4696, %v4688
    %v5929 = vpack.c.b16 %v4705, %v4697
    %v5930 = vpack.c.b16 %v4706, %v4698
    %v5931 = vpack.c.b16 %v4707, %v4699
    %v5932 = vpack.c.b16 %v4708, %v4700
    %v5933 = vpack.c.b16 %v4709, %v4701
    %v5934 = vpack.c.b16 %v4710, %v4702
    %v5935 = vpack.c.b16 %v4711, %v4703
    %v5936 = vpack.c.b16 %v4712, %v4704
    %v5937 = vpack.c.b16 %v4721, %v4713
    %v5938 = vpack.c.b16 %v4722, %v4714
    %v5939 = vpack.c.b16 %v4723, %v4715
    %v5940 = vpack.c.b16 %v4724, %v4716
    %v5941 = vpack.c.b16 %v4725, %v4717
    %v5942 = vpack.c.b16 %v4726, %v4718
    %v5943 = vpack.c.b16 %v4727, %v4719
    %v5944 = vpack.c.b16 %v4728, %v4720
    %v5945 = vpack.c.b16 %v4737, %v4729
    %v5946 = vpack.c.b16 %v4738, %v4730
    %v5947 = vpack.c.b16 %v4739, %v4731
    %v5948 = vpack.c.b16 %v4740, %v4732
    %v5949 = vpack.c.b16 %v4741, %v4733
    %v5950 = vpack.c.b16 %v4742, %v4734
    %v5951 = vpack.c.b16 %v4743, %v4735
    %v5952 = vpack.c.b16 %v4744, %v4736
    %v5953 = vpack.c.b16 %v4753, %v4745
    %v5954 = vpack.c.b16 %v4754, %v4746
    %v5955 = vpack.c.b16 %v4755, %v4747
    %v5956 = vpack.c.b16 %v4756, %v4748
    %v5957 = vpack.c.b16 %v4757, %v4749
    %v5958 = vpack.c.b16 %v4758, %v4750
    %v5959 = vpack.c.b16 %v4759, %v4751
    %v5960 = vpack.c.b16 %v4760, %v4752
    %v5961 = vpack.c.b16 %v4769, %v4761
    %v5962 = vpack.c.b16 %v4770, %v4762
    %v5963 = vpack.c.b16 %v4771, %v4763
    %v5964 = vpack.c.b16 %v4772, %v4764
    %v5965 = vpack.c.b16 %v4773, %v4765
    %v5966 = vpack.c.b16 %v4774, %v4766
    %v5967 = vpack.c.b16 %v4775, %v4767
    %v5968 = vpack.c.b16 %v4776, %v4768
    %v5969 = vpack.c.b16 %v4785, %v4777
    %v5970 = vpack.c.b16 %v4786, %v4778
    %v5971 = vpack.c.b16 %v4787, %v4779
    %v5972 = vpack.c.b16 %v4788, %v4780
    %v5973 = vpack.c.b16 %v4789, %v4781
    %v5974 = vpack.c.b16 %v4790, %v4782
    %v5975 = vpack.c.b16 %v4791, %v4783
    %v5976 = vpack.c.b16 %v4792, %v4784
    %v5977 = vpack.c.b16 %v4801, %v4793
    %v5978 = vpack.c.b16 %v4802, %v4794
    %v5979 = vpack.c.b16 %v4803, %v4795
    %v5980 = vpack.c.b16 %v4804, %v4796
    %v5981 = vpack.c.b16 %v4805, %v4797
    %v5982 = vpack.c.b16 %v4806, %v4798
    %v5983 = vpack.c.b16 %v4807, %v4799
    %v5984 = vpack.c.b16 %v4808, %v4800
    %v5985 = vpack.c.b16 %v4817, %v4809
    %v5986 = vpack.c.b16 %v4818, %v4810
    %v5987 = vpack.c.b16 %v4819, %v4811
    %v5988 = vpack.c.b16 %v4820, %v4812
    %v5989 = vpack.c.b16 %v4821, %v4813
    %v5990 = vpack.c.b16 %v4822, %v4814
    %v5991 = vpack.c.b16 %v4823, %v4815
    %v5992 = vpack.c.b16 %v4824, %v4816
    %v5993 = vpack.c.b16 %v4833, %v4825
    %v5994 = vpack.c.b16 %v4834, %v4826
    %v5995 = vpack.c.b16 %v4835, %v4827
    %v5996 = vpack.c.b16 %v4836, %v4828
    %v5997 = vpack.c.b16 %v4837, %v4829
    %v5998 = vpack.c.b16 %v4838, %v4830
    %v5999 = vpack.c.b16 %v4839, %v4831
    %v6000 = vpack.c.b16 %v4840, %v4832
    %v6001 = vpack.c.b16 %v4849, %v4841
    %v6002 = vpack.c.b16 %v4850, %v4842
    %v6003 = vpack.c.b16 %v4851, %v4843
    %v6004 = vpack.c.b16 %v4852, %v4844
    %v6005 = vpack.c.b16 %v4853, %v4845
    %v6006 = vpack.c.b16 %v4854, %v4846
    %v6007 = vpack.c.b16 %v4855, %v4847
    %v6008 = vpack.c.b16 %v4856, %v4848
    %v6009 = vpack.c.b16 %v4865, %v4857
    %v6010 = vpack.c.b16 %v4866, %v4858
    %v6011 = vpack.c.b16 %v4867, %v4859
    %v6012 = vpack.c.b16 %v4868, %v4860
    %v6013 = vpack.c.b16 %v4869, %v4861
    %v6014 = vpack.c.b16 %v4870, %v4862
    %v6015 = vpack.c.b16 %v4871, %v4863
    %v6016 = vpack.c.b16 %v4872, %v4864
    %v6017 = vpack.c.b16 %v4881, %v4873
    %v6018 = vpack.c.b16 %v4882, %v4874
    %v6019 = vpack.c.b16 %v4883, %v4875
    %v6020 = vpack.c.b16 %v4884, %v4876
    %v6021 = vpack.c.b16 %v4885, %v4877
    %v6022 = vpack.c.b16 %v4886, %v4878
    %v6023 = vpack.c.b16 %v4887, %v4879
    %v6024 = vpack.c.b16 %v4888, %v4880
    %v6025 = vpack.c.b16 %v4897, %v4889
    %v6026 = vpack.c.b16 %v4898, %v4890
    %v6027 = vpack.c.b16 %v4899, %v4891
    %v6028 = vpack.c.b16 %v4900, %v4892
    %v6029 = vpack.c.b16 %v4901, %v4893
    %v6030 = vpack.c.b16 %v4902, %v4894
    %v6031 = vpack.c.b16 %v4903, %v4895
    %v6032 = vpack.c.b16 %v4904, %v4896
    %v6033 = vpack.c.b16 %v4913, %v4905
    %v6034 = vpack.c.b16 %v4914, %v4906
    %v6035 = vpack.c.b16 %v4915, %v4907
    %v6036 = vpack.c.b16 %v4916, %v4908
    %v6037 = vpack.c.b16 %v4917, %v4909
    %v6038 = vpack.c.b16 %v4918, %v4910
    %v6039 = vpack.c.b16 %v4919, %v4911
    %v6040 = vpack.c.b16 %v4920, %v4912
    %v6041 = vpack.c.b16 %v4929, %v4921
    %v6042 = vpack.c.b16 %v4930, %v4922
    %v6043 = vpack.c.b16 %v4931, %v4923
    %v6044 = vpack.c.b16 %v4932, %v4924
    %v6045 = vpack.c.b16 %v4933, %v4925
    %v6046 = vpack.c.b16 %v4934, %v4926
    %v6047 = vpack.c.b16 %v4935, %v4927
    %v6048 = vpack.c.b16 %v4936, %v4928
    %v6049 = vpack.c.b16 %v4945, %v4937
    %v6050 = vpack.c.b16 %v4946, %v4938
    %v6051 = vpack.c.b16 %v4947, %v4939
    %v6052 = vpack.c.b16 %v4948, %v4940
    %v6053 = vpack.c.b16 %v4949, %v4941
    %v6054 = vpack.c.b16 %v4950, %v4942
    %v6055 = vpack.c.b16 %v4951, %v4943
    %v6056 = vpack.c.b16 %v4952, %v4944
    %v6057 = vpack.c.b16 %v4961, %v4953
    %v6058 = vpack.c.b16 %v4962, %v4954
    %v6059 = vpack.c.b16 %v4963, %v4955
    %v6060 = vpack.c.b16 %v4964, %v4956
    %v6061 = vpack.c.b16 %v4965, %v4957
    %v6062 = vpack.c.b16 %v4966, %v4958
    %v6063 = vpack.c.b16 %v4967, %v4959
    %v6064 = vpack.c.b16 %v4968, %v4960
    %v6065 = vpack.c.b16 %v4977, %v4969
    %v6066 = vpack.c.b16 %v4978, %v4970
    %v6067 = vpack.c.b16 %v4979, %v4971
    %v6068 = vpack.c.b16 %v4980, %v4972
    %v6069 = vpack.c.b16 %v4981, %v4973
    %v6070 = vpack.c.b16 %v4982, %v4974
    %v6071 = vpack.c.b16 %v4983, %v4975
    %v6072 = vpack.c.b16 %v4984, %v4976
    %v6073 = vpack.c.b16 %v4993, %v4985
    %v6074 = vpack.c.b16 %v4994, %v4986
    %v6075 = vpack.c.b16 %v4995, %v4987
    %v6076 = vpack.c.b16 %v4996, %v4988
    %v6077 = vpack.c.b16 %v4997, %v4989
    %v6078 = vpack.c.b16 %v4998, %v4990
    %v6079 = vpack.c.b16 %v4999, %v4991
    %v6080 = vpack.c.b16 %v5000, %v4992
    %v6081 = vpack.c.b16 %v5009, %v5001
    %v6082 = vpack.c.b16 %v5010, %v5002
    %v6083 = vpack.c.b16 %v5011, %v5003
    %v6084 = vpack.c.b16 %v5012, %v5004
    %v6085 = vpack.c.b16 %v5013, %v5005
    %v6086 = vpack.c.b16 %v5014, %v5006
    %v6087 = vpack.c.b16 %v5015, %v5007
    %v6088 = vpack.c.b16 %v5016, %v5008
    %v6089 = vpack.c.b16 %v5025, %v5017
    %v6090 = vpack.c.b16 %v5026, %v5018
    %v6091 = vpack.c.b16 %v5027, %v5019
    %v6092 = vpack.c.b16 %v5028, %v5020
    %v6093 = vpack.c.b16 %v5029, %v5021
    %v6094 = vpack.c.b16 %v5030, %v5022
    %v6095 = vpack.c.b16 %v5031, %v5023
    %v6096 = vpack.c.b16 %v5032, %v5024
    %v6097 = vpack.c.b16 %v5041, %v5033
    %v6098 = vpack.c.b16 %v5042, %v5034
    %v6099 = vpack.c.b16 %v5043, %v5035
    %v6100 = vpack.c.b16 %v5044, %v5036
    %v6101 = vpack.c.b16 %v5045, %v5037
    %v6102 = vpack.c.b16 %v5046, %v5038
    %v6103 = vpack.c.b16 %v5047, %v5039
    %v6104 = vpack.c.b16 %v5048, %v5040
    %v6105 = vpack.c.b16 %v5057, %v5049
    %v6106 = vpack.c.b16 %v5058, %v5050
    %v6107 = vpack.c.b16 %v5059, %v5051
    %v6108 = vpack.c.b16 %v5060, %v5052
    %v6109 = vpack.c.b16 %v5061, %v5053
    %v6110 = vpack.c.b16 %v5062, %v5054
    %v6111 = vpack.c.b16 %v5063, %v5055
    %v6112 = vpack.c.b16 %v5064, %v5056
    %v6113 = vpack.c.b16 %v5073, %v5065
    %v6114 = vpack.c.b16 %v5074, %v5066
    %v6115 = vpack.c.b16 %v5075, %v5067
    %v6116 = vpack.c.b16 %v5076, %v5068
    %v6117 = vpack.c.b16 %v5077, %v5069
    %v6118 = vpack.c.b16 %v5078, %v5070
    %v6119 = vpack.c.b16 %v5079, %v5071
    %v6120 = vpack.c.b16 %v5080, %v5072
    %v6121 = vpack.c.b16 %v5089, %v5081
    %v6122 = vpack.c.b16 %v5090, %v5082
    %v6123 = vpack.c.b16 %v5091, %v5083
    %v6124 = vpack.c.b16 %v5092, %v5084
    %v6125 = vpack.c.b16 %v5093, %v5085
    %v6126 = vpack.c.b16 %v5094, %v5086
    %v6127 = vpack.c.b16 %v5095, %v5087
    %v6128 = vpack.c.b16 %v5096, %v5088
    %v6129 = vpack.c.b16 %v5105, %v5097
    %v6130 = vpack.c.b16 %v5106, %v5098
    %v6131 = vpack.c.b16 %v5107, %v5099
    %v6132 = vpack.c.b16 %v5108, %v5100
    %v6133 = vpack.c.b16 %v5109, %v5101
    %v6134 = vpack.c.b16 %v5110, %v5102
    %v6135 = vpack.c.b16 %v5111, %v5103
    %v6136 = vpack.c.b16 %v5112, %v5104
    %v6137 = vpack.c.b16 %v5121, %v5113
    %v6138 = vpack.c.b16 %v5122, %v5114
    %v6139 = vpack.c.b16 %v5123, %v5115
    %v6140 = vpack.c.b16 %v5124, %v5116
    %v6141 = vpack.c.b16 %v5125, %v5117
    %v6142 = vpack.c.b16 %v5126, %v5118
    %v6143 = vpack.c.b16 %v5127, %v5119
    %v6144 = vpack.c.b16 %v5128, %v5120
    %v6145 = vpack.c.b16 %v5137, %v5129
    %v6146 = vpack.c.b16 %v5138, %v5130
    %v6147 = vpack.c.b16 %v5139, %v5131
    %v6148 = vpack.c.b16 %v5140, %v5132
    %v6149 = vpack.c.b16 %v5141, %v5133
    %v6150 = vpack.c.b16 %v5142, %v5134
    %v6151 = vpack.c.b16 %v5143, %v5135
    %v6152 = vpack.c.b16 %v5144, %v5136
    %v6153 = vpack.c.b16 %v5153, %v5145
    %v6154 = vpack.c.b16 %v5154, %v5146
    %v6155 = vpack.c.b16 %v5155, %v5147
    %v6156 = vpack.c.b16 %v5156, %v5148
    %v6157 = vpack.c.b16 %v5157, %v5149
    %v6158 = vpack.c.b16 %v5158, %v5150
    %v6159 = vpack.c.b16 %v5159, %v5151
    %v6160 = vpack.c.b16 %v5160, %v5152
    %v6161 = vpack.c.b16 %v5169, %v5161
    %v6162 = vpack.c.b16 %v5170, %v5162
    %v6163 = vpack.c.b16 %v5171, %v5163
    %v6164 = vpack.c.b16 %v5172, %v5164
    %v6165 = vpack.c.b16 %v5173, %v5165
    %v6166 = vpack.c.b16 %v5174, %v5166
    %v6167 = vpack.c.b16 %v5175, %v5167
    %v6168 = vpack.c.b16 %v5176, %v5168
    %v6169 = vpack.c.b16 %v5185, %v5177
    %v6170 = vpack.c.b16 %v5186, %v5178
    %v6171 = vpack.c.b16 %v5187, %v5179
    %v6172 = vpack.c.b16 %v5188, %v5180
    %v6173 = vpack.c.b16 %v5189, %v5181
    %v6174 = vpack.c.b16 %v5190, %v5182
    %v6175 = vpack.c.b16 %v5191, %v5183
    %v6176 = vpack.c.b16 %v5192, %v5184
    %v6177 = vpack.c.b16 %v5201, %v5193
    %v6178 = vpack.c.b16 %v5202, %v5194
    %v6179 = vpack.c.b16 %v5203, %v5195
    %v6180 = vpack.c.b16 %v5204, %v5196
    %v6181 = vpack.c.b16 %v5205, %v5197
    %v6182 = vpack.c.b16 %v5206, %v5198
    %v6183 = vpack.c.b16 %v5207, %v5199
    %v6184 = vpack.c.b16 %v5208, %v5200
    %v6185 = vpack.c.b16 %v5217, %v5209
    %v6186 = vpack.c.b16 %v5218, %v5210
    %v6187 = vpack.c.b16 %v5219, %v5211
    %v6188 = vpack.c.b16 %v5220, %v5212
    %v6189 = vpack.c.b16 %v5221, %v5213
    %v6190 = vpack.c.b16 %v5222, %v5214
    %v6191 = vpack.c.b16 %v5223, %v5215
    %v6192 = vpack.c.b16 %v5224, %v5216
    %v6193 = vpack.c.b16 %v5233, %v5225
    %v6194 = vpack.c.b16 %v5234, %v5226
    %v6195 = vpack.c.b16 %v5235, %v5227
    %v6196 = vpack.c.b16 %v5236, %v5228
    %v6197 = vpack.c.b16 %v5237, %v5229
    %v6198 = vpack.c.b16 %v5238, %v5230
    %v6199 = vpack.c.b16 %v5239, %v5231
    %v6200 = vpack.c.b16 %v5240, %v5232
    %v6201 = vpack.c.b16 %v5249, %v5241
    %v6202 = vpack.c.b16 %v5250, %v5242
    %v6203 = vpack.c.b16 %v5251, %v5243
    %v6204 = vpack.c.b16 %v5252, %v5244
    %v6205 = vpack.c.b16 %v5253, %v5245
    %v6206 = vpack.c.b16 %v5254, %v5246
    %v6207 = vpack.c.b16 %v5255, %v5247
    %v6208 = vpack.c.b16 %v5256, %v5248
    %v6209 = vpack.c.b16 %v5265, %v5257
    %v6210 = vpack.c.b16 %v5266, %v5258
    %v6211 = vpack.c.b16 %v5267, %v5259
    %v6212 = vpack.c.b16 %v5268, %v5260
    %v6213 = vpack.c.b16 %v5269, %v5261
    %v6214 = vpack.c.b16 %v5270, %v5262
    %v6215 = vpack.c.b16 %v5271, %v5263
    %v6216 = vpack.c.b16 %v5272, %v5264
    %v6217 = vpack.c.b16 %v5281, %v5273
    %v6218 = vpack.c.b16 %v5282, %v5274
    %v6219 = vpack.c.b16 %v5283, %v5275
    %v6220 = vpack.c.b16 %v5284, %v5276
    %v6221 = vpack.c.b16 %v5285, %v5277
    %v6222 = vpack.c.b16 %v5286, %v5278
    %v6223 = vpack.c.b16 %v5287, %v5279
    %v6224 = vpack.c.b16 %v5288, %v5280
    %v6225 = vpack.c.b16 %v5297, %v5289
    %v6226 = vpack.c.b16 %v5298, %v5290
    %v6227 = vpack.c.b16 %v5299, %v5291
    %v6228 = vpack.c.b16 %v5300, %v5292
    %v6229 = vpack.c.b16 %v5301, %v5293
    %v6230 = vpack.c.b16 %v5302, %v5294
    %v6231 = vpack.c.b16 %v5303, %v5295
    %v6232 = vpack.c.b16 %v5304, %v5296
    %v6233 = vpack.c.b16 %v5313, %v5305
    %v6234 = vpack.c.b16 %v5314, %v5306
    %v6235 = vpack.c.b16 %v5315, %v5307
    %v6236 = vpack.c.b16 %v5316, %v5308
    %v6237 = vpack.c.b16 %v5317, %v5309
    %v6238 = vpack.c.b16 %v5318, %v5310
    %v6239 = vpack.c.b16 %v5319, %v5311
    %v6240 = vpack.c.b16 %v5320, %v5312
    %v6241 = vpack.c.b16 %v5329, %v5321
    %v6242 = vpack.c.b16 %v5330, %v5322
    %v6243 = vpack.c.b16 %v5331, %v5323
    %v6244 = vpack.c.b16 %v5332, %v5324
    %v6245 = vpack.c.b16 %v5333, %v5325
    %v6246 = vpack.c.b16 %v5334, %v5326
    %v6247 = vpack.c.b16 %v5335, %v5327
    %v6248 = vpack.c.b16 %v5336, %v5328
    %v6249 = vpack.c.b16 %v5345, %v5337
    %v6250 = vpack.c.b16 %v5346, %v5338
    %v6251 = vpack.c.b16 %v5347, %v5339
    %v6252 = vpack.c.b16 %v5348, %v5340
    %v6253 = vpack.c.b16 %v5349, %v5341
    %v6254 = vpack.c.b16 %v5350, %v5342
    %v6255 = vpack.c.b16 %v5351, %v5343
    %v6256 = vpack.c.b16 %v5352, %v5344
    %v6257 = vpack.c.b16 %v5361, %v5353
    %v6258 = vpack.c.b16 %v5362, %v5354
    %v6259 = vpack.c.b16 %v5363, %v5355
    %v6260 = vpack.c.b16 %v5364, %v5356
    %v6261 = vpack.c.b16 %v5365, %v5357
    %v6262 = vpack.c.b16 %v5366, %v5358
    %v6263 = vpack.c.b16 %v5367, %v5359
    %v6264 = vpack.c.b16 %v5368, %v5360
    %v6265 = vpack.c.b16 %v5377, %v5369
    %v6266 = vpack.c.b16 %v5378, %v5370
    %v6267 = vpack.c.b16 %v5379, %v5371
    %v6268 = vpack.c.b16 %v5380, %v5372
    %v6269 = vpack.c.b16 %v5381, %v5373
    %v6270 = vpack.c.b16 %v5382, %v5374
    %v6271 = vpack.c.b16 %v5383, %v5375
    %v6272 = vpack.c.b16 %v5384, %v5376
    %v6273 = vpack.c.b16 %v5393, %v5385
    %v6274 = vpack.c.b16 %v5394, %v5386
    %v6275 = vpack.c.b16 %v5395, %v5387
    %v6276 = vpack.c.b16 %v5396, %v5388
    %v6277 = vpack.c.b16 %v5397, %v5389
    %v6278 = vpack.c.b16 %v5398, %v5390
    %v6279 = vpack.c.b16 %v5399, %v5391
    %v6280 = vpack.c.b16 %v5400, %v5392
    %v6281 = vpack.c.b16 %v5409, %v5401
    %v6282 = vpack.c.b16 %v5410, %v5402
    %v6283 = vpack.c.b16 %v5411, %v5403
    %v6284 = vpack.c.b16 %v5412, %v5404
    %v6285 = vpack.c.b16 %v5413, %v5405
    %v6286 = vpack.c.b16 %v5414, %v5406
    %v6287 = vpack.c.b16 %v5415, %v5407
    %v6288 = vpack.c.b16 %v5416, %v5408
    %v6289 = vpack.c.b16 %v5425, %v5417
    %v6290 = vpack.c.b16 %v5426, %v5418
    %v6291 = vpack.c.b16 %v5427, %v5419
    %v6292 = vpack.c.b16 %v5428, %v5420
    %v6293 = vpack.c.b16 %v5429, %v5421
    %v6294 = vpack.c.b16 %v5430, %v5422
    %v6295 = vpack.c.b16 %v5431, %v5423
    %v6296 = vpack.c.b16 %v5432, %v5424
    %v6297 = vpack.c.b16 %v5441, %v5433
    %v6298 = vpack.c.b16 %v5442, %v5434
    %v6299 = vpack.c.b16 %v5443, %v5435
    %v6300 = vpack.c.b16 %v5444, %v5436
    %v6301 = vpack.c.b16 %v5445, %v5437
    %v6302 = vpack.c.b16 %v5446, %v5438
    %v6303 = vpack.c.b16 %v5447, %v5439
    %v6304 = vpack.c.b16 %v5448, %v5440
    %v6305 = vpack.c.b16 %v5457, %v5449
    %v6306 = vpack.c.b16 %v5458, %v5450
    %v6307 = vpack.c.b16 %v5459, %v5451
    %v6308 = vpack.c.b16 %v5460, %v5452
    %v6309 = vpack.c.b16 %v5461, %v5453
    %v6310 = vpack.c.b16 %v5462, %v5454
    %v6311 = vpack.c.b16 %v5463, %v5455
    %v6312 = vpack.c.b16 %v5464, %v5456
    %v6313 = vpack.c.b16 %v5473, %v5465
    %v6314 = vpack.c.b16 %v5474, %v5466
    %v6315 = vpack.c.b16 %v5475, %v5467
    %v6316 = vpack.c.b16 %v5476, %v5468
    %v6317 = vpack.c.b16 %v5477, %v5469
    %v6318 = vpack.c.b16 %v5478, %v5470
    %v6319 = vpack.c.b16 %v5479, %v5471
    %v6320 = vpack.c.b16 %v5480, %v5472
    %v6321 = vpack.c.b16 %v5489, %v5481
    %v6322 = vpack.c.b16 %v5490, %v5482
    %v6323 = vpack.c.b16 %v5491, %v5483
    %v6324 = vpack.c.b16 %v5492, %v5484
    %v6325 = vpack.c.b16 %v5493, %v5485
    %v6326 = vpack.c.b16 %v5494, %v5486
    %v6327 = vpack.c.b16 %v5495, %v5487
    %v6328 = vpack.c.b16 %v5496, %v5488
    %v6329 = vpack.c.b16 %v5505, %v5497
    %v6330 = vpack.c.b16 %v5506, %v5498
    %v6331 = vpack.c.b16 %v5507, %v5499
    %v6332 = vpack.c.b16 %v5508, %v5500
    %v6333 = vpack.c.b16 %v5509, %v5501
    %v6334 = vpack.c.b16 %v5510, %v5502
    %v6335 = vpack.c.b16 %v5511, %v5503
    %v6336 = vpack.c.b16 %v5512, %v5504
    %v6337 = vpack.c.b16 %v5521, %v5513
    %v6338 = vpack.c.b16 %v5522, %v5514
    %v6339 = vpack.c.b16 %v5523, %v5515
    %v6340 = vpack.c.b16 %v5524, %v5516
    %v6341 = vpack.c.b16 %v5525, %v5517
    %v6342 = vpack.c.b16 %v5526, %v5518
    %v6343 = vpack.c.b16 %v5527, %v5519
    %v6344 = vpack.c.b16 %v5528, %v5520
    %v6345 = vpack.c.b16 %v5537, %v5529
    %v6346 = vpack.c.b16 %v5538, %v5530
    %v6347 = vpack.c.b16 %v5539, %v5531
    %v6348 = vpack.c.b16 %v5540, %v5532
    %v6349 = vpack.c.b16 %v5541, %v5533
    %v6350 = vpack.c.b16 %v5542, %v5534
    %v6351 = vpack.c.b16 %v5543, %v5535
    %v6352 = vpack.c.b16 %v5544, %v5536
    %v6353 = vpack.c.b16 %v5553, %v5545
    %v6354 = vpack.c.b16 %v5554, %v5546
    %v6355 = vpack.c.b16 %v5555, %v5547
    %v6356 = vpack.c.b16 %v5556, %v5548
    %v6357 = vpack.c.b16 %v5557, %v5549
    %v6358 = vpack.c.b16 %v5558, %v5550
    %v6359 = vpack.c.b16 %v5559, %v5551
    %v6360 = vpack.c.b16 %v5560, %v5552
    %v6361 = vpack.c.b16 %v5569, %v5561
    %v6362 = vpack.c.b16 %v5570, %v5562
    %v6363 = vpack.c.b16 %v5571, %v5563
    %v6364 = vpack.c.b16 %v5572, %v5564
    %v6365 = vpack.c.b16 %v5573, %v5565
    %v6366 = vpack.c.b16 %v5574, %v5566
    %v6367 = vpack.c.b16 %v5575, %v5567
    %v6368 = vpack.c.b16 %v5576, %v5568
    %v6369 = vpack.c.b16 %v5585, %v5577
    %v6370 = vpack.c.b16 %v5586, %v5578
    %v6371 = vpack.c.b16 %v5587, %v5579
    %v6372 = vpack.c.b16 %v5588, %v5580
    %v6373 = vpack.c.b16 %v5589, %v5581
    %v6374 = vpack.c.b16 %v5590, %v5582
    %v6375 = vpack.c.b16 %v5591, %v5583
    %v6376 = vpack.c.b16 %v5592, %v5584
    %v6377 = vpack.c.b16 %v5601, %v5593
    %v6378 = vpack.c.b16 %v5602, %v5594
    %v6379 = vpack.c.b16 %v5603, %v5595
    %v6380 = vpack.c.b16 %v5604, %v5596
    %v6381 = vpack.c.b16 %v5605, %v5597
    %v6382 = vpack.c.b16 %v5606, %v5598
    %v6383 = vpack.c.b16 %v5607, %v5599
    %v6384 = vpack.c.b16 %v5608, %v5600
    %v6385 = vpack.c.b16 %v5617, %v5609
    %v6386 = vpack.c.b16 %v5618, %v5610
    %v6387 = vpack.c.b16 %v5619, %v5611
    %v6388 = vpack.c.b16 %v5620, %v5612
    %v6389 = vpack.c.b16 %v5621, %v5613
    %v6390 = vpack.c.b16 %v5622, %v5614
    %v6391 = vpack.c.b16 %v5623, %v5615
    %v6392 = vpack.c.b16 %v5624, %v5616
    %7161 = vmatprep.subr.bf16.mxu0 %v5626
    %7162 = vmatpush1.bf16.msra.mxu0 %v5625
    %7163 = vmatprep.subr.bf16.mxu0 %v5634
    %7164 = vmatpush1.bf16.msra.mxu0 %v5633
    %7165 = vmatprep.subr.bf16.mxu0 %v5642
    %7166 = vmatpush1.bf16.msra.mxu0 %v5641
    %7167 = vmatprep.subr.bf16.mxu0 %v5650
    %7168 = vmatpush1.bf16.msra.mxu0 %v5649
    %7169 = vmatprep.subr.bf16.mxu0 %v5658
    %7170 = vmatpush1.bf16.msra.mxu0 %v5657
    %7171 = vmatprep.subr.bf16.mxu0 %v5666
    %7172 = vmatpush1.bf16.msra.mxu0 %v5665
    %7173 = vmatprep.subr.bf16.mxu0 %v5674
    %7174 = vmatpush1.bf16.msra.mxu0 %v5673
    %7175 = vmatprep.subr.bf16.mxu0 %v5682
    %7176 = vmatpush1.bf16.msra.mxu0 %v5681
    %7177 = vmatprep.subr.bf16.mxu0 %v5690
    %7178 = vmatpush1.bf16.msra.mxu0 %v5689
    %7179 = vmatprep.subr.bf16.mxu0 %v5698
    %7180 = vmatpush1.bf16.msra.mxu0 %v5697
    %7181 = vmatprep.subr.bf16.mxu0 %v5706
    %7182 = vmatpush1.bf16.msra.mxu0 %v5705
    %7183 = vmatprep.subr.bf16.mxu0 %v5714
    %7184 = vmatpush1.bf16.msra.mxu0 %v5713
    %7185 = vmatprep.subr.bf16.mxu0 %v5722
    %7186 = vmatpush1.bf16.msra.mxu0 %v5721
    %7187 = vmatprep.subr.bf16.mxu0 %v5730
    %7188 = vmatpush1.bf16.msra.mxu0 %v5729
    %7189 = vmatprep.subr.bf16.mxu0 %v5738
    %7190 = vmatpush1.bf16.msra.mxu0 %v5737
    %7191 = vmatprep.subr.bf16.mxu0 %v5746
    %7192 = vmatpush1.bf16.msra.mxu0 %v5745
    %7193 = vmatprep.mubr.bf16.mxu0 %v3202
    %7194 = vmatmul.mubr.bf16.gmra.mrb[0].mxu0 %v3201
    %v7195 = vpop.f32.mrb[0].mxu0
    %v7196 = vadd.f32 0.0, %v7195
    %v7197 = vpop.f32.mrb[0].mxu0
    %v7198 = vadd.f32 0.0, %v7197
    %v7199 = vpop.f32.mrb[0].mxu0
    %v7200 = vadd.f32 0.0, %v7199
    %v7201 = vpop.f32.mrb[0].mxu0
    %v7202 = vadd.f32 0.0, %v7201
    %7203 = vmatprep.mubr.bf16.mxu0 %v3210
    %7204 = vmatmul.mubr.bf16.gmra.mrb[0].mxu0 %v3209
    %v7205 = vpop.f32.mrb[0].mxu0
    %v7206 = vadd.f32 0.0, %v7205
    %v7207 = vpop.f32.mrb[0].mxu0
    %v7208 = vadd.f32 0.0, %v7207
    %v7209 = vpop.f32.mrb[0].mxu0
    %v7210 = vadd.f32 0.0, %v7209
    %v7211 = vpop.f32.mrb[0].mxu0
    %v7212 = vadd.f32 0.0, %v7211
    %7213 = vmatprep.mubr.bf16.mxu0 %v3218
    %7214 = vmatmul.mubr.bf16.gmra.mrb[0].mxu0 %v3217
    %v7215 = vpop.f32.mrb[0].mxu0
    %v7216 = vadd.f32 0.0, %v7215
    %v7217 = vpop.f32.mrb[0].mxu0
    %v7218 = vadd.f32 0.0, %v7217
    %v7219 = vpop.f32.mrb[0].mxu0
    %v7220 = vadd.f32 0.0, %v7219
    %v7221 = vpop.f32.mrb[0].mxu0
    %v7222 = vadd.f32 0.0, %v7221
    %7223 = vmatprep.mubr.bf16.mxu0 %v3226
    %7224 = vmatmul.mubr.bf16.gmra.mrb[0].mxu0 %v3225
    %v7225 = vpop.f32.mrb[0].mxu0
    %v7226 = vadd.f32 0.0, %v7225
    %v7227 = vpop.f32.mrb[0].mxu0
    %v7228 = vadd.f32 0.0, %v7227
    %v7229 = vpop.f32.mrb[0].mxu0
    %v7230 = vadd.f32 0.0, %v7229
    %v7231 = vpop.f32.mrb[0].mxu0
    %v7232 = vadd.f32 0.0, %v7231
    %7233 = vmatprep.mubr.bf16.mxu0 %v3234
    %7234 = vmatmul.mubr.bf16.gmra.mrb[0].mxu0 %v3233
    %v7235 = vpop.f32.mrb[0].mxu0
    %v7236 = vadd.f32 0.0, %v7235
    %v7237 = vpop.f32.mrb[0].mxu0
    %v7238 = vadd.f32 0.0, %v7237
    %v7239 = vpop.f32.mrb[0].mxu0
    %v7240 = vadd.f32 0.0, %v7239
    %v7241 = vpop.f32.mrb[0].mxu0
    %v7242 = vadd.f32 0.0, %v7241
    %7243 = vmatprep.mubr.bf16.mxu0 %v3242
    %7244 = vmatmul.mubr.bf16.gmra.mrb[0].mxu0 %v3241
    %v7245 = vpop.f32.mrb[0].mxu0
    %v7246 = vadd.f32 0.0, %v7245
    %v7247 = vpop.f32.mrb[0].mxu0
    %v7248 = vadd.f32 0.0, %v7247
    %v7249 = vpop.f32.mrb[0].mxu0
    %v7250 = vadd.f32 0.0, %v7249
    %v7251 = vpop.f32.mrb[0].mxu0
    %v7252 = vadd.f32 0.0, %v7251
    %7253 = vmatprep.mubr.bf16.mxu0 %v3250
    %7254 = vmatmul.mubr.bf16.gmra.mrb[0].mxu0 %v3249
    %v7255 = vpop.f32.mrb[0].mxu0
    %v7256 = vadd.f32 0.0, %v7255
    %v7257 = vpop.f32.mrb[0].mxu0
    %v7258 = vadd.f32 0.0, %v7257
    %v7259 = vpop.f32.mrb[0].mxu0
    %v7260 = vadd.f32 0.0, %v7259
    %v7261 = vpop.f32.mrb[0].mxu0
    %v7262 = vadd.f32 0.0, %v7261
    %7263 = vdwg.mxu0
    %7264 = vmatprep.subr.bf16.mxu0 %v5754
    %7265 = vmatpush1.bf16.msra.mxu0 %v5753
    %7266 = vmatprep.subr.bf16.mxu0 %v5762
    %7267 = vmatpush1.bf16.msra.mxu0 %v5761
    %7268 = vmatprep.subr.bf16.mxu0 %v5770
    %7269 = vmatpush1.bf16.msra.mxu0 %v5769
    %7270 = vmatprep.subr.bf16.mxu0 %v5778
    %7271 = vmatpush1.bf16.msra.mxu0 %v5777
    %7272 = vmatprep.subr.bf16.mxu0 %v5786
    %7273 = vmatpush1.bf16.msra.mxu0 %v5785
    %7274 = vmatprep.subr.bf16.mxu0 %v5794
    %7275 = vmatpush1.bf16.msra.mxu0 %v5793
    %7276 = vmatprep.subr.bf16.mxu0 %v5802
    %7277 = vmatpush1.bf16.msra.mxu0 %v5801
    %7278 = vmatprep.subr.bf16.mxu0 %v5810
    %7279 = vmatpush1.bf16.msra.mxu0 %v5809
    %7280 = vmatprep.subr.bf16.mxu0 %v5818
    %7281 = vmatpush1.bf16.msra.mxu0 %v5817
    %7282 = vmatprep.subr.bf16.mxu0 %v5826
    %7283 = vmatpush1.bf16.msra.mxu0 %v5825
    %7284 = vmatprep.subr.bf16.mxu0 %v5834
    %7285 = vmatpush1.bf16.msra.mxu0 %v5833
    %7286 = vmatprep.subr.bf16.mxu0 %v5842
    %7287 = vmatpush1.bf16.msra.mxu0 %v5841
    %7288 = vmatprep.subr.bf16.mxu0 %v5850
    %7289 = vmatpush1.bf16.msra.mxu0 %v5849
    %7290 = vmatprep.subr.bf16.mxu0 %v5858
    %7291 = vmatpush1.bf16.msra.mxu0 %v5857
    %7292 = vmatprep.subr.bf16.mxu0 %v5866
    %7293 = vmatpush1.bf16.msra.mxu0 %v5865
    %7294 = vmatprep.subr.bf16.mxu0 %v5874
    %7295 = vmatpush1.bf16.msra.mxu0 %v5873
    %7296 = vmatprep.mubr.bf16.mxu0 %v3204
    %7297 = vmatmul.mubr.bf16.gmra.mrb[0].mxu0 %v3203
    %v7298 = vpop.f32.mrb[0].mxu0
    %v7299 = vadd.f32 %v7196, %v7298
    %v7300 = vpop.f32.mrb[0].mxu0
    %v7301 = vadd.f32 %v7198, %v7300
    %v7302 = vpop.f32.mrb[0].mxu0
    %v7303 = vadd.f32 %v7200, %v7302
    %v7304 = vpop.f32.mrb[0].mxu0
    %v7305 = vadd.f32 %v7202, %v7304
    %7306 = vmatprep.mubr.bf16.mxu0 %v3212
    %7307 = vmatmul.mubr.bf16.gmra.mrb[0].mxu0 %v3211
    %v7308 = vpop.f32.mrb[0].mxu0
    %v7309 = vadd.f32 %v7206, %v7308
    %v7310 = vpop.f32.mrb[0].mxu0
    %v7311 = vadd.f32 %v7208, %v7310
    %v7312 = vpop.f32.mrb[0].mxu0
    %v7313 = vadd.f32 %v7210, %v7312
    %v7314 = vpop.f32.mrb[0].mxu0
    %v7315 = vadd.f32 %v7212, %v7314
    %7316 = vmatprep.mubr.bf16.mxu0 %v3220
    %7317 = vmatmul.mubr.bf16.gmra.mrb[0].mxu0 %v3219
    %v7318 = vpop.f32.mrb[0].mxu0
    %v7319 = vadd.f32 %v7216, %v7318
    %v7320 = vpop.f32.mrb[0].mxu0
    %v7321 = vadd.f32 %v7218, %v7320
    %v7322 = vpop.f32.mrb[0].mxu0
    %v7323 = vadd.f32 %v7220, %v7322
    %v7324 = vpop.f32.mrb[0].mxu0
    %v7325 = vadd.f32 %v7222, %v7324
    %7326 = vmatprep.mubr.bf16.mxu0 %v3228
    %7327 = vmatmul.mubr.bf16.gmra.mrb[0].mxu0 %v3227
    %v7328 = vpop.f32.mrb[0].mxu0
    %v7329 = vadd.f32 %v7226, %v7328
    %v7330 = vpop.f32.mrb[0].mxu0
    %v7331 = vadd.f32 %v7228, %v7330
    %v7332 = vpop.f32.mrb[0].mxu0
    %v7333 = vadd.f32 %v7230, %v7332
    %v7334 = vpop.f32.mrb[0].mxu0
    %v7335 = vadd.f32 %v7232, %v7334
    %7336 = vmatprep.mubr.bf16.mxu0 %v3236
    %7337 = vmatmul.mubr.bf16.gmra.mrb[0].mxu0 %v3235
    %v7338 = vpop.f32.mrb[0].mxu0
    %v7339 = vadd.f32 %v7236, %v7338
    %v7340 = vpop.f32.mrb[0].mxu0
    %v7341 = vadd.f32 %v7238, %v7340
    %v7342 = vpop.f32.mrb[0].mxu0
    %v7343 = vadd.f32 %v7240, %v7342
    %v7344 = vpop.f32.mrb[0].mxu0
    %v7345 = vadd.f32 %v7242, %v7344
    %7346 = vmatprep.mubr.bf16.mxu0 %v3244
    %7347 = vmatmul.mubr.bf16.gmra.mrb[0].mxu0 %v3243
    %v7348 = vpop.f32.mrb[0].mxu0
    %v7349 = vadd.f32 %v7246, %v7348
    %v7350 = vpop.f32.mrb[0].mxu0
    %v7351 = vadd.f32 %v7248, %v7350
    %v7352 = vpop.f32.mrb[0].mxu0
    %v7353 = vadd.f32 %v7250, %v7352
    %v7354 = vpop.f32.mrb[0].mxu0
    %v7355 = vadd.f32 %v7252, %v7354
    %7356 = vmatprep.mubr.bf16.mxu0 %v3252
    %7357 = vmatmul.mubr.bf16.gmra.mrb[0].mxu0 %v3251
    %v7358 = vpop.f32.mrb[0].mxu0
    %v7359 = vadd.f32 %v7256, %v7358
    %v7360 = vpop.f32.mrb[0].mxu0
    %v7361 = vadd.f32 %v7258, %v7360
    %v7362 = vpop.f32.mrb[0].mxu0
    %v7363 = vadd.f32 %v7260, %v7362
    %v7364 = vpop.f32.mrb[0].mxu0
    %v7365 = vadd.f32 %v7262, %v7364
    %7366 = vdwg.mxu0
    %7367 = vmatprep.subr.bf16.mxu0 %v5882
    %7368 = vmatpush1.bf16.msra.mxu0 %v5881
    %7369 = vmatprep.subr.bf16.mxu0 %v5890
    %7370 = vmatpush1.bf16.msra.mxu0 %v5889
    %7371 = vmatprep.subr.bf16.mxu0 %v5898
    %7372 = vmatpush1.bf16.msra.mxu0 %v5897
    %7373 = vmatprep.subr.bf16.mxu0 %v5906
    %7374 = vmatpush1.bf16.msra.mxu0 %v5905
    %7375 = vmatprep.subr.bf16.mxu0 %v5914
    %7376 = vmatpush1.bf16.msra.mxu0 %v5913
    %7377 = vmatprep.subr.bf16.mxu0 %v5922
    %7378 = vmatpush1.bf16.msra.mxu0 %v5921
    %7379 = vmatprep.subr.bf16.mxu0 %v5930
    %7380 = vmatpush1.bf16.msra.mxu0 %v5929
    %7381 = vmatprep.subr.bf16.mxu0 %v5938
    %7382 = vmatpush1.bf16.msra.mxu0 %v5937
    %7383 = vmatprep.subr.bf16.mxu0 %v5946
    %7384 = vmatpush1.bf16.msra.mxu0 %v5945
    %7385 = vmatprep.subr.bf16.mxu0 %v5954
    %7386 = vmatpush1.bf16.msra.mxu0 %v5953
    %7387 = vmatprep.subr.bf16.mxu0 %v5962
    %7388 = vmatpush1.bf16.msra.mxu0 %v5961
    %7389 = vmatprep.subr.bf16.mxu0 %v5970
    %7390 = vmatpush1.bf16.msra.mxu0 %v5969
    %7391 = vmatprep.subr.bf16.mxu0 %v5978
    %7392 = vmatpush1.bf16.msra.mxu0 %v5977
    %7393 = vmatprep.subr.bf16.mxu0 %v5986
    %7394 = vmatpush1.bf16.msra.mxu0 %v5985
    %7395 = vmatprep.subr.bf16.mxu0 %v5994
    %7396 = vmatpush1.bf16.msra.mxu0 %v5993
    %7397 = vmatprep.subr.bf16.mxu0 %v6002
    %7398 = vmatpush1.bf16.msra.mxu0 %v6001
    %7399 = vmatprep.mubr.bf16.mxu0 %v3206
    %7400 = vmatmul.mubr.bf16.gmra.mrb[0].mxu0 %v3205
    %v7401 = vpop.f32.mrb[0].mxu0
    %v7402 = vadd.f32 %v7299, %v7401
    %v7403 = vpop.f32.mrb[0].mxu0
    %v7404 = vadd.f32 %v7301, %v7403
    %v7405 = vpop.f32.mrb[0].mxu0
    %v7406 = vadd.f32 %v7303, %v7405
    %v7407 = vpop.f32.mrb[0].mxu0
    %v7408 = vadd.f32 %v7305, %v7407
    %7409 = vmatprep.mubr.bf16.mxu0 %v3214
    %7410 = vmatmul.mubr.bf16.gmra.mrb[0].mxu0 %v3213
    %v7411 = vpop.f32.mrb[0].mxu0
    %v7412 = vadd.f32 %v7309, %v7411
    %v7413 = vpop.f32.mrb[0].mxu0
    %v7414 = vadd.f32 %v7311, %v7413
    %v7415 = vpop.f32.mrb[0].mxu0
    %v7416 = vadd.f32 %v7313, %v7415
    %v7417 = vpop.f32.mrb[0].mxu0
    %v7418 = vadd.f32 %v7315, %v7417
    %7419 = vmatprep.mubr.bf16.mxu0 %v3222
    %7420 = vmatmul.mubr.bf16.gmra.mrb[0].mxu0 %v3221
    %v7421 = vpop.f32.mrb[0].mxu0
    %v7422 = vadd.f32 %v7319, %v7421
    %v7423 = vpop.f32.mrb[0].mxu0
    %v7424 = vadd.f32 %v7321, %v7423
    %v7425 = vpop.f32.mrb[0].mxu0
    %v7426 = vadd.f32 %v7323, %v7425
    %v7427 = vpop.f32.mrb[0].mxu0
    %v7428 = vadd.f32 %v7325, %v7427
    %7429 = vmatprep.mubr.bf16.mxu0 %v3230
    %7430 = vmatmul.mubr.bf16.gmra.mrb[0].mxu0 %v3229
    %v7431 = vpop.f32.mrb[0].mxu0
    %v7432 = vadd.f32 %v7329, %v7431
    %v7433 = vpop.f32.mrb[0].mxu0
    %v7434 = vadd.f32 %v7331, %v7433
    %v7435 = vpop.f32.mrb[0].mxu0
    %v7436 = vadd.f32 %v7333, %v7435
    %v7437 = vpop.f32.mrb[0].mxu0
    %v7438 = vadd.f32 %v7335, %v7437
    %7439 = vmatprep.mubr.bf16.mxu0 %v3238
    %7440 = vmatmul.mubr.bf16.gmra.mrb[0].mxu0 %v3237
    %v7441 = vpop.f32.mrb[0].mxu0
    %v7442 = vadd.f32 %v7339, %v7441
    %v7443 = vpop.f32.mrb[0].mxu0
    %v7444 = vadd.f32 %v7341, %v7443
    %v7445 = vpop.f32.mrb[0].mxu0
    %v7446 = vadd.f32 %v7343, %v7445
    %v7447 = vpop.f32.mrb[0].mxu0
    %v7448 = vadd.f32 %v7345, %v7447
    %7449 = vmatprep.mubr.bf16.mxu0 %v3246
    %7450 = vmatmul.mubr.bf16.gmra.mrb[0].mxu0 %v3245
    %v7451 = vpop.f32.mrb[0].mxu0
    %v7452 = vadd.f32 %v7349, %v7451
    %v7453 = vpop.f32.mrb[0].mxu0
    %v7454 = vadd.f32 %v7351, %v7453
    %v7455 = vpop.f32.mrb[0].mxu0
    %v7456 = vadd.f32 %v7353, %v7455
    %v7457 = vpop.f32.mrb[0].mxu0
    %v7458 = vadd.f32 %v7355, %v7457
    %7459 = vmatprep.mubr.bf16.mxu0 %v3254
    %7460 = vmatmul.mubr.bf16.gmra.mrb[0].mxu0 %v3253
    %v7461 = vpop.f32.mrb[0].mxu0
    %v7462 = vadd.f32 %v7359, %v7461
    %v7463 = vpop.f32.mrb[0].mxu0
    %v7464 = vadd.f32 %v7361, %v7463
    %v7465 = vpop.f32.mrb[0].mxu0
    %v7466 = vadd.f32 %v7363, %v7465
    %v7467 = vpop.f32.mrb[0].mxu0
    %v7468 = vadd.f32 %v7365, %v7467
    %7469 = vdwg.mxu0
    %7470 = vmatprep.subr.bf16.mxu0 %v6010
    %7471 = vmatpush1.bf16.msra.mxu0 %v6009
    %7472 = vmatprep.subr.bf16.mxu0 %v6018
    %7473 = vmatpush1.bf16.msra.mxu0 %v6017
    %7474 = vmatprep.subr.bf16.mxu0 %v6026
    %7475 = vmatpush1.bf16.msra.mxu0 %v6025
    %7476 = vmatprep.subr.bf16.mxu0 %v6034
    %7477 = vmatpush1.bf16.msra.mxu0 %v6033
    %7478 = vmatprep.subr.bf16.mxu0 %v6042
    %7479 = vmatpush1.bf16.msra.mxu0 %v6041
    %7480 = vmatprep.subr.bf16.mxu0 %v6050
    %7481 = vmatpush1.bf16.msra.mxu0 %v6049
    %7482 = vmatprep.subr.bf16.mxu0 %v6058
    %7483 = vmatpush1.bf16.msra.mxu0 %v6057
    %7484 = vmatprep.subr.bf16.mxu0 %v6066
    %7485 = vmatpush1.bf16.msra.mxu0 %v6065
    %7486 = vmatprep.subr.bf16.mxu0 %v6074
    %7487 = vmatpush1.bf16.msra.mxu0 %v6073
    %7488 = vmatprep.subr.bf16.mxu0 %v6082
    %7489 = vmatpush1.bf16.msra.mxu0 %v6081
    %7490 = vmatprep.subr.bf16.mxu0 %v6090
    %7491 = vmatpush1.bf16.msra.mxu0 %v6089
    %7492 = vmatprep.subr.bf16.mxu0 %v6098
    %7493 = vmatpush1.bf16.msra.mxu0 %v6097
    %7494 = vmatprep.subr.bf16.mxu0 %v6106
    %7495 = vmatpush1.bf16.msra.mxu0 %v6105
    %7496 = vmatprep.subr.bf16.mxu0 %v6114
    %7497 = vmatpush1.bf16.msra.mxu0 %v6113
    %7498 = vmatprep.subr.bf16.mxu0 %v6122
    %7499 = vmatpush1.bf16.msra.mxu0 %v6121
    %7500 = vmatprep.subr.bf16.mxu0 %v6130
    %7501 = vmatpush1.bf16.msra.mxu0 %v6129
    %7502 = vmatprep.mubr.bf16.mxu0 %v3208
    %7503 = vmatmul.mubr.bf16.gmra.mrb[0].mxu0 %v3207
    %v7504 = vpop.f32.mrb[0].mxu0
    %v7505 = vadd.f32 %v7402, %v7504
    %v7506 = vpop.f32.mrb[0].mxu0
    %v7507 = vadd.f32 %v7404, %v7506
    %v7508 = vpop.f32.mrb[0].mxu0
    %v7509 = vadd.f32 %v7406, %v7508
    %v7510 = vpop.f32.mrb[0].mxu0
    %v7511 = vadd.f32 %v7408, %v7510
    %7512 = vmatprep.mubr.bf16.mxu0 %v3216
    %7513 = vmatmul.mubr.bf16.gmra.mrb[0].mxu0 %v3215
    %v7514 = vpop.f32.mrb[0].mxu0
    %v7515 = vadd.f32 %v7412, %v7514
    %v7516 = vpop.f32.mrb[0].mxu0
    %v7517 = vadd.f32 %v7414, %v7516
    %v7518 = vpop.f32.mrb[0].mxu0
    %v7519 = vadd.f32 %v7416, %v7518
    %v7520 = vpop.f32.mrb[0].mxu0
    %v7521 = vadd.f32 %v7418, %v7520
    %7522 = vmatprep.mubr.bf16.mxu0 %v3224
    %7523 = vmatmul.mubr.bf16.gmra.mrb[0].mxu0 %v3223
    %v7524 = vpop.f32.mrb[0].mxu0
    %v7525 = vadd.f32 %v7422, %v7524
    %v7526 = vpop.f32.mrb[0].mxu0
    %v7527 = vadd.f32 %v7424, %v7526
    %v7528 = vpop.f32.mrb[0].mxu0
    %v7529 = vadd.f32 %v7426, %v7528
    %v7530 = vpop.f32.mrb[0].mxu0
    %v7531 = vadd.f32 %v7428, %v7530
    %7532 = vmatprep.mubr.bf16.mxu0 %v3232
    %7533 = vmatmul.mubr.bf16.gmra.mrb[0].mxu0 %v3231
    %v7534 = vpop.f32.mrb[0].mxu0
    %v7535 = vadd.f32 %v7432, %v7534
    %v7536 = vpop.f32.mrb[0].mxu0
    %v7537 = vadd.f32 %v7434, %v7536
    %v7538 = vpop.f32.mrb[0].mxu0
    %v7539 = vadd.f32 %v7436, %v7538
    %v7540 = vpop.f32.mrb[0].mxu0
    %v7541 = vadd.f32 %v7438, %v7540
    %7542 = vmatprep.mubr.bf16.mxu0 %v3240
    %7543 = vmatmul.mubr.bf16.gmra.mrb[0].mxu0 %v3239
    %v7544 = vpop.f32.mrb[0].mxu0
    %v7545 = vadd.f32 %v7442, %v7544
    %v7546 = vpop.f32.mrb[0].mxu0
    %v7547 = vadd.f32 %v7444, %v7546
    %v7548 = vpop.f32.mrb[0].mxu0
    %v7549 = vadd.f32 %v7446, %v7548
    %v7550 = vpop.f32.mrb[0].mxu0
    %v7551 = vadd.f32 %v7448, %v7550
    %7552 = vmatprep.mubr.bf16.mxu0 %v3248
    %7553 = vmatmul.mubr.bf16.gmra.mrb[0].mxu0 %v3247
    %v7554 = vpop.f32.mrb[0].mxu0
    %v7555 = vadd.f32 %v7452, %v7554
    %v7556 = vpop.f32.mrb[0].mxu0
    %v7557 = vadd.f32 %v7454, %v7556
    %v7558 = vpop.f32.mrb[0].mxu0
    %v7559 = vadd.f32 %v7456, %v7558
    %v7560 = vpop.f32.mrb[0].mxu0
    %v7561 = vadd.f32 %v7458, %v7560
    %7562 = vmatprep.mubr.bf16.mxu0 %v3256
    %7563 = vmatmul.mubr.bf16.gmra.mrb[0].mxu0 %v3255
    %v7564 = vpop.f32.mrb[0].mxu0
    %v7565 = vadd.f32 %v7462, %v7564
    %v7566 = vpop.f32.mrb[0].mxu0
    %v7567 = vadd.f32 %v7464, %v7566
    %v7568 = vpop.f32.mrb[0].mxu0
    %v7569 = vadd.f32 %v7466, %v7568
    %v7570 = vpop.f32.mrb[0].mxu0
    %v7571 = vadd.f32 %v7468, %v7570
    %7572 = vdwg.mxu0
    %7573 = vmatprep.subr.bf16.mxu0 %v6138
    %7574 = vmatpush1.bf16.msra.mxu0 %v6137
    %7575 = vmatprep.subr.bf16.mxu0 %v6146
    %7576 = vmatpush1.bf16.msra.mxu0 %v6145
    %7577 = vmatprep.subr.bf16.mxu0 %v6154
    %7578 = vmatpush1.bf16.msra.mxu0 %v6153
    %7579 = vmatprep.subr.bf16.mxu0 %v6162
    %7580 = vmatpush1.bf16.msra.mxu0 %v6161
    %7581 = vmatprep.subr.bf16.mxu0 %v6170
    %7582 = vmatpush1.bf16.msra.mxu0 %v6169
    %7583 = vmatprep.subr.bf16.mxu0 %v6178
    %7584 = vmatpush1.bf16.msra.mxu0 %v6177
    %7585 = vmatprep.subr.bf16.mxu0 %v6186
    %7586 = vmatpush1.bf16.msra.mxu0 %v6185
    %7587 = vmatprep.subr.bf16.mxu0 %v6194
    %7588 = vmatpush1.bf16.msra.mxu0 %v6193
    %7589 = vmatprep.subr.bf16.mxu0 %v6202
    %7590 = vmatpush1.bf16.msra.mxu0 %v6201
    %7591 = vmatprep.subr.bf16.mxu0 %v6210
    %7592 = vmatpush1.bf16.msra.mxu0 %v6209
    %7593 = vmatprep.subr.bf16.mxu0 %v6218
    %7594 = vmatpush1.bf16.msra.mxu0 %v6217
    %7595 = vmatprep.subr.bf16.mxu0 %v6226
    %7596 = vmatpush1.bf16.msra.mxu0 %v6225
    %7597 = vmatprep.subr.bf16.mxu0 %v6234
    %7598 = vmatpush1.bf16.msra.mxu0 %v6233
    %7599 = vmatprep.subr.bf16.mxu0 %v6242
    %7600 = vmatpush1.bf16.msra.mxu0 %v6241
    %7601 = vmatprep.subr.bf16.mxu0 %v6250
    %7602 = vmatpush1.bf16.msra.mxu0 %v6249
    %7603 = vmatprep.subr.bf16.mxu0 %v6258
    %7604 = vmatpush1.bf16.msra.mxu0 %v6257
    %7605 = vmatprep.mubr.bf16.mxu0 %v3210
    %7606 = vmatmul.mubr.bf16.gmra.mrb[0].mxu0 %v3209
    %v7607 = vpop.f32.mrb[0].mxu0
    %v7608 = vadd.f32 %v7505, %v7607
    %v7609 = vpop.f32.mrb[0].mxu0
    %v7610 = vadd.f32 %v7507, %v7609
    %v7611 = vpop.f32.mrb[0].mxu0
    %v7612 = vadd.f32 %v7509, %v7611
    %v7613 = vpop.f32.mrb[0].mxu0
    %v7614 = vadd.f32 %v7511, %v7613
    %7615 = vmatprep.mubr.bf16.mxu0 %v3218
    %7616 = vmatmul.mubr.bf16.gmra.mrb[0].mxu0 %v3217
    %v7617 = vpop.f32.mrb[0].mxu0
    %v7618 = vadd.f32 %v7515, %v7617
    %v7619 = vpop.f32.mrb[0].mxu0
    %v7620 = vadd.f32 %v7517, %v7619
    %v7621 = vpop.f32.mrb[0].mxu0
    %v7622 = vadd.f32 %v7519, %v7621
    %v7623 = vpop.f32.mrb[0].mxu0
    %v7624 = vadd.f32 %v7521, %v7623
    %7625 = vmatprep.mubr.bf16.mxu0 %v3226
    %7626 = vmatmul.mubr.bf16.gmra.mrb[0].mxu0 %v3225
    %v7627 = vpop.f32.mrb[0].mxu0
    %v7628 = vadd.f32 %v7525, %v7627
    %v7629 = vpop.f32.mrb[0].mxu0
    %v7630 = vadd.f32 %v7527, %v7629
    %v7631 = vpop.f32.mrb[0].mxu0
    %v7632 = vadd.f32 %v7529, %v7631
    %v7633 = vpop.f32.mrb[0].mxu0
    %v7634 = vadd.f32 %v7531, %v7633
    %7635 = vmatprep.mubr.bf16.mxu0 %v3234
    %7636 = vmatmul.mubr.bf16.gmra.mrb[0].mxu0 %v3233
    %v7637 = vpop.f32.mrb[0].mxu0
    %v7638 = vadd.f32 %v7535, %v7637
    %v7639 = vpop.f32.mrb[0].mxu0
    %v7640 = vadd.f32 %v7537, %v7639
    %v7641 = vpop.f32.mrb[0].mxu0
    %v7642 = vadd.f32 %v7539, %v7641
    %v7643 = vpop.f32.mrb[0].mxu0
    %v7644 = vadd.f32 %v7541, %v7643
    %7645 = vmatprep.mubr.bf16.mxu0 %v3242
    %7646 = vmatmul.mubr.bf16.gmra.mrb[0].mxu0 %v3241
    %v7647 = vpop.f32.mrb[0].mxu0
    %v7648 = vadd.f32 %v7545, %v7647
    %v7649 = vpop.f32.mrb[0].mxu0
    %v7650 = vadd.f32 %v7547, %v7649
    %v7651 = vpop.f32.mrb[0].mxu0
    %v7652 = vadd.f32 %v7549, %v7651
    %v7653 = vpop.f32.mrb[0].mxu0
    %v7654 = vadd.f32 %v7551, %v7653
    %7655 = vmatprep.mubr.bf16.mxu0 %v3250
    %7656 = vmatmul.mubr.bf16.gmra.mrb[0].mxu0 %v3249
    %v7657 = vpop.f32.mrb[0].mxu0
    %v7658 = vadd.f32 %v7555, %v7657
    %v7659 = vpop.f32.mrb[0].mxu0
    %v7660 = vadd.f32 %v7557, %v7659
    %v7661 = vpop.f32.mrb[0].mxu0
    %v7662 = vadd.f32 %v7559, %v7661
    %v7663 = vpop.f32.mrb[0].mxu0
    %v7664 = vadd.f32 %v7561, %v7663
    %7665 = vmatprep.mubr.bf16.mxu0 %v3258
    %7666 = vmatmul.mubr.bf16.gmra.mrb[0].mxu0 %v3257
    %v7667 = vpop.f32.mrb[0].mxu0
    %v7668 = vadd.f32 %v7565, %v7667
    %v7669 = vpop.f32.mrb[0].mxu0
    %v7670 = vadd.f32 %v7567, %v7669
    %v7671 = vpop.f32.mrb[0].mxu0
    %v7672 = vadd.f32 %v7569, %v7671
    %v7673 = vpop.f32.mrb[0].mxu0
    %v7674 = vadd.f32 %v7571, %v7673
    %7675 = vdwg.mxu0
    %7676 = vmatprep.subr.bf16.mxu0 %v6266
    %7677 = vmatpush1.bf16.msra.mxu0 %v6265
    %7678 = vmatprep.subr.bf16.mxu0 %v6274
    %7679 = vmatpush1.bf16.msra.mxu0 %v6273
    %7680 = vmatprep.subr.bf16.mxu0 %v6282
    %7681 = vmatpush1.bf16.msra.mxu0 %v6281
    %7682 = vmatprep.subr.bf16.mxu0 %v6290
    %7683 = vmatpush1.bf16.msra.mxu0 %v6289
    %7684 = vmatprep.subr.bf16.mxu0 %v6298
    %7685 = vmatpush1.bf16.msra.mxu0 %v6297
    %7686 = vmatprep.subr.bf16.mxu0 %v6306
    %7687 = vmatpush1.bf16.msra.mxu0 %v6305
    %7688 = vmatprep.subr.bf16.mxu0 %v6314
    %7689 = vmatpush1.bf16.msra.mxu0 %v6313
    %7690 = vmatprep.subr.bf16.mxu0 %v6322
    %7691 = vmatpush1.bf16.msra.mxu0 %v6321
    %7692 = vmatprep.subr.bf16.mxu0 %v6330
    %7693 = vmatpush1.bf16.msra.mxu0 %v6329
    %7694 = vmatprep.subr.bf16.mxu0 %v6338
    %7695 = vmatpush1.bf16.msra.mxu0 %v6337
    %7696 = vmatprep.subr.bf16.mxu0 %v6346
    %7697 = vmatpush1.bf16.msra.mxu0 %v6345
    %7698 = vmatprep.subr.bf16.mxu0 %v6354
    %7699 = vmatpush1.bf16.msra.mxu0 %v6353
    %7700 = vmatprep.subr.bf16.mxu0 %v6362
    %7701 = vmatpush1.bf16.msra.mxu0 %v6361
    %7702 = vmatprep.subr.bf16.mxu0 %v6370
    %7703 = vmatpush1.bf16.msra.mxu0 %v6369
    %7704 = vmatprep.subr.bf16.mxu0 %v6378
    %7705 = vmatpush1.bf16.msra.mxu0 %v6377
    %7706 = vmatprep.subr.bf16.mxu0 %v6386
    %7707 = vmatpush1.bf16.msra.mxu0 %v6385
    %7708 = vmatprep.mubr.bf16.mxu0 %v3212
    %7709 = vmatmul.mubr.bf16.gmra.mrb[0].mxu0 %v3211
    %v7710 = vpop.f32.mrb[0].mxu0
    %v7711 = vadd.f32 %v7608, %v7710
    %v7712 = vpop.f32.mrb[0].mxu0
    %v7713 = vadd.f32 %v7610, %v7712
    %v7714 = vpop.f32.mrb[0].mxu0
    %v7715 = vadd.f32 %v7612, %v7714
    %v7716 = vpop.f32.mrb[0].mxu0
    %v7717 = vadd.f32 %v7614, %v7716
    %7718 = vmatprep.mubr.bf16.mxu0 %v3220
    %7719 = vmatmul.mubr.bf16.gmra.mrb[0].mxu0 %v3219
    %v7720 = vpop.f32.mrb[0].mxu0
    %v7721 = vadd.f32 %v7618, %v7720
    %v7722 = vpop.f32.mrb[0].mxu0
    %v7723 = vadd.f32 %v7620, %v7722
    %v7724 = vpop.f32.mrb[0].mxu0
    %v7725 = vadd.f32 %v7622, %v7724
    %v7726 = vpop.f32.mrb[0].mxu0
    %v7727 = vadd.f32 %v7624, %v7726
    %7728 = vmatprep.mubr.bf16.mxu0 %v3228
    %7729 = vmatmul.mubr.bf16.gmra.mrb[0].mxu0 %v3227
    %v7730 = vpop.f32.mrb[0].mxu0
    %v7731 = vadd.f32 %v7628, %v7730
    %v7732 = vpop.f32.mrb[0].mxu0
    %v7733 = vadd.f32 %v7630, %v7732
    %v7734 = vpop.f32.mrb[0].mxu0
    %v7735 = vadd.f32 %v7632, %v7734
    %v7736 = vpop.f32.mrb[0].mxu0
    %v7737 = vadd.f32 %v7634, %v7736
    %7738 = vmatprep.mubr.bf16.mxu0 %v3236
    %7739 = vmatmul.mubr.bf16.gmra.mrb[0].mxu0 %v3235
    %v7740 = vpop.f32.mrb[0].mxu0
    %v7741 = vadd.f32 %v7638, %v7740
    %v7742 = vpop.f32.mrb[0].mxu0
    %v7743 = vadd.f32 %v7640, %v7742
    %v7744 = vpop.f32.mrb[0].mxu0
    %v7745 = vadd.f32 %v7642, %v7744
    %v7746 = vpop.f32.mrb[0].mxu0
    %v7747 = vadd.f32 %v7644, %v7746
    %7748 = vmatprep.mubr.bf16.mxu0 %v3244
    %7749 = vmatmul.mubr.bf16.gmra.mrb[0].mxu0 %v3243
    %v7750 = vpop.f32.mrb[0].mxu0
    %v7751 = vadd.f32 %v7648, %v7750
    %v7752 = vpop.f32.mrb[0].mxu0
    %v7753 = vadd.f32 %v7650, %v7752
    %v7754 = vpop.f32.mrb[0].mxu0
    %v7755 = vadd.f32 %v7652, %v7754
    %v7756 = vpop.f32.mrb[0].mxu0
    %v7757 = vadd.f32 %v7654, %v7756
    %7758 = vmatprep.mubr.bf16.mxu0 %v3252
    %7759 = vmatmul.mubr.bf16.gmra.mrb[0].mxu0 %v3251
    %v7760 = vpop.f32.mrb[0].mxu0
    %v7761 = vadd.f32 %v7658, %v7760
    %v7762 = vpop.f32.mrb[0].mxu0
    %v7763 = vadd.f32 %v7660, %v7762
    %v7764 = vpop.f32.mrb[0].mxu0
    %v7765 = vadd.f32 %v7662, %v7764
    %v7766 = vpop.f32.mrb[0].mxu0
    %v7767 = vadd.f32 %v7664, %v7766
    %7768 = vmatprep.mubr.bf16.mxu0 %v3260
    %7769 = vmatmul.mubr.bf16.gmra.mrb[0].mxu0 %v3259
    %v7770 = vpop.f32.mrb[0].mxu0
    %v7771 = vadd.f32 %v7668, %v7770
    %v7772 = vpop.f32.mrb[0].mxu0
    %v7773 = vadd.f32 %v7670, %v7772
    %v7774 = vpop.f32.mrb[0].mxu0
    %v7775 = vadd.f32 %v7672, %v7774
    %v7776 = vpop.f32.mrb[0].mxu0
    %v7777 = vadd.f32 %v7674, %v7776
    %7778 = vdwg.mxu0
    %7779 = vmatprep.subr.bf16.mxu0 %v5628
    %7780 = vmatpush1.bf16.msra.mxu0 %v5627
    %7781 = vmatprep.subr.bf16.mxu0 %v5636
    %7782 = vmatpush1.bf16.msra.mxu0 %v5635
    %7783 = vmatprep.subr.bf16.mxu0 %v5644
    %7784 = vmatpush1.bf16.msra.mxu0 %v5643
    %7785 = vmatprep.subr.bf16.mxu0 %v5652
    %7786 = vmatpush1.bf16.msra.mxu0 %v5651
    %7787 = vmatprep.subr.bf16.mxu0 %v5660
    %7788 = vmatpush1.bf16.msra.mxu0 %v5659
    %7789 = vmatprep.subr.bf16.mxu0 %v5668
    %7790 = vmatpush1.bf16.msra.mxu0 %v5667
    %7791 = vmatprep.subr.bf16.mxu0 %v5676
    %7792 = vmatpush1.bf16.msra.mxu0 %v5675
    %7793 = vmatprep.subr.bf16.mxu0 %v5684
    %7794 = vmatpush1.bf16.msra.mxu0 %v5683
    %7795 = vmatprep.subr.bf16.mxu0 %v5692
    %7796 = vmatpush1.bf16.msra.mxu0 %v5691
    %7797 = vmatprep.subr.bf16.mxu0 %v5700
    %7798 = vmatpush1.bf16.msra.mxu0 %v5699
    %7799 = vmatprep.subr.bf16.mxu0 %v5708
    %7800 = vmatpush1.bf16.msra.mxu0 %v5707
    %7801 = vmatprep.subr.bf16.mxu0 %v5716
    %7802 = vmatpush1.bf16.msra.mxu0 %v5715
    %7803 = vmatprep.subr.bf16.mxu0 %v5724
    %7804 = vmatpush1.bf16.msra.mxu0 %v5723
    %7805 = vmatprep.subr.bf16.mxu0 %v5732
    %7806 = vmatpush1.bf16.msra.mxu0 %v5731
    %7807 = vmatprep.subr.bf16.mxu0 %v5740
    %7808 = vmatpush1.bf16.msra.mxu0 %v5739
    %7809 = vmatprep.subr.bf16.mxu0 %v5748
    %7810 = vmatpush1.bf16.msra.mxu0 %v5747
    %7811 = vmatprep.mubr.bf16.mxu0 %v3202
    %7812 = vmatmul.mubr.bf16.gmra.mrb[0].mxu0 %v3201
    %v7813 = vpop.f32.mrb[0].mxu0
    %v7814 = vadd.f32 0.0, %v7813
    %v7815 = vpop.f32.mrb[0].mxu0
    %v7816 = vadd.f32 0.0, %v7815
    %v7817 = vpop.f32.mrb[0].mxu0
    %v7818 = vadd.f32 0.0, %v7817
    %v7819 = vpop.f32.mrb[0].mxu0
    %v7820 = vadd.f32 0.0, %v7819
    %7821 = vmatprep.mubr.bf16.mxu0 %v3210
    %7822 = vmatmul.mubr.bf16.gmra.mrb[0].mxu0 %v3209
    %v7823 = vpop.f32.mrb[0].mxu0
    %v7824 = vadd.f32 0.0, %v7823
    %v7825 = vpop.f32.mrb[0].mxu0
    %v7826 = vadd.f32 0.0, %v7825
    %v7827 = vpop.f32.mrb[0].mxu0
    %v7828 = vadd.f32 0.0, %v7827
    %v7829 = vpop.f32.mrb[0].mxu0
    %v7830 = vadd.f32 0.0, %v7829
    %7831 = vmatprep.mubr.bf16.mxu0 %v3218
    %7832 = vmatmul.mubr.bf16.gmra.mrb[0].mxu0 %v3217
    %v7833 = vpop.f32.mrb[0].mxu0
    %v7834 = vadd.f32 0.0, %v7833
    %v7835 = vpop.f32.mrb[0].mxu0
    %v7836 = vadd.f32 0.0, %v7835
    %v7837 = vpop.f32.mrb[0].mxu0
    %v7838 = vadd.f32 0.0, %v7837
    %v7839 = vpop.f32.mrb[0].mxu0
    %v7840 = vadd.f32 0.0, %v7839
    %7841 = vmatprep.mubr.bf16.mxu0 %v3226
    %7842 = vmatmul.mubr.bf16.gmra.mrb[0].mxu0 %v3225
    %v7843 = vpop.f32.mrb[0].mxu0
    %v7844 = vadd.f32 0.0, %v7843
    %v7845 = vpop.f32.mrb[0].mxu0
    %v7846 = vadd.f32 0.0, %v7845
    %v7847 = vpop.f32.mrb[0].mxu0
    %v7848 = vadd.f32 0.0, %v7847
    %v7849 = vpop.f32.mrb[0].mxu0
    %v7850 = vadd.f32 0.0, %v7849
    %7851 = vmatprep.mubr.bf16.mxu0 %v3234
    %7852 = vmatmul.mubr.bf16.gmra.mrb[0].mxu0 %v3233
    %v7853 = vpop.f32.mrb[0].mxu0
    %v7854 = vadd.f32 0.0, %v7853
    %v7855 = vpop.f32.mrb[0].mxu0
    %v7856 = vadd.f32 0.0, %v7855
    %v7857 = vpop.f32.mrb[0].mxu0
    %v7858 = vadd.f32 0.0, %v7857
    %v7859 = vpop.f32.mrb[0].mxu0
    %v7860 = vadd.f32 0.0, %v7859
    %7861 = vmatprep.mubr.bf16.mxu0 %v3242
    %7862 = vmatmul.mubr.bf16.gmra.mrb[0].mxu0 %v3241
    %v7863 = vpop.f32.mrb[0].mxu0
    %v7864 = vadd.f32 0.0, %v7863
    %v7865 = vpop.f32.mrb[0].mxu0
    %v7866 = vadd.f32 0.0, %v7865
    %v7867 = vpop.f32.mrb[0].mxu0
    %v7868 = vadd.f32 0.0, %v7867
    %v7869 = vpop.f32.mrb[0].mxu0
    %v7870 = vadd.f32 0.0, %v7869
    %7871 = vmatprep.mubr.bf16.mxu0 %v3250
    %7872 = vmatmul.mubr.bf16.gmra.mrb[0].mxu0 %v3249
    %v7873 = vpop.f32.mrb[0].mxu0
    %v7874 = vadd.f32 0.0, %v7873
    %v7875 = vpop.f32.mrb[0].mxu0
    %v7876 = vadd.f32 0.0, %v7875
    %v7877 = vpop.f32.mrb[0].mxu0
    %v7878 = vadd.f32 0.0, %v7877
    %v7879 = vpop.f32.mrb[0].mxu0
    %v7880 = vadd.f32 0.0, %v7879
    %7881 = vdwg.mxu0
    %7882 = vmatprep.subr.bf16.mxu0 %v5756
    %7883 = vmatpush1.bf16.msra.mxu0 %v5755
    %7884 = vmatprep.subr.bf16.mxu0 %v5764
    %7885 = vmatpush1.bf16.msra.mxu0 %v5763
    %7886 = vmatprep.subr.bf16.mxu0 %v5772
    %7887 = vmatpush1.bf16.msra.mxu0 %v5771
    %7888 = vmatprep.subr.bf16.mxu0 %v5780
    %7889 = vmatpush1.bf16.msra.mxu0 %v5779
    %7890 = vmatprep.subr.bf16.mxu0 %v5788
    %7891 = vmatpush1.bf16.msra.mxu0 %v5787
    %7892 = vmatprep.subr.bf16.mxu0 %v5796
    %7893 = vmatpush1.bf16.msra.mxu0 %v5795
    %7894 = vmatprep.subr.bf16.mxu0 %v5804
    %7895 = vmatpush1.bf16.msra.mxu0 %v5803
    %7896 = vmatprep.subr.bf16.mxu0 %v5812
    %7897 = vmatpush1.bf16.msra.mxu0 %v5811
    %7898 = vmatprep.subr.bf16.mxu0 %v5820
    %7899 = vmatpush1.bf16.msra.mxu0 %v5819
    %7900 = vmatprep.subr.bf16.mxu0 %v5828
    %7901 = vmatpush1.bf16.msra.mxu0 %v5827
    %7902 = vmatprep.subr.bf16.mxu0 %v5836
    %7903 = vmatpush1.bf16.msra.mxu0 %v5835
    %7904 = vmatprep.subr.bf16.mxu0 %v5844
    %7905 = vmatpush1.bf16.msra.mxu0 %v5843
    %7906 = vmatprep.subr.bf16.mxu0 %v5852
    %7907 = vmatpush1.bf16.msra.mxu0 %v5851
    %7908 = vmatprep.subr.bf16.mxu0 %v5860
    %7909 = vmatpush1.bf16.msra.mxu0 %v5859
    %7910 = vmatprep.subr.bf16.mxu0 %v5868
    %7911 = vmatpush1.bf16.msra.mxu0 %v5867
    %7912 = vmatprep.subr.bf16.mxu0 %v5876
    %7913 = vmatpush1.bf16.msra.mxu0 %v5875
    %7914 = vmatprep.mubr.bf16.mxu0 %v3204
    %7915 = vmatmul.mubr.bf16.gmra.mrb[0].mxu0 %v3203
    %v7916 = vpop.f32.mrb[0].mxu0
    %v7917 = vadd.f32 %v7814, %v7916
    %v7918 = vpop.f32.mrb[0].mxu0
    %v7919 = vadd.f32 %v7816, %v7918
    %v7920 = vpop.f32.mrb[0].mxu0
    %v7921 = vadd.f32 %v7818, %v7920
    %v7922 = vpop.f32.mrb[0].mxu0
    %v7923 = vadd.f32 %v7820, %v7922
    %7924 = vmatprep.mubr.bf16.mxu0 %v3212
    %7925 = vmatmul.mubr.bf16.gmra.mrb[0].mxu0 %v3211
    %v7926 = vpop.f32.mrb[0].mxu0
    %v7927 = vadd.f32 %v7824, %v7926
    %v7928 = vpop.f32.mrb[0].mxu0
    %v7929 = vadd.f32 %v7826, %v7928
    %v7930 = vpop.f32.mrb[0].mxu0
    %v7931 = vadd.f32 %v7828, %v7930
    %v7932 = vpop.f32.mrb[0].mxu0
    %v7933 = vadd.f32 %v7830, %v7932
    %7934 = vmatprep.mubr.bf16.mxu0 %v3220
    %7935 = vmatmul.mubr.bf16.gmra.mrb[0].mxu0 %v3219
    %v7936 = vpop.f32.mrb[0].mxu0
    %v7937 = vadd.f32 %v7834, %v7936
    %v7938 = vpop.f32.mrb[0].mxu0
    %v7939 = vadd.f32 %v7836, %v7938
    %v7940 = vpop.f32.mrb[0].mxu0
    %v7941 = vadd.f32 %v7838, %v7940
    %v7942 = vpop.f32.mrb[0].mxu0
    %v7943 = vadd.f32 %v7840, %v7942
    %7944 = vmatprep.mubr.bf16.mxu0 %v3228
    %7945 = vmatmul.mubr.bf16.gmra.mrb[0].mxu0 %v3227
    %v7946 = vpop.f32.mrb[0].mxu0
    %v7947 = vadd.f32 %v7844, %v7946
    %v7948 = vpop.f32.mrb[0].mxu0
    %v7949 = vadd.f32 %v7846, %v7948
    %v7950 = vpop.f32.mrb[0].mxu0
    %v7951 = vadd.f32 %v7848, %v7950
    %v7952 = vpop.f32.mrb[0].mxu0
    %v7953 = vadd.f32 %v7850, %v7952
    %7954 = vmatprep.mubr.bf16.mxu0 %v3236
    %7955 = vmatmul.mubr.bf16.gmra.mrb[0].mxu0 %v3235
    %v7956 = vpop.f32.mrb[0].mxu0
    %v7957 = vadd.f32 %v7854, %v7956
    %v7958 = vpop.f32.mrb[0].mxu0
    %v7959 = vadd.f32 %v7856, %v7958
    %v7960 = vpop.f32.mrb[0].mxu0
    %v7961 = vadd.f32 %v7858, %v7960
    %v7962 = vpop.f32.mrb[0].mxu0
    %v7963 = vadd.f32 %v7860, %v7962
    %7964 = vmatprep.mubr.bf16.mxu0 %v3244
    %7965 = vmatmul.mubr.bf16.gmra.mrb[0].mxu0 %v3243
    %v7966 = vpop.f32.mrb[0].mxu0
    %v7967 = vadd.f32 %v7864, %v7966
    %v7968 = vpop.f32.mrb[0].mxu0
    %v7969 = vadd.f32 %v7866, %v7968
    %v7970 = vpop.f32.mrb[0].mxu0
    %v7971 = vadd.f32 %v7868, %v7970
    %v7972 = vpop.f32.mrb[0].mxu0
    %v7973 = vadd.f32 %v7870, %v7972
    %7974 = vmatprep.mubr.bf16.mxu0 %v3252
    %7975 = vmatmul.mubr.bf16.gmra.mrb[0].mxu0 %v3251
    %v7976 = vpop.f32.mrb[0].mxu0
    %v7977 = vadd.f32 %v7874, %v7976
    %v7978 = vpop.f32.mrb[0].mxu0
    %v7979 = vadd.f32 %v7876, %v7978
    %v7980 = vpop.f32.mrb[0].mxu0
    %v7981 = vadd.f32 %v7878, %v7980
    %v7982 = vpop.f32.mrb[0].mxu0
    %v7983 = vadd.f32 %v7880, %v7982
    %7984 = vdwg.mxu0
    %7985 = vmatprep.subr.bf16.mxu0 %v5884
    %7986 = vmatpush1.bf16.msra.mxu0 %v5883
    %7987 = vmatprep.subr.bf16.mxu0 %v5892
    %7988 = vmatpush1.bf16.msra.mxu0 %v5891
    %7989 = vmatprep.subr.bf16.mxu0 %v5900
    %7990 = vmatpush1.bf16.msra.mxu0 %v5899
    %7991 = vmatprep.subr.bf16.mxu0 %v5908
    %7992 = vmatpush1.bf16.msra.mxu0 %v5907
    %7993 = vmatprep.subr.bf16.mxu0 %v5916
    %7994 = vmatpush1.bf16.msra.mxu0 %v5915
    %7995 = vmatprep.subr.bf16.mxu0 %v5924
    %7996 = vmatpush1.bf16.msra.mxu0 %v5923
    %7997 = vmatprep.subr.bf16.mxu0 %v5932
    %7998 = vmatpush1.bf16.msra.mxu0 %v5931
    %7999 = vmatprep.subr.bf16.mxu0 %v5940
    %8000 = vmatpush1.bf16.msra.mxu0 %v5939
    %8001 = vmatprep.subr.bf16.mxu0 %v5948
    %8002 = vmatpush1.bf16.msra.mxu0 %v5947
    %8003 = vmatprep.subr.bf16.mxu0 %v5956
    %8004 = vmatpush1.bf16.msra.mxu0 %v5955
    %8005 = vmatprep.subr.bf16.mxu0 %v5964
    %8006 = vmatpush1.bf16.msra.mxu0 %v5963
    %8007 = vmatprep.subr.bf16.mxu0 %v5972
    %8008 = vmatpush1.bf16.msra.mxu0 %v5971
    %8009 = vmatprep.subr.bf16.mxu0 %v5980
    %8010 = vmatpush1.bf16.msra.mxu0 %v5979
    %8011 = vmatprep.subr.bf16.mxu0 %v5988
    %8012 = vmatpush1.bf16.msra.mxu0 %v5987
    %8013 = vmatprep.subr.bf16.mxu0 %v5996
    %8014 = vmatpush1.bf16.msra.mxu0 %v5995
    %8015 = vmatprep.subr.bf16.mxu0 %v6004
    %8016 = vmatpush1.bf16.msra.mxu0 %v6003
    %8017 = vmatprep.mubr.bf16.mxu0 %v3206
    %8018 = vmatmul.mubr.bf16.gmra.mrb[0].mxu0 %v3205
    %v8019 = vpop.f32.mrb[0].mxu0
    %v8020 = vadd.f32 %v7917, %v8019
    %v8021 = vpop.f32.mrb[0].mxu0
    %v8022 = vadd.f32 %v7919, %v8021
    %v8023 = vpop.f32.mrb[0].mxu0
    %v8024 = vadd.f32 %v7921, %v8023
    %v8025 = vpop.f32.mrb[0].mxu0
    %v8026 = vadd.f32 %v7923, %v8025
    %8027 = vmatprep.mubr.bf16.mxu0 %v3214
    %8028 = vmatmul.mubr.bf16.gmra.mrb[0].mxu0 %v3213
    %v8029 = vpop.f32.mrb[0].mxu0
    %v8030 = vadd.f32 %v7927, %v8029
    %v8031 = vpop.f32.mrb[0].mxu0
    %v8032 = vadd.f32 %v7929, %v8031
    %v8033 = vpop.f32.mrb[0].mxu0
    %v8034 = vadd.f32 %v7931, %v8033
    %v8035 = vpop.f32.mrb[0].mxu0
    %v8036 = vadd.f32 %v7933, %v8035
    %8037 = vmatprep.mubr.bf16.mxu0 %v3222
    %8038 = vmatmul.mubr.bf16.gmra.mrb[0].mxu0 %v3221
    %v8039 = vpop.f32.mrb[0].mxu0
    %v8040 = vadd.f32 %v7937, %v8039
    %v8041 = vpop.f32.mrb[0].mxu0
    %v8042 = vadd.f32 %v7939, %v8041
    %v8043 = vpop.f32.mrb[0].mxu0
    %v8044 = vadd.f32 %v7941, %v8043
    %v8045 = vpop.f32.mrb[0].mxu0
    %v8046 = vadd.f32 %v7943, %v8045
    %8047 = vmatprep.mubr.bf16.mxu0 %v3230
    %8048 = vmatmul.mubr.bf16.gmra.mrb[0].mxu0 %v3229
    %v8049 = vpop.f32.mrb[0].mxu0
    %v8050 = vadd.f32 %v7947, %v8049
    %v8051 = vpop.f32.mrb[0].mxu0
    %v8052 = vadd.f32 %v7949, %v8051
    %v8053 = vpop.f32.mrb[0].mxu0
    %v8054 = vadd.f32 %v7951, %v8053
    %v8055 = vpop.f32.mrb[0].mxu0
    %v8056 = vadd.f32 %v7953, %v8055
    %8057 = vmatprep.mubr.bf16.mxu0 %v3238
    %8058 = vmatmul.mubr.bf16.gmra.mrb[0].mxu0 %v3237
    %v8059 = vpop.f32.mrb[0].mxu0
    %v8060 = vadd.f32 %v7957, %v8059
    %v8061 = vpop.f32.mrb[0].mxu0
    %v8062 = vadd.f32 %v7959, %v8061
    %v8063 = vpop.f32.mrb[0].mxu0
    %v8064 = vadd.f32 %v7961, %v8063
    %v8065 = vpop.f32.mrb[0].mxu0
    %v8066 = vadd.f32 %v7963, %v8065
    %8067 = vmatprep.mubr.bf16.mxu0 %v3246
    %8068 = vmatmul.mubr.bf16.gmra.mrb[0].mxu0 %v3245
    %v8069 = vpop.f32.mrb[0].mxu0
    %v8070 = vadd.f32 %v7967, %v8069
    %v8071 = vpop.f32.mrb[0].mxu0
    %v8072 = vadd.f32 %v7969, %v8071
    %v8073 = vpop.f32.mrb[0].mxu0
    %v8074 = vadd.f32 %v7971, %v8073
    %v8075 = vpop.f32.mrb[0].mxu0
    %v8076 = vadd.f32 %v7973, %v8075
    %8077 = vmatprep.mubr.bf16.mxu0 %v3254
    %8078 = vmatmul.mubr.bf16.gmra.mrb[0].mxu0 %v3253
    %v8079 = vpop.f32.mrb[0].mxu0
    %v8080 = vadd.f32 %v7977, %v8079
    %v8081 = vpop.f32.mrb[0].mxu0
    %v8082 = vadd.f32 %v7979, %v8081
    %v8083 = vpop.f32.mrb[0].mxu0
    %v8084 = vadd.f32 %v7981, %v8083
    %v8085 = vpop.f32.mrb[0].mxu0
    %v8086 = vadd.f32 %v7983, %v8085
    %8087 = vdwg.mxu0
    %8088 = vmatprep.subr.bf16.mxu0 %v6012
    %8089 = vmatpush1.bf16.msra.mxu0 %v6011
    %8090 = vmatprep.subr.bf16.mxu0 %v6020
    %8091 = vmatpush1.bf16.msra.mxu0 %v6019
    %8092 = vmatprep.subr.bf16.mxu0 %v6028
    %8093 = vmatpush1.bf16.msra.mxu0 %v6027
    %8094 = vmatprep.subr.bf16.mxu0 %v6036
    %8095 = vmatpush1.bf16.msra.mxu0 %v6035
    %8096 = vmatprep.subr.bf16.mxu0 %v6044
    %8097 = vmatpush1.bf16.msra.mxu0 %v6043
    %8098 = vmatprep.subr.bf16.mxu0 %v6052
    %8099 = vmatpush1.bf16.msra.mxu0 %v6051
    %8100 = vmatprep.subr.bf16.mxu0 %v6060
    %8101 = vmatpush1.bf16.msra.mxu0 %v6059
    %8102 = vmatprep.subr.bf16.mxu0 %v6068
    %8103 = vmatpush1.bf16.msra.mxu0 %v6067
    %8104 = vmatprep.subr.bf16.mxu0 %v6076
    %8105 = vmatpush1.bf16.msra.mxu0 %v6075
    %8106 = vmatprep.subr.bf16.mxu0 %v6084
    %8107 = vmatpush1.bf16.msra.mxu0 %v6083
    %8108 = vmatprep.subr.bf16.mxu0 %v6092
    %8109 = vmatpush1.bf16.msra.mxu0 %v6091
    %8110 = vmatprep.subr.bf16.mxu0 %v6100
    %8111 = vmatpush1.bf16.msra.mxu0 %v6099
    %8112 = vmatprep.subr.bf16.mxu0 %v6108
    %8113 = vmatpush1.bf16.msra.mxu0 %v6107
    %8114 = vmatprep.subr.bf16.mxu0 %v6116
    %8115 = vmatpush1.bf16.msra.mxu0 %v6115
    %8116 = vmatprep.subr.bf16.mxu0 %v6124
    %8117 = vmatpush1.bf16.msra.mxu0 %v6123
    %8118 = vmatprep.subr.bf16.mxu0 %v6132
    %8119 = vmatpush1.bf16.msra.mxu0 %v6131
    %8120 = vmatprep.mubr.bf16.mxu0 %v3208
    %8121 = vmatmul.mubr.bf16.gmra.mrb[0].mxu0 %v3207
    %v8122 = vpop.f32.mrb[0].mxu0
    %v8123 = vadd.f32 %v8020, %v8122
    %v8124 = vpop.f32.mrb[0].mxu0
    %v8125 = vadd.f32 %v8022, %v8124
    %v8126 = vpop.f32.mrb[0].mxu0
    %v8127 = vadd.f32 %v8024, %v8126
    %v8128 = vpop.f32.mrb[0].mxu0
    %v8129 = vadd.f32 %v8026, %v8128
    %8130 = vmatprep.mubr.bf16.mxu0 %v3216
    %8131 = vmatmul.mubr.bf16.gmra.mrb[0].mxu0 %v3215
    %v8132 = vpop.f32.mrb[0].mxu0
    %v8133 = vadd.f32 %v8030, %v8132
    %v8134 = vpop.f32.mrb[0].mxu0
    %v8135 = vadd.f32 %v8032, %v8134
    %v8136 = vpop.f32.mrb[0].mxu0
    %v8137 = vadd.f32 %v8034, %v8136
    %v8138 = vpop.f32.mrb[0].mxu0
    %v8139 = vadd.f32 %v8036, %v8138
    %8140 = vmatprep.mubr.bf16.mxu0 %v3224
    %8141 = vmatmul.mubr.bf16.gmra.mrb[0].mxu0 %v3223
    %v8142 = vpop.f32.mrb[0].mxu0
    %v8143 = vadd.f32 %v8040, %v8142
    %v8144 = vpop.f32.mrb[0].mxu0
    %v8145 = vadd.f32 %v8042, %v8144
    %v8146 = vpop.f32.mrb[0].mxu0
    %v8147 = vadd.f32 %v8044, %v8146
    %v8148 = vpop.f32.mrb[0].mxu0
    %v8149 = vadd.f32 %v8046, %v8148
    %8150 = vmatprep.mubr.bf16.mxu0 %v3232
    %8151 = vmatmul.mubr.bf16.gmra.mrb[0].mxu0 %v3231
    %v8152 = vpop.f32.mrb[0].mxu0
    %v8153 = vadd.f32 %v8050, %v8152
    %v8154 = vpop.f32.mrb[0].mxu0
    %v8155 = vadd.f32 %v8052, %v8154
    %v8156 = vpop.f32.mrb[0].mxu0
    %v8157 = vadd.f32 %v8054, %v8156
    %v8158 = vpop.f32.mrb[0].mxu0
    %v8159 = vadd.f32 %v8056, %v8158
    %8160 = vmatprep.mubr.bf16.mxu0 %v3240
    %8161 = vmatmul.mubr.bf16.gmra.mrb[0].mxu0 %v3239
    %v8162 = vpop.f32.mrb[0].mxu0
    %v8163 = vadd.f32 %v8060, %v8162
    %v8164 = vpop.f32.mrb[0].mxu0
    %v8165 = vadd.f32 %v8062, %v8164
    %v8166 = vpop.f32.mrb[0].mxu0
    %v8167 = vadd.f32 %v8064, %v8166
    %v8168 = vpop.f32.mrb[0].mxu0
    %v8169 = vadd.f32 %v8066, %v8168
    %8170 = vmatprep.mubr.bf16.mxu0 %v3248
    %8171 = vmatmul.mubr.bf16.gmra.mrb[0].mxu0 %v3247
    %v8172 = vpop.f32.mrb[0].mxu0
    %v8173 = vadd.f32 %v8070, %v8172
    %v8174 = vpop.f32.mrb[0].mxu0
    %v8175 = vadd.f32 %v8072, %v8174
    %v8176 = vpop.f32.mrb[0].mxu0
    %v8177 = vadd.f32 %v8074, %v8176
    %v8178 = vpop.f32.mrb[0].mxu0
    %v8179 = vadd.f32 %v8076, %v8178
    %8180 = vmatprep.mubr.bf16.mxu0 %v3256
    %8181 = vmatmul.mubr.bf16.gmra.mrb[0].mxu0 %v3255
    %v8182 = vpop.f32.mrb[0].mxu0
    %v8183 = vadd.f32 %v8080, %v8182
    %v8184 = vpop.f32.mrb[0].mxu0
    %v8185 = vadd.f32 %v8082, %v8184
    %v8186 = vpop.f32.mrb[0].mxu0
    %v8187 = vadd.f32 %v8084, %v8186
    %v8188 = vpop.f32.mrb[0].mxu0
    %v8189 = vadd.f32 %v8086, %v8188
    %8190 = vdwg.mxu0
    %8191 = vmatprep.subr.bf16.mxu0 %v6140
    %8192 = vmatpush1.bf16.msra.mxu0 %v6139
    %8193 = vmatprep.subr.bf16.mxu0 %v6148
    %8194 = vmatpush1.bf16.msra.mxu0 %v6147
    %8195 = vmatprep.subr.bf16.mxu0 %v6156
    %8196 = vmatpush1.bf16.msra.mxu0 %v6155
    %8197 = vmatprep.subr.bf16.mxu0 %v6164
    %8198 = vmatpush1.bf16.msra.mxu0 %v6163
    %8199 = vmatprep.subr.bf16.mxu0 %v6172
    %8200 = vmatpush1.bf16.msra.mxu0 %v6171
    %8201 = vmatprep.subr.bf16.mxu0 %v6180
    %8202 = vmatpush1.bf16.msra.mxu0 %v6179
    %8203 = vmatprep.subr.bf16.mxu0 %v6188
    %8204 = vmatpush1.bf16.msra.mxu0 %v6187
    %8205 = vmatprep.subr.bf16.mxu0 %v6196
    %8206 = vmatpush1.bf16.msra.mxu0 %v6195
    %8207 = vmatprep.subr.bf16.mxu0 %v6204
    %8208 = vmatpush1.bf16.msra.mxu0 %v6203
    %8209 = vmatprep.subr.bf16.mxu0 %v6212
    %8210 = vmatpush1.bf16.msra.mxu0 %v6211
    %8211 = vmatprep.subr.bf16.mxu0 %v6220
    %8212 = vmatpush1.bf16.msra.mxu0 %v6219
    %8213 = vmatprep.subr.bf16.mxu0 %v6228
    %8214 = vmatpush1.bf16.msra.mxu0 %v6227
    %8215 = vmatprep.subr.bf16.mxu0 %v6236
    %8216 = vmatpush1.bf16.msra.mxu0 %v6235
    %8217 = vmatprep.subr.bf16.mxu0 %v6244
    %8218 = vmatpush1.bf16.msra.mxu0 %v6243
    %8219 = vmatprep.subr.bf16.mxu0 %v6252
    %8220 = vmatpush1.bf16.msra.mxu0 %v6251
    %8221 = vmatprep.subr.bf16.mxu0 %v6260
    %8222 = vmatpush1.bf16.msra.mxu0 %v6259
    %8223 = vmatprep.mubr.bf16.mxu0 %v3210
    %8224 = vmatmul.mubr.bf16.gmra.mrb[0].mxu0 %v3209
    %v8225 = vpop.f32.mrb[0].mxu0
    %v8226 = vadd.f32 %v8123, %v8225
    %v8227 = vpop.f32.mrb[0].mxu0
    %v8228 = vadd.f32 %v8125, %v8227
    %v8229 = vpop.f32.mrb[0].mxu0
    %v8230 = vadd.f32 %v8127, %v8229
    %v8231 = vpop.f32.mrb[0].mxu0
    %v8232 = vadd.f32 %v8129, %v8231
    %8233 = vmatprep.mubr.bf16.mxu0 %v3218
    %8234 = vmatmul.mubr.bf16.gmra.mrb[0].mxu0 %v3217
    %v8235 = vpop.f32.mrb[0].mxu0
    %v8236 = vadd.f32 %v8133, %v8235
    %v8237 = vpop.f32.mrb[0].mxu0
    %v8238 = vadd.f32 %v8135, %v8237
    %v8239 = vpop.f32.mrb[0].mxu0
    %v8240 = vadd.f32 %v8137, %v8239
    %v8241 = vpop.f32.mrb[0].mxu0
    %v8242 = vadd.f32 %v8139, %v8241
    %8243 = vmatprep.mubr.bf16.mxu0 %v3226
    %8244 = vmatmul.mubr.bf16.gmra.mrb[0].mxu0 %v3225
    %v8245 = vpop.f32.mrb[0].mxu0
    %v8246 = vadd.f32 %v8143, %v8245
    %v8247 = vpop.f32.mrb[0].mxu0
    %v8248 = vadd.f32 %v8145, %v8247
    %v8249 = vpop.f32.mrb[0].mxu0
    %v8250 = vadd.f32 %v8147, %v8249
    %v8251 = vpop.f32.mrb[0].mxu0
    %v8252 = vadd.f32 %v8149, %v8251
    %8253 = vmatprep.mubr.bf16.mxu0 %v3234
    %8254 = vmatmul.mubr.bf16.gmra.mrb[0].mxu0 %v3233
    %v8255 = vpop.f32.mrb[0].mxu0
    %v8256 = vadd.f32 %v8153, %v8255
    %v8257 = vpop.f32.mrb[0].mxu0
    %v8258 = vadd.f32 %v8155, %v8257
    %v8259 = vpop.f32.mrb[0].mxu0
    %v8260 = vadd.f32 %v8157, %v8259
    %v8261 = vpop.f32.mrb[0].mxu0
    %v8262 = vadd.f32 %v8159, %v8261
    %8263 = vmatprep.mubr.bf16.mxu0 %v3242
    %8264 = vmatmul.mubr.bf16.gmra.mrb[0].mxu0 %v3241
    %v8265 = vpop.f32.mrb[0].mxu0
    %v8266 = vadd.f32 %v8163, %v8265
    %v8267 = vpop.f32.mrb[0].mxu0
    %v8268 = vadd.f32 %v8165, %v8267
    %v8269 = vpop.f32.mrb[0].mxu0
    %v8270 = vadd.f32 %v8167, %v8269
    %v8271 = vpop.f32.mrb[0].mxu0
    %v8272 = vadd.f32 %v8169, %v8271
    %8273 = vmatprep.mubr.bf16.mxu0 %v3250
    %8274 = vmatmul.mubr.bf16.gmra.mrb[0].mxu0 %v3249
    %v8275 = vpop.f32.mrb[0].mxu0
    %v8276 = vadd.f32 %v8173, %v8275
    %v8277 = vpop.f32.mrb[0].mxu0
    %v8278 = vadd.f32 %v8175, %v8277
    %v8279 = vpop.f32.mrb[0].mxu0
    %v8280 = vadd.f32 %v8177, %v8279
    %v8281 = vpop.f32.mrb[0].mxu0
    %v8282 = vadd.f32 %v8179, %v8281
    %8283 = vmatprep.mubr.bf16.mxu0 %v3258
    %8284 = vmatmul.mubr.bf16.gmra.mrb[0].mxu0 %v3257
    %v8285 = vpop.f32.mrb[0].mxu0
    %v8286 = vadd.f32 %v8183, %v8285
    %v8287 = vpop.f32.mrb[0].mxu0
    %v8288 = vadd.f32 %v8185, %v8287
    %v8289 = vpop.f32.mrb[0].mxu0
    %v8290 = vadd.f32 %v8187, %v8289
    %v8291 = vpop.f32.mrb[0].mxu0
    %v8292 = vadd.f32 %v8189, %v8291
    %8293 = vdwg.mxu0
    %8294 = vmatprep.subr.bf16.mxu0 %v6268
    %8295 = vmatpush1.bf16.msra.mxu0 %v6267
    %8296 = vmatprep.subr.bf16.mxu0 %v6276
    %8297 = vmatpush1.bf16.msra.mxu0 %v6275
    %8298 = vmatprep.subr.bf16.mxu0 %v6284
    %8299 = vmatpush1.bf16.msra.mxu0 %v6283
    %8300 = vmatprep.subr.bf16.mxu0 %v6292
    %8301 = vmatpush1.bf16.msra.mxu0 %v6291
    %8302 = vmatprep.subr.bf16.mxu0 %v6300
    %8303 = vmatpush1.bf16.msra.mxu0 %v6299
    %8304 = vmatprep.subr.bf16.mxu0 %v6308
    %8305 = vmatpush1.bf16.msra.mxu0 %v6307
    %8306 = vmatprep.subr.bf16.mxu0 %v6316
    %8307 = vmatpush1.bf16.msra.mxu0 %v6315
    %8308 = vmatprep.subr.bf16.mxu0 %v6324
    %8309 = vmatpush1.bf16.msra.mxu0 %v6323
    %8310 = vmatprep.subr.bf16.mxu0 %v6332
    %8311 = vmatpush1.bf16.msra.mxu0 %v6331
    %8312 = vmatprep.subr.bf16.mxu0 %v6340
    %8313 = vmatpush1.bf16.msra.mxu0 %v6339
    %8314 = vmatprep.subr.bf16.mxu0 %v6348
    %8315 = vmatpush1.bf16.msra.mxu0 %v6347
    %8316 = vmatprep.subr.bf16.mxu0 %v6356
    %8317 = vmatpush1.bf16.msra.mxu0 %v6355
    %8318 = vmatprep.subr.bf16.mxu0 %v6364
    %8319 = vmatpush1.bf16.msra.mxu0 %v6363
    %8320 = vmatprep.subr.bf16.mxu0 %v6372
    %8321 = vmatpush1.bf16.msra.mxu0 %v6371
    %8322 = vmatprep.subr.bf16.mxu0 %v6380
    %8323 = vmatpush1.bf16.msra.mxu0 %v6379
    %8324 = vmatprep.subr.bf16.mxu0 %v6388
    %8325 = vmatpush1.bf16.msra.mxu0 %v6387
    %8326 = vmatprep.mubr.bf16.mxu0 %v3212
    %8327 = vmatmul.mubr.bf16.gmra.mrb[0].mxu0 %v3211
    %v8328 = vpop.f32.mrb[0].mxu0
    %v8329 = vadd.f32 %v8226, %v8328
    %v8330 = vpop.f32.mrb[0].mxu0
    %v8331 = vadd.f32 %v8228, %v8330
    %v8332 = vpop.f32.mrb[0].mxu0
    %v8333 = vadd.f32 %v8230, %v8332
    %v8334 = vpop.f32.mrb[0].mxu0
    %v8335 = vadd.f32 %v8232, %v8334
    %8336 = vmatprep.mubr.bf16.mxu0 %v3220
    %8337 = vmatmul.mubr.bf16.gmra.mrb[0].mxu0 %v3219
    %v8338 = vpop.f32.mrb[0].mxu0
    %v8339 = vadd.f32 %v8236, %v8338
    %v8340 = vpop.f32.mrb[0].mxu0
    %v8341 = vadd.f32 %v8238, %v8340
    %v8342 = vpop.f32.mrb[0].mxu0
    %v8343 = vadd.f32 %v8240, %v8342
    %v8344 = vpop.f32.mrb[0].mxu0
    %v8345 = vadd.f32 %v8242, %v8344
    %8346 = vmatprep.mubr.bf16.mxu0 %v3228
    %8347 = vmatmul.mubr.bf16.gmra.mrb[0].mxu0 %v3227
    %v8348 = vpop.f32.mrb[0].mxu0
    %v8349 = vadd.f32 %v8246, %v8348
    %v8350 = vpop.f32.mrb[0].mxu0
    %v8351 = vadd.f32 %v8248, %v8350
    %v8352 = vpop.f32.mrb[0].mxu0
    %v8353 = vadd.f32 %v8250, %v8352
    %v8354 = vpop.f32.mrb[0].mxu0
    %v8355 = vadd.f32 %v8252, %v8354
    %8356 = vmatprep.mubr.bf16.mxu0 %v3236
    %8357 = vmatmul.mubr.bf16.gmra.mrb[0].mxu0 %v3235
    %v8358 = vpop.f32.mrb[0].mxu0
    %v8359 = vadd.f32 %v8256, %v8358
    %v8360 = vpop.f32.mrb[0].mxu0
    %v8361 = vadd.f32 %v8258, %v8360
    %v8362 = vpop.f32.mrb[0].mxu0
    %v8363 = vadd.f32 %v8260, %v8362
    %v8364 = vpop.f32.mrb[0].mxu0
    %v8365 = vadd.f32 %v8262, %v8364
    %8366 = vmatprep.mubr.bf16.mxu0 %v3244
    %8367 = vmatmul.mubr.bf16.gmra.mrb[0].mxu0 %v3243
    %v8368 = vpop.f32.mrb[0].mxu0
    %v8369 = vadd.f32 %v8266, %v8368
    %v8370 = vpop.f32.mrb[0].mxu0
    %v8371 = vadd.f32 %v8268, %v8370
    %v8372 = vpop.f32.mrb[0].mxu0
    %v8373 = vadd.f32 %v8270, %v8372
    %v8374 = vpop.f32.mrb[0].mxu0
    %v8375 = vadd.f32 %v8272, %v8374
    %8376 = vmatprep.mubr.bf16.mxu0 %v3252
    %8377 = vmatmul.mubr.bf16.gmra.mrb[0].mxu0 %v3251
    %v8378 = vpop.f32.mrb[0].mxu0
    %v8379 = vadd.f32 %v8276, %v8378
    %v8380 = vpop.f32.mrb[0].mxu0
    %v8381 = vadd.f32 %v8278, %v8380
    %v8382 = vpop.f32.mrb[0].mxu0
    %v8383 = vadd.f32 %v8280, %v8382
    %v8384 = vpop.f32.mrb[0].mxu0
    %v8385 = vadd.f32 %v8282, %v8384
    %8386 = vmatprep.mubr.bf16.mxu0 %v3260
    %8387 = vmatmul.mubr.bf16.gmra.mrb[0].mxu0 %v3259
    %v8388 = vpop.f32.mrb[0].mxu0
    %v8389 = vadd.f32 %v8286, %v8388
    %v8390 = vpop.f32.mrb[0].mxu0
    %v8391 = vadd.f32 %v8288, %v8390
    %v8392 = vpop.f32.mrb[0].mxu0
    %v8393 = vadd.f32 %v8290, %v8392
    %v8394 = vpop.f32.mrb[0].mxu0
    %v8395 = vadd.f32 %v8292, %v8394
    %8396 = vdwg.mxu0
    %8397 = vmatprep.subr.bf16.mxu0 %v5630
    %8398 = vmatpush1.bf16.msra.mxu0 %v5629
    %8399 = vmatprep.subr.bf16.mxu0 %v5638
    %8400 = vmatpush1.bf16.msra.mxu0 %v5637
    %8401 = vmatprep.subr.bf16.mxu0 %v5646
    %8402 = vmatpush1.bf16.msra.mxu0 %v5645
    %8403 = vmatprep.subr.bf16.mxu0 %v5654
    %8404 = vmatpush1.bf16.msra.mxu0 %v5653
    %8405 = vmatprep.subr.bf16.mxu0 %v5662
    %8406 = vmatpush1.bf16.msra.mxu0 %v5661
    %8407 = vmatprep.subr.bf16.mxu0 %v5670
    %8408 = vmatpush1.bf16.msra.mxu0 %v5669
    %8409 = vmatprep.subr.bf16.mxu0 %v5678
    %8410 = vmatpush1.bf16.msra.mxu0 %v5677
    %8411 = vmatprep.subr.bf16.mxu0 %v5686
    %8412 = vmatpush1.bf16.msra.mxu0 %v5685
    %8413 = vmatprep.subr.bf16.mxu0 %v5694
    %8414 = vmatpush1.bf16.msra.mxu0 %v5693
    %8415 = vmatprep.subr.bf16.mxu0 %v5702
    %8416 = vmatpush1.bf16.msra.mxu0 %v5701
    %8417 = vmatprep.subr.bf16.mxu0 %v5710
    %8418 = vmatpush1.bf16.msra.mxu0 %v5709
    %8419 = vmatprep.subr.bf16.mxu0 %v5718
    %8420 = vmatpush1.bf16.msra.mxu0 %v5717
    %8421 = vmatprep.subr.bf16.mxu0 %v5726
    %8422 = vmatpush1.bf16.msra.mxu0 %v5725
    %8423 = vmatprep.subr.bf16.mxu0 %v5734
    %8424 = vmatpush1.bf16.msra.mxu0 %v5733
    %8425 = vmatprep.subr.bf16.mxu0 %v5742
    %8426 = vmatpush1.bf16.msra.mxu0 %v5741
    %8427 = vmatprep.subr.bf16.mxu0 %v5750
    %8428 = vmatpush1.bf16.msra.mxu0 %v5749
    %8429 = vmatprep.mubr.bf16.mxu0 %v3202
    %8430 = vmatmul.mubr.bf16.gmra.mrb[0].mxu0 %v3201
    %v8431 = vpop.f32.mrb[0].mxu0
    %v8432 = vadd.f32 0.0, %v8431
    %v8433 = vpop.f32.mrb[0].mxu0
    %v8434 = vadd.f32 0.0, %v8433
    %v8435 = vpop.f32.mrb[0].mxu0
    %v8436 = vadd.f32 0.0, %v8435
    %v8437 = vpop.f32.mrb[0].mxu0
    %v8438 = vadd.f32 0.0, %v8437
    %8439 = vmatprep.mubr.bf16.mxu0 %v3210
    %8440 = vmatmul.mubr.bf16.gmra.mrb[0].mxu0 %v3209
    %v8441 = vpop.f32.mrb[0].mxu0
    %v8442 = vadd.f32 0.0, %v8441
    %v8443 = vpop.f32.mrb[0].mxu0
    %v8444 = vadd.f32 0.0, %v8443
    %v8445 = vpop.f32.mrb[0].mxu0
    %v8446 = vadd.f32 0.0, %v8445
    %v8447 = vpop.f32.mrb[0].mxu0
    %v8448 = vadd.f32 0.0, %v8447
    %8449 = vmatprep.mubr.bf16.mxu0 %v3218
    %8450 = vmatmul.mubr.bf16.gmra.mrb[0].mxu0 %v3217
    %v8451 = vpop.f32.mrb[0].mxu0
    %v8452 = vadd.f32 0.0, %v8451
    %v8453 = vpop.f32.mrb[0].mxu0
    %v8454 = vadd.f32 0.0, %v8453
    %v8455 = vpop.f32.mrb[0].mxu0
    %v8456 = vadd.f32 0.0, %v8455
    %v8457 = vpop.f32.mrb[0].mxu0
    %v8458 = vadd.f32 0.0, %v8457
    %8459 = vmatprep.mubr.bf16.mxu0 %v3226
    %8460 = vmatmul.mubr.bf16.gmra.mrb[0].mxu0 %v3225
    %v8461 = vpop.f32.mrb[0].mxu0
    %v8462 = vadd.f32 0.0, %v8461
    %v8463 = vpop.f32.mrb[0].mxu0
    %v8464 = vadd.f32 0.0, %v8463
    %v8465 = vpop.f32.mrb[0].mxu0
    %v8466 = vadd.f32 0.0, %v8465
    %v8467 = vpop.f32.mrb[0].mxu0
    %v8468 = vadd.f32 0.0, %v8467
    %8469 = vmatprep.mubr.bf16.mxu0 %v3234
    %8470 = vmatmul.mubr.bf16.gmra.mrb[0].mxu0 %v3233
    %v8471 = vpop.f32.mrb[0].mxu0
    %v8472 = vadd.f32 0.0, %v8471
    %v8473 = vpop.f32.mrb[0].mxu0
    %v8474 = vadd.f32 0.0, %v8473
    %v8475 = vpop.f32.mrb[0].mxu0
    %v8476 = vadd.f32 0.0, %v8475
    %v8477 = vpop.f32.mrb[0].mxu0
    %v8478 = vadd.f32 0.0, %v8477
    %8479 = vmatprep.mubr.bf16.mxu0 %v3242
    %8480 = vmatmul.mubr.bf16.gmra.mrb[0].mxu0 %v3241
    %v8481 = vpop.f32.mrb[0].mxu0
    %v8482 = vadd.f32 0.0, %v8481
    %v8483 = vpop.f32.mrb[0].mxu0
    %v8484 = vadd.f32 0.0, %v8483
    %v8485 = vpop.f32.mrb[0].mxu0
    %v8486 = vadd.f32 0.0, %v8485
    %v8487 = vpop.f32.mrb[0].mxu0
    %v8488 = vadd.f32 0.0, %v8487
    %8489 = vmatprep.mubr.bf16.mxu0 %v3250
    %8490 = vmatmul.mubr.bf16.gmra.mrb[0].mxu0 %v3249
    %v8491 = vpop.f32.mrb[0].mxu0
    %v8492 = vadd.f32 0.0, %v8491
    %v8493 = vpop.f32.mrb[0].mxu0
    %v8494 = vadd.f32 0.0, %v8493
    %v8495 = vpop.f32.mrb[0].mxu0
    %v8496 = vadd.f32 0.0, %v8495
    %v8497 = vpop.f32.mrb[0].mxu0
    %v8498 = vadd.f32 0.0, %v8497
    %8499 = vdwg.mxu0
    %8500 = vmatprep.subr.bf16.mxu0 %v5758
    %8501 = vmatpush1.bf16.msra.mxu0 %v5757
    %8502 = vmatprep.subr.bf16.mxu0 %v5766
    %8503 = vmatpush1.bf16.msra.mxu0 %v5765
    %8504 = vmatprep.subr.bf16.mxu0 %v5774
    %8505 = vmatpush1.bf16.msra.mxu0 %v5773
    %8506 = vmatprep.subr.bf16.mxu0 %v5782
    %8507 = vmatpush1.bf16.msra.mxu0 %v5781
    %8508 = vmatprep.subr.bf16.mxu0 %v5790
    %8509 = vmatpush1.bf16.msra.mxu0 %v5789
    %8510 = vmatprep.subr.bf16.mxu0 %v5798
    %8511 = vmatpush1.bf16.msra.mxu0 %v5797
    %8512 = vmatprep.subr.bf16.mxu0 %v5806
    %8513 = vmatpush1.bf16.msra.mxu0 %v5805
    %8514 = vmatprep.subr.bf16.mxu0 %v5814
    %8515 = vmatpush1.bf16.msra.mxu0 %v5813
    %8516 = vmatprep.subr.bf16.mxu0 %v5822
    %8517 = vmatpush1.bf16.msra.mxu0 %v5821
    %8518 = vmatprep.subr.bf16.mxu0 %v5830
    %8519 = vmatpush1.bf16.msra.mxu0 %v5829
    %8520 = vmatprep.subr.bf16.mxu0 %v5838
    %8521 = vmatpush1.bf16.msra.mxu0 %v5837
    %8522 = vmatprep.subr.bf16.mxu0 %v5846
    %8523 = vmatpush1.bf16.msra.mxu0 %v5845
    %8524 = vmatprep.subr.bf16.mxu0 %v5854
    %8525 = vmatpush1.bf16.msra.mxu0 %v5853
    %8526 = vmatprep.subr.bf16.mxu0 %v5862
    %8527 = vmatpush1.bf16.msra.mxu0 %v5861
    %8528 = vmatprep.subr.bf16.mxu0 %v5870
    %8529 = vmatpush1.bf16.msra.mxu0 %v5869
    %8530 = vmatprep.subr.bf16.mxu0 %v5878
    %8531 = vmatpush1.bf16.msra.mxu0 %v5877
    %8532 = vmatprep.mubr.bf16.mxu0 %v3204
    %8533 = vmatmul.mubr.bf16.gmra.mrb[0].mxu0 %v3203
    %v8534 = vpop.f32.mrb[0].mxu0
    %v8535 = vadd.f32 %v8432, %v8534
    %v8536 = vpop.f32.mrb[0].mxu0
    %v8537 = vadd.f32 %v8434, %v8536
    %v8538 = vpop.f32.mrb[0].mxu0
    %v8539 = vadd.f32 %v8436, %v8538
    %v8540 = vpop.f32.mrb[0].mxu0
    %v8541 = vadd.f32 %v8438, %v8540
    %8542 = vmatprep.mubr.bf16.mxu0 %v3212
    %8543 = vmatmul.mubr.bf16.gmra.mrb[0].mxu0 %v3211
    %v8544 = vpop.f32.mrb[0].mxu0
    %v8545 = vadd.f32 %v8442, %v8544
    %v8546 = vpop.f32.mrb[0].mxu0
    %v8547 = vadd.f32 %v8444, %v8546
    %v8548 = vpop.f32.mrb[0].mxu0
    %v8549 = vadd.f32 %v8446, %v8548
    %v8550 = vpop.f32.mrb[0].mxu0
    %v8551 = vadd.f32 %v8448, %v8550
    %8552 = vmatprep.mubr.bf16.mxu0 %v3220
    %8553 = vmatmul.mubr.bf16.gmra.mrb[0].mxu0 %v3219
    %v8554 = vpop.f32.mrb[0].mxu0
    %v8555 = vadd.f32 %v8452, %v8554
    %v8556 = vpop.f32.mrb[0].mxu0
    %v8557 = vadd.f32 %v8454, %v8556
    %v8558 = vpop.f32.mrb[0].mxu0
    %v8559 = vadd.f32 %v8456, %v8558
    %v8560 = vpop.f32.mrb[0].mxu0
    %v8561 = vadd.f32 %v8458, %v8560
    %8562 = vmatprep.mubr.bf16.mxu0 %v3228
    %8563 = vmatmul.mubr.bf16.gmra.mrb[0].mxu0 %v3227
    %v8564 = vpop.f32.mrb[0].mxu0
    %v8565 = vadd.f32 %v8462, %v8564
    %v8566 = vpop.f32.mrb[0].mxu0
    %v8567 = vadd.f32 %v8464, %v8566
    %v8568 = vpop.f32.mrb[0].mxu0
    %v8569 = vadd.f32 %v8466, %v8568
    %v8570 = vpop.f32.mrb[0].mxu0
    %v8571 = vadd.f32 %v8468, %v8570
    %8572 = vmatprep.mubr.bf16.mxu0 %v3236
    %8573 = vmatmul.mubr.bf16.gmra.mrb[0].mxu0 %v3235
    %v8574 = vpop.f32.mrb[0].mxu0
    %v8575 = vadd.f32 %v8472, %v8574
    %v8576 = vpop.f32.mrb[0].mxu0
    %v8577 = vadd.f32 %v8474, %v8576
    %v8578 = vpop.f32.mrb[0].mxu0
    %v8579 = vadd.f32 %v8476, %v8578
    %v8580 = vpop.f32.mrb[0].mxu0
    %v8581 = vadd.f32 %v8478, %v8580
    %8582 = vmatprep.mubr.bf16.mxu0 %v3244
    %8583 = vmatmul.mubr.bf16.gmra.mrb[0].mxu0 %v3243
    %v8584 = vpop.f32.mrb[0].mxu0
    %v8585 = vadd.f32 %v8482, %v8584
    %v8586 = vpop.f32.mrb[0].mxu0
    %v8587 = vadd.f32 %v8484, %v8586
    %v8588 = vpop.f32.mrb[0].mxu0
    %v8589 = vadd.f32 %v8486, %v8588
    %v8590 = vpop.f32.mrb[0].mxu0
    %v8591 = vadd.f32 %v8488, %v8590
    %8592 = vmatprep.mubr.bf16.mxu0 %v3252
    %8593 = vmatmul.mubr.bf16.gmra.mrb[0].mxu0 %v3251
    %v8594 = vpop.f32.mrb[0].mxu0
    %v8595 = vadd.f32 %v8492, %v8594
    %v8596 = vpop.f32.mrb[0].mxu0
    %v8597 = vadd.f32 %v8494, %v8596
    %v8598 = vpop.f32.mrb[0].mxu0
    %v8599 = vadd.f32 %v8496, %v8598
    %v8600 = vpop.f32.mrb[0].mxu0
    %v8601 = vadd.f32 %v8498, %v8600
    %8602 = vdwg.mxu0
    %8603 = vmatprep.subr.bf16.mxu0 %v5886
    %8604 = vmatpush1.bf16.msra.mxu0 %v5885
    %8605 = vmatprep.subr.bf16.mxu0 %v5894
    %8606 = vmatpush1.bf16.msra.mxu0 %v5893
    %8607 = vmatprep.subr.bf16.mxu0 %v5902
    %8608 = vmatpush1.bf16.msra.mxu0 %v5901
    %8609 = vmatprep.subr.bf16.mxu0 %v5910
    %8610 = vmatpush1.bf16.msra.mxu0 %v5909
    %8611 = vmatprep.subr.bf16.mxu0 %v5918
    %8612 = vmatpush1.bf16.msra.mxu0 %v5917
    %8613 = vmatprep.subr.bf16.mxu0 %v5926
    %8614 = vmatpush1.bf16.msra.mxu0 %v5925
    %8615 = vmatprep.subr.bf16.mxu0 %v5934
    %8616 = vmatpush1.bf16.msra.mxu0 %v5933
    %8617 = vmatprep.subr.bf16.mxu0 %v5942
    %8618 = vmatpush1.bf16.msra.mxu0 %v5941
    %8619 = vmatprep.subr.bf16.mxu0 %v5950
    %8620 = vmatpush1.bf16.msra.mxu0 %v5949
    %8621 = vmatprep.subr.bf16.mxu0 %v5958
    %8622 = vmatpush1.bf16.msra.mxu0 %v5957
    %8623 = vmatprep.subr.bf16.mxu0 %v5966
    %8624 = vmatpush1.bf16.msra.mxu0 %v5965
    %8625 = vmatprep.subr.bf16.mxu0 %v5974
    %8626 = vmatpush1.bf16.msra.mxu0 %v5973
    %8627 = vmatprep.subr.bf16.mxu0 %v5982
    %8628 = vmatpush1.bf16.msra.mxu0 %v5981
    %8629 = vmatprep.subr.bf16.mxu0 %v5990
    %8630 = vmatpush1.bf16.msra.mxu0 %v5989
    %8631 = vmatprep.subr.bf16.mxu0 %v5998
    %8632 = vmatpush1.bf16.msra.mxu0 %v5997
    %8633 = vmatprep.subr.bf16.mxu0 %v6006
    %8634 = vmatpush1.bf16.msra.mxu0 %v6005
    %8635 = vmatprep.mubr.bf16.mxu0 %v3206
    %8636 = vmatmul.mubr.bf16.gmra.mrb[0].mxu0 %v3205
    %v8637 = vpop.f32.mrb[0].mxu0
    %v8638 = vadd.f32 %v8535, %v8637
    %v8639 = vpop.f32.mrb[0].mxu0
    %v8640 = vadd.f32 %v8537, %v8639
    %v8641 = vpop.f32.mrb[0].mxu0
    %v8642 = vadd.f32 %v8539, %v8641
    %v8643 = vpop.f32.mrb[0].mxu0
    %v8644 = vadd.f32 %v8541, %v8643
    %8645 = vmatprep.mubr.bf16.mxu0 %v3214
    %8646 = vmatmul.mubr.bf16.gmra.mrb[0].mxu0 %v3213
    %v8647 = vpop.f32.mrb[0].mxu0
    %v8648 = vadd.f32 %v8545, %v8647
    %v8649 = vpop.f32.mrb[0].mxu0
    %v8650 = vadd.f32 %v8547, %v8649
    %v8651 = vpop.f32.mrb[0].mxu0
    %v8652 = vadd.f32 %v8549, %v8651
    %v8653 = vpop.f32.mrb[0].mxu0
    %v8654 = vadd.f32 %v8551, %v8653
    %8655 = vmatprep.mubr.bf16.mxu0 %v3222
    %8656 = vmatmul.mubr.bf16.gmra.mrb[0].mxu0 %v3221
    %v8657 = vpop.f32.mrb[0].mxu0
    %v8658 = vadd.f32 %v8555, %v8657
    %v8659 = vpop.f32.mrb[0].mxu0
    %v8660 = vadd.f32 %v8557, %v8659
    %v8661 = vpop.f32.mrb[0].mxu0
    %v8662 = vadd.f32 %v8559, %v8661
    %v8663 = vpop.f32.mrb[0].mxu0
    %v8664 = vadd.f32 %v8561, %v8663
    %8665 = vmatprep.mubr.bf16.mxu0 %v3230
    %8666 = vmatmul.mubr.bf16.gmra.mrb[0].mxu0 %v3229
    %v8667 = vpop.f32.mrb[0].mxu0
    %v8668 = vadd.f32 %v8565, %v8667
    %v8669 = vpop.f32.mrb[0].mxu0
    %v8670 = vadd.f32 %v8567, %v8669
    %v8671 = vpop.f32.mrb[0].mxu0
    %v8672 = vadd.f32 %v8569, %v8671
    %v8673 = vpop.f32.mrb[0].mxu0
    %v8674 = vadd.f32 %v8571, %v8673
    %8675 = vmatprep.mubr.bf16.mxu0 %v3238
    %8676 = vmatmul.mubr.bf16.gmra.mrb[0].mxu0 %v3237
    %v8677 = vpop.f32.mrb[0].mxu0
    %v8678 = vadd.f32 %v8575, %v8677
    %v8679 = vpop.f32.mrb[0].mxu0
    %v8680 = vadd.f32 %v8577, %v8679
    %v8681 = vpop.f32.mrb[0].mxu0
    %v8682 = vadd.f32 %v8579, %v8681
    %v8683 = vpop.f32.mrb[0].mxu0
    %v8684 = vadd.f32 %v8581, %v8683
    %8685 = vmatprep.mubr.bf16.mxu0 %v3246
    %8686 = vmatmul.mubr.bf16.gmra.mrb[0].mxu0 %v3245
    %v8687 = vpop.f32.mrb[0].mxu0
    %v8688 = vadd.f32 %v8585, %v8687
    %v8689 = vpop.f32.mrb[0].mxu0
    %v8690 = vadd.f32 %v8587, %v8689
    %v8691 = vpop.f32.mrb[0].mxu0
    %v8692 = vadd.f32 %v8589, %v8691
    %v8693 = vpop.f32.mrb[0].mxu0
    %v8694 = vadd.f32 %v8591, %v8693
    %8695 = vmatprep.mubr.bf16.mxu0 %v3254
    %8696 = vmatmul.mubr.bf16.gmra.mrb[0].mxu0 %v3253
    %v8697 = vpop.f32.mrb[0].mxu0
    %v8698 = vadd.f32 %v8595, %v8697
    %v8699 = vpop.f32.mrb[0].mxu0
    %v8700 = vadd.f32 %v8597, %v8699
    %v8701 = vpop.f32.mrb[0].mxu0
    %v8702 = vadd.f32 %v8599, %v8701
    %v8703 = vpop.f32.mrb[0].mxu0
    %v8704 = vadd.f32 %v8601, %v8703
    %8705 = vdwg.mxu0
    %8706 = vmatprep.subr.bf16.mxu0 %v6014
    %8707 = vmatpush1.bf16.msra.mxu0 %v6013
    %8708 = vmatprep.subr.bf16.mxu0 %v6022
    %8709 = vmatpush1.bf16.msra.mxu0 %v6021
    %8710 = vmatprep.subr.bf16.mxu0 %v6030
    %8711 = vmatpush1.bf16.msra.mxu0 %v6029
    %8712 = vmatprep.subr.bf16.mxu0 %v6038
    %8713 = vmatpush1.bf16.msra.mxu0 %v6037
    %8714 = vmatprep.subr.bf16.mxu0 %v6046
    %8715 = vmatpush1.bf16.msra.mxu0 %v6045
    %8716 = vmatprep.subr.bf16.mxu0 %v6054
    %8717 = vmatpush1.bf16.msra.mxu0 %v6053
    %8718 = vmatprep.subr.bf16.mxu0 %v6062
    %8719 = vmatpush1.bf16.msra.mxu0 %v6061
    %8720 = vmatprep.subr.bf16.mxu0 %v6070
    %8721 = vmatpush1.bf16.msra.mxu0 %v6069
    %8722 = vmatprep.subr.bf16.mxu0 %v6078
    %8723 = vmatpush1.bf16.msra.mxu0 %v6077
    %8724 = vmatprep.subr.bf16.mxu0 %v6086
    %8725 = vmatpush1.bf16.msra.mxu0 %v6085
    %8726 = vmatprep.subr.bf16.mxu0 %v6094
    %8727 = vmatpush1.bf16.msra.mxu0 %v6093
    %8728 = vmatprep.subr.bf16.mxu0 %v6102
    %8729 = vmatpush1.bf16.msra.mxu0 %v6101
    %8730 = vmatprep.subr.bf16.mxu0 %v6110
    %8731 = vmatpush1.bf16.msra.mxu0 %v6109
    %8732 = vmatprep.subr.bf16.mxu0 %v6118
    %8733 = vmatpush1.bf16.msra.mxu0 %v6117
    %8734 = vmatprep.subr.bf16.mxu0 %v6126
    %8735 = vmatpush1.bf16.msra.mxu0 %v6125
    %8736 = vmatprep.subr.bf16.mxu0 %v6134
    %8737 = vmatpush1.bf16.msra.mxu0 %v6133
    %8738 = vmatprep.mubr.bf16.mxu0 %v3208
    %8739 = vmatmul.mubr.bf16.gmra.mrb[0].mxu0 %v3207
    %v8740 = vpop.f32.mrb[0].mxu0
    %v8741 = vadd.f32 %v8638, %v8740
    %v8742 = vpop.f32.mrb[0].mxu0
    %v8743 = vadd.f32 %v8640, %v8742
    %v8744 = vpop.f32.mrb[0].mxu0
    %v8745 = vadd.f32 %v8642, %v8744
    %v8746 = vpop.f32.mrb[0].mxu0
    %v8747 = vadd.f32 %v8644, %v8746
    %8748 = vmatprep.mubr.bf16.mxu0 %v3216
    %8749 = vmatmul.mubr.bf16.gmra.mrb[0].mxu0 %v3215
    %v8750 = vpop.f32.mrb[0].mxu0
    %v8751 = vadd.f32 %v8648, %v8750
    %v8752 = vpop.f32.mrb[0].mxu0
    %v8753 = vadd.f32 %v8650, %v8752
    %v8754 = vpop.f32.mrb[0].mxu0
    %v8755 = vadd.f32 %v8652, %v8754
    %v8756 = vpop.f32.mrb[0].mxu0
    %v8757 = vadd.f32 %v8654, %v8756
    %8758 = vmatprep.mubr.bf16.mxu0 %v3224
    %8759 = vmatmul.mubr.bf16.gmra.mrb[0].mxu0 %v3223
    %v8760 = vpop.f32.mrb[0].mxu0
    %v8761 = vadd.f32 %v8658, %v8760
    %v8762 = vpop.f32.mrb[0].mxu0
    %v8763 = vadd.f32 %v8660, %v8762
    %v8764 = vpop.f32.mrb[0].mxu0
    %v8765 = vadd.f32 %v8662, %v8764
    %v8766 = vpop.f32.mrb[0].mxu0
    %v8767 = vadd.f32 %v8664, %v8766
    %8768 = vmatprep.mubr.bf16.mxu0 %v3232
    %8769 = vmatmul.mubr.bf16.gmra.mrb[0].mxu0 %v3231
    %v8770 = vpop.f32.mrb[0].mxu0
    %v8771 = vadd.f32 %v8668, %v8770
    %v8772 = vpop.f32.mrb[0].mxu0
    %v8773 = vadd.f32 %v8670, %v8772
    %v8774 = vpop.f32.mrb[0].mxu0
    %v8775 = vadd.f32 %v8672, %v8774
    %v8776 = vpop.f32.mrb[0].mxu0
    %v8777 = vadd.f32 %v8674, %v8776
    %8778 = vmatprep.mubr.bf16.mxu0 %v3240
    %8779 = vmatmul.mubr.bf16.gmra.mrb[0].mxu0 %v3239
    %v8780 = vpop.f32.mrb[0].mxu0
    %v8781 = vadd.f32 %v8678, %v8780
    %v8782 = vpop.f32.mrb[0].mxu0
    %v8783 = vadd.f32 %v8680, %v8782
    %v8784 = vpop.f32.mrb[0].mxu0
    %v8785 = vadd.f32 %v8682, %v8784
    %v8786 = vpop.f32.mrb[0].mxu0
    %v8787 = vadd.f32 %v8684, %v8786
    %8788 = vmatprep.mubr.bf16.mxu0 %v3248
    %8789 = vmatmul.mubr.bf16.gmra.mrb[0].mxu0 %v3247
    %v8790 = vpop.f32.mrb[0].mxu0
    %v8791 = vadd.f32 %v8688, %v8790
    %v8792 = vpop.f32.mrb[0].mxu0
    %v8793 = vadd.f32 %v8690, %v8792
    %v8794 = vpop.f32.mrb[0].mxu0
    %v8795 = vadd.f32 %v8692, %v8794
    %v8796 = vpop.f32.mrb[0].mxu0
    %v8797 = vadd.f32 %v8694, %v8796
    %8798 = vmatprep.mubr.bf16.mxu0 %v3256
    %8799 = vmatmul.mubr.bf16.gmra.mrb[0].mxu0 %v3255
    %v8800 = vpop.f32.mrb[0].mxu0
    %v8801 = vadd.f32 %v8698, %v8800
    %v8802 = vpop.f32.mrb[0].mxu0
    %v8803 = vadd.f32 %v8700, %v8802
    %v8804 = vpop.f32.mrb[0].mxu0
    %v8805 = vadd.f32 %v8702, %v8804
    %v8806 = vpop.f32.mrb[0].mxu0
    %v8807 = vadd.f32 %v8704, %v8806
    %8808 = vdwg.mxu0
    %8809 = vmatprep.subr.bf16.mxu0 %v6142
    %8810 = vmatpush1.bf16.msra.mxu0 %v6141
    %8811 = vmatprep.subr.bf16.mxu0 %v6150
    %8812 = vmatpush1.bf16.msra.mxu0 %v6149
    %8813 = vmatprep.subr.bf16.mxu0 %v6158
    %8814 = vmatpush1.bf16.msra.mxu0 %v6157
    %8815 = vmatprep.subr.bf16.mxu0 %v6166
    %8816 = vmatpush1.bf16.msra.mxu0 %v6165
    %8817 = vmatprep.subr.bf16.mxu0 %v6174
    %8818 = vmatpush1.bf16.msra.mxu0 %v6173
    %8819 = vmatprep.subr.bf16.mxu0 %v6182
    %8820 = vmatpush1.bf16.msra.mxu0 %v6181
    %8821 = vmatprep.subr.bf16.mxu0 %v6190
    %8822 = vmatpush1.bf16.msra.mxu0 %v6189
    %8823 = vmatprep.subr.bf16.mxu0 %v6198
    %8824 = vmatpush1.bf16.msra.mxu0 %v6197
    %8825 = vmatprep.subr.bf16.mxu0 %v6206
    %8826 = vmatpush1.bf16.msra.mxu0 %v6205
    %8827 = vmatprep.subr.bf16.mxu0 %v6214
    %8828 = vmatpush1.bf16.msra.mxu0 %v6213
    %8829 = vmatprep.subr.bf16.mxu0 %v6222
    %8830 = vmatpush1.bf16.msra.mxu0 %v6221
    %8831 = vmatprep.subr.bf16.mxu0 %v6230
    %8832 = vmatpush1.bf16.msra.mxu0 %v6229
    %8833 = vmatprep.subr.bf16.mxu0 %v6238
    %8834 = vmatpush1.bf16.msra.mxu0 %v6237
    %8835 = vmatprep.subr.bf16.mxu0 %v6246
    %8836 = vmatpush1.bf16.msra.mxu0 %v6245
    %8837 = vmatprep.subr.bf16.mxu0 %v6254
    %8838 = vmatpush1.bf16.msra.mxu0 %v6253
    %8839 = vmatprep.subr.bf16.mxu0 %v6262
    %8840 = vmatpush1.bf16.msra.mxu0 %v6261
    %8841 = vmatprep.mubr.bf16.mxu0 %v3210
    %8842 = vmatmul.mubr.bf16.gmra.mrb[0].mxu0 %v3209
    %v8843 = vpop.f32.mrb[0].mxu0
    %v8844 = vadd.f32 %v8741, %v8843
    %v8845 = vpop.f32.mrb[0].mxu0
    %v8846 = vadd.f32 %v8743, %v8845
    %v8847 = vpop.f32.mrb[0].mxu0
    %v8848 = vadd.f32 %v8745, %v8847
    %v8849 = vpop.f32.mrb[0].mxu0
    %v8850 = vadd.f32 %v8747, %v8849
    %8851 = vmatprep.mubr.bf16.mxu0 %v3218
    %8852 = vmatmul.mubr.bf16.gmra.mrb[0].mxu0 %v3217
    %v8853 = vpop.f32.mrb[0].mxu0
    %v8854 = vadd.f32 %v8751, %v8853
    %v8855 = vpop.f32.mrb[0].mxu0
    %v8856 = vadd.f32 %v8753, %v8855
    %v8857 = vpop.f32.mrb[0].mxu0
    %v8858 = vadd.f32 %v8755, %v8857
    %v8859 = vpop.f32.mrb[0].mxu0
    %v8860 = vadd.f32 %v8757, %v8859
    %8861 = vmatprep.mubr.bf16.mxu0 %v3226
    %8862 = vmatmul.mubr.bf16.gmra.mrb[0].mxu0 %v3225
    %v8863 = vpop.f32.mrb[0].mxu0
    %v8864 = vadd.f32 %v8761, %v8863
    %v8865 = vpop.f32.mrb[0].mxu0
    %v8866 = vadd.f32 %v8763, %v8865
    %v8867 = vpop.f32.mrb[0].mxu0
    %v8868 = vadd.f32 %v8765, %v8867
    %v8869 = vpop.f32.mrb[0].mxu0
    %v8870 = vadd.f32 %v8767, %v8869
    %8871 = vmatprep.mubr.bf16.mxu0 %v3234
    %8872 = vmatmul.mubr.bf16.gmra.mrb[0].mxu0 %v3233
    %v8873 = vpop.f32.mrb[0].mxu0
    %v8874 = vadd.f32 %v8771, %v8873
    %v8875 = vpop.f32.mrb[0].mxu0
    %v8876 = vadd.f32 %v8773, %v8875
    %v8877 = vpop.f32.mrb[0].mxu0
    %v8878 = vadd.f32 %v8775, %v8877
    %v8879 = vpop.f32.mrb[0].mxu0
    %v8880 = vadd.f32 %v8777, %v8879
    %8881 = vmatprep.mubr.bf16.mxu0 %v3242
    %8882 = vmatmul.mubr.bf16.gmra.mrb[0].mxu0 %v3241
    %v8883 = vpop.f32.mrb[0].mxu0
    %v8884 = vadd.f32 %v8781, %v8883
    %v8885 = vpop.f32.mrb[0].mxu0
    %v8886 = vadd.f32 %v8783, %v8885
    %v8887 = vpop.f32.mrb[0].mxu0
    %v8888 = vadd.f32 %v8785, %v8887
    %v8889 = vpop.f32.mrb[0].mxu0
    %v8890 = vadd.f32 %v8787, %v8889
    %8891 = vmatprep.mubr.bf16.mxu0 %v3250
    %8892 = vmatmul.mubr.bf16.gmra.mrb[0].mxu0 %v3249
    %v8893 = vpop.f32.mrb[0].mxu0
    %v8894 = vadd.f32 %v8791, %v8893
    %v8895 = vpop.f32.mrb[0].mxu0
    %v8896 = vadd.f32 %v8793, %v8895
    %v8897 = vpop.f32.mrb[0].mxu0
    %v8898 = vadd.f32 %v8795, %v8897
    %v8899 = vpop.f32.mrb[0].mxu0
    %v8900 = vadd.f32 %v8797, %v8899
    %8901 = vmatprep.mubr.bf16.mxu0 %v3258
    %8902 = vmatmul.mubr.bf16.gmra.mrb[0].mxu0 %v3257
    %v8903 = vpop.f32.mrb[0].mxu0
    %v8904 = vadd.f32 %v8801, %v8903
    %v8905 = vpop.f32.mrb[0].mxu0
    %v8906 = vadd.f32 %v8803, %v8905
    %v8907 = vpop.f32.mrb[0].mxu0
    %v8908 = vadd.f32 %v8805, %v8907
    %v8909 = vpop.f32.mrb[0].mxu0
    %v8910 = vadd.f32 %v8807, %v8909
    %8911 = vdwg.mxu0
    %8912 = vmatprep.subr.bf16.mxu0 %v6270
    %8913 = vmatpush1.bf16.msra.mxu0 %v6269
    %8914 = vmatprep.subr.bf16.mxu0 %v6278
    %8915 = vmatpush1.bf16.msra.mxu0 %v6277
    %8916 = vmatprep.subr.bf16.mxu0 %v6286
    %8917 = vmatpush1.bf16.msra.mxu0 %v6285
    %8918 = vmatprep.subr.bf16.mxu0 %v6294
    %8919 = vmatpush1.bf16.msra.mxu0 %v6293
    %8920 = vmatprep.subr.bf16.mxu0 %v6302
    %8921 = vmatpush1.bf16.msra.mxu0 %v6301
    %8922 = vmatprep.subr.bf16.mxu0 %v6310
    %8923 = vmatpush1.bf16.msra.mxu0 %v6309
    %8924 = vmatprep.subr.bf16.mxu0 %v6318
    %8925 = vmatpush1.bf16.msra.mxu0 %v6317
    %8926 = vmatprep.subr.bf16.mxu0 %v6326
    %8927 = vmatpush1.bf16.msra.mxu0 %v6325
    %8928 = vmatprep.subr.bf16.mxu0 %v6334
    %8929 = vmatpush1.bf16.msra.mxu0 %v6333
    %8930 = vmatprep.subr.bf16.mxu0 %v6342
    %8931 = vmatpush1.bf16.msra.mxu0 %v6341
    %8932 = vmatprep.subr.bf16.mxu0 %v6350
    %8933 = vmatpush1.bf16.msra.mxu0 %v6349
    %8934 = vmatprep.subr.bf16.mxu0 %v6358
    %8935 = vmatpush1.bf16.msra.mxu0 %v6357
    %8936 = vmatprep.subr.bf16.mxu0 %v6366
    %8937 = vmatpush1.bf16.msra.mxu0 %v6365
    %8938 = vmatprep.subr.bf16.mxu0 %v6374
    %8939 = vmatpush1.bf16.msra.mxu0 %v6373
    %8940 = vmatprep.subr.bf16.mxu0 %v6382
    %8941 = vmatpush1.bf16.msra.mxu0 %v6381
    %8942 = vmatprep.subr.bf16.mxu0 %v6390
    %8943 = vmatpush1.bf16.msra.mxu0 %v6389
    %8944 = vmatprep.mubr.bf16.mxu0 %v3212
    %8945 = vmatmul.mubr.bf16.gmra.mrb[0].mxu0 %v3211
    %v8946 = vpop.f32.mrb[0].mxu0
    %v8947 = vadd.f32 %v8844, %v8946
    %v8948 = vpop.f32.mrb[0].mxu0
    %v8949 = vadd.f32 %v8846, %v8948
    %v8950 = vpop.f32.mrb[0].mxu0
    %v8951 = vadd.f32 %v8848, %v8950
    %v8952 = vpop.f32.mrb[0].mxu0
    %v8953 = vadd.f32 %v8850, %v8952
    %8954 = vmatprep.mubr.bf16.mxu0 %v3220
    %8955 = vmatmul.mubr.bf16.gmra.mrb[0].mxu0 %v3219
    %v8956 = vpop.f32.mrb[0].mxu0
    %v8957 = vadd.f32 %v8854, %v8956
    %v8958 = vpop.f32.mrb[0].mxu0
    %v8959 = vadd.f32 %v8856, %v8958
    %v8960 = vpop.f32.mrb[0].mxu0
    %v8961 = vadd.f32 %v8858, %v8960
    %v8962 = vpop.f32.mrb[0].mxu0
    %v8963 = vadd.f32 %v8860, %v8962
    %8964 = vmatprep.mubr.bf16.mxu0 %v3228
    %8965 = vmatmul.mubr.bf16.gmra.mrb[0].mxu0 %v3227
    %v8966 = vpop.f32.mrb[0].mxu0
    %v8967 = vadd.f32 %v8864, %v8966
    %v8968 = vpop.f32.mrb[0].mxu0
    %v8969 = vadd.f32 %v8866, %v8968
    %v8970 = vpop.f32.mrb[0].mxu0
    %v8971 = vadd.f32 %v8868, %v8970
    %v8972 = vpop.f32.mrb[0].mxu0
    %v8973 = vadd.f32 %v8870, %v8972
    %8974 = vmatprep.mubr.bf16.mxu0 %v3236
    %8975 = vmatmul.mubr.bf16.gmra.mrb[0].mxu0 %v3235
    %v8976 = vpop.f32.mrb[0].mxu0
    %v8977 = vadd.f32 %v8874, %v8976
    %v8978 = vpop.f32.mrb[0].mxu0
    %v8979 = vadd.f32 %v8876, %v8978
    %v8980 = vpop.f32.mrb[0].mxu0
    %v8981 = vadd.f32 %v8878, %v8980
    %v8982 = vpop.f32.mrb[0].mxu0
    %v8983 = vadd.f32 %v8880, %v8982
    %8984 = vmatprep.mubr.bf16.mxu0 %v3244
    %8985 = vmatmul.mubr.bf16.gmra.mrb[0].mxu0 %v3243
    %v8986 = vpop.f32.mrb[0].mxu0
    %v8987 = vadd.f32 %v8884, %v8986
    %v8988 = vpop.f32.mrb[0].mxu0
    %v8989 = vadd.f32 %v8886, %v8988
    %v8990 = vpop.f32.mrb[0].mxu0
    %v8991 = vadd.f32 %v8888, %v8990
    %v8992 = vpop.f32.mrb[0].mxu0
    %v8993 = vadd.f32 %v8890, %v8992
    %8994 = vmatprep.mubr.bf16.mxu0 %v3252
    %8995 = vmatmul.mubr.bf16.gmra.mrb[0].mxu0 %v3251
    %v8996 = vpop.f32.mrb[0].mxu0
    %v8997 = vadd.f32 %v8894, %v8996
    %v8998 = vpop.f32.mrb[0].mxu0
    %v8999 = vadd.f32 %v8896, %v8998
    %v9000 = vpop.f32.mrb[0].mxu0
    %v9001 = vadd.f32 %v8898, %v9000
    %v9002 = vpop.f32.mrb[0].mxu0
    %v9003 = vadd.f32 %v8900, %v9002
    %9004 = vmatprep.mubr.bf16.mxu0 %v3260
    %9005 = vmatmul.mubr.bf16.gmra.mrb[0].mxu0 %v3259
    %v9006 = vpop.f32.mrb[0].mxu0
    %v9007 = vadd.f32 %v8904, %v9006
    %v9008 = vpop.f32.mrb[0].mxu0
    %v9009 = vadd.f32 %v8906, %v9008
    %v9010 = vpop.f32.mrb[0].mxu0
    %v9011 = vadd.f32 %v8908, %v9010
    %v9012 = vpop.f32.mrb[0].mxu0
    %v9013 = vadd.f32 %v8910, %v9012
    %9014 = vdwg.mxu0
    %9015 = vmatprep.subr.bf16.mxu0 %v5632
    %9016 = vmatpush1.bf16.msra.mxu0 %v5631
    %9017 = vmatprep.subr.bf16.mxu0 %v5640
    %9018 = vmatpush1.bf16.msra.mxu0 %v5639
    %9019 = vmatprep.subr.bf16.mxu0 %v5648
    %9020 = vmatpush1.bf16.msra.mxu0 %v5647
    %9021 = vmatprep.subr.bf16.mxu0 %v5656
    %9022 = vmatpush1.bf16.msra.mxu0 %v5655
    %9023 = vmatprep.subr.bf16.mxu0 %v5664
    %9024 = vmatpush1.bf16.msra.mxu0 %v5663
    %9025 = vmatprep.subr.bf16.mxu0 %v5672
    %9026 = vmatpush1.bf16.msra.mxu0 %v5671
    %9027 = vmatprep.subr.bf16.mxu0 %v5680
    %9028 = vmatpush1.bf16.msra.mxu0 %v5679
    %9029 = vmatprep.subr.bf16.mxu0 %v5688
    %9030 = vmatpush1.bf16.msra.mxu0 %v5687
    %9031 = vmatprep.subr.bf16.mxu0 %v5696
    %9032 = vmatpush1.bf16.msra.mxu0 %v5695
    %9033 = vmatprep.subr.bf16.mxu0 %v5704
    %9034 = vmatpush1.bf16.msra.mxu0 %v5703
    %9035 = vmatprep.subr.bf16.mxu0 %v5712
    %9036 = vmatpush1.bf16.msra.mxu0 %v5711
    %9037 = vmatprep.subr.bf16.mxu0 %v5720
    %9038 = vmatpush1.bf16.msra.mxu0 %v5719
    %9039 = vmatprep.subr.bf16.mxu0 %v5728
    %9040 = vmatpush1.bf16.msra.mxu0 %v5727
    %9041 = vmatprep.subr.bf16.mxu0 %v5736
    %9042 = vmatpush1.bf16.msra.mxu0 %v5735
    %9043 = vmatprep.subr.bf16.mxu0 %v5744
    %9044 = vmatpush1.bf16.msra.mxu0 %v5743
    %9045 = vmatprep.subr.bf16.mxu0 %v5752
    %9046 = vmatpush1.bf16.msra.mxu0 %v5751
    %9047 = vmatprep.mubr.bf16.mxu0 %v3202
    %9048 = vmatmul.mubr.bf16.gmra.mrb[0].mxu0 %v3201
    %v9049 = vpop.f32.mrb[0].mxu0
    %v9050 = vadd.f32 0.0, %v9049
    %v9051 = vpop.f32.mrb[0].mxu0
    %v9052 = vadd.f32 0.0, %v9051
    %v9053 = vpop.f32.mrb[0].mxu0
    %v9054 = vadd.f32 0.0, %v9053
    %v9055 = vpop.f32.mrb[0].mxu0
    %v9056 = vadd.f32 0.0, %v9055
    %9057 = vmatprep.mubr.bf16.mxu0 %v3210
    %9058 = vmatmul.mubr.bf16.gmra.mrb[0].mxu0 %v3209
    %v9059 = vpop.f32.mrb[0].mxu0
    %v9060 = vadd.f32 0.0, %v9059
    %v9061 = vpop.f32.mrb[0].mxu0
    %v9062 = vadd.f32 0.0, %v9061
    %v9063 = vpop.f32.mrb[0].mxu0
    %v9064 = vadd.f32 0.0, %v9063
    %v9065 = vpop.f32.mrb[0].mxu0
    %v9066 = vadd.f32 0.0, %v9065
    %9067 = vmatprep.mubr.bf16.mxu0 %v3218
    %9068 = vmatmul.mubr.bf16.gmra.mrb[0].mxu0 %v3217
    %v9069 = vpop.f32.mrb[0].mxu0
    %v9070 = vadd.f32 0.0, %v9069
    %v9071 = vpop.f32.mrb[0].mxu0
    %v9072 = vadd.f32 0.0, %v9071
    %v9073 = vpop.f32.mrb[0].mxu0
    %v9074 = vadd.f32 0.0, %v9073
    %v9075 = vpop.f32.mrb[0].mxu0
    %v9076 = vadd.f32 0.0, %v9075
    %9077 = vmatprep.mubr.bf16.mxu0 %v3226
    %9078 = vmatmul.mubr.bf16.gmra.mrb[0].mxu0 %v3225
    %v9079 = vpop.f32.mrb[0].mxu0
    %v9080 = vadd.f32 0.0, %v9079
    %v9081 = vpop.f32.mrb[0].mxu0
    %v9082 = vadd.f32 0.0, %v9081
    %v9083 = vpop.f32.mrb[0].mxu0
    %v9084 = vadd.f32 0.0, %v9083
    %v9085 = vpop.f32.mrb[0].mxu0
    %v9086 = vadd.f32 0.0, %v9085
    %9087 = vmatprep.mubr.bf16.mxu0 %v3234
    %9088 = vmatmul.mubr.bf16.gmra.mrb[0].mxu0 %v3233
    %v9089 = vpop.f32.mrb[0].mxu0
    %v9090 = vadd.f32 0.0, %v9089
    %v9091 = vpop.f32.mrb[0].mxu0
    %v9092 = vadd.f32 0.0, %v9091
    %v9093 = vpop.f32.mrb[0].mxu0
    %v9094 = vadd.f32 0.0, %v9093
    %v9095 = vpop.f32.mrb[0].mxu0
    %v9096 = vadd.f32 0.0, %v9095
    %9097 = vmatprep.mubr.bf16.mxu0 %v3242
    %9098 = vmatmul.mubr.bf16.gmra.mrb[0].mxu0 %v3241
    %v9099 = vpop.f32.mrb[0].mxu0
    %v9100 = vadd.f32 0.0, %v9099
    %v9101 = vpop.f32.mrb[0].mxu0
    %v9102 = vadd.f32 0.0, %v9101
    %v9103 = vpop.f32.mrb[0].mxu0
    %v9104 = vadd.f32 0.0, %v9103
    %v9105 = vpop.f32.mrb[0].mxu0
    %v9106 = vadd.f32 0.0, %v9105
    %9107 = vmatprep.mubr.bf16.mxu0 %v3250
    %9108 = vmatmul.mubr.bf16.gmra.mrb[0].mxu0 %v3249
    %v9109 = vpop.f32.mrb[0].mxu0
    %v9110 = vadd.f32 0.0, %v9109
    %v9111 = vpop.f32.mrb[0].mxu0
    %v9112 = vadd.f32 0.0, %v9111
    %v9113 = vpop.f32.mrb[0].mxu0
    %v9114 = vadd.f32 0.0, %v9113
    %v9115 = vpop.f32.mrb[0].mxu0
    %v9116 = vadd.f32 0.0, %v9115
    %9117 = vdwg.mxu0
    %9118 = vmatprep.subr.bf16.mxu0 %v5760
    %9119 = vmatpush1.bf16.msra.mxu0 %v5759
    %9120 = vmatprep.subr.bf16.mxu0 %v5768
    %9121 = vmatpush1.bf16.msra.mxu0 %v5767
    %9122 = vmatprep.subr.bf16.mxu0 %v5776
    %9123 = vmatpush1.bf16.msra.mxu0 %v5775
    %9124 = vmatprep.subr.bf16.mxu0 %v5784
    %9125 = vmatpush1.bf16.msra.mxu0 %v5783
    %9126 = vmatprep.subr.bf16.mxu0 %v5792
    %9127 = vmatpush1.bf16.msra.mxu0 %v5791
    %9128 = vmatprep.subr.bf16.mxu0 %v5800
    %9129 = vmatpush1.bf16.msra.mxu0 %v5799
    %9130 = vmatprep.subr.bf16.mxu0 %v5808
    %9131 = vmatpush1.bf16.msra.mxu0 %v5807
    %9132 = vmatprep.subr.bf16.mxu0 %v5816
    %9133 = vmatpush1.bf16.msra.mxu0 %v5815
    %9134 = vmatprep.subr.bf16.mxu0 %v5824
    %9135 = vmatpush1.bf16.msra.mxu0 %v5823
    %9136 = vmatprep.subr.bf16.mxu0 %v5832
    %9137 = vmatpush1.bf16.msra.mxu0 %v5831
    %9138 = vmatprep.subr.bf16.mxu0 %v5840
    %9139 = vmatpush1.bf16.msra.mxu0 %v5839
    %9140 = vmatprep.subr.bf16.mxu0 %v5848
    %9141 = vmatpush1.bf16.msra.mxu0 %v5847
    %9142 = vmatprep.subr.bf16.mxu0 %v5856
    %9143 = vmatpush1.bf16.msra.mxu0 %v5855
    %9144 = vmatprep.subr.bf16.mxu0 %v5864
    %9145 = vmatpush1.bf16.msra.mxu0 %v5863
    %9146 = vmatprep.subr.bf16.mxu0 %v5872
    %9147 = vmatpush1.bf16.msra.mxu0 %v5871
    %9148 = vmatprep.subr.bf16.mxu0 %v5880
    %9149 = vmatpush1.bf16.msra.mxu0 %v5879
    %9150 = vmatprep.mubr.bf16.mxu0 %v3204
    %9151 = vmatmul.mubr.bf16.gmra.mrb[0].mxu0 %v3203
    %v9152 = vpop.f32.mrb[0].mxu0
    %v9153 = vadd.f32 %v9050, %v9152
    %v9154 = vpop.f32.mrb[0].mxu0
    %v9155 = vadd.f32 %v9052, %v9154
    %v9156 = vpop.f32.mrb[0].mxu0
    %v9157 = vadd.f32 %v9054, %v9156
    %v9158 = vpop.f32.mrb[0].mxu0
    %v9159 = vadd.f32 %v9056, %v9158
    %9160 = vmatprep.mubr.bf16.mxu0 %v3212
    %9161 = vmatmul.mubr.bf16.gmra.mrb[0].mxu0 %v3211
    %v9162 = vpop.f32.mrb[0].mxu0
    %v9163 = vadd.f32 %v9060, %v9162
    %v9164 = vpop.f32.mrb[0].mxu0
    %v9165 = vadd.f32 %v9062, %v9164
    %v9166 = vpop.f32.mrb[0].mxu0
    %v9167 = vadd.f32 %v9064, %v9166
    %v9168 = vpop.f32.mrb[0].mxu0
    %v9169 = vadd.f32 %v9066, %v9168
    %9170 = vmatprep.mubr.bf16.mxu0 %v3220
    %9171 = vmatmul.mubr.bf16.gmra.mrb[0].mxu0 %v3219
    %v9172 = vpop.f32.mrb[0].mxu0
    %v9173 = vadd.f32 %v9070, %v9172
    %v9174 = vpop.f32.mrb[0].mxu0
    %v9175 = vadd.f32 %v9072, %v9174
    %v9176 = vpop.f32.mrb[0].mxu0
    %v9177 = vadd.f32 %v9074, %v9176
    %v9178 = vpop.f32.mrb[0].mxu0
    %v9179 = vadd.f32 %v9076, %v9178
    %9180 = vmatprep.mubr.bf16.mxu0 %v3228
    %9181 = vmatmul.mubr.bf16.gmra.mrb[0].mxu0 %v3227
    %v9182 = vpop.f32.mrb[0].mxu0
    %v9183 = vadd.f32 %v9080, %v9182
    %v9184 = vpop.f32.mrb[0].mxu0
    %v9185 = vadd.f32 %v9082, %v9184
    %v9186 = vpop.f32.mrb[0].mxu0
    %v9187 = vadd.f32 %v9084, %v9186
    %v9188 = vpop.f32.mrb[0].mxu0
    %v9189 = vadd.f32 %v9086, %v9188
    %9190 = vmatprep.mubr.bf16.mxu0 %v3236
    %9191 = vmatmul.mubr.bf16.gmra.mrb[0].mxu0 %v3235
    %v9192 = vpop.f32.mrb[0].mxu0
    %v9193 = vadd.f32 %v9090, %v9192
    %v9194 = vpop.f32.mrb[0].mxu0
    %v9195 = vadd.f32 %v9092, %v9194
    %v9196 = vpop.f32.mrb[0].mxu0
    %v9197 = vadd.f32 %v9094, %v9196
    %v9198 = vpop.f32.mrb[0].mxu0
    %v9199 = vadd.f32 %v9096, %v9198
    %9200 = vmatprep.mubr.bf16.mxu0 %v3244
    %9201 = vmatmul.mubr.bf16.gmra.mrb[0].mxu0 %v3243
    %v9202 = vpop.f32.mrb[0].mxu0
    %v9203 = vadd.f32 %v9100, %v9202
    %v9204 = vpop.f32.mrb[0].mxu0
    %v9205 = vadd.f32 %v9102, %v9204
    %v9206 = vpop.f32.mrb[0].mxu0
    %v9207 = vadd.f32 %v9104, %v9206
    %v9208 = vpop.f32.mrb[0].mxu0
    %v9209 = vadd.f32 %v9106, %v9208
    %9210 = vmatprep.mubr.bf16.mxu0 %v3252
    %9211 = vmatmul.mubr.bf16.gmra.mrb[0].mxu0 %v3251
    %v9212 = vpop.f32.mrb[0].mxu0
    %v9213 = vadd.f32 %v9110, %v9212
    %v9214 = vpop.f32.mrb[0].mxu0
    %v9215 = vadd.f32 %v9112, %v9214
    %v9216 = vpop.f32.mrb[0].mxu0
    %v9217 = vadd.f32 %v9114, %v9216
    %v9218 = vpop.f32.mrb[0].mxu0
    %v9219 = vadd.f32 %v9116, %v9218
    %9220 = vdwg.mxu0
    %9221 = vmatprep.subr.bf16.mxu0 %v5888
    %9222 = vmatpush1.bf16.msra.mxu0 %v5887
    %9223 = vmatprep.subr.bf16.mxu0 %v5896
    %9224 = vmatpush1.bf16.msra.mxu0 %v5895
    %9225 = vmatprep.subr.bf16.mxu0 %v5904
    %9226 = vmatpush1.bf16.msra.mxu0 %v5903
    %9227 = vmatprep.subr.bf16.mxu0 %v5912
    %9228 = vmatpush1.bf16.msra.mxu0 %v5911
    %9229 = vmatprep.subr.bf16.mxu0 %v5920
    %9230 = vmatpush1.bf16.msra.mxu0 %v5919
    %9231 = vmatprep.subr.bf16.mxu0 %v5928
    %9232 = vmatpush1.bf16.msra.mxu0 %v5927
    %9233 = vmatprep.subr.bf16.mxu0 %v5936
    %9234 = vmatpush1.bf16.msra.mxu0 %v5935
    %9235 = vmatprep.subr.bf16.mxu0 %v5944
    %9236 = vmatpush1.bf16.msra.mxu0 %v5943
    %9237 = vmatprep.subr.bf16.mxu0 %v5952
    %9238 = vmatpush1.bf16.msra.mxu0 %v5951
    %9239 = vmatprep.subr.bf16.mxu0 %v5960
    %9240 = vmatpush1.bf16.msra.mxu0 %v5959
    %9241 = vmatprep.subr.bf16.mxu0 %v5968
    %9242 = vmatpush1.bf16.msra.mxu0 %v5967
    %9243 = vmatprep.subr.bf16.mxu0 %v5976
    %9244 = vmatpush1.bf16.msra.mxu0 %v5975
    %9245 = vmatprep.subr.bf16.mxu0 %v5984
    %9246 = vmatpush1.bf16.msra.mxu0 %v5983
    %9247 = vmatprep.subr.bf16.mxu0 %v5992
    %9248 = vmatpush1.bf16.msra.mxu0 %v5991
    %9249 = vmatprep.subr.bf16.mxu0 %v6000
    %9250 = vmatpush1.bf16.msra.mxu0 %v5999
    %9251 = vmatprep.subr.bf16.mxu0 %v6008
    %9252 = vmatpush1.bf16.msra.mxu0 %v6007
    %9253 = vmatprep.mubr.bf16.mxu0 %v3206
    %9254 = vmatmul.mubr.bf16.gmra.mrb[0].mxu0 %v3205
    %v9255 = vpop.f32.mrb[0].mxu0
    %v9256 = vadd.f32 %v9153, %v9255
    %v9257 = vpop.f32.mrb[0].mxu0
    %v9258 = vadd.f32 %v9155, %v9257
    %v9259 = vpop.f32.mrb[0].mxu0
    %v9260 = vadd.f32 %v9157, %v9259
    %v9261 = vpop.f32.mrb[0].mxu0
    %v9262 = vadd.f32 %v9159, %v9261
    %9263 = vmatprep.mubr.bf16.mxu0 %v3214
    %9264 = vmatmul.mubr.bf16.gmra.mrb[0].mxu0 %v3213
    %v9265 = vpop.f32.mrb[0].mxu0
    %v9266 = vadd.f32 %v9163, %v9265
    %v9267 = vpop.f32.mrb[0].mxu0
    %v9268 = vadd.f32 %v9165, %v9267
    %v9269 = vpop.f32.mrb[0].mxu0
    %v9270 = vadd.f32 %v9167, %v9269
    %v9271 = vpop.f32.mrb[0].mxu0
    %v9272 = vadd.f32 %v9169, %v9271
    %9273 = vmatprep.mubr.bf16.mxu0 %v3222
    %9274 = vmatmul.mubr.bf16.gmra.mrb[0].mxu0 %v3221
    %v9275 = vpop.f32.mrb[0].mxu0
    %v9276 = vadd.f32 %v9173, %v9275
    %v9277 = vpop.f32.mrb[0].mxu0
    %v9278 = vadd.f32 %v9175, %v9277
    %v9279 = vpop.f32.mrb[0].mxu0
    %v9280 = vadd.f32 %v9177, %v9279
    %v9281 = vpop.f32.mrb[0].mxu0
    %v9282 = vadd.f32 %v9179, %v9281
    %9283 = vmatprep.mubr.bf16.mxu0 %v3230
    %9284 = vmatmul.mubr.bf16.gmra.mrb[0].mxu0 %v3229
    %v9285 = vpop.f32.mrb[0].mxu0
    %v9286 = vadd.f32 %v9183, %v9285
    %v9287 = vpop.f32.mrb[0].mxu0
    %v9288 = vadd.f32 %v9185, %v9287
    %v9289 = vpop.f32.mrb[0].mxu0
    %v9290 = vadd.f32 %v9187, %v9289
    %v9291 = vpop.f32.mrb[0].mxu0
    %v9292 = vadd.f32 %v9189, %v9291
    %9293 = vmatprep.mubr.bf16.mxu0 %v3238
    %9294 = vmatmul.mubr.bf16.gmra.mrb[0].mxu0 %v3237
    %v9295 = vpop.f32.mrb[0].mxu0
    %v9296 = vadd.f32 %v9193, %v9295
    %v9297 = vpop.f32.mrb[0].mxu0
    %v9298 = vadd.f32 %v9195, %v9297
    %v9299 = vpop.f32.mrb[0].mxu0
    %v9300 = vadd.f32 %v9197, %v9299
    %v9301 = vpop.f32.mrb[0].mxu0
    %v9302 = vadd.f32 %v9199, %v9301
    %9303 = vmatprep.mubr.bf16.mxu0 %v3246
    %9304 = vmatmul.mubr.bf16.gmra.mrb[0].mxu0 %v3245
    %v9305 = vpop.f32.mrb[0].mxu0
    %v9306 = vadd.f32 %v9203, %v9305
    %v9307 = vpop.f32.mrb[0].mxu0
    %v9308 = vadd.f32 %v9205, %v9307
    %v9309 = vpop.f32.mrb[0].mxu0
    %v9310 = vadd.f32 %v9207, %v9309
    %v9311 = vpop.f32.mrb[0].mxu0
    %v9312 = vadd.f32 %v9209, %v9311
    %9313 = vmatprep.mubr.bf16.mxu0 %v3254
    %9314 = vmatmul.mubr.bf16.gmra.mrb[0].mxu0 %v3253
    %v9315 = vpop.f32.mrb[0].mxu0
    %v9316 = vadd.f32 %v9213, %v9315
    %v9317 = vpop.f32.mrb[0].mxu0
    %v9318 = vadd.f32 %v9215, %v9317
    %v9319 = vpop.f32.mrb[0].mxu0
    %v9320 = vadd.f32 %v9217, %v9319
    %v9321 = vpop.f32.mrb[0].mxu0
    %v9322 = vadd.f32 %v9219, %v9321
    %9323 = vdwg.mxu0
    %9324 = vmatprep.subr.bf16.mxu0 %v6016
    %9325 = vmatpush1.bf16.msra.mxu0 %v6015
    %9326 = vmatprep.subr.bf16.mxu0 %v6024
    %9327 = vmatpush1.bf16.msra.mxu0 %v6023
    %9328 = vmatprep.subr.bf16.mxu0 %v6032
    %9329 = vmatpush1.bf16.msra.mxu0 %v6031
    %9330 = vmatprep.subr.bf16.mxu0 %v6040
    %9331 = vmatpush1.bf16.msra.mxu0 %v6039
    %9332 = vmatprep.subr.bf16.mxu0 %v6048
    %9333 = vmatpush1.bf16.msra.mxu0 %v6047
    %9334 = vmatprep.subr.bf16.mxu0 %v6056
    %9335 = vmatpush1.bf16.msra.mxu0 %v6055
    %9336 = vmatprep.subr.bf16.mxu0 %v6064
    %9337 = vmatpush1.bf16.msra.mxu0 %v6063
    %9338 = vmatprep.subr.bf16.mxu0 %v6072
    %9339 = vmatpush1.bf16.msra.mxu0 %v6071
    %9340 = vmatprep.subr.bf16.mxu0 %v6080
    %9341 = vmatpush1.bf16.msra.mxu0 %v6079
    %9342 = vmatprep.subr.bf16.mxu0 %v6088
    %9343 = vmatpush1.bf16.msra.mxu0 %v6087
    %9344 = vmatprep.subr.bf16.mxu0 %v6096
    %9345 = vmatpush1.bf16.msra.mxu0 %v6095
    %9346 = vmatprep.subr.bf16.mxu0 %v6104
    %9347 = vmatpush1.bf16.msra.mxu0 %v6103
    %9348 = vmatprep.subr.bf16.mxu0 %v6112
    %9349 = vmatpush1.bf16.msra.mxu0 %v6111
    %9350 = vmatprep.subr.bf16.mxu0 %v6120
    %9351 = vmatpush1.bf16.msra.mxu0 %v6119
    %9352 = vmatprep.subr.bf16.mxu0 %v6128
    %9353 = vmatpush1.bf16.msra.mxu0 %v6127
    %9354 = vmatprep.subr.bf16.mxu0 %v6136
    %9355 = vmatpush1.bf16.msra.mxu0 %v6135
    %9356 = vmatprep.mubr.bf16.mxu0 %v3208
    %9357 = vmatmul.mubr.bf16.gmra.mrb[0].mxu0 %v3207
    %v9358 = vpop.f32.mrb[0].mxu0
    %v9359 = vadd.f32 %v9256, %v9358
    %v9360 = vpop.f32.mrb[0].mxu0
    %v9361 = vadd.f32 %v9258, %v9360
    %v9362 = vpop.f32.mrb[0].mxu0
    %v9363 = vadd.f32 %v9260, %v9362
    %v9364 = vpop.f32.mrb[0].mxu0
    %v9365 = vadd.f32 %v9262, %v9364
    %9366 = vmatprep.mubr.bf16.mxu0 %v3216
    %9367 = vmatmul.mubr.bf16.gmra.mrb[0].mxu0 %v3215
    %v9368 = vpop.f32.mrb[0].mxu0
    %v9369 = vadd.f32 %v9266, %v9368
    %v9370 = vpop.f32.mrb[0].mxu0
    %v9371 = vadd.f32 %v9268, %v9370
    %v9372 = vpop.f32.mrb[0].mxu0
    %v9373 = vadd.f32 %v9270, %v9372
    %v9374 = vpop.f32.mrb[0].mxu0
    %v9375 = vadd.f32 %v9272, %v9374
    %9376 = vmatprep.mubr.bf16.mxu0 %v3224
    %9377 = vmatmul.mubr.bf16.gmra.mrb[0].mxu0 %v3223
    %v9378 = vpop.f32.mrb[0].mxu0
    %v9379 = vadd.f32 %v9276, %v9378
    %v9380 = vpop.f32.mrb[0].mxu0
    %v9381 = vadd.f32 %v9278, %v9380
    %v9382 = vpop.f32.mrb[0].mxu0
    %v9383 = vadd.f32 %v9280, %v9382
    %v9384 = vpop.f32.mrb[0].mxu0
    %v9385 = vadd.f32 %v9282, %v9384
    %9386 = vmatprep.mubr.bf16.mxu0 %v3232
    %9387 = vmatmul.mubr.bf16.gmra.mrb[0].mxu0 %v3231
    %v9388 = vpop.f32.mrb[0].mxu0
    %v9389 = vadd.f32 %v9286, %v9388
    %v9390 = vpop.f32.mrb[0].mxu0
    %v9391 = vadd.f32 %v9288, %v9390
    %v9392 = vpop.f32.mrb[0].mxu0
    %v9393 = vadd.f32 %v9290, %v9392
    %v9394 = vpop.f32.mrb[0].mxu0
    %v9395 = vadd.f32 %v9292, %v9394
    %9396 = vmatprep.mubr.bf16.mxu0 %v3240
    %9397 = vmatmul.mubr.bf16.gmra.mrb[0].mxu0 %v3239
    %v9398 = vpop.f32.mrb[0].mxu0
    %v9399 = vadd.f32 %v9296, %v9398
    %v9400 = vpop.f32.mrb[0].mxu0
    %v9401 = vadd.f32 %v9298, %v9400
    %v9402 = vpop.f32.mrb[0].mxu0
    %v9403 = vadd.f32 %v9300, %v9402
    %v9404 = vpop.f32.mrb[0].mxu0
    %v9405 = vadd.f32 %v9302, %v9404
    %9406 = vmatprep.mubr.bf16.mxu0 %v3248
    %9407 = vmatmul.mubr.bf16.gmra.mrb[0].mxu0 %v3247
    %v9408 = vpop.f32.mrb[0].mxu0
    %v9409 = vadd.f32 %v9306, %v9408
    %v9410 = vpop.f32.mrb[0].mxu0
    %v9411 = vadd.f32 %v9308, %v9410
    %v9412 = vpop.f32.mrb[0].mxu0
    %v9413 = vadd.f32 %v9310, %v9412
    %v9414 = vpop.f32.mrb[0].mxu0
    %v9415 = vadd.f32 %v9312, %v9414
    %9416 = vmatprep.mubr.bf16.mxu0 %v3256
    %9417 = vmatmul.mubr.bf16.gmra.mrb[0].mxu0 %v3255
    %v9418 = vpop.f32.mrb[0].mxu0
    %v9419 = vadd.f32 %v9316, %v9418
    %v9420 = vpop.f32.mrb[0].mxu0
    %v9421 = vadd.f32 %v9318, %v9420
    %v9422 = vpop.f32.mrb[0].mxu0
    %v9423 = vadd.f32 %v9320, %v9422
    %v9424 = vpop.f32.mrb[0].mxu0
    %v9425 = vadd.f32 %v9322, %v9424
    %9426 = vdwg.mxu0
    %9427 = vmatprep.subr.bf16.mxu0 %v6144
    %9428 = vmatpush1.bf16.msra.mxu0 %v6143
    %9429 = vmatprep.subr.bf16.mxu0 %v6152
    %9430 = vmatpush1.bf16.msra.mxu0 %v6151
    %9431 = vmatprep.subr.bf16.mxu0 %v6160
    %9432 = vmatpush1.bf16.msra.mxu0 %v6159
    %9433 = vmatprep.subr.bf16.mxu0 %v6168
    %9434 = vmatpush1.bf16.msra.mxu0 %v6167
    %9435 = vmatprep.subr.bf16.mxu0 %v6176
    %9436 = vmatpush1.bf16.msra.mxu0 %v6175
    %9437 = vmatprep.subr.bf16.mxu0 %v6184
    %9438 = vmatpush1.bf16.msra.mxu0 %v6183
    %9439 = vmatprep.subr.bf16.mxu0 %v6192
    %9440 = vmatpush1.bf16.msra.mxu0 %v6191
    %9441 = vmatprep.subr.bf16.mxu0 %v6200
    %9442 = vmatpush1.bf16.msra.mxu0 %v6199
    %9443 = vmatprep.subr.bf16.mxu0 %v6208
    %9444 = vmatpush1.bf16.msra.mxu0 %v6207
    %9445 = vmatprep.subr.bf16.mxu0 %v6216
    %9446 = vmatpush1.bf16.msra.mxu0 %v6215
    %9447 = vmatprep.subr.bf16.mxu0 %v6224
    %9448 = vmatpush1.bf16.msra.mxu0 %v6223
    %9449 = vmatprep.subr.bf16.mxu0 %v6232
    %9450 = vmatpush1.bf16.msra.mxu0 %v6231
    %9451 = vmatprep.subr.bf16.mxu0 %v6240
    %9452 = vmatpush1.bf16.msra.mxu0 %v6239
    %9453 = vmatprep.subr.bf16.mxu0 %v6248
    %9454 = vmatpush1.bf16.msra.mxu0 %v6247
    %9455 = vmatprep.subr.bf16.mxu0 %v6256
    %9456 = vmatpush1.bf16.msra.mxu0 %v6255
    %9457 = vmatprep.subr.bf16.mxu0 %v6264
    %9458 = vmatpush1.bf16.msra.mxu0 %v6263
    %9459 = vmatprep.mubr.bf16.mxu0 %v3210
    %9460 = vmatmul.mubr.bf16.gmra.mrb[0].mxu0 %v3209
    %v9461 = vpop.f32.mrb[0].mxu0
    %v9462 = vadd.f32 %v9359, %v9461
    %v9463 = vpop.f32.mrb[0].mxu0
    %v9464 = vadd.f32 %v9361, %v9463
    %v9465 = vpop.f32.mrb[0].mxu0
    %v9466 = vadd.f32 %v9363, %v9465
    %v9467 = vpop.f32.mrb[0].mxu0
    %v9468 = vadd.f32 %v9365, %v9467
    %9469 = vmatprep.mubr.bf16.mxu0 %v3218
    %9470 = vmatmul.mubr.bf16.gmra.mrb[0].mxu0 %v3217
    %v9471 = vpop.f32.mrb[0].mxu0
    %v9472 = vadd.f32 %v9369, %v9471
    %v9473 = vpop.f32.mrb[0].mxu0
    %v9474 = vadd.f32 %v9371, %v9473
    %v9475 = vpop.f32.mrb[0].mxu0
    %v9476 = vadd.f32 %v9373, %v9475
    %v9477 = vpop.f32.mrb[0].mxu0
    %v9478 = vadd.f32 %v9375, %v9477
    %9479 = vmatprep.mubr.bf16.mxu0 %v3226
    %9480 = vmatmul.mubr.bf16.gmra.mrb[0].mxu0 %v3225
    %v9481 = vpop.f32.mrb[0].mxu0
    %v9482 = vadd.f32 %v9379, %v9481
    %v9483 = vpop.f32.mrb[0].mxu0
    %v9484 = vadd.f32 %v9381, %v9483
    %v9485 = vpop.f32.mrb[0].mxu0
    %v9486 = vadd.f32 %v9383, %v9485
    %v9487 = vpop.f32.mrb[0].mxu0
    %v9488 = vadd.f32 %v9385, %v9487
    %9489 = vmatprep.mubr.bf16.mxu0 %v3234
    %9490 = vmatmul.mubr.bf16.gmra.mrb[0].mxu0 %v3233
    %v9491 = vpop.f32.mrb[0].mxu0
    %v9492 = vadd.f32 %v9389, %v9491
    %v9493 = vpop.f32.mrb[0].mxu0
    %v9494 = vadd.f32 %v9391, %v9493
    %v9495 = vpop.f32.mrb[0].mxu0
    %v9496 = vadd.f32 %v9393, %v9495
    %v9497 = vpop.f32.mrb[0].mxu0
    %v9498 = vadd.f32 %v9395, %v9497
    %9499 = vmatprep.mubr.bf16.mxu0 %v3242
    %9500 = vmatmul.mubr.bf16.gmra.mrb[0].mxu0 %v3241
    %v9501 = vpop.f32.mrb[0].mxu0
    %v9502 = vadd.f32 %v9399, %v9501
    %v9503 = vpop.f32.mrb[0].mxu0
    %v9504 = vadd.f32 %v9401, %v9503
    %v9505 = vpop.f32.mrb[0].mxu0
    %v9506 = vadd.f32 %v9403, %v9505
    %v9507 = vpop.f32.mrb[0].mxu0
    %v9508 = vadd.f32 %v9405, %v9507
    %9509 = vmatprep.mubr.bf16.mxu0 %v3250
    %9510 = vmatmul.mubr.bf16.gmra.mrb[0].mxu0 %v3249
    %v9511 = vpop.f32.mrb[0].mxu0
    %v9512 = vadd.f32 %v9409, %v9511
    %v9513 = vpop.f32.mrb[0].mxu0
    %v9514 = vadd.f32 %v9411, %v9513
    %v9515 = vpop.f32.mrb[0].mxu0
    %v9516 = vadd.f32 %v9413, %v9515
    %v9517 = vpop.f32.mrb[0].mxu0
    %v9518 = vadd.f32 %v9415, %v9517
    %9519 = vmatprep.mubr.bf16.mxu0 %v3258
    %9520 = vmatmul.mubr.bf16.gmra.mrb[0].mxu0 %v3257
    %v9521 = vpop.f32.mrb[0].mxu0
    %v9522 = vadd.f32 %v9419, %v9521
    %v9523 = vpop.f32.mrb[0].mxu0
    %v9524 = vadd.f32 %v9421, %v9523
    %v9525 = vpop.f32.mrb[0].mxu0
    %v9526 = vadd.f32 %v9423, %v9525
    %v9527 = vpop.f32.mrb[0].mxu0
    %v9528 = vadd.f32 %v9425, %v9527
    %9529 = vdwg.mxu0
    %9530 = vmatprep.subr.bf16.mxu0 %v6272
    %9531 = vmatpush1.bf16.msra.mxu0 %v6271
    %9532 = vmatprep.subr.bf16.mxu0 %v6280
    %9533 = vmatpush1.bf16.msra.mxu0 %v6279
    %9534 = vmatprep.subr.bf16.mxu0 %v6288
    %9535 = vmatpush1.bf16.msra.mxu0 %v6287
    %9536 = vmatprep.subr.bf16.mxu0 %v6296
    %9537 = vmatpush1.bf16.msra.mxu0 %v6295
    %9538 = vmatprep.subr.bf16.mxu0 %v6304
    %9539 = vmatpush1.bf16.msra.mxu0 %v6303
    %9540 = vmatprep.subr.bf16.mxu0 %v6312
    %9541 = vmatpush1.bf16.msra.mxu0 %v6311
    %9542 = vmatprep.subr.bf16.mxu0 %v6320
    %9543 = vmatpush1.bf16.msra.mxu0 %v6319
    %9544 = vmatprep.subr.bf16.mxu0 %v6328
    %9545 = vmatpush1.bf16.msra.mxu0 %v6327
    %9546 = vmatprep.subr.bf16.mxu0 %v6336
    %9547 = vmatpush1.bf16.msra.mxu0 %v6335
    %9548 = vmatprep.subr.bf16.mxu0 %v6344
    %9549 = vmatpush1.bf16.msra.mxu0 %v6343
    %9550 = vmatprep.subr.bf16.mxu0 %v6352
    %9551 = vmatpush1.bf16.msra.mxu0 %v6351
    %9552 = vmatprep.subr.bf16.mxu0 %v6360
    %9553 = vmatpush1.bf16.msra.mxu0 %v6359
    %9554 = vmatprep.subr.bf16.mxu0 %v6368
    %9555 = vmatpush1.bf16.msra.mxu0 %v6367
    %9556 = vmatprep.subr.bf16.mxu0 %v6376
    %9557 = vmatpush1.bf16.msra.mxu0 %v6375
    %9558 = vmatprep.subr.bf16.mxu0 %v6384
    %9559 = vmatpush1.bf16.msra.mxu0 %v6383
    %9560 = vmatprep.subr.bf16.mxu0 %v6392
    %9561 = vmatpush1.bf16.msra.mxu0 %v6391
    %9562 = vmatprep.mubr.bf16.mxu0 %v3212
    %9563 = vmatmul.mubr.bf16.gmra.mrb[0].mxu0 %v3211
    %v9564 = vpop.f32.mrb[0].mxu0
    %v9565 = vadd.f32 %v9462, %v9564
    %v9566 = vpop.f32.mrb[0].mxu0
    %v9567 = vadd.f32 %v9464, %v9566
    %v9568 = vpop.f32.mrb[0].mxu0
    %v9569 = vadd.f32 %v9466, %v9568
    %v9570 = vpop.f32.mrb[0].mxu0
    %v9571 = vadd.f32 %v9468, %v9570
    %9572 = vmatprep.mubr.bf16.mxu0 %v3220
    %9573 = vmatmul.mubr.bf16.gmra.mrb[0].mxu0 %v3219
    %v9574 = vpop.f32.mrb[0].mxu0
    %v9575 = vadd.f32 %v9472, %v9574
    %v9576 = vpop.f32.mrb[0].mxu0
    %v9577 = vadd.f32 %v9474, %v9576
    %v9578 = vpop.f32.mrb[0].mxu0
    %v9579 = vadd.f32 %v9476, %v9578
    %v9580 = vpop.f32.mrb[0].mxu0
    %v9581 = vadd.f32 %v9478, %v9580
    %9582 = vmatprep.mubr.bf16.mxu0 %v3228
    %9583 = vmatmul.mubr.bf16.gmra.mrb[0].mxu0 %v3227
    %v9584 = vpop.f32.mrb[0].mxu0
    %v9585 = vadd.f32 %v9482, %v9584
    %v9586 = vpop.f32.mrb[0].mxu0
    %v9587 = vadd.f32 %v9484, %v9586
    %v9588 = vpop.f32.mrb[0].mxu0
    %v9589 = vadd.f32 %v9486, %v9588
    %v9590 = vpop.f32.mrb[0].mxu0
    %v9591 = vadd.f32 %v9488, %v9590
    %9592 = vmatprep.mubr.bf16.mxu0 %v3236
    %9593 = vmatmul.mubr.bf16.gmra.mrb[0].mxu0 %v3235
    %v9594 = vpop.f32.mrb[0].mxu0
    %v9595 = vadd.f32 %v9492, %v9594
    %v9596 = vpop.f32.mrb[0].mxu0
    %v9597 = vadd.f32 %v9494, %v9596
    %v9598 = vpop.f32.mrb[0].mxu0
    %v9599 = vadd.f32 %v9496, %v9598
    %v9600 = vpop.f32.mrb[0].mxu0
    %v9601 = vadd.f32 %v9498, %v9600
    %9602 = vmatprep.mubr.bf16.mxu0 %v3244
    %9603 = vmatmul.mubr.bf16.gmra.mrb[0].mxu0 %v3243
    %v9604 = vpop.f32.mrb[0].mxu0
    %v9605 = vadd.f32 %v9502, %v9604
    %v9606 = vpop.f32.mrb[0].mxu0
    %v9607 = vadd.f32 %v9504, %v9606
    %v9608 = vpop.f32.mrb[0].mxu0
    %v9609 = vadd.f32 %v9506, %v9608
    %v9610 = vpop.f32.mrb[0].mxu0
    %v9611 = vadd.f32 %v9508, %v9610
    %9612 = vmatprep.mubr.bf16.mxu0 %v3252
    %9613 = vmatmul.mubr.bf16.gmra.mrb[0].mxu0 %v3251
    %v9614 = vpop.f32.mrb[0].mxu0
    %v9615 = vadd.f32 %v9512, %v9614
    %v9616 = vpop.f32.mrb[0].mxu0
    %v9617 = vadd.f32 %v9514, %v9616
    %v9618 = vpop.f32.mrb[0].mxu0
    %v9619 = vadd.f32 %v9516, %v9618
    %v9620 = vpop.f32.mrb[0].mxu0
    %v9621 = vadd.f32 %v9518, %v9620
    %9622 = vmatprep.mubr.bf16.mxu0 %v3260
    %9623 = vmatmul.mubr.bf16.gmra.mrb[0].mxu0 %v3259
    %v9624 = vpop.f32.mrb[0].mxu0
    %v9625 = vadd.f32 %v9522, %v9624
    %v9626 = vpop.f32.mrb[0].mxu0
    %v9627 = vadd.f32 %v9524, %v9626
    %v9628 = vpop.f32.mrb[0].mxu0
    %v9629 = vadd.f32 %v9526, %v9628
    %v9630 = vpop.f32.mrb[0].mxu0
    %v9631 = vadd.f32 %v9528, %v9630
    %9632 = vdwg.mxu0
    %v9633 = vmax.f32 %v7711, %v7715
    %v9634 = vmax.f32 %v7713, %v7717
    %v9635 = vmax.f32 %v8329, %v8333
    %v9636 = vmax.f32 %v8331, %v8335
    %v9637 = vmax.f32 %v8947, %v8951
    %v9638 = vmax.f32 %v8949, %v8953
    %v9639 = vmax.f32 %v9565, %v9569
    %v9640 = vmax.f32 %v9567, %v9571
    %v9641 = vmax.f32 %v7721, %v7725
    %v9642 = vmax.f32 %v7723, %v7727
    %v9643 = vmax.f32 %v8339, %v8343
    %v9644 = vmax.f32 %v8341, %v8345
    %v9645 = vmax.f32 %v8957, %v8961
    %v9646 = vmax.f32 %v8959, %v8963
    %v9647 = vmax.f32 %v9575, %v9579
    %v9648 = vmax.f32 %v9577, %v9581
    %v9649 = vmax.f32 %v7731, %v7735
    %v9650 = vmax.f32 %v7733, %v7737
    %v9651 = vmax.f32 %v8349, %v8353
    %v9652 = vmax.f32 %v8351, %v8355
    %v9653 = vmax.f32 %v8967, %v8971
    %v9654 = vmax.f32 %v8969, %v8973
    %v9655 = vmax.f32 %v9585, %v9589
    %v9656 = vmax.f32 %v9587, %v9591
    %v9657 = vmax.f32 %v7741, %v7745
    %v9658 = vmax.f32 %v7743, %v7747
    %v9659 = vmax.f32 %v8359, %v8363
    %v9660 = vmax.f32 %v8361, %v8365
    %v9661 = vmax.f32 %v8977, %v8981
    %v9662 = vmax.f32 %v8979, %v8983
    %v9663 = vmax.f32 %v9595, %v9599
    %v9664 = vmax.f32 %v9597, %v9601
    %v9665 = vmax.f32 %v7751, %v7755
    %v9666 = vmax.f32 %v7753, %v7757
    %v9667 = vmax.f32 %v8369, %v8373
    %v9668 = vmax.f32 %v8371, %v8375
    %v9669 = vmax.f32 %v8987, %v8991
    %v9670 = vmax.f32 %v8989, %v8993
    %v9671 = vmax.f32 %v9605, %v9609
    %v9672 = vmax.f32 %v9607, %v9611
    %v9673 = vmax.f32 %v7761, %v7765
    %v9674 = vmax.f32 %v7763, %v7767
    %v9675 = vmax.f32 %v8379, %v8383
    %v9676 = vmax.f32 %v8381, %v8385
    %v9677 = vmax.f32 %v8997, %v9001
    %v9678 = vmax.f32 %v8999, %v9003
    %v9679 = vmax.f32 %v9615, %v9619
    %v9680 = vmax.f32 %v9617, %v9621
    %v9681 = vmax.f32 %v7771, %v7775
    %v9682 = vmax.f32 %v7773, %v7777
    %v9683 = vmax.f32 %v8389, %v8393
    %v9684 = vmax.f32 %v8391, %v8395
    %v9685 = vmax.f32 %v9007, %v9011
    %v9686 = vmax.f32 %v9009, %v9013
    %v9687 = vmax.f32 %v9625, %v9629
    %v9688 = vmax.f32 %v9627, %v9631
    %v9689 = vmax.f32 %v9633, %v9637
    %v9690 = vmax.f32 %v9634, %v9638
    %v9691 = vmax.f32 %v9635, %v9639
    %v9692 = vmax.f32 %v9636, %v9640
    %v9693 = vmax.f32 %v9641, %v9645
    %v9694 = vmax.f32 %v9642, %v9646
    %v9695 = vmax.f32 %v9643, %v9647
    %v9696 = vmax.f32 %v9644, %v9648
    %v9697 = vmax.f32 %v9649, %v9653
    %v9698 = vmax.f32 %v9650, %v9654
    %v9699 = vmax.f32 %v9651, %v9655
    %v9700 = vmax.f32 %v9652, %v9656
    %v9701 = vmax.f32 %v9657, %v9661
    %v9702 = vmax.f32 %v9658, %v9662
    %v9703 = vmax.f32 %v9659, %v9663
    %v9704 = vmax.f32 %v9660, %v9664
    %v9705 = vmax.f32 %v9665, %v9669
    %v9706 = vmax.f32 %v9666, %v9670
    %v9707 = vmax.f32 %v9667, %v9671
    %v9708 = vmax.f32 %v9668, %v9672
    %v9709 = vmax.f32 %v9673, %v9677
    %v9710 = vmax.f32 %v9674, %v9678
    %v9711 = vmax.f32 %v9675, %v9679
    %v9712 = vmax.f32 %v9676, %v9680
    %v9713 = vmax.f32 %v9681, %v9685
    %v9714 = vmax.f32 %v9682, %v9686
    %v9715 = vmax.f32 %v9683, %v9687
    %v9716 = vmax.f32 %v9684, %v9688
    %v9717 = vld [vmem:[#allocation7] sm:$0xf]
    %v9719 = vlaneseq
    %v9720 = vshrl.u32 %v9719, 7
    %v9721 = vsub.s32 0, %v9720
    %v9722 = vrot.slane %v9717, %v9721
    %v9723 = vlaneseq
    %v9724 = vshrl.u32 %v9723, 7
    %v9725 = vsub.s32 1, %v9724
    %v9726 = vrot.slane %v9717, %v9725
    %v9727 = vlaneseq
    %v9728 = vshrl.u32 %v9727, 7
    %v9729 = vsub.s32 2, %v9728
    %v9730 = vrot.slane %v9717, %v9729
    %v9731 = vlaneseq
    %v9732 = vshrl.u32 %v9731, 7
    %v9733 = vsub.s32 3, %v9732
    %v9734 = vrot.slane %v9717, %v9733
    %v9739 = vadd.f32 %v9689, %v9722
    %v9740 = vadd.f32 %v9690, %v9726
    %v9741 = vadd.f32 %v9691, %v9730
    %v9742 = vadd.f32 %v9692, %v9734
    %v9743 = vadd.f32 %v9693, %v9722
    %v9744 = vadd.f32 %v9694, %v9726
    %v9745 = vadd.f32 %v9695, %v9730
    %v9746 = vadd.f32 %v9696, %v9734
    %v9747 = vadd.f32 %v9697, %v9722
    %v9748 = vadd.f32 %v9698, %v9726
    %v9749 = vadd.f32 %v9699, %v9730
    %v9750 = vadd.f32 %v9700, %v9734
    %v9751 = vadd.f32 %v9701, %v9722
    %v9752 = vadd.f32 %v9702, %v9726
    %v9753 = vadd.f32 %v9703, %v9730
    %v9754 = vadd.f32 %v9704, %v9734
    %v9755 = vadd.f32 %v9705, %v9722
    %v9756 = vadd.f32 %v9706, %v9726
    %v9757 = vadd.f32 %v9707, %v9730
    %v9758 = vadd.f32 %v9708, %v9734
    %v9759 = vadd.f32 %v9709, %v9722
    %v9760 = vadd.f32 %v9710, %v9726
    %v9761 = vadd.f32 %v9711, %v9730
    %v9762 = vadd.f32 %v9712, %v9734
    %v9763 = vadd.f32 %v9713, %v9722
    %v9764 = vadd.f32 %v9714, %v9726
    %v9765 = vadd.f32 %v9715, %v9730
    %v9766 = vadd.f32 %v9716, %v9734
    %v9767 = vmax.f32 %v9739, 0.0
    %v9768 = vmax.f32 %v9740, 0.0
    %v9769 = vmax.f32 %v9741, 0.0
    %v9770 = vmax.f32 %v9742, 0.0
    %v9771 = vmax.f32 %v9743, 0.0
    %v9772 = vmax.f32 %v9744, 0.0
    %v9773 = vmax.f32 %v9745, 0.0
    %v9774 = vmax.f32 %v9746, 0.0
    %v9775 = vmax.f32 %v9747, 0.0
    %v9776 = vmax.f32 %v9748, 0.0
    %v9777 = vmax.f32 %v9749, 0.0
    %v9778 = vmax.f32 %v9750, 0.0
    %v9779 = vmax.f32 %v9751, 0.0
    %v9780 = vmax.f32 %v9752, 0.0
    %v9781 = vmax.f32 %v9753, 0.0
    %v9782 = vmax.f32 %v9754, 0.0
    %v9783 = vmax.f32 %v9755, 0.0
    %v9784 = vmax.f32 %v9756, 0.0
    %v9785 = vmax.f32 %v9757, 0.0
    %v9786 = vmax.f32 %v9758, 0.0
    %v9787 = vmax.f32 %v9759, 0.0
    %v9788 = vmax.f32 %v9760, 0.0
    %v9789 = vmax.f32 %v9761, 0.0
    %v9790 = vmax.f32 %v9762, 0.0
    %v9791 = vmax.f32 %v9763, 0.0
    %v9792 = vmax.f32 %v9764, 0.0
    %v9793 = vmax.f32 %v9765, 0.0
    %v9794 = vmax.f32 %v9766, 0.0
    %v9795 = vpack.c.bf16 %v9767, %v9767
    %v9796 = vpack.c.bf16 %v9768, %v9768
    %v9797 = vpack.c.bf16 %v9769, %v9769
    %v9798 = vpack.c.bf16 %v9770, %v9770
    %v9799 = vpack.c.bf16 %v9771, %v9771
    %v9800 = vpack.c.bf16 %v9772, %v9772
    %v9801 = vpack.c.bf16 %v9773, %v9773
    %v9802 = vpack.c.bf16 %v9774, %v9774
    %v9803 = vpack.c.bf16 %v9775, %v9775
    %v9804 = vpack.c.bf16 %v9776, %v9776
    %v9805 = vpack.c.bf16 %v9777, %v9777
    %v9806 = vpack.c.bf16 %v9778, %v9778
    %v9807 = vpack.c.bf16 %v9779, %v9779
    %v9808 = vpack.c.bf16 %v9780, %v9780
    %v9809 = vpack.c.bf16 %v9781, %v9781
    %v9810 = vpack.c.bf16 %v9782, %v9782
    %v9811 = vpack.c.bf16 %v9783, %v9783
    %v9812 = vpack.c.bf16 %v9784, %v9784
    %v9813 = vpack.c.bf16 %v9785, %v9785
    %v9814 = vpack.c.bf16 %v9786, %v9786
    %v9815 = vpack.c.bf16 %v9787, %v9787
    %v9816 = vpack.c.bf16 %v9788, %v9788
    %v9817 = vpack.c.bf16 %v9789, %v9789
    %v9818 = vpack.c.bf16 %v9790, %v9790
    %v9819 = vpack.c.bf16 %v9791, %v9791
    %v9820 = vpack.c.bf16 %v9792, %v9792
    %v9821 = vpack.c.bf16 %v9793, %v9793
    %v9822 = vpack.c.bf16 %v9794, %v9794
    %v9823 = vld [vmem:[#allocation9] sm:$0xf]
    %v9824 = vld [vmem:[#allocation9 + $0x4] sm:$0xf]
    %v9825 = vld [vmem:[#allocation9 + $0x8] sm:$0xf]
    %v9826 = vld [vmem:[#allocation9 + $0xc] sm:$0xf]
    %v9827 = vld [vmem:[#allocation9 + $0x10] sm:$0xf]
    %v9828 = vld [vmem:[#allocation9 + $0x14] sm:$0xf]
    %v9829 = vld [vmem:[#allocation9 + $0x18] sm:$0xf]
    %v9830 = vld [vmem:[#allocation9 + $0x1c] sm:$0xf]
    %v9831 = vld [vmem:[#allocation9 + $0x20] sm:$0xf]
    %v9832 = vld [vmem:[#allocation9 + $0x24] sm:$0xf]
    %v9833 = vld [vmem:[#allocation9 + $0x28] sm:$0xf]
    %v9834 = vld [vmem:[#allocation9 + $0x2c] sm:$0xf]
    %v9835 = vld [vmem:[#allocation9 + $0x30] sm:$0xf]
    %v9836 = vld [vmem:[#allocation9 + $0x34] sm:$0xf]
    %v9837 = vld [vmem:[#allocation9 + $0x38] sm:$0xf]
    %v9838 = vld [vmem:[#allocation9 + $0x3c] sm:$0xf]
    %v9839 = vld [vmem:[#allocation9 + $0x40] sm:$0xf]
    %v9840 = vld [vmem:[#allocation9 + $0x44] sm:$0xf]
    %v9841 = vld [vmem:[#allocation9 + $0x48] sm:$0xf]
    %v9842 = vld [vmem:[#allocation9 + $0x4c] sm:$0xf]
    %v9843 = vld [vmem:[#allocation9 + $0x50] sm:$0xf]
    %v9844 = vld [vmem:[#allocation9 + $0x54] sm:$0xf]
    %v9845 = vld [vmem:[#allocation9 + $0x58] sm:$0xf]
    %v9846 = vld [vmem:[#allocation9 + $0x5c] sm:$0xf]
    %v9847 = vld [vmem:[#allocation9 + $0x60] sm:$0xf]
    %v9848 = vld [vmem:[#allocation9 + $0x64] sm:$0xf]
    %v9849 = vld [vmem:[#allocation9 + $0x68] sm:$0xf]
    %v9850 = vld [vmem:[#allocation9 + $0x6c] sm:$0xf]
    %v9851 = vld [vmem:[#allocation9 + $0x70] sm:$0xf]
    %v9852 = vld [vmem:[#allocation9 + $0x74] sm:$0xf]
    %v9853 = vld [vmem:[#allocation9 + $0x78] sm:$0xf]
    %v9854 = vld [vmem:[#allocation9 + $0x7c] sm:$0xf]
    %v9855 = vld [vmem:[#allocation9 + $0x80] sm:$0xf]
    %v9856 = vld [vmem:[#allocation9 + $0x84] sm:$0xf]
    %v9857 = vld [vmem:[#allocation9 + $0x88] sm:$0xf]
    %v9858 = vld [vmem:[#allocation9 + $0x8c] sm:$0xf]
    %v9859 = vld [vmem:[#allocation9 + $0x90] sm:$0xf]
    %v9860 = vld [vmem:[#allocation9 + $0x94] sm:$0xf]
    %v9861 = vld [vmem:[#allocation9 + $0x98] sm:$0xf]
    %v9862 = vld [vmem:[#allocation9 + $0x9c] sm:$0xf]
    %v9863 = vld [vmem:[#allocation9 + $0xa0] sm:$0xf]
    %v9864 = vld [vmem:[#allocation9 + $0xa4] sm:$0xf]
    %v9865 = vld [vmem:[#allocation9 + $0xa8] sm:$0xf]
    %v9866 = vld [vmem:[#allocation9 + $0xac] sm:$0xf]
    %v9867 = vld [vmem:[#allocation9 + $0xb0] sm:$0xf]
    %v9868 = vld [vmem:[#allocation9 + $0xb4] sm:$0xf]
    %v9869 = vld [vmem:[#allocation9 + $0xb8] sm:$0xf]
    %v9870 = vld [vmem:[#allocation9 + $0xbc] sm:$0xf]
    %v9871 = vld [vmem:[#allocation9 + $0xc0] sm:$0xf]
    %v9872 = vld [vmem:[#allocation9 + $0xc4] sm:$0xf]
    %v9873 = vld [vmem:[#allocation9 + $0xc8] sm:$0xf]
    %v9874 = vld [vmem:[#allocation9 + $0xcc] sm:$0xf]
    %v9875 = vld [vmem:[#allocation9 + $0xd0] sm:$0xf]
    %v9876 = vld [vmem:[#allocation9 + $0xd4] sm:$0xf]
    %v9877 = vld [vmem:[#allocation9 + $0xd8] sm:$0xf]
    %v9878 = vld [vmem:[#allocation9 + $0xdc] sm:$0xf]
    %s9879 = scalar_lea.vmem [#allocation9], 224
    %v9880 = vld [vmem:[%s9879] sm:$0xf]
    %v9881 = vld [vmem:[%s9879 + $0x4] sm:$0xf]
    %v9882 = vld [vmem:[%s9879 + $0x8] sm:$0xf]
    %v9883 = vld [vmem:[%s9879 + $0xc] sm:$0xf]
    %v9884 = vld [vmem:[%s9879 + $0x10] sm:$0xf]
    %v9885 = vld [vmem:[%s9879 + $0x14] sm:$0xf]
    %v9886 = vld [vmem:[%s9879 + $0x18] sm:$0xf]
    %v9887 = vld [vmem:[%s9879 + $0x1c] sm:$0xf]
    %v9888 = vld [vmem:[%s9879 + $0x20] sm:$0xf]
    %v9889 = vld [vmem:[%s9879 + $0x24] sm:$0xf]
    %v9890 = vld [vmem:[%s9879 + $0x28] sm:$0xf]
    %v9891 = vld [vmem:[%s9879 + $0x2c] sm:$0xf]
    %v9892 = vld [vmem:[%s9879 + $0x30] sm:$0xf]
    %v9893 = vld [vmem:[%s9879 + $0x34] sm:$0xf]
    %v9894 = vld [vmem:[%s9879 + $0x38] sm:$0xf]
    %v9895 = vld [vmem:[%s9879 + $0x3c] sm:$0xf]
    %v9896 = vld [vmem:[%s9879 + $0x40] sm:$0xf]
    %v9897 = vld [vmem:[%s9879 + $0x44] sm:$0xf]
    %v9898 = vld [vmem:[%s9879 + $0x48] sm:$0xf]
    %v9899 = vld [vmem:[%s9879 + $0x4c] sm:$0xf]
    %v9900 = vld [vmem:[%s9879 + $0x50] sm:$0xf]
    %v9901 = vld [vmem:[%s9879 + $0x54] sm:$0xf]
    %v9902 = vld [vmem:[%s9879 + $0x58] sm:$0xf]
    %v9903 = vld [vmem:[%s9879 + $0x5c] sm:$0xf]
    %v9904 = vld [vmem:[%s9879 + $0x60] sm:$0xf]
    %v9905 = vld [vmem:[%s9879 + $0x64] sm:$0xf]
    %v9906 = vld [vmem:[%s9879 + $0x68] sm:$0xf]
    %v9907 = vld [vmem:[%s9879 + $0x6c] sm:$0xf]
    %v9908 = vld [vmem:[%s9879 + $0x70] sm:$0xf]
    %v9909 = vld [vmem:[%s9879 + $0x74] sm:$0xf]
    %v9910 = vld [vmem:[%s9879 + $0x78] sm:$0xf]
    %v9911 = vld [vmem:[%s9879 + $0x7c] sm:$0xf]
    %v9912 = vld [vmem:[%s9879 + $0x80] sm:$0xf]
    %v9913 = vld [vmem:[%s9879 + $0x84] sm:$0xf]
    %v9914 = vld [vmem:[%s9879 + $0x88] sm:$0xf]
    %v9915 = vld [vmem:[%s9879 + $0x8c] sm:$0xf]
    %v9916 = vld [vmem:[%s9879 + $0x90] sm:$0xf]
    %v9917 = vld [vmem:[%s9879 + $0x94] sm:$0xf]
    %v9918 = vld [vmem:[%s9879 + $0x98] sm:$0xf]
    %v9919 = vld [vmem:[%s9879 + $0x9c] sm:$0xf]
    %v9920 = vld [vmem:[%s9879 + $0xa0] sm:$0xf]
    %v9921 = vld [vmem:[%s9879 + $0xa4] sm:$0xf]
    %v9922 = vld [vmem:[%s9879 + $0xa8] sm:$0xf]
    %v9923 = vld [vmem:[%s9879 + $0xac] sm:$0xf]
    %v9924 = vld [vmem:[%s9879 + $0xb0] sm:$0xf]
    %v9925 = vld [vmem:[%s9879 + $0xb4] sm:$0xf]
    %v9926 = vld [vmem:[%s9879 + $0xb8] sm:$0xf]
    %v9927 = vld [vmem:[%s9879 + $0xbc] sm:$0xf]
    %v9928 = vld [vmem:[%s9879 + $0xc0] sm:$0xf]
    %v9929 = vld [vmem:[%s9879 + $0xc4] sm:$0xf]
    %v9930 = vld [vmem:[%s9879 + $0xc8] sm:$0xf]
    %v9931 = vld [vmem:[%s9879 + $0xcc] sm:$0xf]
    %v9932 = vld [vmem:[%s9879 + $0xd0] sm:$0xf]
    %v9933 = vld [vmem:[%s9879 + $0xd4] sm:$0xf]
    %v9934 = vld [vmem:[%s9879 + $0xd8] sm:$0xf]
    %v9935 = vld [vmem:[%s9879 + $0xdc] sm:$0xf]
    %v9992 = vunpack.c.l.b16 %v9880
    %v9993 = vunpack.c.l.b16 %v9881
    %v9994 = vunpack.c.l.b16 %v9882
    %v9995 = vunpack.c.l.b16 %v9883
    %v9996 = vunpack.c.l.b16 %v9884
    %v9997 = vunpack.c.l.b16 %v9885
    %v9998 = vunpack.c.l.b16 %v9886
    %v9999 = vunpack.c.l.b16 %v9887
    %v10000 = vunpack.c.l.b16 %v9888
    %v10001 = vunpack.c.l.b16 %v9889
    %v10002 = vunpack.c.l.b16 %v9890
    %v10003 = vunpack.c.l.b16 %v9891
    %v10004 = vunpack.c.l.b16 %v9892
    %v10005 = vunpack.c.l.b16 %v9893
    %v10006 = vunpack.c.l.b16 %v9894
    %v10007 = vunpack.c.l.b16 %v9895
    %v10008 = vunpack.c.l.b16 %v9896
    %v10009 = vunpack.c.l.b16 %v9897
    %v10010 = vunpack.c.l.b16 %v9898
    %v10011 = vunpack.c.l.b16 %v9899
    %v10012 = vunpack.c.l.b16 %v9900
    %v10013 = vunpack.c.l.b16 %v9901
    %v10014 = vunpack.c.l.b16 %v9902
    %v10015 = vunpack.c.l.b16 %v9903
    %v10016 = vunpack.c.l.b16 %v9904
    %v10017 = vunpack.c.l.b16 %v9905
    %v10018 = vunpack.c.l.b16 %v9906
    %v10019 = vunpack.c.l.b16 %v9907
    %v10020 = vunpack.c.l.b16 %v9908
    %v10021 = vunpack.c.l.b16 %v9909
    %v10022 = vunpack.c.l.b16 %v9910
    %v10023 = vunpack.c.l.b16 %v9911
    %v10024 = vunpack.c.l.b16 %v9912
    %v10025 = vunpack.c.l.b16 %v9913
    %v10026 = vunpack.c.l.b16 %v9914
    %v10027 = vunpack.c.l.b16 %v9915
    %v10028 = vunpack.c.l.b16 %v9916
    %v10029 = vunpack.c.l.b16 %v9917
    %v10030 = vunpack.c.l.b16 %v9918
    %v10031 = vunpack.c.l.b16 %v9919
    %v10032 = vunpack.c.l.b16 %v9920
    %v10033 = vunpack.c.l.b16 %v9921
    %v10034 = vunpack.c.l.b16 %v9922
    %v10035 = vunpack.c.l.b16 %v9923
    %v10036 = vunpack.c.l.b16 %v9924
    %v10037 = vunpack.c.l.b16 %v9925
    %v10038 = vunpack.c.l.b16 %v9926
    %v10039 = vunpack.c.l.b16 %v9927
    %v10040 = vunpack.c.l.b16 %v9928
    %v10041 = vunpack.c.l.b16 %v9929
    %v10042 = vunpack.c.l.b16 %v9930
    %v10043 = vunpack.c.l.b16 %v9931
    %v10044 = vunpack.c.l.b16 %v9932
    %v10045 = vunpack.c.l.b16 %v9933
    %v10046 = vunpack.c.l.b16 %v9934
    %v10047 = vunpack.c.l.b16 %v9935
    %v10048 = vpack.c.b16 %v9993, %v9992
    %v10049 = vpack.c.b16 %v9995, %v9994
    %v10050 = vpack.c.b16 %v9997, %v9996
    %v10051 = vpack.c.b16 %v9999, %v9998
    %v10052 = vpack.c.b16 %v10001, %v10000
    %v10053 = vpack.c.b16 %v10003, %v10002
    %v10054 = vpack.c.b16 %v10005, %v10004
    %v10055 = vpack.c.b16 %v10007, %v10006
    %v10056 = vpack.c.b16 %v10009, %v10008
    %v10057 = vpack.c.b16 %v10011, %v10010
    %v10058 = vpack.c.b16 %v10013, %v10012
    %v10059 = vpack.c.b16 %v10015, %v10014
    %v10060 = vpack.c.b16 %v10017, %v10016
    %v10061 = vpack.c.b16 %v10019, %v10018
    %v10062 = vpack.c.b16 %v10021, %v10020
    %v10063 = vpack.c.b16 %v10023, %v10022
    %v10064 = vpack.c.b16 %v10025, %v10024
    %v10065 = vpack.c.b16 %v10027, %v10026
    %v10066 = vpack.c.b16 %v10029, %v10028
    %v10067 = vpack.c.b16 %v10031, %v10030
    %v10068 = vpack.c.b16 %v10033, %v10032
    %v10069 = vpack.c.b16 %v10035, %v10034
    %v10070 = vpack.c.b16 %v10037, %v10036
    %v10071 = vpack.c.b16 %v10039, %v10038
    %v10072 = vpack.c.b16 %v10041, %v10040
    %v10073 = vpack.c.b16 %v10043, %v10042
    %v10074 = vpack.c.b16 %v10045, %v10044
    %v10075 = vpack.c.b16 %v10047, %v10046
    %v10105 = vsel %vm571, %v9802, 0
    %10107 = vmatprep.subr.bf16.mxu0 0
    %10108 = vmatpush1.bf16.msra.mxu0 %v10048
    %10109 = vmatprep.subr.bf16.mxu0 0
    %10110 = vmatpush1.bf16.msra.mxu0 %v10049
    %10111 = vmatprep.subr.bf16.mxu0 0
    %10112 = vmatpush1.bf16.msra.mxu0 %v10050
    %10113 = vmatprep.subr.bf16.mxu0 0
    %10114 = vmatpush1.bf16.msra.mxu0 %v10051
    %10115 = vmatprep.subr.bf16.mxu0 0
    %10116 = vmatpush1.bf16.msra.mxu0 %v10052
    %10117 = vmatprep.subr.bf16.mxu0 0
    %10118 = vmatpush1.bf16.msra.mxu0 %v10053
    %10119 = vmatprep.subr.bf16.mxu0 0
    %10120 = vmatpush1.bf16.msra.mxu0 %v10054
    %10121 = vmatprep.subr.bf16.mxu0 0
    %10122 = vmatpush1.bf16.msra.mxu0 %v10055
    %10123 = vmatprep.subr.bf16.mxu0 0
    %10124 = vmatpush1.bf16.msra.mxu0 %v10056
    %10125 = vmatprep.subr.bf16.mxu0 0
    %10126 = vmatpush1.bf16.msra.mxu0 %v10057
    %10127 = vmatprep.subr.bf16.mxu0 0
    %10128 = vmatpush1.bf16.msra.mxu0 %v10058
    %10129 = vmatprep.subr.bf16.mxu0 0
    %10130 = vmatpush1.bf16.msra.mxu0 %v10059
    %10131 = vmatprep.subr.bf16.mxu0 0
    %10132 = vmatpush1.bf16.msra.mxu0 %v10060
    %10133 = vmatprep.subr.bf16.mxu0 0
    %10134 = vmatpush1.bf16.msra.mxu0 %v10061
    %10135 = vmatprep.subr.bf16.mxu0 0
    %10136 = vmatpush1.bf16.msra.mxu0 %v10062
    %10137 = vmatprep.subr.bf16.mxu0 0
    %10138 = vmatpush1.bf16.msra.mxu0 %v10063
    %10139 = vmatprep.mubr.bf16.mxu0 %v9800
    %10140 = vmatmul.mubr.bf16.gmra.mrb[0].mxu0 %v9799
    %v10141 = vpop.f32.mrb[0].mxu0
    %v10142 = vadd.f32 0.0, %v10141
    %v10143 = vpop.f32.mrb[0].mxu0
    %v10144 = vpop.f32.mrb[0].mxu0
    %v10145 = vpop.f32.mrb[0].mxu0
    %10146 = vdwg.mxu0
    %10147 = vmatprep.subr.bf16.mxu0 0
    %10148 = vmatpush1.bf16.msra.mxu0 %v10064
    %10149 = vmatprep.subr.bf16.mxu0 0
    %10150 = vmatpush1.bf16.msra.mxu0 %v10065
    %10151 = vmatprep.subr.bf16.mxu0 0
    %10152 = vmatpush1.bf16.msra.mxu0 %v10066
    %10153 = vmatprep.subr.bf16.mxu0 0
    %10154 = vmatpush1.bf16.msra.mxu0 %v10067
    %10155 = vmatprep.subr.bf16.mxu0 0
    %10156 = vmatpush1.bf16.msra.mxu0 %v10068
    %10157 = vmatprep.subr.bf16.mxu0 0
    %10158 = vmatpush1.bf16.msra.mxu0 %v10069
    %10159 = vmatprep.subr.bf16.mxu0 0
    %10160 = vmatpush1.bf16.msra.mxu0 %v10070
    %10161 = vmatprep.subr.bf16.mxu0 0
    %10162 = vmatpush1.bf16.msra.mxu0 %v10071
    %10163 = vmatprep.subr.bf16.mxu0 0
    %10164 = vmatpush1.bf16.msra.mxu0 %v10072
    %10165 = vmatprep.subr.bf16.mxu0 0
    %10166 = vmatpush1.bf16.msra.mxu0 %v10073
    %10167 = vmatprep.subr.bf16.mxu0 0
    %10168 = vmatpush1.bf16.msra.mxu0 %v10074
    %10169 = vmatprep.subr.bf16.mxu0 0
    %10170 = vmatpush1.bf16.msra.mxu0 %v10075
    %10171 = vmatprep.subr.bf16.mxu0 0
    %10172 = vmatpush1.bf16.msra.mxu0 0
    %10173 = vmatprep.subr.bf16.mxu0 0
    %10174 = vmatpush1.bf16.msra.mxu0 0
    %10175 = vmatprep.subr.bf16.mxu0 0
    %10176 = vmatpush1.bf16.msra.mxu0 0
    %10177 = vmatprep.subr.bf16.mxu0 0
    %10178 = vmatpush1.bf16.msra.mxu0 0
    %10179 = vmatprep.mubr.bf16.mxu0 %v10105
    %10180 = vmatmul.mubr.bf16.gmra.mrb[0].mxu0 %v9801
    %v10181 = vpop.f32.mrb[0].mxu0
    %v10182 = vadd.f32 %v10142, %v10181
    %v10183 = vpop.f32.mrb[0].mxu0
    %v10184 = vpop.f32.mrb[0].mxu0
    %v10185 = vpop.f32.mrb[0].mxu0
    %10186 = vdwg.mxu0
    %v10243 = vunpack.c.l.b16 %v9823
    %v10244 = vunpack.c.l.b16 %v9824
    %v10245 = vunpack.c.l.b16 %v9825
    %v10246 = vunpack.c.l.b16 %v9826
    %v10247 = vunpack.c.l.b16 %v9827
    %v10248 = vunpack.c.l.b16 %v9828
    %v10249 = vunpack.c.l.b16 %v9829
    %v10250 = vunpack.c.l.b16 %v9830
    %v10251 = vunpack.c.l.b16 %v9831
    %v10252 = vunpack.c.l.b16 %v9832
    %v10253 = vunpack.c.l.b16 %v9833
    %v10254 = vunpack.c.l.b16 %v9834
    %v10255 = vunpack.c.l.b16 %v9835
    %v10256 = vunpack.c.l.b16 %v9836
    %v10257 = vunpack.c.l.b16 %v9837
    %v10258 = vunpack.c.l.b16 %v9838
    %v10259 = vunpack.c.l.b16 %v9839
    %v10260 = vunpack.c.l.b16 %v9840
    %v10261 = vunpack.c.l.b16 %v9841
    %v10262 = vunpack.c.l.b16 %v9842
    %v10263 = vunpack.c.l.b16 %v9843
    %v10264 = vunpack.c.l.b16 %v9844
    %v10265 = vunpack.c.l.b16 %v9845
    %v10266 = vunpack.c.l.b16 %v9846
    %v10267 = vunpack.c.l.b16 %v9847
    %v10268 = vunpack.c.l.b16 %v9848
    %v10269 = vunpack.c.l.b16 %v9849
    %v10270 = vunpack.c.l.b16 %v9850
    %v10271 = vunpack.c.l.b16 %v9851
    %v10272 = vunpack.c.l.b16 %v9852
    %v10273 = vunpack.c.l.b16 %v9853
    %v10274 = vunpack.c.l.b16 %v9854
    %v10275 = vunpack.c.l.b16 %v9855
    %v10276 = vunpack.c.l.b16 %v9856
    %v10277 = vunpack.c.l.b16 %v9857
    %v10278 = vunpack.c.l.b16 %v9858
    %v10279 = vunpack.c.l.b16 %v9859
    %v10280 = vunpack.c.l.b16 %v9860
    %v10281 = vunpack.c.l.b16 %v9861
    %v10282 = vunpack.c.l.b16 %v9862
    %v10283 = vunpack.c.l.b16 %v9863
    %v10284 = vunpack.c.l.b16 %v9864
    %v10285 = vunpack.c.l.b16 %v9865
    %v10286 = vunpack.c.l.b16 %v9866
    %v10287 = vunpack.c.l.b16 %v9867
    %v10288 = vunpack.c.l.b16 %v9868
    %v10289 = vunpack.c.l.b16 %v9869
    %v10290 = vunpack.c.l.b16 %v9870
    %v10291 = vunpack.c.l.b16 %v9871
    %v10292 = vunpack.c.l.b16 %v9872
    %v10293 = vunpack.c.l.b16 %v9873
    %v10294 = vunpack.c.l.b16 %v9874
    %v10295 = vunpack.c.l.b16 %v9875
    %v10296 = vunpack.c.l.b16 %v9876
    %v10297 = vunpack.c.l.b16 %v9877
    %v10298 = vunpack.c.l.b16 %v9878
    %v10299 = vpack.c.b16 %v10244, %v10243
    %v10300 = vpack.c.b16 %v10246, %v10245
    %v10301 = vpack.c.b16 %v10248, %v10247
    %v10302 = vpack.c.b16 %v10250, %v10249
    %v10303 = vpack.c.b16 %v10252, %v10251
    %v10304 = vpack.c.b16 %v10254, %v10253
    %v10305 = vpack.c.b16 %v10256, %v10255
    %v10306 = vpack.c.b16 %v10258, %v10257
    %v10307 = vpack.c.b16 %v10260, %v10259
    %v10308 = vpack.c.b16 %v10262, %v10261
    %v10309 = vpack.c.b16 %v10264, %v10263
    %v10310 = vpack.c.b16 %v10266, %v10265
    %v10311 = vpack.c.b16 %v10268, %v10267
    %v10312 = vpack.c.b16 %v10270, %v10269
    %v10313 = vpack.c.b16 %v10272, %v10271
    %v10314 = vpack.c.b16 %v10274, %v10273
    %v10315 = vpack.c.b16 %v10276, %v10275
    %v10316 = vpack.c.b16 %v10278, %v10277
    %v10317 = vpack.c.b16 %v10280, %v10279
    %v10318 = vpack.c.b16 %v10282, %v10281
    %v10319 = vpack.c.b16 %v10284, %v10283
    %v10320 = vpack.c.b16 %v10286, %v10285
    %v10321 = vpack.c.b16 %v10288, %v10287
    %v10322 = vpack.c.b16 %v10290, %v10289
    %v10323 = vpack.c.b16 %v10292, %v10291
    %v10324 = vpack.c.b16 %v10294, %v10293
    %v10325 = vpack.c.b16 %v10296, %v10295
    %v10326 = vpack.c.b16 %v10298, %v10297
    %v10356 = vsel %vm571, %v9798, 0
    %10358 = vmatprep.subr.bf16.mxu0 0
    %10359 = vmatpush1.bf16.msra.mxu0 %v10299
    %10360 = vmatprep.subr.bf16.mxu0 0
    %10361 = vmatpush1.bf16.msra.mxu0 %v10300
    %10362 = vmatprep.subr.bf16.mxu0 0
    %10363 = vmatpush1.bf16.msra.mxu0 %v10301
    %10364 = vmatprep.subr.bf16.mxu0 0
    %10365 = vmatpush1.bf16.msra.mxu0 %v10302
    %10366 = vmatprep.subr.bf16.mxu0 0
    %10367 = vmatpush1.bf16.msra.mxu0 %v10303
    %10368 = vmatprep.subr.bf16.mxu0 0
    %10369 = vmatpush1.bf16.msra.mxu0 %v10304
    %10370 = vmatprep.subr.bf16.mxu0 0
    %10371 = vmatpush1.bf16.msra.mxu0 %v10305
    %10372 = vmatprep.subr.bf16.mxu0 0
    %10373 = vmatpush1.bf16.msra.mxu0 %v10306
    %10374 = vmatprep.subr.bf16.mxu0 0
    %10375 = vmatpush1.bf16.msra.mxu0 %v10307
    %10376 = vmatprep.subr.bf16.mxu0 0
    %10377 = vmatpush1.bf16.msra.mxu0 %v10308
    %10378 = vmatprep.subr.bf16.mxu0 0
    %10379 = vmatpush1.bf16.msra.mxu0 %v10309
    %10380 = vmatprep.subr.bf16.mxu0 0
    %10381 = vmatpush1.bf16.msra.mxu0 %v10310
    %10382 = vmatprep.subr.bf16.mxu0 0
    %10383 = vmatpush1.bf16.msra.mxu0 %v10311
    %10384 = vmatprep.subr.bf16.mxu0 0
    %10385 = vmatpush1.bf16.msra.mxu0 %v10312
    %10386 = vmatprep.subr.bf16.mxu0 0
    %10387 = vmatpush1.bf16.msra.mxu0 %v10313
    %10388 = vmatprep.subr.bf16.mxu0 0
    %10389 = vmatpush1.bf16.msra.mxu0 %v10314
    %10390 = vmatprep.mubr.bf16.mxu0 %v9796
    %10391 = vmatmul.mubr.bf16.gmra.mrb[0].mxu0 %v9795
    %v10392 = vpop.f32.mrb[0].mxu0
    %v10393 = vadd.f32 %v10182, %v10392
    %v10394 = vpop.f32.mrb[0].mxu0
    %v10395 = vpop.f32.mrb[0].mxu0
    %v10396 = vpop.f32.mrb[0].mxu0
    %10397 = vdwg.mxu0
    %10398 = vmatprep.subr.bf16.mxu0 0
    %10399 = vmatpush1.bf16.msra.mxu0 %v10315
    %10400 = vmatprep.subr.bf16.mxu0 0
    %10401 = vmatpush1.bf16.msra.mxu0 %v10316
    %10402 = vmatprep.subr.bf16.mxu0 0
    %10403 = vmatpush1.bf16.msra.mxu0 %v10317
    %10404 = vmatprep.subr.bf16.mxu0 0
    %10405 = vmatpush1.bf16.msra.mxu0 %v10318
    %10406 = vmatprep.subr.bf16.mxu0 0
    %10407 = vmatpush1.bf16.msra.mxu0 %v10319
    %10408 = vmatprep.subr.bf16.mxu0 0
    %10409 = vmatpush1.bf16.msra.mxu0 %v10320
    %10410 = vmatprep.subr.bf16.mxu0 0
    %10411 = vmatpush1.bf16.msra.mxu0 %v10321
    %10412 = vmatprep.subr.bf16.mxu0 0
    %10413 = vmatpush1.bf16.msra.mxu0 %v10322
    %10414 = vmatprep.subr.bf16.mxu0 0
    %10415 = vmatpush1.bf16.msra.mxu0 %v10323
    %10416 = vmatprep.subr.bf16.mxu0 0
    %10417 = vmatpush1.bf16.msra.mxu0 %v10324
    %10418 = vmatprep.subr.bf16.mxu0 0
    %10419 = vmatpush1.bf16.msra.mxu0 %v10325
    %10420 = vmatprep.subr.bf16.mxu0 0
    %10421 = vmatpush1.bf16.msra.mxu0 %v10326
    %10422 = vmatprep.subr.bf16.mxu0 0
    %10423 = vmatpush1.bf16.msra.mxu0 0
    %10424 = vmatprep.subr.bf16.mxu0 0
    %10425 = vmatpush1.bf16.msra.mxu0 0
    %10426 = vmatprep.subr.bf16.mxu0 0
    %10427 = vmatpush1.bf16.msra.mxu0 0
    %10428 = vmatprep.subr.bf16.mxu0 0
    %10429 = vmatpush1.bf16.msra.mxu0 0
    %10430 = vmatprep.mubr.bf16.mxu0 %v10356
    %10431 = vmatmul.mubr.bf16.gmra.mrb[0].mxu0 %v9797
    %v10432 = vpop.f32.mrb[0].mxu0
    %v10433 = vadd.f32 %v10393, %v10432
    %v10434 = vpop.f32.mrb[0].mxu0
    %v10435 = vpop.f32.mrb[0].mxu0
    %v10436 = vpop.f32.mrb[0].mxu0
    %10437 = vdwg.mxu0
    %s10438 = scalar_lea.vmem [#allocation9], 448
    %v10439 = vld [vmem:[%s10438] sm:$0xf]
    %v10440 = vld [vmem:[%s10438 + $0x4] sm:$0xf]
    %v10441 = vld [vmem:[%s10438 + $0x8] sm:$0xf]
    %v10442 = vld [vmem:[%s10438 + $0xc] sm:$0xf]
    %v10443 = vld [vmem:[%s10438 + $0x10] sm:$0xf]
    %v10444 = vld [vmem:[%s10438 + $0x14] sm:$0xf]
    %v10445 = vld [vmem:[%s10438 + $0x18] sm:$0xf]
    %v10446 = vld [vmem:[%s10438 + $0x1c] sm:$0xf]
    %v10447 = vld [vmem:[%s10438 + $0x20] sm:$0xf]
    %v10448 = vld [vmem:[%s10438 + $0x24] sm:$0xf]
    %v10449 = vld [vmem:[%s10438 + $0x28] sm:$0xf]
    %v10450 = vld [vmem:[%s10438 + $0x2c] sm:$0xf]
    %v10451 = vld [vmem:[%s10438 + $0x30] sm:$0xf]
    %v10452 = vld [vmem:[%s10438 + $0x34] sm:$0xf]
    %v10453 = vld [vmem:[%s10438 + $0x38] sm:$0xf]
    %v10454 = vld [vmem:[%s10438 + $0x3c] sm:$0xf]
    %v10455 = vld [vmem:[%s10438 + $0x40] sm:$0xf]
    %v10456 = vld [vmem:[%s10438 + $0x44] sm:$0xf]
    %v10457 = vld [vmem:[%s10438 + $0x48] sm:$0xf]
    %v10458 = vld [vmem:[%s10438 + $0x4c] sm:$0xf]
    %v10459 = vld [vmem:[%s10438 + $0x50] sm:$0xf]
    %v10460 = vld [vmem:[%s10438 + $0x54] sm:$0xf]
    %v10461 = vld [vmem:[%s10438 + $0x58] sm:$0xf]
    %v10462 = vld [vmem:[%s10438 + $0x5c] sm:$0xf]
    %v10463 = vld [vmem:[%s10438 + $0x60] sm:$0xf]
    %v10464 = vld [vmem:[%s10438 + $0x64] sm:$0xf]
    %v10465 = vld [vmem:[%s10438 + $0x68] sm:$0xf]
    %v10466 = vld [vmem:[%s10438 + $0x6c] sm:$0xf]
    %v10467 = vld [vmem:[%s10438 + $0x70] sm:$0xf]
    %v10468 = vld [vmem:[%s10438 + $0x74] sm:$0xf]
    %v10469 = vld [vmem:[%s10438 + $0x78] sm:$0xf]
    %v10470 = vld [vmem:[%s10438 + $0x7c] sm:$0xf]
    %v10471 = vld [vmem:[%s10438 + $0x80] sm:$0xf]
    %v10472 = vld [vmem:[%s10438 + $0x84] sm:$0xf]
    %v10473 = vld [vmem:[%s10438 + $0x88] sm:$0xf]
    %v10474 = vld [vmem:[%s10438 + $0x8c] sm:$0xf]
    %v10475 = vld [vmem:[%s10438 + $0x90] sm:$0xf]
    %v10476 = vld [vmem:[%s10438 + $0x94] sm:$0xf]
    %v10477 = vld [vmem:[%s10438 + $0x98] sm:$0xf]
    %v10478 = vld [vmem:[%s10438 + $0x9c] sm:$0xf]
    %v10479 = vld [vmem:[%s10438 + $0xa0] sm:$0xf]
    %v10480 = vld [vmem:[%s10438 + $0xa4] sm:$0xf]
    %v10481 = vld [vmem:[%s10438 + $0xa8] sm:$0xf]
    %v10482 = vld [vmem:[%s10438 + $0xac] sm:$0xf]
    %v10483 = vld [vmem:[%s10438 + $0xb0] sm:$0xf]
    %v10484 = vld [vmem:[%s10438 + $0xb4] sm:$0xf]
    %v10485 = vld [vmem:[%s10438 + $0xb8] sm:$0xf]
    %v10486 = vld [vmem:[%s10438 + $0xbc] sm:$0xf]
    %v10487 = vld [vmem:[%s10438 + $0xc0] sm:$0xf]
    %v10488 = vld [vmem:[%s10438 + $0xc4] sm:$0xf]
    %v10489 = vld [vmem:[%s10438 + $0xc8] sm:$0xf]
    %v10490 = vld [vmem:[%s10438 + $0xcc] sm:$0xf]
    %v10491 = vld [vmem:[%s10438 + $0xd0] sm:$0xf]
    %v10492 = vld [vmem:[%s10438 + $0xd4] sm:$0xf]
    %v10493 = vld [vmem:[%s10438 + $0xd8] sm:$0xf]
    %v10494 = vld [vmem:[%s10438 + $0xdc] sm:$0xf]
    %v10551 = vunpack.c.l.b16 %v10439
    %v10552 = vunpack.c.l.b16 %v10440
    %v10553 = vunpack.c.l.b16 %v10441
    %v10554 = vunpack.c.l.b16 %v10442
    %v10555 = vunpack.c.l.b16 %v10443
    %v10556 = vunpack.c.l.b16 %v10444
    %v10557 = vunpack.c.l.b16 %v10445
    %v10558 = vunpack.c.l.b16 %v10446
    %v10559 = vunpack.c.l.b16 %v10447
    %v10560 = vunpack.c.l.b16 %v10448
    %v10561 = vunpack.c.l.b16 %v10449
    %v10562 = vunpack.c.l.b16 %v10450
    %v10563 = vunpack.c.l.b16 %v10451
    %v10564 = vunpack.c.l.b16 %v10452
    %v10565 = vunpack.c.l.b16 %v10453
    %v10566 = vunpack.c.l.b16 %v10454
    %v10567 = vunpack.c.l.b16 %v10455
    %v10568 = vunpack.c.l.b16 %v10456
    %v10569 = vunpack.c.l.b16 %v10457
    %v10570 = vunpack.c.l.b16 %v10458
    %v10571 = vunpack.c.l.b16 %v10459
    %v10572 = vunpack.c.l.b16 %v10460
    %v10573 = vunpack.c.l.b16 %v10461
    %v10574 = vunpack.c.l.b16 %v10462
    %v10575 = vunpack.c.l.b16 %v10463
    %v10576 = vunpack.c.l.b16 %v10464
    %v10577 = vunpack.c.l.b16 %v10465
    %v10578 = vunpack.c.l.b16 %v10466
    %v10579 = vunpack.c.l.b16 %v10467
    %v10580 = vunpack.c.l.b16 %v10468
    %v10581 = vunpack.c.l.b16 %v10469
    %v10582 = vunpack.c.l.b16 %v10470
    %v10583 = vunpack.c.l.b16 %v10471
    %v10584 = vunpack.c.l.b16 %v10472
    %v10585 = vunpack.c.l.b16 %v10473
    %v10586 = vunpack.c.l.b16 %v10474
    %v10587 = vunpack.c.l.b16 %v10475
    %v10588 = vunpack.c.l.b16 %v10476
    %v10589 = vunpack.c.l.b16 %v10477
    %v10590 = vunpack.c.l.b16 %v10478
    %v10591 = vunpack.c.l.b16 %v10479
    %v10592 = vunpack.c.l.b16 %v10480
    %v10593 = vunpack.c.l.b16 %v10481
    %v10594 = vunpack.c.l.b16 %v10482
    %v10595 = vunpack.c.l.b16 %v10483
    %v10596 = vunpack.c.l.b16 %v10484
    %v10597 = vunpack.c.l.b16 %v10485
    %v10598 = vunpack.c.l.b16 %v10486
    %v10599 = vunpack.c.l.b16 %v10487
    %v10600 = vunpack.c.l.b16 %v10488
    %v10601 = vunpack.c.l.b16 %v10489
    %v10602 = vunpack.c.l.b16 %v10490
    %v10603 = vunpack.c.l.b16 %v10491
    %v10604 = vunpack.c.l.b16 %v10492
    %v10605 = vunpack.c.l.b16 %v10493
    %v10606 = vunpack.c.l.b16 %v10494
    %v10607 = vpack.c.b16 %v10552, %v10551
    %v10608 = vpack.c.b16 %v10554, %v10553
    %v10609 = vpack.c.b16 %v10556, %v10555
    %v10610 = vpack.c.b16 %v10558, %v10557
    %v10611 = vpack.c.b16 %v10560, %v10559
    %v10612 = vpack.c.b16 %v10562, %v10561
    %v10613 = vpack.c.b16 %v10564, %v10563
    %v10614 = vpack.c.b16 %v10566, %v10565
    %v10615 = vpack.c.b16 %v10568, %v10567
    %v10616 = vpack.c.b16 %v10570, %v10569
    %v10617 = vpack.c.b16 %v10572, %v10571
    %v10618 = vpack.c.b16 %v10574, %v10573
    %v10619 = vpack.c.b16 %v10576, %v10575
    %v10620 = vpack.c.b16 %v10578, %v10577
    %v10621 = vpack.c.b16 %v10580, %v10579
    %v10622 = vpack.c.b16 %v10582, %v10581
    %v10623 = vpack.c.b16 %v10584, %v10583
    %v10624 = vpack.c.b16 %v10586, %v10585
    %v10625 = vpack.c.b16 %v10588, %v10587
    %v10626 = vpack.c.b16 %v10590, %v10589
    %v10627 = vpack.c.b16 %v10592, %v10591
    %v10628 = vpack.c.b16 %v10594, %v10593
    %v10629 = vpack.c.b16 %v10596, %v10595
    %v10630 = vpack.c.b16 %v10598, %v10597
    %v10631 = vpack.c.b16 %v10600, %v10599
    %v10632 = vpack.c.b16 %v10602, %v10601
    %v10633 = vpack.c.b16 %v10604, %v10603
    %v10634 = vpack.c.b16 %v10606, %v10605
    %v10664 = vsel %vm571, %v9806, 0
    %10666 = vmatprep.subr.bf16.mxu0 0
    %10667 = vmatpush1.bf16.msra.mxu0 %v10607
    %10668 = vmatprep.subr.bf16.mxu0 0
    %10669 = vmatpush1.bf16.msra.mxu0 %v10608
    %10670 = vmatprep.subr.bf16.mxu0 0
    %10671 = vmatpush1.bf16.msra.mxu0 %v10609
    %10672 = vmatprep.subr.bf16.mxu0 0
    %10673 = vmatpush1.bf16.msra.mxu0 %v10610
    %10674 = vmatprep.subr.bf16.mxu0 0
    %10675 = vmatpush1.bf16.msra.mxu0 %v10611
    %10676 = vmatprep.subr.bf16.mxu0 0
    %10677 = vmatpush1.bf16.msra.mxu0 %v10612
    %10678 = vmatprep.subr.bf16.mxu0 0
    %10679 = vmatpush1.bf16.msra.mxu0 %v10613
    %10680 = vmatprep.subr.bf16.mxu0 0
    %10681 = vmatpush1.bf16.msra.mxu0 %v10614
    %10682 = vmatprep.subr.bf16.mxu0 0
    %10683 = vmatpush1.bf16.msra.mxu0 %v10615
    %10684 = vmatprep.subr.bf16.mxu0 0
    %10685 = vmatpush1.bf16.msra.mxu0 %v10616
    %10686 = vmatprep.subr.bf16.mxu0 0
    %10687 = vmatpush1.bf16.msra.mxu0 %v10617
    %10688 = vmatprep.subr.bf16.mxu0 0
    %10689 = vmatpush1.bf16.msra.mxu0 %v10618
    %10690 = vmatprep.subr.bf16.mxu0 0
    %10691 = vmatpush1.bf16.msra.mxu0 %v10619
    %10692 = vmatprep.subr.bf16.mxu0 0
    %10693 = vmatpush1.bf16.msra.mxu0 %v10620
    %10694 = vmatprep.subr.bf16.mxu0 0
    %10695 = vmatpush1.bf16.msra.mxu0 %v10621
    %10696 = vmatprep.subr.bf16.mxu0 0
    %10697 = vmatpush1.bf16.msra.mxu0 %v10622
    %10698 = vmatprep.mubr.bf16.mxu0 %v9804
    %10699 = vmatmul.mubr.bf16.gmra.mrb[0].mxu0 %v9803
    %v10700 = vpop.f32.mrb[0].mxu0
    %v10701 = vadd.f32 0.0, %v10700
    %v10702 = vpop.f32.mrb[0].mxu0
    %v10703 = vpop.f32.mrb[0].mxu0
    %v10704 = vpop.f32.mrb[0].mxu0
    %10705 = vdwg.mxu0
    %10706 = vmatprep.subr.bf16.mxu0 0
    %10707 = vmatpush1.bf16.msra.mxu0 %v10623
    %10708 = vmatprep.subr.bf16.mxu0 0
    %10709 = vmatpush1.bf16.msra.mxu0 %v10624
    %10710 = vmatprep.subr.bf16.mxu0 0
    %10711 = vmatpush1.bf16.msra.mxu0 %v10625
    %10712 = vmatprep.subr.bf16.mxu0 0
    %10713 = vmatpush1.bf16.msra.mxu0 %v10626
    %10714 = vmatprep.subr.bf16.mxu0 0
    %10715 = vmatpush1.bf16.msra.mxu0 %v10627
    %10716 = vmatprep.subr.bf16.mxu0 0
    %10717 = vmatpush1.bf16.msra.mxu0 %v10628
    %10718 = vmatprep.subr.bf16.mxu0 0
    %10719 = vmatpush1.bf16.msra.mxu0 %v10629
    %10720 = vmatprep.subr.bf16.mxu0 0
    %10721 = vmatpush1.bf16.msra.mxu0 %v10630
    %10722 = vmatprep.subr.bf16.mxu0 0
    %10723 = vmatpush1.bf16.msra.mxu0 %v10631
    %10724 = vmatprep.subr.bf16.mxu0 0
    %10725 = vmatpush1.bf16.msra.mxu0 %v10632
    %10726 = vmatprep.subr.bf16.mxu0 0
    %10727 = vmatpush1.bf16.msra.mxu0 %v10633
    %10728 = vmatprep.subr.bf16.mxu0 0
    %10729 = vmatpush1.bf16.msra.mxu0 %v10634
    %10730 = vmatprep.subr.bf16.mxu0 0
    %10731 = vmatpush1.bf16.msra.mxu0 0
    %10732 = vmatprep.subr.bf16.mxu0 0
    %10733 = vmatpush1.bf16.msra.mxu0 0
    %10734 = vmatprep.subr.bf16.mxu0 0
    %10735 = vmatpush1.bf16.msra.mxu0 0
    %10736 = vmatprep.subr.bf16.mxu0 0
    %10737 = vmatpush1.bf16.msra.mxu0 0
    %10738 = vmatprep.mubr.bf16.mxu0 %v10664
    %10739 = vmatmul.mubr.bf16.gmra.mrb[0].mxu0 %v9805
    %v10740 = vpop.f32.mrb[0].mxu0
    %v10741 = vadd.f32 %v10701, %v10740
    %v10742 = vpop.f32.mrb[0].mxu0
    %v10743 = vpop.f32.mrb[0].mxu0
    %v10744 = vpop.f32.mrb[0].mxu0
    %10745 = vdwg.mxu0
    %v10746 = vadd.f32 %v10433, %v10741
    %s10747 = scalar_lea.vmem [#allocation9], 672
    %v10748 = vld [vmem:[%s10747] sm:$0xf]
    %v10749 = vld [vmem:[%s10747 + $0x4] sm:$0xf]
    %v10750 = vld [vmem:[%s10747 + $0x8] sm:$0xf]
    %v10751 = vld [vmem:[%s10747 + $0xc] sm:$0xf]
    %v10752 = vld [vmem:[%s10747 + $0x10] sm:$0xf]
    %v10753 = vld [vmem:[%s10747 + $0x14] sm:$0xf]
    %v10754 = vld [vmem:[%s10747 + $0x18] sm:$0xf]
    %v10755 = vld [vmem:[%s10747 + $0x1c] sm:$0xf]
    %v10756 = vld [vmem:[%s10747 + $0x20] sm:$0xf]
    %v10757 = vld [vmem:[%s10747 + $0x24] sm:$0xf]
    %v10758 = vld [vmem:[%s10747 + $0x28] sm:$0xf]
    %v10759 = vld [vmem:[%s10747 + $0x2c] sm:$0xf]
    %v10760 = vld [vmem:[%s10747 + $0x30] sm:$0xf]
    %v10761 = vld [vmem:[%s10747 + $0x34] sm:$0xf]
    %v10762 = vld [vmem:[%s10747 + $0x38] sm:$0xf]
    %v10763 = vld [vmem:[%s10747 + $0x3c] sm:$0xf]
    %v10764 = vld [vmem:[%s10747 + $0x40] sm:$0xf]
    %v10765 = vld [vmem:[%s10747 + $0x44] sm:$0xf]
    %v10766 = vld [vmem:[%s10747 + $0x48] sm:$0xf]
    %v10767 = vld [vmem:[%s10747 + $0x4c] sm:$0xf]
    %v10768 = vld [vmem:[%s10747 + $0x50] sm:$0xf]
    %v10769 = vld [vmem:[%s10747 + $0x54] sm:$0xf]
    %v10770 = vld [vmem:[%s10747 + $0x58] sm:$0xf]
    %v10771 = vld [vmem:[%s10747 + $0x5c] sm:$0xf]
    %v10772 = vld [vmem:[%s10747 + $0x60] sm:$0xf]
    %v10773 = vld [vmem:[%s10747 + $0x64] sm:$0xf]
    %v10774 = vld [vmem:[%s10747 + $0x68] sm:$0xf]
    %v10775 = vld [vmem:[%s10747 + $0x6c] sm:$0xf]
    %v10776 = vld [vmem:[%s10747 + $0x70] sm:$0xf]
    %v10777 = vld [vmem:[%s10747 + $0x74] sm:$0xf]
    %v10778 = vld [vmem:[%s10747 + $0x78] sm:$0xf]
    %v10779 = vld [vmem:[%s10747 + $0x7c] sm:$0xf]
    %v10780 = vld [vmem:[%s10747 + $0x80] sm:$0xf]
    %v10781 = vld [vmem:[%s10747 + $0x84] sm:$0xf]
    %v10782 = vld [vmem:[%s10747 + $0x88] sm:$0xf]
    %v10783 = vld [vmem:[%s10747 + $0x8c] sm:$0xf]
    %v10784 = vld [vmem:[%s10747 + $0x90] sm:$0xf]
    %v10785 = vld [vmem:[%s10747 + $0x94] sm:$0xf]
    %v10786 = vld [vmem:[%s10747 + $0x98] sm:$0xf]
    %v10787 = vld [vmem:[%s10747 + $0x9c] sm:$0xf]
    %v10788 = vld [vmem:[%s10747 + $0xa0] sm:$0xf]
    %v10789 = vld [vmem:[%s10747 + $0xa4] sm:$0xf]
    %v10790 = vld [vmem:[%s10747 + $0xa8] sm:$0xf]
    %v10791 = vld [vmem:[%s10747 + $0xac] sm:$0xf]
    %v10792 = vld [vmem:[%s10747 + $0xb0] sm:$0xf]
    %v10793 = vld [vmem:[%s10747 + $0xb4] sm:$0xf]
    %v10794 = vld [vmem:[%s10747 + $0xb8] sm:$0xf]
    %v10795 = vld [vmem:[%s10747 + $0xbc] sm:$0xf]
    %v10796 = vld [vmem:[%s10747 + $0xc0] sm:$0xf]
    %v10797 = vld [vmem:[%s10747 + $0xc4] sm:$0xf]
    %v10798 = vld [vmem:[%s10747 + $0xc8] sm:$0xf]
    %v10799 = vld [vmem:[%s10747 + $0xcc] sm:$0xf]
    %v10800 = vld [vmem:[%s10747 + $0xd0] sm:$0xf]
    %v10801 = vld [vmem:[%s10747 + $0xd4] sm:$0xf]
    %v10802 = vld [vmem:[%s10747 + $0xd8] sm:$0xf]
    %v10803 = vld [vmem:[%s10747 + $0xdc] sm:$0xf]
    %v10860 = vunpack.c.l.b16 %v10748
    %v10861 = vunpack.c.l.b16 %v10749
    %v10862 = vunpack.c.l.b16 %v10750
    %v10863 = vunpack.c.l.b16 %v10751
    %v10864 = vunpack.c.l.b16 %v10752
    %v10865 = vunpack.c.l.b16 %v10753
    %v10866 = vunpack.c.l.b16 %v10754
    %v10867 = vunpack.c.l.b16 %v10755
    %v10868 = vunpack.c.l.b16 %v10756
    %v10869 = vunpack.c.l.b16 %v10757
    %v10870 = vunpack.c.l.b16 %v10758
    %v10871 = vunpack.c.l.b16 %v10759
    %v10872 = vunpack.c.l.b16 %v10760
    %v10873 = vunpack.c.l.b16 %v10761
    %v10874 = vunpack.c.l.b16 %v10762
    %v10875 = vunpack.c.l.b16 %v10763
    %v10876 = vunpack.c.l.b16 %v10764
    %v10877 = vunpack.c.l.b16 %v10765
    %v10878 = vunpack.c.l.b16 %v10766
    %v10879 = vunpack.c.l.b16 %v10767
    %v10880 = vunpack.c.l.b16 %v10768
    %v10881 = vunpack.c.l.b16 %v10769
    %v10882 = vunpack.c.l.b16 %v10770
    %v10883 = vunpack.c.l.b16 %v10771
    %v10884 = vunpack.c.l.b16 %v10772
    %v10885 = vunpack.c.l.b16 %v10773
    %v10886 = vunpack.c.l.b16 %v10774
    %v10887 = vunpack.c.l.b16 %v10775
    %v10888 = vunpack.c.l.b16 %v10776
    %v10889 = vunpack.c.l.b16 %v10777
    %v10890 = vunpack.c.l.b16 %v10778
    %v10891 = vunpack.c.l.b16 %v10779
    %v10892 = vunpack.c.l.b16 %v10780
    %v10893 = vunpack.c.l.b16 %v10781
    %v10894 = vunpack.c.l.b16 %v10782
    %v10895 = vunpack.c.l.b16 %v10783
    %v10896 = vunpack.c.l.b16 %v10784
    %v10897 = vunpack.c.l.b16 %v10785
    %v10898 = vunpack.c.l.b16 %v10786
    %v10899 = vunpack.c.l.b16 %v10787
    %v10900 = vunpack.c.l.b16 %v10788
    %v10901 = vunpack.c.l.b16 %v10789
    %v10902 = vunpack.c.l.b16 %v10790
    %v10903 = vunpack.c.l.b16 %v10791
    %v10904 = vunpack.c.l.b16 %v10792
    %v10905 = vunpack.c.l.b16 %v10793
    %v10906 = vunpack.c.l.b16 %v10794
    %v10907 = vunpack.c.l.b16 %v10795
    %v10908 = vunpack.c.l.b16 %v10796
    %v10909 = vunpack.c.l.b16 %v10797
    %v10910 = vunpack.c.l.b16 %v10798
    %v10911 = vunpack.c.l.b16 %v10799
    %v10912 = vunpack.c.l.b16 %v10800
    %v10913 = vunpack.c.l.b16 %v10801
    %v10914 = vunpack.c.l.b16 %v10802
    %v10915 = vunpack.c.l.b16 %v10803
    %v10916 = vpack.c.b16 %v10861, %v10860
    %v10917 = vpack.c.b16 %v10863, %v10862
    %v10918 = vpack.c.b16 %v10865, %v10864
    %v10919 = vpack.c.b16 %v10867, %v10866
    %v10920 = vpack.c.b16 %v10869, %v10868
    %v10921 = vpack.c.b16 %v10871, %v10870
    %v10922 = vpack.c.b16 %v10873, %v10872
    %v10923 = vpack.c.b16 %v10875, %v10874
    %v10924 = vpack.c.b16 %v10877, %v10876
    %v10925 = vpack.c.b16 %v10879, %v10878
    %v10926 = vpack.c.b16 %v10881, %v10880
    %v10927 = vpack.c.b16 %v10883, %v10882
    %v10928 = vpack.c.b16 %v10885, %v10884
    %v10929 = vpack.c.b16 %v10887, %v10886
    %v10930 = vpack.c.b16 %v10889, %v10888
    %v10931 = vpack.c.b16 %v10891, %v10890
    %v10932 = vpack.c.b16 %v10893, %v10892
    %v10933 = vpack.c.b16 %v10895, %v10894
    %v10934 = vpack.c.b16 %v10897, %v10896
    %v10935 = vpack.c.b16 %v10899, %v10898
    %v10936 = vpack.c.b16 %v10901, %v10900
    %v10937 = vpack.c.b16 %v10903, %v10902
    %v10938 = vpack.c.b16 %v10905, %v10904
    %v10939 = vpack.c.b16 %v10907, %v10906
    %v10940 = vpack.c.b16 %v10909, %v10908
    %v10941 = vpack.c.b16 %v10911, %v10910
    %v10942 = vpack.c.b16 %v10913, %v10912
    %v10943 = vpack.c.b16 %v10915, %v10914
    %v10973 = vsel %vm571, %v9810, 0
    %10975 = vmatprep.subr.bf16.mxu0 0
    %10976 = vmatpush1.bf16.msra.mxu0 %v10916
    %10977 = vmatprep.subr.bf16.mxu0 0
    %10978 = vmatpush1.bf16.msra.mxu0 %v10917
    %10979 = vmatprep.subr.bf16.mxu0 0
    %10980 = vmatpush1.bf16.msra.mxu0 %v10918
    %10981 = vmatprep.subr.bf16.mxu0 0
    %10982 = vmatpush1.bf16.msra.mxu0 %v10919
    %10983 = vmatprep.subr.bf16.mxu0 0
    %10984 = vmatpush1.bf16.msra.mxu0 %v10920
    %10985 = vmatprep.subr.bf16.mxu0 0
    %10986 = vmatpush1.bf16.msra.mxu0 %v10921
    %10987 = vmatprep.subr.bf16.mxu0 0
    %10988 = vmatpush1.bf16.msra.mxu0 %v10922
    %10989 = vmatprep.subr.bf16.mxu0 0
    %10990 = vmatpush1.bf16.msra.mxu0 %v10923
    %10991 = vmatprep.subr.bf16.mxu0 0
    %10992 = vmatpush1.bf16.msra.mxu0 %v10924
    %10993 = vmatprep.subr.bf16.mxu0 0
    %10994 = vmatpush1.bf16.msra.mxu0 %v10925
    %10995 = vmatprep.subr.bf16.mxu0 0
    %10996 = vmatpush1.bf16.msra.mxu0 %v10926
    %10997 = vmatprep.subr.bf16.mxu0 0
    %10998 = vmatpush1.bf16.msra.mxu0 %v10927
    %10999 = vmatprep.subr.bf16.mxu0 0
    %11000 = vmatpush1.bf16.msra.mxu0 %v10928
    %11001 = vmatprep.subr.bf16.mxu0 0
    %11002 = vmatpush1.bf16.msra.mxu0 %v10929
    %11003 = vmatprep.subr.bf16.mxu0 0
    %11004 = vmatpush1.bf16.msra.mxu0 %v10930
    %11005 = vmatprep.subr.bf16.mxu0 0
    %11006 = vmatpush1.bf16.msra.mxu0 %v10931
    %11007 = vmatprep.mubr.bf16.mxu0 %v9808
    %11008 = vmatmul.mubr.bf16.gmra.mrb[0].mxu0 %v9807
    %v11009 = vpop.f32.mrb[0].mxu0
    %v11010 = vadd.f32 0.0, %v11009
    %v11011 = vpop.f32.mrb[0].mxu0
    %v11012 = vpop.f32.mrb[0].mxu0
    %v11013 = vpop.f32.mrb[0].mxu0
    %11014 = vdwg.mxu0
    %11015 = vmatprep.subr.bf16.mxu0 0
    %11016 = vmatpush1.bf16.msra.mxu0 %v10932
    %11017 = vmatprep.subr.bf16.mxu0 0
    %11018 = vmatpush1.bf16.msra.mxu0 %v10933
    %11019 = vmatprep.subr.bf16.mxu0 0
    %11020 = vmatpush1.bf16.msra.mxu0 %v10934
    %11021 = vmatprep.subr.bf16.mxu0 0
    %11022 = vmatpush1.bf16.msra.mxu0 %v10935
    %11023 = vmatprep.subr.bf16.mxu0 0
    %11024 = vmatpush1.bf16.msra.mxu0 %v10936
    %11025 = vmatprep.subr.bf16.mxu0 0
    %11026 = vmatpush1.bf16.msra.mxu0 %v10937
    %11027 = vmatprep.subr.bf16.mxu0 0
    %11028 = vmatpush1.bf16.msra.mxu0 %v10938
    %11029 = vmatprep.subr.bf16.mxu0 0
    %11030 = vmatpush1.bf16.msra.mxu0 %v10939
    %11031 = vmatprep.subr.bf16.mxu0 0
    %11032 = vmatpush1.bf16.msra.mxu0 %v10940
    %11033 = vmatprep.subr.bf16.mxu0 0
    %11034 = vmatpush1.bf16.msra.mxu0 %v10941
    %11035 = vmatprep.subr.bf16.mxu0 0
    %11036 = vmatpush1.bf16.msra.mxu0 %v10942
    %11037 = vmatprep.subr.bf16.mxu0 0
    %11038 = vmatpush1.bf16.msra.mxu0 %v10943
    %11039 = vmatprep.subr.bf16.mxu0 0
    %11040 = vmatpush1.bf16.msra.mxu0 0
    %11041 = vmatprep.subr.bf16.mxu0 0
    %11042 = vmatpush1.bf16.msra.mxu0 0
    %11043 = vmatprep.subr.bf16.mxu0 0
    %11044 = vmatpush1.bf16.msra.mxu0 0
    %11045 = vmatprep.subr.bf16.mxu0 0
    %11046 = vmatpush1.bf16.msra.mxu0 0
    %11047 = vmatprep.mubr.bf16.mxu0 %v10973
    %11048 = vmatmul.mubr.bf16.gmra.mrb[0].mxu0 %v9809
    %v11049 = vpop.f32.mrb[0].mxu0
    %v11050 = vadd.f32 %v11010, %v11049
    %v11051 = vpop.f32.mrb[0].mxu0
    %v11052 = vpop.f32.mrb[0].mxu0
    %v11053 = vpop.f32.mrb[0].mxu0
    %11054 = vdwg.mxu0
    %v11055 = vadd.f32 %v10746, %v11050
    %s11056 = scalar_lea.vmem [#allocation9], 896
    %v11057 = vld [vmem:[%s11056] sm:$0xf]
    %v11058 = vld [vmem:[%s11056 + $0x4] sm:$0xf]
    %v11059 = vld [vmem:[%s11056 + $0x8] sm:$0xf]
    %v11060 = vld [vmem:[%s11056 + $0xc] sm:$0xf]
    %v11061 = vld [vmem:[%s11056 + $0x10] sm:$0xf]
    %v11062 = vld [vmem:[%s11056 + $0x14] sm:$0xf]
    %v11063 = vld [vmem:[%s11056 + $0x18] sm:$0xf]
    %v11064 = vld [vmem:[%s11056 + $0x1c] sm:$0xf]
    %v11065 = vld [vmem:[%s11056 + $0x20] sm:$0xf]
    %v11066 = vld [vmem:[%s11056 + $0x24] sm:$0xf]
    %v11067 = vld [vmem:[%s11056 + $0x28] sm:$0xf]
    %v11068 = vld [vmem:[%s11056 + $0x2c] sm:$0xf]
    %v11069 = vld [vmem:[%s11056 + $0x30] sm:$0xf]
    %v11070 = vld [vmem:[%s11056 + $0x34] sm:$0xf]
    %v11071 = vld [vmem:[%s11056 + $0x38] sm:$0xf]
    %v11072 = vld [vmem:[%s11056 + $0x3c] sm:$0xf]
    %v11073 = vld [vmem:[%s11056 + $0x40] sm:$0xf]
    %v11074 = vld [vmem:[%s11056 + $0x44] sm:$0xf]
    %v11075 = vld [vmem:[%s11056 + $0x48] sm:$0xf]
    %v11076 = vld [vmem:[%s11056 + $0x4c] sm:$0xf]
    %v11077 = vld [vmem:[%s11056 + $0x50] sm:$0xf]
    %v11078 = vld [vmem:[%s11056 + $0x54] sm:$0xf]
    %v11079 = vld [vmem:[%s11056 + $0x58] sm:$0xf]
    %v11080 = vld [vmem:[%s11056 + $0x5c] sm:$0xf]
    %v11081 = vld [vmem:[%s11056 + $0x60] sm:$0xf]
    %v11082 = vld [vmem:[%s11056 + $0x64] sm:$0xf]
    %v11083 = vld [vmem:[%s11056 + $0x68] sm:$0xf]
    %v11084 = vld [vmem:[%s11056 + $0x6c] sm:$0xf]
    %v11085 = vld [vmem:[%s11056 + $0x70] sm:$0xf]
    %v11086 = vld [vmem:[%s11056 + $0x74] sm:$0xf]
    %v11087 = vld [vmem:[%s11056 + $0x78] sm:$0xf]
    %v11088 = vld [vmem:[%s11056 + $0x7c] sm:$0xf]
    %v11089 = vld [vmem:[%s11056 + $0x80] sm:$0xf]
    %v11090 = vld [vmem:[%s11056 + $0x84] sm:$0xf]
    %v11091 = vld [vmem:[%s11056 + $0x88] sm:$0xf]
    %v11092 = vld [vmem:[%s11056 + $0x8c] sm:$0xf]
    %v11093 = vld [vmem:[%s11056 + $0x90] sm:$0xf]
    %v11094 = vld [vmem:[%s11056 + $0x94] sm:$0xf]
    %v11095 = vld [vmem:[%s11056 + $0x98] sm:$0xf]
    %v11096 = vld [vmem:[%s11056 + $0x9c] sm:$0xf]
    %v11097 = vld [vmem:[%s11056 + $0xa0] sm:$0xf]
    %v11098 = vld [vmem:[%s11056 + $0xa4] sm:$0xf]
    %v11099 = vld [vmem:[%s11056 + $0xa8] sm:$0xf]
    %v11100 = vld [vmem:[%s11056 + $0xac] sm:$0xf]
    %v11101 = vld [vmem:[%s11056 + $0xb0] sm:$0xf]
    %v11102 = vld [vmem:[%s11056 + $0xb4] sm:$0xf]
    %v11103 = vld [vmem:[%s11056 + $0xb8] sm:$0xf]
    %v11104 = vld [vmem:[%s11056 + $0xbc] sm:$0xf]
    %v11105 = vld [vmem:[%s11056 + $0xc0] sm:$0xf]
    %v11106 = vld [vmem:[%s11056 + $0xc4] sm:$0xf]
    %v11107 = vld [vmem:[%s11056 + $0xc8] sm:$0xf]
    %v11108 = vld [vmem:[%s11056 + $0xcc] sm:$0xf]
    %v11109 = vld [vmem:[%s11056 + $0xd0] sm:$0xf]
    %v11110 = vld [vmem:[%s11056 + $0xd4] sm:$0xf]
    %v11111 = vld [vmem:[%s11056 + $0xd8] sm:$0xf]
    %v11112 = vld [vmem:[%s11056 + $0xdc] sm:$0xf]
    %v11169 = vunpack.c.l.b16 %v11057
    %v11170 = vunpack.c.l.b16 %v11058
    %v11171 = vunpack.c.l.b16 %v11059
    %v11172 = vunpack.c.l.b16 %v11060
    %v11173 = vunpack.c.l.b16 %v11061
    %v11174 = vunpack.c.l.b16 %v11062
    %v11175 = vunpack.c.l.b16 %v11063
    %v11176 = vunpack.c.l.b16 %v11064
    %v11177 = vunpack.c.l.b16 %v11065
    %v11178 = vunpack.c.l.b16 %v11066
    %v11179 = vunpack.c.l.b16 %v11067
    %v11180 = vunpack.c.l.b16 %v11068
    %v11181 = vunpack.c.l.b16 %v11069
    %v11182 = vunpack.c.l.b16 %v11070
    %v11183 = vunpack.c.l.b16 %v11071
    %v11184 = vunpack.c.l.b16 %v11072
    %v11185 = vunpack.c.l.b16 %v11073
    %v11186 = vunpack.c.l.b16 %v11074
    %v11187 = vunpack.c.l.b16 %v11075
    %v11188 = vunpack.c.l.b16 %v11076
    %v11189 = vunpack.c.l.b16 %v11077
    %v11190 = vunpack.c.l.b16 %v11078
    %v11191 = vunpack.c.l.b16 %v11079
    %v11192 = vunpack.c.l.b16 %v11080
    %v11193 = vunpack.c.l.b16 %v11081
    %v11194 = vunpack.c.l.b16 %v11082
    %v11195 = vunpack.c.l.b16 %v11083
    %v11196 = vunpack.c.l.b16 %v11084
    %v11197 = vunpack.c.l.b16 %v11085
    %v11198 = vunpack.c.l.b16 %v11086
    %v11199 = vunpack.c.l.b16 %v11087
    %v11200 = vunpack.c.l.b16 %v11088
    %v11201 = vunpack.c.l.b16 %v11089
    %v11202 = vunpack.c.l.b16 %v11090
    %v11203 = vunpack.c.l.b16 %v11091
    %v11204 = vunpack.c.l.b16 %v11092
    %v11205 = vunpack.c.l.b16 %v11093
    %v11206 = vunpack.c.l.b16 %v11094
    %v11207 = vunpack.c.l.b16 %v11095
    %v11208 = vunpack.c.l.b16 %v11096
    %v11209 = vunpack.c.l.b16 %v11097
    %v11210 = vunpack.c.l.b16 %v11098
    %v11211 = vunpack.c.l.b16 %v11099
    %v11212 = vunpack.c.l.b16 %v11100
    %v11213 = vunpack.c.l.b16 %v11101
    %v11214 = vunpack.c.l.b16 %v11102
    %v11215 = vunpack.c.l.b16 %v11103
    %v11216 = vunpack.c.l.b16 %v11104
    %v11217 = vunpack.c.l.b16 %v11105
    %v11218 = vunpack.c.l.b16 %v11106
    %v11219 = vunpack.c.l.b16 %v11107
    %v11220 = vunpack.c.l.b16 %v11108
    %v11221 = vunpack.c.l.b16 %v11109
    %v11222 = vunpack.c.l.b16 %v11110
    %v11223 = vunpack.c.l.b16 %v11111
    %v11224 = vunpack.c.l.b16 %v11112
    %v11225 = vpack.c.b16 %v11170, %v11169
    %v11226 = vpack.c.b16 %v11172, %v11171
    %v11227 = vpack.c.b16 %v11174, %v11173
    %v11228 = vpack.c.b16 %v11176, %v11175
    %v11229 = vpack.c.b16 %v11178, %v11177
    %v11230 = vpack.c.b16 %v11180, %v11179
    %v11231 = vpack.c.b16 %v11182, %v11181
    %v11232 = vpack.c.b16 %v11184, %v11183
    %v11233 = vpack.c.b16 %v11186, %v11185
    %v11234 = vpack.c.b16 %v11188, %v11187
    %v11235 = vpack.c.b16 %v11190, %v11189
    %v11236 = vpack.c.b16 %v11192, %v11191
    %v11237 = vpack.c.b16 %v11194, %v11193
    %v11238 = vpack.c.b16 %v11196, %v11195
    %v11239 = vpack.c.b16 %v11198, %v11197
    %v11240 = vpack.c.b16 %v11200, %v11199
    %v11241 = vpack.c.b16 %v11202, %v11201
    %v11242 = vpack.c.b16 %v11204, %v11203
    %v11243 = vpack.c.b16 %v11206, %v11205
    %v11244 = vpack.c.b16 %v11208, %v11207
    %v11245 = vpack.c.b16 %v11210, %v11209
    %v11246 = vpack.c.b16 %v11212, %v11211
    %v11247 = vpack.c.b16 %v11214, %v11213
    %v11248 = vpack.c.b16 %v11216, %v11215
    %v11249 = vpack.c.b16 %v11218, %v11217
    %v11250 = vpack.c.b16 %v11220, %v11219
    %v11251 = vpack.c.b16 %v11222, %v11221
    %v11252 = vpack.c.b16 %v11224, %v11223
    %v11282 = vsel %vm571, %v9814, 0
    %11284 = vmatprep.subr.bf16.mxu0 0
    %11285 = vmatpush1.bf16.msra.mxu0 %v11225
    %11286 = vmatprep.subr.bf16.mxu0 0
    %11287 = vmatpush1.bf16.msra.mxu0 %v11226
    %11288 = vmatprep.subr.bf16.mxu0 0
    %11289 = vmatpush1.bf16.msra.mxu0 %v11227
    %11290 = vmatprep.subr.bf16.mxu0 0
    %11291 = vmatpush1.bf16.msra.mxu0 %v11228
    %11292 = vmatprep.subr.bf16.mxu0 0
    %11293 = vmatpush1.bf16.msra.mxu0 %v11229
    %11294 = vmatprep.subr.bf16.mxu0 0
    %11295 = vmatpush1.bf16.msra.mxu0 %v11230
    %11296 = vmatprep.subr.bf16.mxu0 0
    %11297 = vmatpush1.bf16.msra.mxu0 %v11231
    %11298 = vmatprep.subr.bf16.mxu0 0
    %11299 = vmatpush1.bf16.msra.mxu0 %v11232
    %11300 = vmatprep.subr.bf16.mxu0 0
    %11301 = vmatpush1.bf16.msra.mxu0 %v11233
    %11302 = vmatprep.subr.bf16.mxu0 0
    %11303 = vmatpush1.bf16.msra.mxu0 %v11234
    %11304 = vmatprep.subr.bf16.mxu0 0
    %11305 = vmatpush1.bf16.msra.mxu0 %v11235
    %11306 = vmatprep.subr.bf16.mxu0 0
    %11307 = vmatpush1.bf16.msra.mxu0 %v11236
    %11308 = vmatprep.subr.bf16.mxu0 0
    %11309 = vmatpush1.bf16.msra.mxu0 %v11237
    %11310 = vmatprep.subr.bf16.mxu0 0
    %11311 = vmatpush1.bf16.msra.mxu0 %v11238
    %11312 = vmatprep.subr.bf16.mxu0 0
    %11313 = vmatpush1.bf16.msra.mxu0 %v11239
    %11314 = vmatprep.subr.bf16.mxu0 0
    %11315 = vmatpush1.bf16.msra.mxu0 %v11240
    %11316 = vmatprep.mubr.bf16.mxu0 %v9812
    %11317 = vmatmul.mubr.bf16.gmra.mrb[0].mxu0 %v9811
    %v11318 = vpop.f32.mrb[0].mxu0
    %v11319 = vadd.f32 0.0, %v11318
    %v11320 = vpop.f32.mrb[0].mxu0
    %v11321 = vpop.f32.mrb[0].mxu0
    %v11322 = vpop.f32.mrb[0].mxu0
    %11323 = vdwg.mxu0
    %11324 = vmatprep.subr.bf16.mxu0 0
    %11325 = vmatpush1.bf16.msra.mxu0 %v11241
    %11326 = vmatprep.subr.bf16.mxu0 0
    %11327 = vmatpush1.bf16.msra.mxu0 %v11242
    %11328 = vmatprep.subr.bf16.mxu0 0
    %11329 = vmatpush1.bf16.msra.mxu0 %v11243
    %11330 = vmatprep.subr.bf16.mxu0 0
    %11331 = vmatpush1.bf16.msra.mxu0 %v11244
    %11332 = vmatprep.subr.bf16.mxu0 0
    %11333 = vmatpush1.bf16.msra.mxu0 %v11245
    %11334 = vmatprep.subr.bf16.mxu0 0
    %11335 = vmatpush1.bf16.msra.mxu0 %v11246
    %11336 = vmatprep.subr.bf16.mxu0 0
    %11337 = vmatpush1.bf16.msra.mxu0 %v11247
    %11338 = vmatprep.subr.bf16.mxu0 0
    %11339 = vmatpush1.bf16.msra.mxu0 %v11248
    %11340 = vmatprep.subr.bf16.mxu0 0
    %11341 = vmatpush1.bf16.msra.mxu0 %v11249
    %11342 = vmatprep.subr.bf16.mxu0 0
    %11343 = vmatpush1.bf16.msra.mxu0 %v11250
    %11344 = vmatprep.subr.bf16.mxu0 0
    %11345 = vmatpush1.bf16.msra.mxu0 %v11251
    %11346 = vmatprep.subr.bf16.mxu0 0
    %11347 = vmatpush1.bf16.msra.mxu0 %v11252
    %11348 = vmatprep.subr.bf16.mxu0 0
    %11349 = vmatpush1.bf16.msra.mxu0 0
    %11350 = vmatprep.subr.bf16.mxu0 0
    %11351 = vmatpush1.bf16.msra.mxu0 0
    %11352 = vmatprep.subr.bf16.mxu0 0
    %11353 = vmatpush1.bf16.msra.mxu0 0
    %11354 = vmatprep.subr.bf16.mxu0 0
    %11355 = vmatpush1.bf16.msra.mxu0 0
    %11356 = vmatprep.mubr.bf16.mxu0 %v11282
    %11357 = vmatmul.mubr.bf16.gmra.mrb[0].mxu0 %v9813
    %v11358 = vpop.f32.mrb[0].mxu0
    %v11359 = vadd.f32 %v11319, %v11358
    %v11360 = vpop.f32.mrb[0].mxu0
    %v11361 = vpop.f32.mrb[0].mxu0
    %v11362 = vpop.f32.mrb[0].mxu0
    %11363 = vdwg.mxu0
    %v11364 = vadd.f32 %v11055, %v11359
    %s11365 = scalar_lea.vmem [#allocation9], 1120
    %v11366 = vld [vmem:[%s11365] sm:$0xf]
    %v11367 = vld [vmem:[%s11365 + $0x4] sm:$0xf]
    %v11368 = vld [vmem:[%s11365 + $0x8] sm:$0xf]
    %v11369 = vld [vmem:[%s11365 + $0xc] sm:$0xf]
    %v11370 = vld [vmem:[%s11365 + $0x10] sm:$0xf]
    %v11371 = vld [vmem:[%s11365 + $0x14] sm:$0xf]
    %v11372 = vld [vmem:[%s11365 + $0x18] sm:$0xf]
    %v11373 = vld [vmem:[%s11365 + $0x1c] sm:$0xf]
    %v11374 = vld [vmem:[%s11365 + $0x20] sm:$0xf]
    %v11375 = vld [vmem:[%s11365 + $0x24] sm:$0xf]
    %v11376 = vld [vmem:[%s11365 + $0x28] sm:$0xf]
    %v11377 = vld [vmem:[%s11365 + $0x2c] sm:$0xf]
    %v11378 = vld [vmem:[%s11365 + $0x30] sm:$0xf]
    %v11379 = vld [vmem:[%s11365 + $0x34] sm:$0xf]
    %v11380 = vld [vmem:[%s11365 + $0x38] sm:$0xf]
    %v11381 = vld [vmem:[%s11365 + $0x3c] sm:$0xf]
    %v11382 = vld [vmem:[%s11365 + $0x40] sm:$0xf]
    %v11383 = vld [vmem:[%s11365 + $0x44] sm:$0xf]
    %v11384 = vld [vmem:[%s11365 + $0x48] sm:$0xf]
    %v11385 = vld [vmem:[%s11365 + $0x4c] sm:$0xf]
    %v11386 = vld [vmem:[%s11365 + $0x50] sm:$0xf]
    %v11387 = vld [vmem:[%s11365 + $0x54] sm:$0xf]
    %v11388 = vld [vmem:[%s11365 + $0x58] sm:$0xf]
    %v11389 = vld [vmem:[%s11365 + $0x5c] sm:$0xf]
    %v11390 = vld [vmem:[%s11365 + $0x60] sm:$0xf]
    %v11391 = vld [vmem:[%s11365 + $0x64] sm:$0xf]
    %v11392 = vld [vmem:[%s11365 + $0x68] sm:$0xf]
    %v11393 = vld [vmem:[%s11365 + $0x6c] sm:$0xf]
    %v11394 = vld [vmem:[%s11365 + $0x70] sm:$0xf]
    %v11395 = vld [vmem:[%s11365 + $0x74] sm:$0xf]
    %v11396 = vld [vmem:[%s11365 + $0x78] sm:$0xf]
    %v11397 = vld [vmem:[%s11365 + $0x7c] sm:$0xf]
    %v11398 = vld [vmem:[%s11365 + $0x80] sm:$0xf]
    %v11399 = vld [vmem:[%s11365 + $0x84] sm:$0xf]
    %v11400 = vld [vmem:[%s11365 + $0x88] sm:$0xf]
    %v11401 = vld [vmem:[%s11365 + $0x8c] sm:$0xf]
    %v11402 = vld [vmem:[%s11365 + $0x90] sm:$0xf]
    %v11403 = vld [vmem:[%s11365 + $0x94] sm:$0xf]
    %v11404 = vld [vmem:[%s11365 + $0x98] sm:$0xf]
    %v11405 = vld [vmem:[%s11365 + $0x9c] sm:$0xf]
    %v11406 = vld [vmem:[%s11365 + $0xa0] sm:$0xf]
    %v11407 = vld [vmem:[%s11365 + $0xa4] sm:$0xf]
    %v11408 = vld [vmem:[%s11365 + $0xa8] sm:$0xf]
    %v11409 = vld [vmem:[%s11365 + $0xac] sm:$0xf]
    %v11410 = vld [vmem:[%s11365 + $0xb0] sm:$0xf]
    %v11411 = vld [vmem:[%s11365 + $0xb4] sm:$0xf]
    %v11412 = vld [vmem:[%s11365 + $0xb8] sm:$0xf]
    %v11413 = vld [vmem:[%s11365 + $0xbc] sm:$0xf]
    %v11414 = vld [vmem:[%s11365 + $0xc0] sm:$0xf]
    %v11415 = vld [vmem:[%s11365 + $0xc4] sm:$0xf]
    %v11416 = vld [vmem:[%s11365 + $0xc8] sm:$0xf]
    %v11417 = vld [vmem:[%s11365 + $0xcc] sm:$0xf]
    %v11418 = vld [vmem:[%s11365 + $0xd0] sm:$0xf]
    %v11419 = vld [vmem:[%s11365 + $0xd4] sm:$0xf]
    %v11420 = vld [vmem:[%s11365 + $0xd8] sm:$0xf]
    %v11421 = vld [vmem:[%s11365 + $0xdc] sm:$0xf]
    %v11478 = vunpack.c.l.b16 %v11366
    %v11479 = vunpack.c.l.b16 %v11367
    %v11480 = vunpack.c.l.b16 %v11368
    %v11481 = vunpack.c.l.b16 %v11369
    %v11482 = vunpack.c.l.b16 %v11370
    %v11483 = vunpack.c.l.b16 %v11371
    %v11484 = vunpack.c.l.b16 %v11372
    %v11485 = vunpack.c.l.b16 %v11373
    %v11486 = vunpack.c.l.b16 %v11374
    %v11487 = vunpack.c.l.b16 %v11375
    %v11488 = vunpack.c.l.b16 %v11376
    %v11489 = vunpack.c.l.b16 %v11377
    %v11490 = vunpack.c.l.b16 %v11378
    %v11491 = vunpack.c.l.b16 %v11379
    %v11492 = vunpack.c.l.b16 %v11380
    %v11493 = vunpack.c.l.b16 %v11381
    %v11494 = vunpack.c.l.b16 %v11382
    %v11495 = vunpack.c.l.b16 %v11383
    %v11496 = vunpack.c.l.b16 %v11384
    %v11497 = vunpack.c.l.b16 %v11385
    %v11498 = vunpack.c.l.b16 %v11386
    %v11499 = vunpack.c.l.b16 %v11387
    %v11500 = vunpack.c.l.b16 %v11388
    %v11501 = vunpack.c.l.b16 %v11389
    %v11502 = vunpack.c.l.b16 %v11390
    %v11503 = vunpack.c.l.b16 %v11391
    %v11504 = vunpack.c.l.b16 %v11392
    %v11505 = vunpack.c.l.b16 %v11393
    %v11506 = vunpack.c.l.b16 %v11394
    %v11507 = vunpack.c.l.b16 %v11395
    %v11508 = vunpack.c.l.b16 %v11396
    %v11509 = vunpack.c.l.b16 %v11397
    %v11510 = vunpack.c.l.b16 %v11398
    %v11511 = vunpack.c.l.b16 %v11399
    %v11512 = vunpack.c.l.b16 %v11400
    %v11513 = vunpack.c.l.b16 %v11401
    %v11514 = vunpack.c.l.b16 %v11402
    %v11515 = vunpack.c.l.b16 %v11403
    %v11516 = vunpack.c.l.b16 %v11404
    %v11517 = vunpack.c.l.b16 %v11405
    %v11518 = vunpack.c.l.b16 %v11406
    %v11519 = vunpack.c.l.b16 %v11407
    %v11520 = vunpack.c.l.b16 %v11408
    %v11521 = vunpack.c.l.b16 %v11409
    %v11522 = vunpack.c.l.b16 %v11410
    %v11523 = vunpack.c.l.b16 %v11411
    %v11524 = vunpack.c.l.b16 %v11412
    %v11525 = vunpack.c.l.b16 %v11413
    %v11526 = vunpack.c.l.b16 %v11414
    %v11527 = vunpack.c.l.b16 %v11415
    %v11528 = vunpack.c.l.b16 %v11416
    %v11529 = vunpack.c.l.b16 %v11417
    %v11530 = vunpack.c.l.b16 %v11418
    %v11531 = vunpack.c.l.b16 %v11419
    %v11532 = vunpack.c.l.b16 %v11420
    %v11533 = vunpack.c.l.b16 %v11421
    %v11534 = vpack.c.b16 %v11479, %v11478
    %v11535 = vpack.c.b16 %v11481, %v11480
    %v11536 = vpack.c.b16 %v11483, %v11482
    %v11537 = vpack.c.b16 %v11485, %v11484
    %v11538 = vpack.c.b16 %v11487, %v11486
    %v11539 = vpack.c.b16 %v11489, %v11488
    %v11540 = vpack.c.b16 %v11491, %v11490
    %v11541 = vpack.c.b16 %v11493, %v11492
    %v11542 = vpack.c.b16 %v11495, %v11494
    %v11543 = vpack.c.b16 %v11497, %v11496
    %v11544 = vpack.c.b16 %v11499, %v11498
    %v11545 = vpack.c.b16 %v11501, %v11500
    %v11546 = vpack.c.b16 %v11503, %v11502
    %v11547 = vpack.c.b16 %v11505, %v11504
    %v11548 = vpack.c.b16 %v11507, %v11506
    %v11549 = vpack.c.b16 %v11509, %v11508
    %v11550 = vpack.c.b16 %v11511, %v11510
    %v11551 = vpack.c.b16 %v11513, %v11512
    %v11552 = vpack.c.b16 %v11515, %v11514
    %v11553 = vpack.c.b16 %v11517, %v11516
    %v11554 = vpack.c.b16 %v11519, %v11518
    %v11555 = vpack.c.b16 %v11521, %v11520
    %v11556 = vpack.c.b16 %v11523, %v11522
    %v11557 = vpack.c.b16 %v11525, %v11524
    %v11558 = vpack.c.b16 %v11527, %v11526
    %v11559 = vpack.c.b16 %v11529, %v11528
    %v11560 = vpack.c.b16 %v11531, %v11530
    %v11561 = vpack.c.b16 %v11533, %v11532
    %v11591 = vsel %vm571, %v9818, 0
    %11593 = vmatprep.subr.bf16.mxu0 0
    %11594 = vmatpush1.bf16.msra.mxu0 %v11534
    %11595 = vmatprep.subr.bf16.mxu0 0
    %11596 = vmatpush1.bf16.msra.mxu0 %v11535
    %11597 = vmatprep.subr.bf16.mxu0 0
    %11598 = vmatpush1.bf16.msra.mxu0 %v11536
    %11599 = vmatprep.subr.bf16.mxu0 0
    %11600 = vmatpush1.bf16.msra.mxu0 %v11537
    %11601 = vmatprep.subr.bf16.mxu0 0
    %11602 = vmatpush1.bf16.msra.mxu0 %v11538
    %11603 = vmatprep.subr.bf16.mxu0 0
    %11604 = vmatpush1.bf16.msra.mxu0 %v11539
    %11605 = vmatprep.subr.bf16.mxu0 0
    %11606 = vmatpush1.bf16.msra.mxu0 %v11540
    %11607 = vmatprep.subr.bf16.mxu0 0
    %11608 = vmatpush1.bf16.msra.mxu0 %v11541
    %11609 = vmatprep.subr.bf16.mxu0 0
    %11610 = vmatpush1.bf16.msra.mxu0 %v11542
    %11611 = vmatprep.subr.bf16.mxu0 0
    %11612 = vmatpush1.bf16.msra.mxu0 %v11543
    %11613 = vmatprep.subr.bf16.mxu0 0
    %11614 = vmatpush1.bf16.msra.mxu0 %v11544
    %11615 = vmatprep.subr.bf16.mxu0 0
    %11616 = vmatpush1.bf16.msra.mxu0 %v11545
    %11617 = vmatprep.subr.bf16.mxu0 0
    %11618 = vmatpush1.bf16.msra.mxu0 %v11546
    %11619 = vmatprep.subr.bf16.mxu0 0
    %11620 = vmatpush1.bf16.msra.mxu0 %v11547
    %11621 = vmatprep.subr.bf16.mxu0 0
    %11622 = vmatpush1.bf16.msra.mxu0 %v11548
    %11623 = vmatprep.subr.bf16.mxu0 0
    %11624 = vmatpush1.bf16.msra.mxu0 %v11549
    %11625 = vmatprep.mubr.bf16.mxu0 %v9816
    %11626 = vmatmul.mubr.bf16.gmra.mrb[0].mxu0 %v9815
    %v11627 = vpop.f32.mrb[0].mxu0
    %v11628 = vadd.f32 0.0, %v11627
    %v11629 = vpop.f32.mrb[0].mxu0
    %v11630 = vpop.f32.mrb[0].mxu0
    %v11631 = vpop.f32.mrb[0].mxu0
    %11632 = vdwg.mxu0
    %11633 = vmatprep.subr.bf16.mxu0 0
    %11634 = vmatpush1.bf16.msra.mxu0 %v11550
    %11635 = vmatprep.subr.bf16.mxu0 0
    %11636 = vmatpush1.bf16.msra.mxu0 %v11551
    %11637 = vmatprep.subr.bf16.mxu0 0
    %11638 = vmatpush1.bf16.msra.mxu0 %v11552
    %11639 = vmatprep.subr.bf16.mxu0 0
    %11640 = vmatpush1.bf16.msra.mxu0 %v11553
    %11641 = vmatprep.subr.bf16.mxu0 0
    %11642 = vmatpush1.bf16.msra.mxu0 %v11554
    %11643 = vmatprep.subr.bf16.mxu0 0
    %11644 = vmatpush1.bf16.msra.mxu0 %v11555
    %11645 = vmatprep.subr.bf16.mxu0 0
    %11646 = vmatpush1.bf16.msra.mxu0 %v11556
    %11647 = vmatprep.subr.bf16.mxu0 0
    %11648 = vmatpush1.bf16.msra.mxu0 %v11557
    %11649 = vmatprep.subr.bf16.mxu0 0
    %11650 = vmatpush1.bf16.msra.mxu0 %v11558
    %11651 = vmatprep.subr.bf16.mxu0 0
    %11652 = vmatpush1.bf16.msra.mxu0 %v11559
    %11653 = vmatprep.subr.bf16.mxu0 0
    %11654 = vmatpush1.bf16.msra.mxu0 %v11560
    %11655 = vmatprep.subr.bf16.mxu0 0
    %11656 = vmatpush1.bf16.msra.mxu0 %v11561
    %11657 = vmatprep.subr.bf16.mxu0 0
    %11658 = vmatpush1.bf16.msra.mxu0 0
    %11659 = vmatprep.subr.bf16.mxu0 0
    %11660 = vmatpush1.bf16.msra.mxu0 0
    %11661 = vmatprep.subr.bf16.mxu0 0
    %11662 = vmatpush1.bf16.msra.mxu0 0
    %11663 = vmatprep.subr.bf16.mxu0 0
    %11664 = vmatpush1.bf16.msra.mxu0 0
    %11665 = vmatprep.mubr.bf16.mxu0 %v11591
    %11666 = vmatmul.mubr.bf16.gmra.mrb[0].mxu0 %v9817
    %v11667 = vpop.f32.mrb[0].mxu0
    %v11668 = vadd.f32 %v11628, %v11667
    %v11669 = vpop.f32.mrb[0].mxu0
    %v11670 = vpop.f32.mrb[0].mxu0
    %v11671 = vpop.f32.mrb[0].mxu0
    %11672 = vdwg.mxu0
    %v11673 = vadd.f32 %v11364, %v11668
    %s11674 = scalar_lea.vmem [#allocation9], 1344
    %v11675 = vld [vmem:[%s11674] sm:$0xf]
    %v11676 = vld [vmem:[%s11674 + $0x4] sm:$0xf]
    %v11677 = vld [vmem:[%s11674 + $0x8] sm:$0xf]
    %v11678 = vld [vmem:[%s11674 + $0xc] sm:$0xf]
    %v11679 = vld [vmem:[%s11674 + $0x10] sm:$0xf]
    %v11680 = vld [vmem:[%s11674 + $0x14] sm:$0xf]
    %v11681 = vld [vmem:[%s11674 + $0x18] sm:$0xf]
    %v11682 = vld [vmem:[%s11674 + $0x1c] sm:$0xf]
    %v11683 = vld [vmem:[%s11674 + $0x20] sm:$0xf]
    %v11684 = vld [vmem:[%s11674 + $0x24] sm:$0xf]
    %v11685 = vld [vmem:[%s11674 + $0x28] sm:$0xf]
    %v11686 = vld [vmem:[%s11674 + $0x2c] sm:$0xf]
    %v11687 = vld [vmem:[%s11674 + $0x30] sm:$0xf]
    %v11688 = vld [vmem:[%s11674 + $0x34] sm:$0xf]
    %v11689 = vld [vmem:[%s11674 + $0x38] sm:$0xf]
    %v11690 = vld [vmem:[%s11674 + $0x3c] sm:$0xf]
    %v11691 = vld [vmem:[%s11674 + $0x40] sm:$0xf]
    %v11692 = vld [vmem:[%s11674 + $0x44] sm:$0xf]
    %v11693 = vld [vmem:[%s11674 + $0x48] sm:$0xf]
    %v11694 = vld [vmem:[%s11674 + $0x4c] sm:$0xf]
    %v11695 = vld [vmem:[%s11674 + $0x50] sm:$0xf]
    %v11696 = vld [vmem:[%s11674 + $0x54] sm:$0xf]
    %v11697 = vld [vmem:[%s11674 + $0x58] sm:$0xf]
    %v11698 = vld [vmem:[%s11674 + $0x5c] sm:$0xf]
    %v11699 = vld [vmem:[%s11674 + $0x60] sm:$0xf]
    %v11700 = vld [vmem:[%s11674 + $0x64] sm:$0xf]
    %v11701 = vld [vmem:[%s11674 + $0x68] sm:$0xf]
    %v11702 = vld [vmem:[%s11674 + $0x6c] sm:$0xf]
    %v11703 = vld [vmem:[%s11674 + $0x70] sm:$0xf]
    %v11704 = vld [vmem:[%s11674 + $0x74] sm:$0xf]
    %v11705 = vld [vmem:[%s11674 + $0x78] sm:$0xf]
    %v11706 = vld [vmem:[%s11674 + $0x7c] sm:$0xf]
    %v11707 = vld [vmem:[%s11674 + $0x80] sm:$0xf]
    %v11708 = vld [vmem:[%s11674 + $0x84] sm:$0xf]
    %v11709 = vld [vmem:[%s11674 + $0x88] sm:$0xf]
    %v11710 = vld [vmem:[%s11674 + $0x8c] sm:$0xf]
    %v11711 = vld [vmem:[%s11674 + $0x90] sm:$0xf]
    %v11712 = vld [vmem:[%s11674 + $0x94] sm:$0xf]
    %v11713 = vld [vmem:[%s11674 + $0x98] sm:$0xf]
    %v11714 = vld [vmem:[%s11674 + $0x9c] sm:$0xf]
    %v11715 = vld [vmem:[%s11674 + $0xa0] sm:$0xf]
    %v11716 = vld [vmem:[%s11674 + $0xa4] sm:$0xf]
    %v11717 = vld [vmem:[%s11674 + $0xa8] sm:$0xf]
    %v11718 = vld [vmem:[%s11674 + $0xac] sm:$0xf]
    %v11719 = vld [vmem:[%s11674 + $0xb0] sm:$0xf]
    %v11720 = vld [vmem:[%s11674 + $0xb4] sm:$0xf]
    %v11721 = vld [vmem:[%s11674 + $0xb8] sm:$0xf]
    %v11722 = vld [vmem:[%s11674 + $0xbc] sm:$0xf]
    %v11723 = vld [vmem:[%s11674 + $0xc0] sm:$0xf]
    %v11724 = vld [vmem:[%s11674 + $0xc4] sm:$0xf]
    %v11725 = vld [vmem:[%s11674 + $0xc8] sm:$0xf]
    %v11726 = vld [vmem:[%s11674 + $0xcc] sm:$0xf]
    %v11727 = vld [vmem:[%s11674 + $0xd0] sm:$0xf]
    %v11728 = vld [vmem:[%s11674 + $0xd4] sm:$0xf]
    %v11729 = vld [vmem:[%s11674 + $0xd8] sm:$0xf]
    %v11730 = vld [vmem:[%s11674 + $0xdc] sm:$0xf]
    %v11787 = vunpack.c.l.b16 %v11675
    %v11788 = vunpack.c.l.b16 %v11676
    %v11789 = vunpack.c.l.b16 %v11677
    %v11790 = vunpack.c.l.b16 %v11678
    %v11791 = vunpack.c.l.b16 %v11679
    %v11792 = vunpack.c.l.b16 %v11680
    %v11793 = vunpack.c.l.b16 %v11681
    %v11794 = vunpack.c.l.b16 %v11682
    %v11795 = vunpack.c.l.b16 %v11683
    %v11796 = vunpack.c.l.b16 %v11684
    %v11797 = vunpack.c.l.b16 %v11685
    %v11798 = vunpack.c.l.b16 %v11686
    %v11799 = vunpack.c.l.b16 %v11687
    %v11800 = vunpack.c.l.b16 %v11688
    %v11801 = vunpack.c.l.b16 %v11689
    %v11802 = vunpack.c.l.b16 %v11690
    %v11803 = vunpack.c.l.b16 %v11691
    %v11804 = vunpack.c.l.b16 %v11692
    %v11805 = vunpack.c.l.b16 %v11693
    %v11806 = vunpack.c.l.b16 %v11694
    %v11807 = vunpack.c.l.b16 %v11695
    %v11808 = vunpack.c.l.b16 %v11696
    %v11809 = vunpack.c.l.b16 %v11697
    %v11810 = vunpack.c.l.b16 %v11698
    %v11811 = vunpack.c.l.b16 %v11699
    %v11812 = vunpack.c.l.b16 %v11700
    %v11813 = vunpack.c.l.b16 %v11701
    %v11814 = vunpack.c.l.b16 %v11702
    %v11815 = vunpack.c.l.b16 %v11703
    %v11816 = vunpack.c.l.b16 %v11704
    %v11817 = vunpack.c.l.b16 %v11705
    %v11818 = vunpack.c.l.b16 %v11706
    %v11819 = vunpack.c.l.b16 %v11707
    %v11820 = vunpack.c.l.b16 %v11708
    %v11821 = vunpack.c.l.b16 %v11709
    %v11822 = vunpack.c.l.b16 %v11710
    %v11823 = vunpack.c.l.b16 %v11711
    %v11824 = vunpack.c.l.b16 %v11712
    %v11825 = vunpack.c.l.b16 %v11713
    %v11826 = vunpack.c.l.b16 %v11714
    %v11827 = vunpack.c.l.b16 %v11715
    %v11828 = vunpack.c.l.b16 %v11716
    %v11829 = vunpack.c.l.b16 %v11717
    %v11830 = vunpack.c.l.b16 %v11718
    %v11831 = vunpack.c.l.b16 %v11719
    %v11832 = vunpack.c.l.b16 %v11720
    %v11833 = vunpack.c.l.b16 %v11721
    %v11834 = vunpack.c.l.b16 %v11722
    %v11835 = vunpack.c.l.b16 %v11723
    %v11836 = vunpack.c.l.b16 %v11724
    %v11837 = vunpack.c.l.b16 %v11725
    %v11838 = vunpack.c.l.b16 %v11726
    %v11839 = vunpack.c.l.b16 %v11727
    %v11840 = vunpack.c.l.b16 %v11728
    %v11841 = vunpack.c.l.b16 %v11729
    %v11842 = vunpack.c.l.b16 %v11730
    %v11843 = vpack.c.b16 %v11788, %v11787
    %v11844 = vpack.c.b16 %v11790, %v11789
    %v11845 = vpack.c.b16 %v11792, %v11791
    %v11846 = vpack.c.b16 %v11794, %v11793
    %v11847 = vpack.c.b16 %v11796, %v11795
    %v11848 = vpack.c.b16 %v11798, %v11797
    %v11849 = vpack.c.b16 %v11800, %v11799
    %v11850 = vpack.c.b16 %v11802, %v11801
    %v11851 = vpack.c.b16 %v11804, %v11803
    %v11852 = vpack.c.b16 %v11806, %v11805
    %v11853 = vpack.c.b16 %v11808, %v11807
    %v11854 = vpack.c.b16 %v11810, %v11809
    %v11855 = vpack.c.b16 %v11812, %v11811
    %v11856 = vpack.c.b16 %v11814, %v11813
    %v11857 = vpack.c.b16 %v11816, %v11815
    %v11858 = vpack.c.b16 %v11818, %v11817
    %v11859 = vpack.c.b16 %v11820, %v11819
    %v11860 = vpack.c.b16 %v11822, %v11821
    %v11861 = vpack.c.b16 %v11824, %v11823
    %v11862 = vpack.c.b16 %v11826, %v11825
    %v11863 = vpack.c.b16 %v11828, %v11827
    %v11864 = vpack.c.b16 %v11830, %v11829
    %v11865 = vpack.c.b16 %v11832, %v11831
    %v11866 = vpack.c.b16 %v11834, %v11833
    %v11867 = vpack.c.b16 %v11836, %v11835
    %v11868 = vpack.c.b16 %v11838, %v11837
    %v11869 = vpack.c.b16 %v11840, %v11839
    %v11870 = vpack.c.b16 %v11842, %v11841
    %v11900 = vsel %vm571, %v9822, 0
    %11902 = vmatprep.subr.bf16.mxu0 0
    %11903 = vmatpush1.bf16.msra.mxu0 %v11843
    %11904 = vmatprep.subr.bf16.mxu0 0
    %11905 = vmatpush1.bf16.msra.mxu0 %v11844
    %11906 = vmatprep.subr.bf16.mxu0 0
    %11907 = vmatpush1.bf16.msra.mxu0 %v11845
    %11908 = vmatprep.subr.bf16.mxu0 0
    %11909 = vmatpush1.bf16.msra.mxu0 %v11846
    %11910 = vmatprep.subr.bf16.mxu0 0
    %11911 = vmatpush1.bf16.msra.mxu0 %v11847
    %11912 = vmatprep.subr.bf16.mxu0 0
    %11913 = vmatpush1.bf16.msra.mxu0 %v11848
    %11914 = vmatprep.subr.bf16.mxu0 0
    %11915 = vmatpush1.bf16.msra.mxu0 %v11849
    %11916 = vmatprep.subr.bf16.mxu0 0
    %11917 = vmatpush1.bf16.msra.mxu0 %v11850
    %11918 = vmatprep.subr.bf16.mxu0 0
    %11919 = vmatpush1.bf16.msra.mxu0 %v11851
    %11920 = vmatprep.subr.bf16.mxu0 0
    %11921 = vmatpush1.bf16.msra.mxu0 %v11852
    %11922 = vmatprep.subr.bf16.mxu0 0
    %11923 = vmatpush1.bf16.msra.mxu0 %v11853
    %11924 = vmatprep.subr.bf16.mxu0 0
    %11925 = vmatpush1.bf16.msra.mxu0 %v11854
    %11926 = vmatprep.subr.bf16.mxu0 0
    %11927 = vmatpush1.bf16.msra.mxu0 %v11855
    %11928 = vmatprep.subr.bf16.mxu0 0
    %11929 = vmatpush1.bf16.msra.mxu0 %v11856
    %11930 = vmatprep.subr.bf16.mxu0 0
    %11931 = vmatpush1.bf16.msra.mxu0 %v11857
    %11932 = vmatprep.subr.bf16.mxu0 0
    %11933 = vmatpush1.bf16.msra.mxu0 %v11858
    %11934 = vmatprep.mubr.bf16.mxu0 %v9820
    %11935 = vmatmul.mubr.bf16.gmra.mrb[0].mxu0 %v9819
    %v11936 = vpop.f32.mrb[0].mxu0
    %v11937 = vadd.f32 0.0, %v11936
    %v11938 = vpop.f32.mrb[0].mxu0
    %v11939 = vpop.f32.mrb[0].mxu0
    %v11940 = vpop.f32.mrb[0].mxu0
    %11941 = vdwg.mxu0
    %11942 = vmatprep.subr.bf16.mxu0 0
    %11943 = vmatpush1.bf16.msra.mxu0 %v11859
    %11944 = vmatprep.subr.bf16.mxu0 0
    %11945 = vmatpush1.bf16.msra.mxu0 %v11860
    %11946 = vmatprep.subr.bf16.mxu0 0
    %11947 = vmatpush1.bf16.msra.mxu0 %v11861
    %11948 = vmatprep.subr.bf16.mxu0 0
    %11949 = vmatpush1.bf16.msra.mxu0 %v11862
    %11950 = vmatprep.subr.bf16.mxu0 0
    %11951 = vmatpush1.bf16.msra.mxu0 %v11863
    %11952 = vmatprep.subr.bf16.mxu0 0
    %11953 = vmatpush1.bf16.msra.mxu0 %v11864
    %11954 = vmatprep.subr.bf16.mxu0 0
    %11955 = vmatpush1.bf16.msra.mxu0 %v11865
    %11956 = vmatprep.subr.bf16.mxu0 0
    %11957 = vmatpush1.bf16.msra.mxu0 %v11866
    %11958 = vmatprep.subr.bf16.mxu0 0
    %11959 = vmatpush1.bf16.msra.mxu0 %v11867
    %11960 = vmatprep.subr.bf16.mxu0 0
    %11961 = vmatpush1.bf16.msra.mxu0 %v11868
    %11962 = vmatprep.subr.bf16.mxu0 0
    %11963 = vmatpush1.bf16.msra.mxu0 %v11869
    %11964 = vmatprep.subr.bf16.mxu0 0
    %11965 = vmatpush1.bf16.msra.mxu0 %v11870
    %11966 = vmatprep.subr.bf16.mxu0 0
    %11967 = vmatpush1.bf16.msra.mxu0 0
    %11968 = vmatprep.subr.bf16.mxu0 0
    %11969 = vmatpush1.bf16.msra.mxu0 0
    %11970 = vmatprep.subr.bf16.mxu0 0
    %11971 = vmatpush1.bf16.msra.mxu0 0
    %11972 = vmatprep.subr.bf16.mxu0 0
    %11973 = vmatpush1.bf16.msra.mxu0 0
    %11974 = vmatprep.mubr.bf16.mxu0 %v11900
    %11975 = vmatmul.mubr.bf16.gmra.mrb[0].mxu0 %v9821
    %v11976 = vpop.f32.mrb[0].mxu0
    %v11977 = vadd.f32 %v11937, %v11976
    %v11978 = vpop.f32.mrb[0].mxu0
    %v11979 = vpop.f32.mrb[0].mxu0
    %v11980 = vpop.f32.mrb[0].mxu0
    %11981 = vdwg.mxu0
    %v11982 = vadd.f32 %v11673, %v11977
    %v11983 = vld [vmem:[#allocation10] sm:$0x1]
    %v11985 = vlaneseq
    %v11986 = vshrl.u32 %v11985, 7
    %v11987 = vsub.s32 0, %v11986
    %v11988 = vrot.slane %v11983, %v11987
    %v11990 = vadd.f32 %v11982, %v11988
    %v11991 = vmax.f32 %v11990, 0.0
    %v11992 = vpack.c.bf16 %v11991, %v11991
    %v11993 = vld [vmem:[%s7] sm:$0xf]
    %v11994 = vld [vmem:[%s7 + $0x4] sm:$0xf]
    %v11995 = vld [vmem:[%s7 + $0x8] sm:$0xf]
    %v11996 = vld [vmem:[%s7 + $0xc] sm:$0xf]
    %v11997 = vld [vmem:[%s7 + $0x10] sm:$0xf]
    %v11998 = vld [vmem:[%s7 + $0x14] sm:$0xf]
    %v11999 = vld [vmem:[%s7 + $0x18] sm:$0xf]
    %v12000 = vld [vmem:[%s7 + $0x1c] sm:$0xf]
    %v12001 = vld [vmem:[%s7 + $0x20] sm:$0xf]
    %v12002 = vld [vmem:[%s7 + $0x24] sm:$0xf]
    %v12003 = vld [vmem:[%s7 + $0x28] sm:$0xf]
    %v12004 = vld [vmem:[%s7 + $0x2c] sm:$0xf]
    %v12005 = vld [vmem:[%s7 + $0x30] sm:$0xf]
    %v12006 = vld [vmem:[%s7 + $0x34] sm:$0xf]
    %v12007 = vld [vmem:[%s7 + $0x38] sm:$0xf]
    %v12008 = vld [vmem:[%s7 + $0x3c] sm:$0xf]
    %v12009 = vld [vmem:[#allocation12] sm:$0x1]
    %v12011 = vlaneseq
    %v12012 = vshrl.u32 %v12011, 7
    %v12013 = vsub.s32 0, %v12012
    %v12014 = vrot.slane %v12009, %v12013
    %v12032 = vunpack.c.l.b16 %v11993
    %v12033 = vunpack.c.l.b16 %v11994
    %v12034 = vunpack.c.l.b16 %v11995
    %v12035 = vunpack.c.l.b16 %v11996
    %v12036 = vunpack.c.l.b16 %v11997
    %v12037 = vunpack.c.l.b16 %v11998
    %v12038 = vunpack.c.l.b16 %v11999
    %v12039 = vunpack.c.l.b16 %v12000
    %v12040 = vunpack.c.l.b16 %v12001
    %v12041 = vunpack.c.l.b16 %v12002
    %v12042 = vunpack.c.l.b16 %v12003
    %v12043 = vunpack.c.l.b16 %v12004
    %v12044 = vunpack.c.l.b16 %v12005
    %v12045 = vunpack.c.l.b16 %v12006
    %v12046 = vunpack.c.l.b16 %v12007
    %v12047 = vunpack.c.l.b16 %v12008
    %v12048 = vpack.c.b16 %v12033, %v12032
    %v12049 = vpack.c.b16 %v12035, %v12034
    %v12050 = vpack.c.b16 %v12037, %v12036
    %v12051 = vpack.c.b16 %v12039, %v12038
    %v12052 = vpack.c.b16 %v12041, %v12040
    %v12053 = vpack.c.b16 %v12043, %v12042
    %v12054 = vpack.c.b16 %v12045, %v12044
    %v12055 = vpack.c.b16 %v12047, %v12046
    %12064 = vmatprep.subr.bf16.mxu0 0
    %12065 = vmatpush1.bf16.msra.mxu0 %v12048
    %12066 = vmatprep.subr.bf16.mxu0 0
    %12067 = vmatpush1.bf16.msra.mxu0 %v12049
    %12068 = vmatprep.subr.bf16.mxu0 0
    %12069 = vmatpush1.bf16.msra.mxu0 %v12050
    %12070 = vmatprep.subr.bf16.mxu0 0
    %12071 = vmatpush1.bf16.msra.mxu0 %v12051
    %12072 = vmatprep.subr.bf16.mxu0 0
    %12073 = vmatpush1.bf16.msra.mxu0 %v12052
    %12074 = vmatprep.subr.bf16.mxu0 0
    %12075 = vmatpush1.bf16.msra.mxu0 %v12053
    %12076 = vmatprep.subr.bf16.mxu0 0
    %12077 = vmatpush1.bf16.msra.mxu0 %v12054
    %12078 = vmatprep.subr.bf16.mxu0 0
    %12079 = vmatpush1.bf16.msra.mxu0 %v12055
    %12080 = vmatprep.subr.bf16.mxu0 0
    %12081 = vmatpush1.bf16.msra.mxu0 0
    %12082 = vmatprep.subr.bf16.mxu0 0
    %12083 = vmatpush1.bf16.msra.mxu0 0
    %12084 = vmatprep.subr.bf16.mxu0 0
    %12085 = vmatpush1.bf16.msra.mxu0 0
    %12086 = vmatprep.subr.bf16.mxu0 0
    %12087 = vmatpush1.bf16.msra.mxu0 0
    %12088 = vmatprep.subr.bf16.mxu0 0
    %12089 = vmatpush1.bf16.msra.mxu0 0
    %12090 = vmatprep.subr.bf16.mxu0 0
    %12091 = vmatpush1.bf16.msra.mxu0 0
    %12092 = vmatprep.subr.bf16.mxu0 0
    %12093 = vmatpush1.bf16.msra.mxu0 0
    %12094 = vmatprep.subr.bf16.mxu0 0
    %12095 = vmatpush1.bf16.msra.mxu0 0
    %12096 = vmatprep.mubr.bf16.mxu0 0
    %12097 = vmatmul.mubr.bf16.gmra.mrb[0].mxu0 %v11992
    %v12098 = vpop.f32.mrb[0].mxu0
    %v12099 = vadd.f32 %v12014, %v12098
    %v12100 = vpop.f32.mrb[0].mxu0
    %v12101 = vpop.f32.mrb[0].mxu0
    %v12102 = vpop.f32.mrb[0].mxu0
    %12103 = vdwg.mxu0
    %vm12104 = vcmask 80896
    %12105 = vst.msk [vmem:[%s9] sm:$0xff] %vm12104, %v12099
    // Predicated region
    $region66: #{simple_cnn_forward.1} parent=1 // pred_check
      _
    $region67: #{simple_cnn_forward.1} parent=1 // pred_check_branch
      %12107 = sbr.rel (0) target = $region69
    $region68: #{simple_cnn_forward.1} parent=1 // pred_region
      _
    $region69: #{simple_cnn_forward.1} parent=1 // pred_fallthru
      _
    // Predicated region
    $region70: #{simple_cnn_forward.1} parent=1 // pred_check
      _
    $region71: #{simple_cnn_forward.1} parent=1 // pred_check_branch
      %12109 = sbr.rel (0) target = $region73
    $region72: #{simple_cnn_forward.1} parent=1 // pred_region
      _
    $region73: #{simple_cnn_forward.1} parent=1 // pred_fallthru
      _
    %12110 = vsyncpa [#allocation3], 1
    %12111 = vsyncpa [#allocation5], 1
    %12112 = vsyncpa [#allocation8], 1
    %12113 = vsyncpa [#allocation11], 1

</llo_original>
